<compile_context>
chip_gen: v5e
topology: v5e:2x2
jax: 0.10.0
libtpu: 0.0.40
codegen_flags: <defaults>
</compile_context>

<pallas_src>
import functools

import jax
import jax.numpy as jnp
from jax import lax
from jax.experimental import pallas as pl
from jax.experimental.pallas import tpu as pltpu

NEG_SLOPE = 0.01    # torch.nn.LeakyReLU(negative_slope=0.01)
BN_EPS = 1e-5       # torch.nn.BatchNorm2d default eps
FC2_PAD = 128       # fc2 output padded to a full lane width (sliced back outside)


def _round_up(x, m):
    return (x + m - 1) // m * m


# ----------------------------------------------------------------------------
# Fused Pallas kernel: conv1/bn1/lrelu/pool -> conv2/... -> conv3/... -> fc1 -> fc2
# (BN scale and avg-pool 1/4 are pre-folded into the weights in pack_params.)
# ----------------------------------------------------------------------------
def _fused_cnn_kernel(
    x1_ref, w1_ref, b1_ref,                   # stage 1 (pre-im2col input)
    w2_ref, b2_ref,                           # stage 2
    w3_ref, b3_ref,                           # stage 3
    wf1_ref, bf1_ref, wf2_ref, bf2_ref,       # classifier head
    o_ref,                                    # (Bb, 1, 128) logits (padded)
    pad2_ref, pad3_ref,                       # zero-halo buffers for conv2/conv3
    patch2_ref, patch3_ref,                   # im2col patch matrices
    flat_ref,                                 # flattened features for fc1
    c1_ref, hs1_ref, c2_ref, hs2_ref, c3_ref, hs3_ref,   # pooling staging
    *, Bb):
    f32 = jnp.float32
    bf16 = jnp.bfloat16

    def bias_lrelu(h, b_ref):
        h = h + b_ref[...]                              # folded BN offset / fc bias
        return jnp.where(h >= 0, h, NEG_SLOPE * h)      # LeakyReLU

    def pool2x2_sum(h, c_ref, hs_ref, H, W, C):
        # h: (Bb*H*W, C) conv output, rows in (b, h, w) row-major order.
        # Returns the 2x2 window SUM; the 1/4 mean factor is folded into the
        # weights of the next linear op.
        c_ref[...] = h.reshape(Bb * H, W, C)
        # horizontal 2x1 sums via stride-2 slices of the (., W, C) ref
        hsum = c_ref[:, pl.ds(0, W // 2, 2), :] + c_ref[:, pl.ds(1, W // 2, 2), :]
        hs_ref[...] = hsum
        # vertical 2x1 sums via stride-2 slices over the (b, h) row axis
        vsum = (hs_ref[pl.ds(0, Bb * (H // 2), 2), :, :]
                + hs_ref[pl.ds(1, Bb * (H // 2), 2), :, :])
        return vsum.reshape(Bb, H // 2, W // 2, C)

    # ---------------- stage 1: conv1 (im2col'd in wrapper) + bias + LReLU + pool ------
    k1 = x1_ref.shape[-1]
    x1 = x1_ref[...].reshape(Bb * 1024, k1)                         # bf16 patches
    h1 = jnp.dot(x1, w1_ref[...], preferred_element_type=f32)       # (Bb*1024, 32)
    h1 = bias_lrelu(h1, b1_ref)
    p1 = pool2x2_sum(h1, c1_ref, hs1_ref, 32, 32, 32)               # (Bb, 16, 16, 32)

    pad2_ref[...] = jnp.zeros_like(pad2_ref)                        # zero halo
    pad2_ref[:, 1:17, 1:17, :] = p1

    # ---------------- stage 2: in-VMEM im2col -> single matmul ----------------
    for t in range(9):
        dy, dx = t // 3, t % 3
        patch2_ref[:, t * 32:(t + 1) * 32] = (
            pad2_ref[:, dy:dy + 16, dx:dx + 16, :].reshape(Bb * 256, 32))
    h2 = jnp.dot(patch2_ref[...].astype(bf16), w2_ref[...],
                 preferred_element_type=f32)                        # (Bb*256, 64)
    h2 = bias_lrelu(h2, b2_ref)
    p2 = pool2x2_sum(h2, c2_ref, hs2_ref, 16, 16, 64)               # (Bb, 8, 8, 64)

    pad3_ref[...] = jnp.zeros_like(pad3_ref)
    pad3_ref[:, 1:9, 1:9, :] = p2

    # ---------------- stage 3 ----------------
    for t in range(9):
        dy, dx = t // 3, t % 3
        patch3_ref[:, t * 64:(t + 1) * 64] = (
            pad3_ref[:, dy:dy + 8, dx:dx + 8, :].reshape(Bb * 64, 64))
    h3 = jnp.dot(patch3_ref[...].astype(bf16), w3_ref[...],
                 preferred_element_type=f32)                        # (Bb*64, 128)
    h3 = bias_lrelu(h3, b3_ref)
    p3 = pool2x2_sum(h3, c3_ref, hs3_ref, 8, 8, 128)                # (Bb, 4, 4, 128)

    # ---------------- classifier head: flatten (h, w, c) -> fc1 -> LReLU -> fc2 -------
    for hh in range(4):
        for ww in range(4):
            s = hh * 4 + ww
            flat_ref[:, s * 128:(s + 1) * 128] = p3[:, hh, ww, :]   # 128-aligned stores
    hf = (jnp.dot(flat_ref[...].astype(bf16), wf1_ref[...],
                  preferred_element_type=f32) + bf1_ref[...])       # (Bb, 256)
    hf = jnp.where(hf >= 0, hf, NEG_SLOPE * hf)
    # TODO(synk): Dropout(0.5) is applied as eval-mode identity (no RNG masking).
    logits = (jnp.dot(hf.astype(bf16), wf2_ref[...],
                      preferred_element_type=f32) + bf2_ref[...])   # (Bb, 128)
    o_ref[:, 0, :] = logits.astype(o_ref.dtype)


# ----------------------------------------------------------------------------
# Wrappers
# ----------------------------------------------------------------------------
def _pick_block_b(B):
    """Largest divisor of B that is <= 8 while keeping >= 2 grid steps (megacore)."""
    best = 1
    for d in range(1, min(B, 8) + 1):
        if B % d == 0 and (B // d >= 2 or B == 1):
            best = d
    return best


def _im2col_stage1(x_nhwc, k1):
    """(B, 32, 32, Cin) -> (B, 1024, k1) bf16 patches for the 3x3 / pad=1 conv."""
    B, H, W, Cin = x_nhwc.shape
    xp = jnp.pad(x_nhwc, ((0, 0), (1, 1), (1, 1), (0, 0)))
    taps = [xp[:, dy:dy + H, dx:dx + W, :] for dy in range(3) for dx in range(3)]
    p = jnp.stack(taps, axis=3).reshape(B, H * W, 9 * Cin)          # (tap, cin) order
    if k1 > 9 * Cin:
        p = jnp.pad(p, ((0, 0), (0, 0), (0, k1 - 9 * Cin)))
    return p.astype(jnp.bfloat16)


def fused_cnn_forward(xcol, kp, block_b):
    B = xcol.shape[0]
    assert B % block_b == 0, (B, block_b)
    Bb = block_b
    k1 = xcol.shape[-1]

    in_specs = [
        pl.BlockSpec((Bb, 1024, k1), lambda b: (b, 0, 0)),   # stage-1 im2col patches
        pl.BlockSpec((k1, 32), lambda b: (0, 0)),            # w1 (im2col, BN-folded)
        pl.BlockSpec((1, 32), lambda b: (0, 0)),             # bn1 offset
        pl.BlockSpec((288, 64), lambda b: (0, 0)),           # w2 (im2col, BN+pool-folded)
        pl.BlockSpec((1, 64), lambda b: (0, 0)),             # bn2 offset
        pl.BlockSpec((576, 128), lambda b: (0, 0)),          # w3 (im2col, BN+pool-folded)
        pl.BlockSpec((1, 128), lambda b: (0, 0)),            # bn3 offset
        pl.BlockSpec((2048, 256), lambda b: (0, 0)),         # fc1 (NHWC-permuted, pool-folded)
        pl.BlockSpec((1, 256), lambda b: (0, 0)),            # fc1 bias
        pl.BlockSpec((256, FC2_PAD), lambda b: (0, 0)),      # fc2 (padded to 128)
        pl.BlockSpec((1, FC2_PAD), lambda b: (0, 0)),        # fc2 bias (padded)
    ]
    scratch_shapes = [
        pltpu.VMEM((Bb, 18, 18, 32), jnp.float32),    # pad2: zero-halo input of conv2
        pltpu.VMEM((Bb, 10, 10, 64), jnp.float32),    # pad3: zero-halo input of conv3
        pltpu.VMEM((Bb * 256, 288), jnp.float32),     # stage-2 im2col patch matrix
        pltpu.VMEM((Bb * 64, 576), jnp.float32),      # stage-3 im2col patch matrix
        pltpu.VMEM((Bb, 2048), jnp.float32),          # flattened features for fc1
        pltpu.VMEM((Bb * 32, 32, 32), jnp.float32),   # stage-1 conv out (pool staging)
        pltpu.VMEM((Bb * 32, 16, 32), jnp.float32),   # stage-1 horizontal pool sums
        pltpu.VMEM((Bb * 16, 16, 64), jnp.float32),   # stage-2 conv out
        pltpu.VMEM((Bb * 16, 8, 64), jnp.float32),    # stage-2 horizontal pool sums
        pltpu.VMEM((Bb * 8, 8, 128), jnp.float32),    # stage-3 conv out
        pltpu.VMEM((Bb * 8, 4, 128), jnp.float32),    # stage-3 horizontal pool sums
    ]
    out = pl.pallas_call(
        functools.partial(_fused_cnn_kernel, Bb=Bb),
        out_shape=jax.ShapeDtypeStruct((B, 1, FC2_PAD), jnp.float32),
        grid=(B // Bb,),
        in_specs=in_specs,
        out_specs=pl.BlockSpec((Bb, 1, FC2_PAD), lambda b: (b, 0, 0)),
        scratch_shapes=scratch_shapes,
        compiler_params=pltpu.CompilerParams(dimension_semantics=("parallel",)),
    )(xcol, kp["w1c"], kp["b1"],
      kp["w2c"], kp["b2"],
      kp["w3c"], kp["b3"],
      kp["wf1"], kp["bf1"], kp["wf2"], kp["bf2"])
    return out.reshape(B, FC2_PAD)


@functools.partial(jax.jit, static_argnames=("out_channels", "block_b"))
def forward(kparams, x_nchw, *, out_channels=10, block_b=1):
    x = jnp.transpose(x_nchw, (0, 2, 3, 1)).astype(jnp.float32)     # NCHW -> NHWC
    xcol = _im2col_stage1(x, kparams["w1c"].shape[0])
    logits = fused_cnn_forward(xcol, kparams, block_b)
    return logits[:, :out_channels]


# ----------------------------------------------------------------------------
# Parameters (deterministic synthetic init matching the PyTorch module shapes)
# ----------------------------------------------------------------------------
def fold_bn(gamma, beta, mean, var):
    scale = gamma / jnp.sqrt(var + BN_EPS)
    bias = beta - mean * scale
    return scale, bias


def init_params(key, in_channels=3, out_channels=10):
    ks = jax.random.split(key, 10)
    p = {}

    def conv_w(k, cin, cout):                       # HWIO layout (3, 3, Cin, Cout)
        return jax.random.normal(k, (3, 3, cin, cout), jnp.float32) * 0.05

    def bn(k, c):
        k1, k2, k3, k4 = jax.random.split(k, 4)
        gamma = 1.0 + 0.1 * jax.random.normal(k1, (c,), jnp.float32)
        beta = 0.1 * jax.random.normal(k2, (c,), jnp.float32)
        mean = 0.1 * jax.random.normal(k3, (c,), jnp.float32)
        var = 1.0 + 0.1 * jnp.abs(jax.random.normal(k4, (c,), jnp.float32))
        return fold_bn(gamma, beta, mean, var)

    p["w1"] = conv_w(ks[0], in_channels, 32)
    p["s1"], p["o1"] = bn(ks[1], 32)
    p["w2"] = conv_w(ks[2], 32, 64)
    p["s2"], p["o2"] = bn(ks[3], 64)
    p["w3"] = conv_w(ks[4], 64, 128)
    p["s3"], p["o3"] = bn(ks[5], 128)
    # fc1 acts on the torch NCHW (c, h, w) flatten; stored transposed (2048, 256).
    p["w_fc1_torch"] = jax.random.normal(ks[6], (128 * 4 * 4, 256), jnp.float32) * 0.02
    p["b_fc1"] = 0.01 * jax.random.normal(ks[7], (256,), jnp.float32)
    p["w_fc2"] = jax.random.normal(ks[8], (256, out_channels), jnp.float32) * 0.05
    p["b_fc2"] = 0.01 * jax.random.normal(ks[9], (out_channels,), jnp.float32)
    return p


def pack_params(p, in_channels=3, out_channels=10):
    """Kernel-ready params:
      - bf16 im2col conv weights with the eval-mode BN scale folded into the
        output-channel columns,
      - the 2x2 avg-pool 1/4 factor from each stage folded into the NEXT
        linear layer's weights (w2c, w3c, wf1),
      - f32 (1, C) bias/offset rows,
      - fc1 permuted to the in-kernel (h, w, c) flatten,
      - fc2 padded to a full 128-lane output width."""
    kp = {}
    k1 = _round_up(9 * in_channels, 8)

    w1c = p["w1"].reshape(9 * in_channels, 32) * p["s1"][None, :]
    w1c = jnp.pad(w1c, ((0, k1 - 9 * in_channels), (0, 0)))
    kp["w1c"] = w1c.astype(jnp.bfloat16)
    kp["b1"] = p["o1"].reshape(1, 32).astype(jnp.float32)

    kp["w2c"] = (0.25 * p["w2"].reshape(9 * 32, 64)
                 * p["s2"][None, :]).astype(jnp.bfloat16)
    kp["b2"] = p["o2"].reshape(1, 64).astype(jnp.float32)

    kp["w3c"] = (0.25 * p["w3"].reshape(9 * 64, 128)
                 * p["s3"][None, :]).astype(jnp.bfloat16)
    kp["b3"] = p["o3"].reshape(1, 128).astype(jnp.float32)

    # torch (c, h, w) flatten order -> kernel (h, w, c) flatten order; fold the
    # final pool's 1/4 factor in as well.
    wf1 = (p["w_fc1_torch"].reshape(128, 4, 4, 256)
           .transpose(1, 2, 0, 3).reshape(128 * 4 * 4, 256))
    kp["wf1"] = (0.25 * wf1).astype(jnp.bfloat16)
    kp["bf1"] = p["b_fc1"].reshape(1, 256).astype(jnp.float32)

    kp["wf2"] = jnp.pad(p["w_fc2"],
                        ((0, 0), (0, FC2_PAD - out_channels))).astype(jnp.bfloat16)
    kp["bf2"] = jnp.pad(p["b_fc2"],
                        (0, FC2_PAD - out_channels)).reshape(1, FC2_PAD).astype(jnp.float32)
    return kp


# ----------------------------------------------------------------------------
# Pure-JAX reference (f32, unfolded) for verification
# ----------------------------------------------------------------------------
def _ref_stage(x, w33, scale, bias):
    y = lax.conv_general_dilated(x, w33, window_strides=(1, 1),
                                 padding=((1, 1), (1, 1)),
                                 dimension_numbers=("NHWC", "HWIO", "NHWC"))
    y = y * scale.reshape(1, 1, 1, -1) + bias.reshape(1, 1, 1, -1)
    y = jnp.where(y >= 0, y, NEG_SLOPE * y)
    B, H, W, C = y.shape
    return y.reshape(B, H // 2, 2, W // 2, 2, C).mean(axis=(2, 4))


def reference_forward(p, x_nchw):
    x = jnp.transpose(x_nchw, (0, 2, 3, 1))
    x = _ref_stage(x, p["w1"], p["s1"], p["o1"])
    x = _ref_stage(x, p["w2"], p["s2"], p["o2"])
    x = _ref_stage(x, p["w3"], p["s3"], p["o3"])
    B = x.shape[0]
    xf = jnp.transpose(x, (0, 3, 1, 2)).reshape(B, -1)   # torch NCHW (c, h, w) flatten
    h = xf @ p["w_fc1_torch"] + p["b_fc1"]
    h = jnp.where(h >= 0, h, NEG_SLOPE * h)
    return h @ p["w_fc2"] + p["b_fc2"]


# ----------------------------------------------------------------------------
if __name__ == "__main__":
    key = jax.random.PRNGKey(0)
    kp_key, kx = jax.random.split(key)
    in_channels, out_channels = 3, 10
    params = init_params(kp_key, in_channels, out_channels)
    kparams = pack_params(params, in_channels, out_channels)

    # Input: (B, C, H, W) = (2, 3, 32, 32) -- fc1 (128*4*4) implies 32x32 spatial.
    x = jax.random.normal(kx, (2, in_channels, 32, 32), jnp.float32)
    block_b = _pick_block_b(x.shape[0])

    out = forward(kparams, x, out_channels=out_channels, block_b=block_b)
    out = jax.block_until_ready(out)
    assert out.shape == (2, out_channels), out.shape
    assert bool(jnp.all(jnp.isfinite(out)))

    ref = jax.block_until_ready(reference_forward(params, x))
    err = float(jnp.max(jnp.abs(out - ref)))
    tol = 5e-2 * (float(jnp.max(jnp.abs(ref))) + 1.0)
    assert err < tol, f"mismatch vs f32 reference: max|diff|={err} tol={tol}"

    print("KERNEL_OK")
</pallas_src>

<mosaic_0001>
module attributes {stable_mosaic.version = 11 : i64} {
  func.func @_fused_cnn_kernel(%arg0: i32, %arg1: memref<1x1024x32xbf16, #tpu.memory_space<vmem>>, %arg2: memref<32x32xbf16, #tpu.memory_space<vmem>>, %arg3: memref<1x32xf32, #tpu.memory_space<vmem>>, %arg4: memref<288x64xbf16, #tpu.memory_space<vmem>>, %arg5: memref<1x64xf32, #tpu.memory_space<vmem>>, %arg6: memref<576x128xbf16, #tpu.memory_space<vmem>>, %arg7: memref<1x128xf32, #tpu.memory_space<vmem>>, %arg8: memref<2048x256xbf16, #tpu.memory_space<vmem>>, %arg9: memref<1x256xf32, #tpu.memory_space<vmem>>, %arg10: memref<256x128xbf16, #tpu.memory_space<vmem>>, %arg11: memref<1x128xf32, #tpu.memory_space<vmem>>, %arg12: memref<1x1x128xf32, #tpu.memory_space<vmem>>, %arg13: memref<1x18x18x32xf32, #tpu.memory_space<vmem>>, %arg14: memref<1x10x10x64xf32, #tpu.memory_space<vmem>>, %arg15: memref<256x288xf32, #tpu.memory_space<vmem>>, %arg16: memref<64x576xf32, #tpu.memory_space<vmem>>, %arg17: memref<1x2048xf32, #tpu.memory_space<vmem>>, %arg18: memref<32x32x32xf32, #tpu.memory_space<vmem>>, %arg19: memref<32x16x32xf32, #tpu.memory_space<vmem>>, %arg20: memref<16x16x64xf32, #tpu.memory_space<vmem>>, %arg21: memref<16x8x64xf32, #tpu.memory_space<vmem>>, %arg22: memref<8x8x128xf32, #tpu.memory_space<vmem>>, %arg23: memref<8x4x128xf32, #tpu.memory_space<vmem>>) attributes {dimension_semantics = [#tpu.dimension_semantics<parallel>], iteration_bounds = array<i64: 2>, scalar_prefetch = 0 : i64, scratch_operands = 11 : i64, tpu.core_type = #tpu.core_type<tc>, window_params = [{transform_indices = @transform_0, window_bounds = array<i64: 1, 1024, 32>}, {pipeline_mode = #tpu.pipeline_mode<synchronous>, transform_indices = @transform_1, window_bounds = array<i64: 32, 32>}, {pipeline_mode = #tpu.pipeline_mode<synchronous>, transform_indices = @transform_2, window_bounds = array<i64: 1, 32>}, {pipeline_mode = #tpu.pipeline_mode<synchronous>, transform_indices = @transform_3, window_bounds = array<i64: 288, 64>}, {pipeline_mode = #tpu.pipeline_mode<synchronous>, transform_indices = @transform_4, window_bounds = array<i64: 1, 64>}, {pipeline_mode = #tpu.pipeline_mode<synchronous>, transform_indices = @transform_5, window_bounds = array<i64: 576, 128>}, {pipeline_mode = #tpu.pipeline_mode<synchronous>, transform_indices = @transform_6, window_bounds = array<i64: 1, 128>}, {pipeline_mode = #tpu.pipeline_mode<synchronous>, transform_indices = @transform_7, window_bounds = array<i64: 2048, 256>}, {pipeline_mode = #tpu.pipeline_mode<synchronous>, transform_indices = @transform_8, window_bounds = array<i64: 1, 256>}, {pipeline_mode = #tpu.pipeline_mode<synchronous>, transform_indices = @transform_9, window_bounds = array<i64: 256, 128>}, {pipeline_mode = #tpu.pipeline_mode<synchronous>, transform_indices = @transform_10, window_bounds = array<i64: 1, 128>}, {transform_indices = @transform_11, window_bounds = array<i64: 1, 1, 128>}]} {
    %c0 = arith.constant 0 : index
    %c0_0 = arith.constant 0 : index
    %c0_1 = arith.constant 0 : index
    %0 = vector.load %arg1[%c0, %c0_0, %c0_1] : memref<1x1024x32xbf16, #tpu.memory_space<vmem>>, vector<1x1024x32xbf16>
    %1 = vector.shape_cast %0 : vector<1x1024x32xbf16> to vector<1024x32xbf16>
    %c0_2 = arith.constant 0 : index
    %c0_3 = arith.constant 0 : index
    %2 = vector.load %arg2[%c0_2, %c0_3] : memref<32x32xbf16, #tpu.memory_space<vmem>>, vector<32x32xbf16>
    %cst = arith.constant dense<0.000000e+00> : vector<1024x32xf32>
    %3 = tpu.matmul %1, %2, %cst {dimension_numbers = #tpu.dot_dimension_numbers<[1], [0], [0], [1], [0, 0, 1, 1], [], []>} : vector<1024x32xbf16>, vector<32x32xbf16>, vector<1024x32xf32> -> vector<1024x32xf32>
    %c0_4 = arith.constant 0 : index
    %c0_5 = arith.constant 0 : index
    %4 = vector.load %arg3[%c0_4, %c0_5] : memref<1x32xf32, #tpu.memory_space<vmem>>, vector<1x32xf32>
    %5 = vector.broadcast %4 : vector<1x32xf32> to vector<1024x32xf32>
    %6 = arith.addf %3, %5 : vector<1024x32xf32>
    %cst_6 = arith.constant 0.000000e+00 : f32
    %7 = vector.broadcast %cst_6 : f32 to vector<1024x32xf32>
    %8 = arith.cmpf oge, %6, %7 : vector<1024x32xf32>
    %cst_7 = arith.constant 0.00999999977 : f32
    %9 = vector.broadcast %cst_7 : f32 to vector<1024x32xf32>
    %10 = arith.mulf %9, %6 : vector<1024x32xf32>
    %11 = arith.select %8, %6, %10 : vector<1024x32xi1>, vector<1024x32xf32>
    %12 = vector.shape_cast %11 : vector<1024x32xf32> to vector<32x32x32xf32>
    %c0_8 = arith.constant 0 : index
    %c0_9 = arith.constant 0 : index
    %c0_10 = arith.constant 0 : index
    %13 = vector.load %arg18[%c0_8, %c0_9, %c0_10] : memref<32x32x32xf32, #tpu.memory_space<vmem>>, vector<32x32x32xf32>
    tpu.vector_store %arg18[%c0_8, %c0_9, %c0_10], %12 {strides = array<i32>} : memref<32x32x32xf32, #tpu.memory_space<vmem>>, vector<32x32x32xf32>,
    %c0_11 = arith.constant 0 : index
    %c0_12 = arith.constant 0 : index
    %c0_13 = arith.constant 0 : index
    %14 = tpu.strided_load %arg18[%c0_11, %c0_12, %c0_13] {strides = array<i32: 1, 2, 1>} : memref<32x32x32xf32, #tpu.memory_space<vmem>>, vector<32x16x32xf32>
    %c0_14 = arith.constant 0 : index
    %c1 = arith.constant 1 : index
    %c0_15 = arith.constant 0 : index
    %15 = tpu.strided_load %arg18[%c0_14, %c1, %c0_15] {strides = array<i32: 1, 2, 1>} : memref<32x32x32xf32, #tpu.memory_space<vmem>>, vector<32x16x32xf32>
    %16 = arith.addf %14, %15 : vector<32x16x32xf32>
    %c0_16 = arith.constant 0 : index
    %c0_17 = arith.constant 0 : index
    %c0_18 = arith.constant 0 : index
    %17 = vector.load %arg19[%c0_16, %c0_17, %c0_18] : memref<32x16x32xf32, #tpu.memory_space<vmem>>, vector<32x16x32xf32>
    tpu.vector_store %arg19[%c0_16, %c0_17, %c0_18], %16 {strides = array<i32>} : memref<32x16x32xf32, #tpu.memory_space<vmem>>, vector<32x16x32xf32>,
    %c0_19 = arith.constant 0 : index
    %c0_20 = arith.constant 0 : index
    %c0_21 = arith.constant 0 : index
    %18 = tpu.strided_load %arg19[%c0_19, %c0_20, %c0_21] {strides = array<i32: 2, 1, 1>} : memref<32x16x32xf32, #tpu.memory_space<vmem>>, vector<16x16x32xf32>
    %c1_22 = arith.constant 1 : index
    %c0_23 = arith.constant 0 : index
    %c0_24 = arith.constant 0 : index
    %19 = tpu.strided_load %arg19[%c1_22, %c0_23, %c0_24] {strides = array<i32: 2, 1, 1>} : memref<32x16x32xf32, #tpu.memory_space<vmem>>, vector<16x16x32xf32>
    %20 = arith.addf %18, %19 : vector<16x16x32xf32>
    %21 = vector.shape_cast %20 : vector<16x16x32xf32> to vector<1x16x16x32xf32>
    %cst_25 = arith.constant 0.000000e+00 : f32
    %22 = vector.broadcast %cst_25 : f32 to vector<1x18x18x32xf32>
    %c0_26 = arith.constant 0 : index
    %c0_27 = arith.constant 0 : index
    %c0_28 = arith.constant 0 : index
    %c0_29 = arith.constant 0 : index
    %23 = vector.load %arg13[%c0_26, %c0_27, %c0_28, %c0_29] : memref<1x18x18x32xf32, #tpu.memory_space<vmem>>, vector<1x18x18x32xf32>
    tpu.vector_store %arg13[%c0_26, %c0_27, %c0_28, %c0_29], %22 {strides = array<i32>} : memref<1x18x18x32xf32, #tpu.memory_space<vmem>>, vector<1x18x18x32xf32>,
    %c0_30 = arith.constant 0 : index
    %c1_31 = arith.constant 1 : index
    %c1_32 = arith.constant 1 : index
    %c0_33 = arith.constant 0 : index
    %24 = vector.load %arg13[%c0_30, %c1_31, %c1_32, %c0_33] : memref<1x18x18x32xf32, #tpu.memory_space<vmem>>, vector<1x16x16x32xf32>
    tpu.vector_store %arg13[%c0_30, %c1_31, %c1_32, %c0_33], %21 {strides = array<i32>} : memref<1x18x18x32xf32, #tpu.memory_space<vmem>>, vector<1x16x16x32xf32>,
    %c0_34 = arith.constant 0 : index
    %c0_35 = arith.constant 0 : index
    %c0_36 = arith.constant 0 : index
    %c0_37 = arith.constant 0 : index
    %25 = vector.load %arg13[%c0_34, %c0_35, %c0_36, %c0_37] : memref<1x18x18x32xf32, #tpu.memory_space<vmem>>, vector<1x16x16x32xf32>
    %26 = vector.shape_cast %25 : vector<1x16x16x32xf32> to vector<256x32xf32>
    %c0_38 = arith.constant 0 : index
    %c0_39 = arith.constant 0 : index
    %27 = vector.load %arg15[%c0_38, %c0_39] : memref<256x288xf32, #tpu.memory_space<vmem>>, vector<256x32xf32>
    tpu.vector_store %arg15[%c0_38, %c0_39], %26 {strides = array<i32>} : memref<256x288xf32, #tpu.memory_space<vmem>>, vector<256x32xf32>,
    %c0_40 = arith.constant 0 : index
    %c0_41 = arith.constant 0 : index
    %c1_42 = arith.constant 1 : index
    %c0_43 = arith.constant 0 : index
    %28 = vector.load %arg13[%c0_40, %c0_41, %c1_42, %c0_43] : memref<1x18x18x32xf32, #tpu.memory_space<vmem>>, vector<1x16x16x32xf32>
    %29 = vector.shape_cast %28 : vector<1x16x16x32xf32> to vector<256x32xf32>
    %c0_44 = arith.constant 0 : index
    %c32 = arith.constant 32 : index
    %30 = vector.load %arg15[%c0_44, %c32] : memref<256x288xf32, #tpu.memory_space<vmem>>, vector<256x32xf32>
    tpu.vector_store %arg15[%c0_44, %c32], %29 {strides = array<i32>} : memref<256x288xf32, #tpu.memory_space<vmem>>, vector<256x32xf32>,
    %c0_45 = arith.constant 0 : index
    %c0_46 = arith.constant 0 : index
    %c2 = arith.constant 2 : index
    %c0_47 = arith.constant 0 : index
    %31 = vector.load %arg13[%c0_45, %c0_46, %c2, %c0_47] : memref<1x18x18x32xf32, #tpu.memory_space<vmem>>, vector<1x16x16x32xf32>
    %32 = vector.shape_cast %31 : vector<1x16x16x32xf32> to vector<256x32xf32>
    %c0_48 = arith.constant 0 : index
    %c64 = arith.constant 64 : index
    %33 = vector.load %arg15[%c0_48, %c64] : memref<256x288xf32, #tpu.memory_space<vmem>>, vector<256x32xf32>
    tpu.vector_store %arg15[%c0_48, %c64], %32 {strides = array<i32>} : memref<256x288xf32, #tpu.memory_space<vmem>>, vector<256x32xf32>,
    %c0_49 = arith.constant 0 : index
    %c1_50 = arith.constant 1 : index
    %c0_51 = arith.constant 0 : index
    %c0_52 = arith.constant 0 : index
    %34 = vector.load %arg13[%c0_49, %c1_50, %c0_51, %c0_52] : memref<1x18x18x32xf32, #tpu.memory_space<vmem>>, vector<1x16x16x32xf32>
    %35 = vector.shape_cast %34 : vector<1x16x16x32xf32> to vector<256x32xf32>
    %c0_53 = arith.constant 0 : index
    %c96 = arith.constant 96 : index
    %36 = vector.load %arg15[%c0_53, %c96] : memref<256x288xf32, #tpu.memory_space<vmem>>, vector<256x32xf32>
    tpu.vector_store %arg15[%c0_53, %c96], %35 {strides = array<i32>} : memref<256x288xf32, #tpu.memory_space<vmem>>, vector<256x32xf32>,
    %c0_54 = arith.constant 0 : index
    %c1_55 = arith.constant 1 : index
    %c1_56 = arith.constant 1 : index
    %c0_57 = arith.constant 0 : index
    %37 = vector.load %arg13[%c0_54, %c1_55, %c1_56, %c0_57] : memref<1x18x18x32xf32, #tpu.memory_space<vmem>>, vector<1x16x16x32xf32>
    %38 = vector.shape_cast %37 : vector<1x16x16x32xf32> to vector<256x32xf32>
    %c0_58 = arith.constant 0 : index
    %c128 = arith.constant 128 : index
    %39 = vector.load %arg15[%c0_58, %c128] : memref<256x288xf32, #tpu.memory_space<vmem>>, vector<256x32xf32>
    tpu.vector_store %arg15[%c0_58, %c128], %38 {strides = array<i32>} : memref<256x288xf32, #tpu.memory_space<vmem>>, vector<256x32xf32>,
    %c0_59 = arith.constant 0 : index
    %c1_60 = arith.constant 1 : index
    %c2_61 = arith.constant 2 : index
    %c0_62 = arith.constant 0 : index
    %40 = vector.load %arg13[%c0_59, %c1_60, %c2_61, %c0_62] : memref<1x18x18x32xf32, #tpu.memory_space<vmem>>, vector<1x16x16x32xf32>
    %41 = vector.shape_cast %40 : vector<1x16x16x32xf32> to vector<256x32xf32>
    %c0_63 = arith.constant 0 : index
    %c160 = arith.constant 160 : index
    %42 = vector.load %arg15[%c0_63, %c160] : memref<256x288xf32, #tpu.memory_space<vmem>>, vector<256x32xf32>
    tpu.vector_store %arg15[%c0_63, %c160], %41 {strides = array<i32>} : memref<256x288xf32, #tpu.memory_space<vmem>>, vector<256x32xf32>,
    %c0_64 = arith.constant 0 : index
    %c2_65 = arith.constant 2 : index
    %c0_66 = arith.constant 0 : index
    %c0_67 = arith.constant 0 : index
    %43 = vector.load %arg13[%c0_64, %c2_65, %c0_66, %c0_67] : memref<1x18x18x32xf32, #tpu.memory_space<vmem>>, vector<1x16x16x32xf32>
    %44 = vector.shape_cast %43 : vector<1x16x16x32xf32> to vector<256x32xf32>
    %c0_68 = arith.constant 0 : index
    %c192 = arith.constant 192 : index
    %45 = vector.load %arg15[%c0_68, %c192] : memref<256x288xf32, #tpu.memory_space<vmem>>, vector<256x32xf32>
    tpu.vector_store %arg15[%c0_68, %c192], %44 {strides = array<i32>} : memref<256x288xf32, #tpu.memory_space<vmem>>, vector<256x32xf32>,
    %c0_69 = arith.constant 0 : index
    %c2_70 = arith.constant 2 : index
    %c1_71 = arith.constant 1 : index
    %c0_72 = arith.constant 0 : index
    %46 = vector.load %arg13[%c0_69, %c2_70, %c1_71, %c0_72] : memref<1x18x18x32xf32, #tpu.memory_space<vmem>>, vector<1x16x16x32xf32>
    %47 = vector.shape_cast %46 : vector<1x16x16x32xf32> to vector<256x32xf32>
    %c0_73 = arith.constant 0 : index
    %c224 = arith.constant 224 : index
    %48 = vector.load %arg15[%c0_73, %c224] : memref<256x288xf32, #tpu.memory_space<vmem>>, vector<256x32xf32>
    tpu.vector_store %arg15[%c0_73, %c224], %47 {strides = array<i32>} : memref<256x288xf32, #tpu.memory_space<vmem>>, vector<256x32xf32>,
    %c0_74 = arith.constant 0 : index
    %c2_75 = arith.constant 2 : index
    %c2_76 = arith.constant 2 : index
    %c0_77 = arith.constant 0 : index
    %49 = vector.load %arg13[%c0_74, %c2_75, %c2_76, %c0_77] : memref<1x18x18x32xf32, #tpu.memory_space<vmem>>, vector<1x16x16x32xf32>
    %50 = vector.shape_cast %49 : vector<1x16x16x32xf32> to vector<256x32xf32>
    %c0_78 = arith.constant 0 : index
    %c256 = arith.constant 256 : index
    %51 = vector.load %arg15[%c0_78, %c256] : memref<256x288xf32, #tpu.memory_space<vmem>>, vector<256x32xf32>
    tpu.vector_store %arg15[%c0_78, %c256], %50 {strides = array<i32>} : memref<256x288xf32, #tpu.memory_space<vmem>>, vector<256x32xf32>,
    %c0_79 = arith.constant 0 : index
    %c0_80 = arith.constant 0 : index
    %52 = vector.load %arg15[%c0_79, %c0_80] : memref<256x288xf32, #tpu.memory_space<vmem>>, vector<256x288xf32>
    %53 = arith.truncf %52 : vector<256x288xf32> to vector<256x288xbf16>
    %c0_81 = arith.constant 0 : index
    %c0_82 = arith.constant 0 : index
    %54 = vector.load %arg4[%c0_81, %c0_82] : memref<288x64xbf16, #tpu.memory_space<vmem>>, vector<288x64xbf16>
    %cst_83 = arith.constant dense<0.000000e+00> : vector<256x64xf32>
    %55 = tpu.matmul %53, %54, %cst_83 {dimension_numbers = #tpu.dot_dimension_numbers<[1], [0], [0], [1], [0, 0, 1, 1], [], []>} : vector<256x288xbf16>, vector<288x64xbf16>, vector<256x64xf32> -> vector<256x64xf32>
    %c0_84 = arith.constant 0 : index
    %c0_85 = arith.constant 0 : index
    %56 = vector.load %arg5[%c0_84, %c0_85] : memref<1x64xf32, #tpu.memory_space<vmem>>, vector<1x64xf32>
    %57 = vector.broadcast %56 : vector<1x64xf32> to vector<256x64xf32>
    %58 = arith.addf %55, %57 : vector<256x64xf32>
    %cst_86 = arith.constant 0.000000e+00 : f32
    %59 = vector.broadcast %cst_86 : f32 to vector<256x64xf32>
    %60 = arith.cmpf oge, %58, %59 : vector<256x64xf32>
    %cst_87 = arith.constant 0.00999999977 : f32
    %61 = vector.broadcast %cst_87 : f32 to vector<256x64xf32>
    %62 = arith.mulf %61, %58 : vector<256x64xf32>
    %63 = arith.select %60, %58, %62 : vector<256x64xi1>, vector<256x64xf32>
    %64 = vector.shape_cast %63 : vector<256x64xf32> to vector<16x16x64xf32>
    %c0_88 = arith.constant 0 : index
    %c0_89 = arith.constant 0 : index
    %c0_90 = arith.constant 0 : index
    %65 = vector.load %arg20[%c0_88, %c0_89, %c0_90] : memref<16x16x64xf32, #tpu.memory_space<vmem>>, vector<16x16x64xf32>
    tpu.vector_store %arg20[%c0_88, %c0_89, %c0_90], %64 {strides = array<i32>} : memref<16x16x64xf32, #tpu.memory_space<vmem>>, vector<16x16x64xf32>,
    %c0_91 = arith.constant 0 : index
    %c0_92 = arith.constant 0 : index
    %c0_93 = arith.constant 0 : index
    %66 = tpu.strided_load %arg20[%c0_91, %c0_92, %c0_93] {strides = array<i32: 1, 2, 1>} : memref<16x16x64xf32, #tpu.memory_space<vmem>>, vector<16x8x64xf32>
    %c0_94 = arith.constant 0 : index
    %c1_95 = arith.constant 1 : index
    %c0_96 = arith.constant 0 : index
    %67 = tpu.strided_load %arg20[%c0_94, %c1_95, %c0_96] {strides = array<i32: 1, 2, 1>} : memref<16x16x64xf32, #tpu.memory_space<vmem>>, vector<16x8x64xf32>
    %68 = arith.addf %66, %67 : vector<16x8x64xf32>
    %c0_97 = arith.constant 0 : index
    %c0_98 = arith.constant 0 : index
    %c0_99 = arith.constant 0 : index
    %69 = vector.load %arg21[%c0_97, %c0_98, %c0_99] : memref<16x8x64xf32, #tpu.memory_space<vmem>>, vector<16x8x64xf32>
    tpu.vector_store %arg21[%c0_97, %c0_98, %c0_99], %68 {strides = array<i32>} : memref<16x8x64xf32, #tpu.memory_space<vmem>>, vector<16x8x64xf32>,
    %c0_100 = arith.constant 0 : index
    %c0_101 = arith.constant 0 : index
    %c0_102 = arith.constant 0 : index
    %70 = tpu.strided_load %arg21[%c0_100, %c0_101, %c0_102] {strides = array<i32: 2, 1, 1>} : memref<16x8x64xf32, #tpu.memory_space<vmem>>, vector<8x8x64xf32>
    %c1_103 = arith.constant 1 : index
    %c0_104 = arith.constant 0 : index
    %c0_105 = arith.constant 0 : index
    %71 = tpu.strided_load %arg21[%c1_103, %c0_104, %c0_105] {strides = array<i32: 2, 1, 1>} : memref<16x8x64xf32, #tpu.memory_space<vmem>>, vector<8x8x64xf32>
    %72 = arith.addf %70, %71 : vector<8x8x64xf32>
    %73 = vector.shape_cast %72 : vector<8x8x64xf32> to vector<1x8x8x64xf32>
    %cst_106 = arith.constant 0.000000e+00 : f32
    %74 = vector.broadcast %cst_106 : f32 to vector<1x10x10x64xf32>
    %c0_107 = arith.constant 0 : index
    %c0_108 = arith.constant 0 : index
    %c0_109 = arith.constant 0 : index
    %c0_110 = arith.constant 0 : index
    %75 = vector.load %arg14[%c0_107, %c0_108, %c0_109, %c0_110] : memref<1x10x10x64xf32, #tpu.memory_space<vmem>>, vector<1x10x10x64xf32>
    tpu.vector_store %arg14[%c0_107, %c0_108, %c0_109, %c0_110], %74 {strides = array<i32>} : memref<1x10x10x64xf32, #tpu.memory_space<vmem>>, vector<1x10x10x64xf32>,
    %c0_111 = arith.constant 0 : index
    %c1_112 = arith.constant 1 : index
    %c1_113 = arith.constant 1 : index
    %c0_114 = arith.constant 0 : index
    %76 = vector.load %arg14[%c0_111, %c1_112, %c1_113, %c0_114] : memref<1x10x10x64xf32, #tpu.memory_space<vmem>>, vector<1x8x8x64xf32>
    tpu.vector_store %arg14[%c0_111, %c1_112, %c1_113, %c0_114], %73 {strides = array<i32>} : memref<1x10x10x64xf32, #tpu.memory_space<vmem>>, vector<1x8x8x64xf32>,
    %c0_115 = arith.constant 0 : index
    %c0_116 = arith.constant 0 : index
    %c0_117 = arith.constant 0 : index
    %c0_118 = arith.constant 0 : index
    %77 = vector.load %arg14[%c0_115, %c0_116, %c0_117, %c0_118] : memref<1x10x10x64xf32, #tpu.memory_space<vmem>>, vector<1x8x8x64xf32>
    %78 = vector.shape_cast %77 : vector<1x8x8x64xf32> to vector<64x64xf32>
    %c0_119 = arith.constant 0 : index
    %c0_120 = arith.constant 0 : index
    %79 = vector.load %arg16[%c0_119, %c0_120] : memref<64x576xf32, #tpu.memory_space<vmem>>, vector<64x64xf32>
    tpu.vector_store %arg16[%c0_119, %c0_120], %78 {strides = array<i32>} : memref<64x576xf32, #tpu.memory_space<vmem>>, vector<64x64xf32>,
    %c0_121 = arith.constant 0 : index
    %c0_122 = arith.constant 0 : index
    %c1_123 = arith.constant 1 : index
    %c0_124 = arith.constant 0 : index
    %80 = vector.load %arg14[%c0_121, %c0_122, %c1_123, %c0_124] : memref<1x10x10x64xf32, #tpu.memory_space<vmem>>, vector<1x8x8x64xf32>
    %81 = vector.shape_cast %80 : vector<1x8x8x64xf32> to vector<64x64xf32>
    %c0_125 = arith.constant 0 : index
    %c64_126 = arith.constant 64 : index
    %82 = vector.load %arg16[%c0_125, %c64_126] : memref<64x576xf32, #tpu.memory_space<vmem>>, vector<64x64xf32>
    tpu.vector_store %arg16[%c0_125, %c64_126], %81 {strides = array<i32>} : memref<64x576xf32, #tpu.memory_space<vmem>>, vector<64x64xf32>,
    %c0_127 = arith.constant 0 : index
    %c0_128 = arith.constant 0 : index
    %c2_129 = arith.constant 2 : index
    %c0_130 = arith.constant 0 : index
    %83 = vector.load %arg14[%c0_127, %c0_128, %c2_129, %c0_130] : memref<1x10x10x64xf32, #tpu.memory_space<vmem>>, vector<1x8x8x64xf32>
    %84 = vector.shape_cast %83 : vector<1x8x8x64xf32> to vector<64x64xf32>
    %c0_131 = arith.constant 0 : index
    %c128_132 = arith.constant 128 : index
    %85 = vector.load %arg16[%c0_131, %c128_132] : memref<64x576xf32, #tpu.memory_space<vmem>>, vector<64x64xf32>
    tpu.vector_store %arg16[%c0_131, %c128_132], %84 {strides = array<i32>} : memref<64x576xf32, #tpu.memory_space<vmem>>, vector<64x64xf32>,
    %c0_133 = arith.constant 0 : index
    %c1_134 = arith.constant 1 : index
    %c0_135 = arith.constant 0 : index
    %c0_136 = arith.constant 0 : index
    %86 = vector.load %arg14[%c0_133, %c1_134, %c0_135, %c0_136] : memref<1x10x10x64xf32, #tpu.memory_space<vmem>>, vector<1x8x8x64xf32>
    %87 = vector.shape_cast %86 : vector<1x8x8x64xf32> to vector<64x64xf32>
    %c0_137 = arith.constant 0 : index
    %c192_138 = arith.constant 192 : index
    %88 = vector.load %arg16[%c0_137, %c192_138] : memref<64x576xf32, #tpu.memory_space<vmem>>, vector<64x64xf32>
    tpu.vector_store %arg16[%c0_137, %c192_138], %87 {strides = array<i32>} : memref<64x576xf32, #tpu.memory_space<vmem>>, vector<64x64xf32>,
    %c0_139 = arith.constant 0 : index
    %c1_140 = arith.constant 1 : index
    %c1_141 = arith.constant 1 : index
    %c0_142 = arith.constant 0 : index
    %89 = vector.load %arg14[%c0_139, %c1_140, %c1_141, %c0_142] : memref<1x10x10x64xf32, #tpu.memory_space<vmem>>, vector<1x8x8x64xf32>
    %90 = vector.shape_cast %89 : vector<1x8x8x64xf32> to vector<64x64xf32>
    %c0_143 = arith.constant 0 : index
    %c256_144 = arith.constant 256 : index
    %91 = vector.load %arg16[%c0_143, %c256_144] : memref<64x576xf32, #tpu.memory_space<vmem>>, vector<64x64xf32>
    tpu.vector_store %arg16[%c0_143, %c256_144], %90 {strides = array<i32>} : memref<64x576xf32, #tpu.memory_space<vmem>>, vector<64x64xf32>,
    %c0_145 = arith.constant 0 : index
    %c1_146 = arith.constant 1 : index
    %c2_147 = arith.constant 2 : index
    %c0_148 = arith.constant 0 : index
    %92 = vector.load %arg14[%c0_145, %c1_146, %c2_147, %c0_148] : memref<1x10x10x64xf32, #tpu.memory_space<vmem>>, vector<1x8x8x64xf32>
    %93 = vector.shape_cast %92 : vector<1x8x8x64xf32> to vector<64x64xf32>
    %c0_149 = arith.constant 0 : index
    %c320 = arith.constant 320 : index
    %94 = vector.load %arg16[%c0_149, %c320] : memref<64x576xf32, #tpu.memory_space<vmem>>, vector<64x64xf32>
    tpu.vector_store %arg16[%c0_149, %c320], %93 {strides = array<i32>} : memref<64x576xf32, #tpu.memory_space<vmem>>, vector<64x64xf32>,
    %c0_150 = arith.constant 0 : index
    %c2_151 = arith.constant 2 : index
    %c0_152 = arith.constant 0 : index
    %c0_153 = arith.constant 0 : index
    %95 = vector.load %arg14[%c0_150, %c2_151, %c0_152, %c0_153] : memref<1x10x10x64xf32, #tpu.memory_space<vmem>>, vector<1x8x8x64xf32>
    %96 = vector.shape_cast %95 : vector<1x8x8x64xf32> to vector<64x64xf32>
    %c0_154 = arith.constant 0 : index
    %c384 = arith.constant 384 : index
    %97 = vector.load %arg16[%c0_154, %c384] : memref<64x576xf32, #tpu.memory_space<vmem>>, vector<64x64xf32>
    tpu.vector_store %arg16[%c0_154, %c384], %96 {strides = array<i32>} : memref<64x576xf32, #tpu.memory_space<vmem>>, vector<64x64xf32>,
    %c0_155 = arith.constant 0 : index
    %c2_156 = arith.constant 2 : index
    %c1_157 = arith.constant 1 : index
    %c0_158 = arith.constant 0 : index
    %98 = vector.load %arg14[%c0_155, %c2_156, %c1_157, %c0_158] : memref<1x10x10x64xf32, #tpu.memory_space<vmem>>, vector<1x8x8x64xf32>
    %99 = vector.shape_cast %98 : vector<1x8x8x64xf32> to vector<64x64xf32>
    %c0_159 = arith.constant 0 : index
    %c448 = arith.constant 448 : index
    %100 = vector.load %arg16[%c0_159, %c448] : memref<64x576xf32, #tpu.memory_space<vmem>>, vector<64x64xf32>
    tpu.vector_store %arg16[%c0_159, %c448], %99 {strides = array<i32>} : memref<64x576xf32, #tpu.memory_space<vmem>>, vector<64x64xf32>,
    %c0_160 = arith.constant 0 : index
    %c2_161 = arith.constant 2 : index
    %c2_162 = arith.constant 2 : index
    %c0_163 = arith.constant 0 : index
    %101 = vector.load %arg14[%c0_160, %c2_161, %c2_162, %c0_163] : memref<1x10x10x64xf32, #tpu.memory_space<vmem>>, vector<1x8x8x64xf32>
    %102 = vector.shape_cast %101 : vector<1x8x8x64xf32> to vector<64x64xf32>
    %c0_164 = arith.constant 0 : index
    %c512 = arith.constant 512 : index
    %103 = vector.load %arg16[%c0_164, %c512] : memref<64x576xf32, #tpu.memory_space<vmem>>, vector<64x64xf32>
    tpu.vector_store %arg16[%c0_164, %c512], %102 {strides = array<i32>} : memref<64x576xf32, #tpu.memory_space<vmem>>, vector<64x64xf32>,
    %c0_165 = arith.constant 0 : index
    %c0_166 = arith.constant 0 : index
    %104 = vector.load %arg16[%c0_165, %c0_166] : memref<64x576xf32, #tpu.memory_space<vmem>>, vector<64x576xf32>
    %105 = arith.truncf %104 : vector<64x576xf32> to vector<64x576xbf16>
    %c0_167 = arith.constant 0 : index
    %c0_168 = arith.constant 0 : index
    %106 = vector.load %arg6[%c0_167, %c0_168] : memref<576x128xbf16, #tpu.memory_space<vmem>>, vector<576x128xbf16>
    %cst_169 = arith.constant dense<0.000000e+00> : vector<64x128xf32>
    %107 = tpu.matmul %105, %106, %cst_169 {dimension_numbers = #tpu.dot_dimension_numbers<[1], [0], [0], [1], [0, 0, 1, 1], [], []>} : vector<64x576xbf16>, vector<576x128xbf16>, vector<64x128xf32> -> vector<64x128xf32>
    %c0_170 = arith.constant 0 : index
    %c0_171 = arith.constant 0 : index
    %108 = vector.load %arg7[%c0_170, %c0_171] : memref<1x128xf32, #tpu.memory_space<vmem>>, vector<1x128xf32>
    %109 = vector.broadcast %108 : vector<1x128xf32> to vector<64x128xf32>
    %110 = arith.addf %107, %109 : vector<64x128xf32>
    %cst_172 = arith.constant 0.000000e+00 : f32
    %111 = vector.broadcast %cst_172 : f32 to vector<64x128xf32>
    %112 = arith.cmpf oge, %110, %111 : vector<64x128xf32>
    %cst_173 = arith.constant 0.00999999977 : f32
    %113 = vector.broadcast %cst_173 : f32 to vector<64x128xf32>
    %114 = arith.mulf %113, %110 : vector<64x128xf32>
    %115 = arith.select %112, %110, %114 : vector<64x128xi1>, vector<64x128xf32>
    %116 = vector.shape_cast %115 : vector<64x128xf32> to vector<8x8x128xf32>
    %c0_174 = arith.constant 0 : index
    %c0_175 = arith.constant 0 : index
    %c0_176 = arith.constant 0 : index
    %117 = vector.load %arg22[%c0_174, %c0_175, %c0_176] : memref<8x8x128xf32, #tpu.memory_space<vmem>>, vector<8x8x128xf32>
    tpu.vector_store %arg22[%c0_174, %c0_175, %c0_176], %116 {strides = array<i32>} : memref<8x8x128xf32, #tpu.memory_space<vmem>>, vector<8x8x128xf32>,
    %c0_177 = arith.constant 0 : index
    %c0_178 = arith.constant 0 : index
    %c0_179 = arith.constant 0 : index
    %118 = tpu.strided_load %arg22[%c0_177, %c0_178, %c0_179] {strides = array<i32: 1, 2, 1>} : memref<8x8x128xf32, #tpu.memory_space<vmem>>, vector<8x4x128xf32>
    %c0_180 = arith.constant 0 : index
    %c1_181 = arith.constant 1 : index
    %c0_182 = arith.constant 0 : index
    %119 = tpu.strided_load %arg22[%c0_180, %c1_181, %c0_182] {strides = array<i32: 1, 2, 1>} : memref<8x8x128xf32, #tpu.memory_space<vmem>>, vector<8x4x128xf32>
    %120 = arith.addf %118, %119 : vector<8x4x128xf32>
    %c0_183 = arith.constant 0 : index
    %c0_184 = arith.constant 0 : index
    %c0_185 = arith.constant 0 : index
    %121 = vector.load %arg23[%c0_183, %c0_184, %c0_185] : memref<8x4x128xf32, #tpu.memory_space<vmem>>, vector<8x4x128xf32>
    tpu.vector_store %arg23[%c0_183, %c0_184, %c0_185], %120 {strides = array<i32>} : memref<8x4x128xf32, #tpu.memory_space<vmem>>, vector<8x4x128xf32>,
    %c0_186 = arith.constant 0 : index
    %c0_187 = arith.constant 0 : index
    %c0_188 = arith.constant 0 : index
    %122 = tpu.strided_load %arg23[%c0_186, %c0_187, %c0_188] {strides = array<i32: 2, 1, 1>} : memref<8x4x128xf32, #tpu.memory_space<vmem>>, vector<4x4x128xf32>
    %c1_189 = arith.constant 1 : index
    %c0_190 = arith.constant 0 : index
    %c0_191 = arith.constant 0 : index
    %123 = tpu.strided_load %arg23[%c1_189, %c0_190, %c0_191] {strides = array<i32: 2, 1, 1>} : memref<8x4x128xf32, #tpu.memory_space<vmem>>, vector<4x4x128xf32>
    %124 = arith.addf %122, %123 : vector<4x4x128xf32>
    %125 = vector.shape_cast %124 : vector<4x4x128xf32> to vector<1x4x4x128xf32>
    %126 = vector.extract_strided_slice %125 {offsets = [0, 0, 0, 0], sizes = [1, 1, 1, 128], strides = [1, 1, 1, 1]} : vector<1x4x4x128xf32> to vector<1x1x1x128xf32>
    %127 = vector.shape_cast %126 : vector<1x1x1x128xf32> to vector<1x128xf32>
    %c0_192 = arith.constant 0 : index
    %c0_193 = arith.constant 0 : index
    %128 = vector.load %arg17[%c0_192, %c0_193] : memref<1x2048xf32, #tpu.memory_space<vmem>>, vector<1x128xf32>
    tpu.vector_store %arg17[%c0_192, %c0_193], %127 {strides = array<i32>} : memref<1x2048xf32, #tpu.memory_space<vmem>>, vector<1x128xf32>,
    %129 = vector.extract_strided_slice %125 {offsets = [0, 0, 1, 0], sizes = [1, 1, 1, 128], strides = [1, 1, 1, 1]} : vector<1x4x4x128xf32> to vector<1x1x1x128xf32>
    %130 = vector.shape_cast %129 : vector<1x1x1x128xf32> to vector<1x128xf32>
    %c0_194 = arith.constant 0 : index
    %c128_195 = arith.constant 128 : index
    %131 = vector.load %arg17[%c0_194, %c128_195] : memref<1x2048xf32, #tpu.memory_space<vmem>>, vector<1x128xf32>
    tpu.vector_store %arg17[%c0_194, %c128_195], %130 {strides = array<i32>} : memref<1x2048xf32, #tpu.memory_space<vmem>>, vector<1x128xf32>,
    %132 = vector.extract_strided_slice %125 {offsets = [0, 0, 2, 0], sizes = [1, 1, 1, 128], strides = [1, 1, 1, 1]} : vector<1x4x4x128xf32> to vector<1x1x1x128xf32>
    %133 = vector.shape_cast %132 : vector<1x1x1x128xf32> to vector<1x128xf32>
    %c0_196 = arith.constant 0 : index
    %c256_197 = arith.constant 256 : index
    %134 = vector.load %arg17[%c0_196, %c256_197] : memref<1x2048xf32, #tpu.memory_space<vmem>>, vector<1x128xf32>
    tpu.vector_store %arg17[%c0_196, %c256_197], %133 {strides = array<i32>} : memref<1x2048xf32, #tpu.memory_space<vmem>>, vector<1x128xf32>,
    %135 = vector.extract_strided_slice %125 {offsets = [0, 0, 3, 0], sizes = [1, 1, 1, 128], strides = [1, 1, 1, 1]} : vector<1x4x4x128xf32> to vector<1x1x1x128xf32>
    %136 = vector.shape_cast %135 : vector<1x1x1x128xf32> to vector<1x128xf32>
    %c0_198 = arith.constant 0 : index
    %c384_199 = arith.constant 384 : index
    %137 = vector.load %arg17[%c0_198, %c384_199] : memref<1x2048xf32, #tpu.memory_space<vmem>>, vector<1x128xf32>
    tpu.vector_store %arg17[%c0_198, %c384_199], %136 {strides = array<i32>} : memref<1x2048xf32, #tpu.memory_space<vmem>>, vector<1x128xf32>,
    %138 = vector.extract_strided_slice %125 {offsets = [0, 1, 0, 0], sizes = [1, 1, 1, 128], strides = [1, 1, 1, 1]} : vector<1x4x4x128xf32> to vector<1x1x1x128xf32>
    %139 = vector.shape_cast %138 : vector<1x1x1x128xf32> to vector<1x128xf32>
    %c0_200 = arith.constant 0 : index
    %c512_201 = arith.constant 512 : index
    %140 = vector.load %arg17[%c0_200, %c512_201] : memref<1x2048xf32, #tpu.memory_space<vmem>>, vector<1x128xf32>
    tpu.vector_store %arg17[%c0_200, %c512_201], %139 {strides = array<i32>} : memref<1x2048xf32, #tpu.memory_space<vmem>>, vector<1x128xf32>,
    %141 = vector.extract_strided_slice %125 {offsets = [0, 1, 1, 0], sizes = [1, 1, 1, 128], strides = [1, 1, 1, 1]} : vector<1x4x4x128xf32> to vector<1x1x1x128xf32>
    %142 = vector.shape_cast %141 : vector<1x1x1x128xf32> to vector<1x128xf32>
    %c0_202 = arith.constant 0 : index
    %c640 = arith.constant 640 : index
    %143 = vector.load %arg17[%c0_202, %c640] : memref<1x2048xf32, #tpu.memory_space<vmem>>, vector<1x128xf32>
    tpu.vector_store %arg17[%c0_202, %c640], %142 {strides = array<i32>} : memref<1x2048xf32, #tpu.memory_space<vmem>>, vector<1x128xf32>,
    %144 = vector.extract_strided_slice %125 {offsets = [0, 1, 2, 0], sizes = [1, 1, 1, 128], strides = [1, 1, 1, 1]} : vector<1x4x4x128xf32> to vector<1x1x1x128xf32>
    %145 = vector.shape_cast %144 : vector<1x1x1x128xf32> to vector<1x128xf32>
    %c0_203 = arith.constant 0 : index
    %c768 = arith.constant 768 : index
    %146 = vector.load %arg17[%c0_203, %c768] : memref<1x2048xf32, #tpu.memory_space<vmem>>, vector<1x128xf32>
    tpu.vector_store %arg17[%c0_203, %c768], %145 {strides = array<i32>} : memref<1x2048xf32, #tpu.memory_space<vmem>>, vector<1x128xf32>,
    %147 = vector.extract_strided_slice %125 {offsets = [0, 1, 3, 0], sizes = [1, 1, 1, 128], strides = [1, 1, 1, 1]} : vector<1x4x4x128xf32> to vector<1x1x1x128xf32>
    %148 = vector.shape_cast %147 : vector<1x1x1x128xf32> to vector<1x128xf32>
    %c0_204 = arith.constant 0 : index
    %c896 = arith.constant 896 : index
    %149 = vector.load %arg17[%c0_204, %c896] : memref<1x2048xf32, #tpu.memory_space<vmem>>, vector<1x128xf32>
    tpu.vector_store %arg17[%c0_204, %c896], %148 {strides = array<i32>} : memref<1x2048xf32, #tpu.memory_space<vmem>>, vector<1x128xf32>,
    %150 = vector.extract_strided_slice %125 {offsets = [0, 2, 0, 0], sizes = [1, 1, 1, 128], strides = [1, 1, 1, 1]} : vector<1x4x4x128xf32> to vector<1x1x1x128xf32>
    %151 = vector.shape_cast %150 : vector<1x1x1x128xf32> to vector<1x128xf32>
    %c0_205 = arith.constant 0 : index
    %c1024 = arith.constant 1024 : index
    %152 = vector.load %arg17[%c0_205, %c1024] : memref<1x2048xf32, #tpu.memory_space<vmem>>, vector<1x128xf32>
    tpu.vector_store %arg17[%c0_205, %c1024], %151 {strides = array<i32>} : memref<1x2048xf32, #tpu.memory_space<vmem>>, vector<1x128xf32>,
    %153 = vector.extract_strided_slice %125 {offsets = [0, 2, 1, 0], sizes = [1, 1, 1, 128], strides = [1, 1, 1, 1]} : vector<1x4x4x128xf32> to vector<1x1x1x128xf32>
    %154 = vector.shape_cast %153 : vector<1x1x1x128xf32> to vector<1x128xf32>
    %c0_206 = arith.constant 0 : index
    %c1152 = arith.constant 1152 : index
    %155 = vector.load %arg17[%c0_206, %c1152] : memref<1x2048xf32, #tpu.memory_space<vmem>>, vector<1x128xf32>
    tpu.vector_store %arg17[%c0_206, %c1152], %154 {strides = array<i32>} : memref<1x2048xf32, #tpu.memory_space<vmem>>, vector<1x128xf32>,
    %156 = vector.extract_strided_slice %125 {offsets = [0, 2, 2, 0], sizes = [1, 1, 1, 128], strides = [1, 1, 1, 1]} : vector<1x4x4x128xf32> to vector<1x1x1x128xf32>
    %157 = vector.shape_cast %156 : vector<1x1x1x128xf32> to vector<1x128xf32>
    %c0_207 = arith.constant 0 : index
    %c1280 = arith.constant 1280 : index
    %158 = vector.load %arg17[%c0_207, %c1280] : memref<1x2048xf32, #tpu.memory_space<vmem>>, vector<1x128xf32>
    tpu.vector_store %arg17[%c0_207, %c1280], %157 {strides = array<i32>} : memref<1x2048xf32, #tpu.memory_space<vmem>>, vector<1x128xf32>,
    %159 = vector.extract_strided_slice %125 {offsets = [0, 2, 3, 0], sizes = [1, 1, 1, 128], strides = [1, 1, 1, 1]} : vector<1x4x4x128xf32> to vector<1x1x1x128xf32>
    %160 = vector.shape_cast %159 : vector<1x1x1x128xf32> to vector<1x128xf32>
    %c0_208 = arith.constant 0 : index
    %c1408 = arith.constant 1408 : index
    %161 = vector.load %arg17[%c0_208, %c1408] : memref<1x2048xf32, #tpu.memory_space<vmem>>, vector<1x128xf32>
    tpu.vector_store %arg17[%c0_208, %c1408], %160 {strides = array<i32>} : memref<1x2048xf32, #tpu.memory_space<vmem>>, vector<1x128xf32>,
    %162 = vector.extract_strided_slice %125 {offsets = [0, 3, 0, 0], sizes = [1, 1, 1, 128], strides = [1, 1, 1, 1]} : vector<1x4x4x128xf32> to vector<1x1x1x128xf32>
    %163 = vector.shape_cast %162 : vector<1x1x1x128xf32> to vector<1x128xf32>
    %c0_209 = arith.constant 0 : index
    %c1536 = arith.constant 1536 : index
    %164 = vector.load %arg17[%c0_209, %c1536] : memref<1x2048xf32, #tpu.memory_space<vmem>>, vector<1x128xf32>
    tpu.vector_store %arg17[%c0_209, %c1536], %163 {strides = array<i32>} : memref<1x2048xf32, #tpu.memory_space<vmem>>, vector<1x128xf32>,
    %165 = vector.extract_strided_slice %125 {offsets = [0, 3, 1, 0], sizes = [1, 1, 1, 128], strides = [1, 1, 1, 1]} : vector<1x4x4x128xf32> to vector<1x1x1x128xf32>
    %166 = vector.shape_cast %165 : vector<1x1x1x128xf32> to vector<1x128xf32>
    %c0_210 = arith.constant 0 : index
    %c1664 = arith.constant 1664 : index
    %167 = vector.load %arg17[%c0_210, %c1664] : memref<1x2048xf32, #tpu.memory_space<vmem>>, vector<1x128xf32>
    tpu.vector_store %arg17[%c0_210, %c1664], %166 {strides = array<i32>} : memref<1x2048xf32, #tpu.memory_space<vmem>>, vector<1x128xf32>,
    %168 = vector.extract_strided_slice %125 {offsets = [0, 3, 2, 0], sizes = [1, 1, 1, 128], strides = [1, 1, 1, 1]} : vector<1x4x4x128xf32> to vector<1x1x1x128xf32>
    %169 = vector.shape_cast %168 : vector<1x1x1x128xf32> to vector<1x128xf32>
    %c0_211 = arith.constant 0 : index
    %c1792 = arith.constant 1792 : index
    %170 = vector.load %arg17[%c0_211, %c1792] : memref<1x2048xf32, #tpu.memory_space<vmem>>, vector<1x128xf32>
    tpu.vector_store %arg17[%c0_211, %c1792], %169 {strides = array<i32>} : memref<1x2048xf32, #tpu.memory_space<vmem>>, vector<1x128xf32>,
    %171 = vector.extract_strided_slice %125 {offsets = [0, 3, 3, 0], sizes = [1, 1, 1, 128], strides = [1, 1, 1, 1]} : vector<1x4x4x128xf32> to vector<1x1x1x128xf32>
    %172 = vector.shape_cast %171 : vector<1x1x1x128xf32> to vector<1x128xf32>
    %c0_212 = arith.constant 0 : index
    %c1920 = arith.constant 1920 : index
    %173 = vector.load %arg17[%c0_212, %c1920] : memref<1x2048xf32, #tpu.memory_space<vmem>>, vector<1x128xf32>
    tpu.vector_store %arg17[%c0_212, %c1920], %172 {strides = array<i32>} : memref<1x2048xf32, #tpu.memory_space<vmem>>, vector<1x128xf32>,
    %c0_213 = arith.constant 0 : index
    %c0_214 = arith.constant 0 : index
    %174 = vector.load %arg17[%c0_213, %c0_214] : memref<1x2048xf32, #tpu.memory_space<vmem>>, vector<1x2048xf32>
    %175 = arith.truncf %174 : vector<1x2048xf32> to vector<1x2048xbf16>
    %c0_215 = arith.constant 0 : index
    %c0_216 = arith.constant 0 : index
    %176 = vector.load %arg8[%c0_215, %c0_216] : memref<2048x256xbf16, #tpu.memory_space<vmem>>, vector<2048x256xbf16>
    %cst_217 = arith.constant dense<0.000000e+00> : vector<1x256xf32>
    %177 = tpu.matmul %175, %176, %cst_217 {dimension_numbers = #tpu.dot_dimension_numbers<[1], [0], [0], [1], [0, 0, 1, 1], [], []>} : vector<1x2048xbf16>, vector<2048x256xbf16>, vector<1x256xf32> -> vector<1x256xf32>
    %c0_218 = arith.constant 0 : index
    %c0_219 = arith.constant 0 : index
    %178 = vector.load %arg9[%c0_218, %c0_219] : memref<1x256xf32, #tpu.memory_space<vmem>>, vector<1x256xf32>
    %179 = arith.addf %177, %178 : vector<1x256xf32>
    %cst_220 = arith.constant 0.000000e+00 : f32
    %180 = vector.broadcast %cst_220 : f32 to vector<1x256xf32>
    %181 = arith.cmpf oge, %179, %180 : vector<1x256xf32>
    %cst_221 = arith.constant 0.00999999977 : f32
    %182 = vector.broadcast %cst_221 : f32 to vector<1x256xf32>
    %183 = arith.mulf %182, %179 : vector<1x256xf32>
    %184 = arith.select %181, %179, %183 : vector<1x256xi1>, vector<1x256xf32>
    %185 = arith.truncf %184 : vector<1x256xf32> to vector<1x256xbf16>
    %c0_222 = arith.constant 0 : index
    %c0_223 = arith.constant 0 : index
    %186 = vector.load %arg10[%c0_222, %c0_223] : memref<256x128xbf16, #tpu.memory_space<vmem>>, vector<256x128xbf16>
    %cst_224 = arith.constant dense<0.000000e+00> : vector<1x128xf32>
    %187 = tpu.matmul %185, %186, %cst_224 {dimension_numbers = #tpu.dot_dimension_numbers<[1], [0], [0], [1], [0, 0, 1, 1], [], []>} : vector<1x256xbf16>, vector<256x128xbf16>, vector<1x128xf32> -> vector<1x128xf32>
    %c0_225 = arith.constant 0 : index
    %c0_226 = arith.constant 0 : index
    %188 = vector.load %arg11[%c0_225, %c0_226] : memref<1x128xf32, #tpu.memory_space<vmem>>, vector<1x128xf32>
    %189 = arith.addf %187, %188 : vector<1x128xf32>
    %c0_227 = arith.constant 0 : index
    %c0_228 = arith.constant 0 : index
    %c0_229 = arith.constant 0 : index
    %190 = vector.load %arg12[%c0_227, %c0_228, %c0_229] : memref<1x1x128xf32, #tpu.memory_space<vmem>>, vector<1x1x128xf32>
    %191 = vector.shape_cast %190 : vector<1x1x128xf32> to vector<1x128xf32>
    %192 = vector.shape_cast %189 : vector<1x128xf32> to vector<1x1x128xf32>
    tpu.vector_store %arg12[%c0_227, %c0_228, %c0_229], %192 {strides = array<i32>} : memref<1x1x128xf32, #tpu.memory_space<vmem>>, vector<1x1x128xf32>,
    return
  }
  func.func @transform_0(%arg0: i32) -> (i32, i32, i32) {
    %c0_i32 = arith.constant 0 : i32
    %c0_i32_0 = arith.constant 0 : i32
    %c0_i32_1 = arith.constant 0 : i32
    return %arg0, %c0_i32, %c0_i32_0 : i32, i32, i32
  }
  func.func @transform_1(%arg0: i32) -> (i32, i32) {
    %c0_i32 = arith.constant 0 : i32
    %c0_i32_0 = arith.constant 0 : i32
    %c0_i32_1 = arith.constant 0 : i32
    return %c0_i32, %c0_i32_0 : i32, i32
  }
  func.func @transform_2(%arg0: i32) -> (i32, i32) {
    %c0_i32 = arith.constant 0 : i32
    %c0_i32_0 = arith.constant 0 : i32
    %c0_i32_1 = arith.constant 0 : i32
    return %c0_i32, %c0_i32_0 : i32, i32
  }
  func.func @transform_3(%arg0: i32) -> (i32, i32) {
    %c0_i32 = arith.constant 0 : i32
    %c0_i32_0 = arith.constant 0 : i32
    %c0_i32_1 = arith.constant 0 : i32
    return %c0_i32, %c0_i32_0 : i32, i32
  }
  func.func @transform_4(%arg0: i32) -> (i32, i32) {
    %c0_i32 = arith.constant 0 : i32
    %c0_i32_0 = arith.constant 0 : i32
    %c0_i32_1 = arith.constant 0 : i32
    return %c0_i32, %c0_i32_0 : i32, i32
  }
  func.func @transform_5(%arg0: i32) -> (i32, i32) {
    %c0_i32 = arith.constant 0 : i32
    %c0_i32_0 = arith.constant 0 : i32
    %c0_i32_1 = arith.constant 0 : i32
    return %c0_i32, %c0_i32_0 : i32, i32
  }
  func.func @transform_6(%arg0: i32) -> (i32, i32) {
    %c0_i32 = arith.constant 0 : i32
    %c0_i32_0 = arith.constant 0 : i32
    %c0_i32_1 = arith.constant 0 : i32
    return %c0_i32, %c0_i32_0 : i32, i32
  }
  func.func @transform_7(%arg0: i32) -> (i32, i32) {
    %c0_i32 = arith.constant 0 : i32
    %c0_i32_0 = arith.constant 0 : i32
    %c0_i32_1 = arith.constant 0 : i32
    return %c0_i32, %c0_i32_0 : i32, i32
  }
  func.func @transform_8(%arg0: i32) -> (i32, i32) {
    %c0_i32 = arith.constant 0 : i32
    %c0_i32_0 = arith.constant 0 : i32
    %c0_i32_1 = arith.constant 0 : i32
    return %c0_i32, %c0_i32_0 : i32, i32
  }
  func.func @transform_9(%arg0: i32) -> (i32, i32) {
    %c0_i32 = arith.constant 0 : i32
    %c0_i32_0 = arith.constant 0 : i32
    %c0_i32_1 = arith.constant 0 : i32
    return %c0_i32, %c0_i32_0 : i32, i32
  }
  func.func @transform_10(%arg0: i32) -> (i32, i32) {
    %c0_i32 = arith.constant 0 : i32
    %c0_i32_0 = arith.constant 0 : i32
    %c0_i32_1 = arith.constant 0 : i32
    return %c0_i32, %c0_i32_0 : i32, i32
  }
  func.func @transform_11(%arg0: i32) -> (i32, i32, i32) {
    %c0_i32 = arith.constant 0 : i32
    %c0_i32_0 = arith.constant 0 : i32
    %c0_i32_1 = arith.constant 0 : i32
    return %arg0, %c0_i32, %c0_i32_0 : i32, i32, i32
  }
}

</mosaic_0001>

<llo_original>
// kernel: forward.1
$region0: #{forward.1}
  #allocation0 [shape = 'u32[]', space=smem, size = 0x4, offset = 0x4, fixed_abs, tag = 'smem constant byte address 0x4 - core index']
  #allocation1 [shape = 'u32[72,128]{1,0:T(1,128)}', space=vmem, size = 0x9000, scoped, tag = 'internal scratch']
  #allocation2 [shape = 'f32[1,18,18,32]{3,2,1,0:T(8,128)}', space=vmem, size = 0x36000, scoped, tag = 'scratch operand']
  #allocation3 [shape = 'f32[1,10,10,64]{3,2,1,0:T(8,128)}', space=vmem, size = 0x14000, scoped, tag = 'scratch operand']
  #allocation4 [shape = 'f32[256,288]{1,0:T(8,128)}', space=vmem, size = 0x60000, scoped, tag = 'scratch operand']
  #allocation5 [shape = 'f32[64,576]{1,0:T(8,128)}', space=vmem, size = 0x28000, scoped, tag = 'scratch operand']
  #allocation6 [shape = 'f32[1,2048]{1,0:T(1,128)}', space=vmem, size = 0x2000, scoped, tag = 'scratch operand']
  #allocation7 [shape = 'f32[32,32,32]{2,1,0:T(8,128)}', space=vmem, size = 0x80000, scoped, tag = 'scratch operand']
  #allocation8 [shape = 'f32[32,16,32]{2,1,0:T(8,128)}', space=vmem, size = 0x40000, scoped, tag = 'scratch operand']
  #allocation9 [shape = 'f32[16,16,64]{2,1,0:T(8,128)}', space=vmem, size = 0x20000, scoped, tag = 'scratch operand']
  #allocation10 [shape = 'f32[16,8,64]{2,1,0:T(8,128)}', space=vmem, size = 0x10000, scoped, tag = 'scratch operand']
  #allocation11 [shape = 'f32[8,8,128]{2,1,0:T(8,128)}', space=vmem, size = 0x8000, scoped, tag = 'scratch operand']
  #allocation12 [shape = 'f32[8,4,128]{2,1,0:T(4,128)}', space=vmem, size = 0x4000, scoped, tag = 'scratch operand']
  %s0 = inlined_call_operand.vmem [shape: bf16[2,1024,32], index: 0, kind: input, shape index: {}]
  %s1 = inlined_call_operand.vmem [shape: bf16[32,32], index: 1, kind: input, shape index: {}]
  %s2 = inlined_call_operand.vmem [shape: f32[1,32], index: 2, kind: input, shape index: {}]
  %s3 = inlined_call_operand.vmem [shape: bf16[288,64], index: 3, kind: input, shape index: {}]
  %s4 = inlined_call_operand.vmem [shape: f32[1,64], index: 4, kind: input, shape index: {}]
  %s5 = inlined_call_operand.vmem [shape: bf16[576,128], index: 5, kind: input, shape index: {}]
  %s6 = inlined_call_operand.vmem [shape: f32[1,128], index: 6, kind: input, shape index: {}]
  %s7 = inlined_call_operand.vmem [shape: bf16[2048,256], index: 7, kind: input, shape index: {}]
  %s8 = inlined_call_operand.vmem [shape: f32[1,256], index: 8, kind: input, shape index: {}]
  %s9 = inlined_call_operand.vmem [shape: bf16[256,128], index: 9, kind: input, shape index: {}]
  %s10 = inlined_call_operand.vmem [shape: f32[1,128], index: 10, kind: input, shape index: {}]
  %s11 = inlined_call_operand.hbm [shape: f32[2,1,128], index: 11, kind: output, shape index: {}]
  %s12 = sld [smem:[#allocation0]]
  $region77: #{forward.1} parent=0
    _
  %s14 = ssub.s32 1, %s12
  %s15 = scalar_select 0, %s14, %s12
  $region1: #{forward.1} parent=0
    #allocation13 [shape = 'u8[1024]{0}', space=vmem, size = 0x400, scoped, tag = 'output window, operand 0']
    #allocation14 [shape = 's32[2]{0}', space=sflag, size = 0x8, scoped, tag = 'scoped memory for forward.1']
    %16 = vsyncpa [#allocation14], 0
    %s17 = scalar_lea.sflag [#allocation14], 1
    %18 = vsyncpa %s17, 0
    loop: start=0, step=1, limit=4
    $region2: #{forward.1} parent=1 // loop_pre_header
      _
    $region3: #{forward.1} parent=1 // loop_header
      %s20 = sphi 0, %s24
      %p21 = scmp.ge.s32.totalorder %s20, 4
      %s30 = sphi 0, %s32
      %s33 = sphi 0, %s30
      %s34 = sphi 0, %s33
      %s50 = sphi 0, %s34
      %s54 = sphi 0, %s54
      %s56 = sphi 0, %s54
      %s57 = sphi 0, %s56
      %s71 = sphi 0, %s57
      %s75 = sphi 0, %s75
      %s77 = sphi 0, %s75
      %s78 = sphi 0, %s77
      %s92 = sphi 0, %s78
      %s96 = sphi 0, %s96
      %s98 = sphi 0, %s96
      %s99 = sphi 0, %s98
      %s113 = sphi 0, %s99
      %s117 = sphi 0, %s117
      %s119 = sphi 0, %s117
      %s120 = sphi 0, %s119
      %s134 = sphi 0, %s120
      %s138 = sphi 0, %s138
      %s140 = sphi 0, %s138
      %s141 = sphi 0, %s140
      %s155 = sphi 0, %s141
      %s159 = sphi 0, %s159
      %s161 = sphi 0, %s159
      %s162 = sphi 0, %s161
      %s176 = sphi 0, %s162
      %s180 = sphi 0, %s180
      %s182 = sphi 0, %s180
      %s183 = sphi 0, %s182
      %s197 = sphi 0, %s183
      %s201 = sphi 0, %s201
      %s203 = sphi 0, %s201
      %s204 = sphi 0, %s203
      %s218 = sphi 0, %s204
      %s222 = sphi 0, %s222
      %s224 = sphi 0, %s222
      %s225 = sphi 0, %s224
      %s239 = sphi 0, %s225
      %s243 = sphi 0, %s243
      %s245 = sphi 0, %s243
      %s246 = sphi 0, %s245
      %s260 = sphi 0, %s246
      %s266 = sphi 0, %s268
      %s269 = sphi 0, %s266
      %s270 = sphi 0, %s269
      %s286 = sphi 0, %s270
    $region4: #{forward.1} parent=1 // loop_header_branch
      %23 = sbr.rel (%p21) target = $region8
    $region5: #{forward.1} parent=1 // loop_body
      %s25 = ssub.s32 %s20, 1
      %s26 = ssub.s32 %s20, 2
      %s27 = sadd.s32 %s20, 1
      %s28 = ssub.s32 %s20, %s27
      %p29 = scmp.eq.s32.totalorder %s28, 0
      %s31 = sadd.s32 %s30, 1
      %s32 = scalar_select %p29, %s30, %s31
      %p35 = pneg %p29
      %p36 = scmp.eq.s32.totalorder %s20, 1
      %p37 = por %p35, %p36
      %p38 = scmp.ne.s32.totalorder %s30, %s33
      %p39 = scmp.eq.s32.totalorder %s20, 0
      %p40 = por %p38, %p39
      %p41 = scmp.ne.s32.totalorder %s30, %s33
      %p42 = scmp.eq.s32.totalorder %s25, 1
      %p43 = por %p41, %p42
      %p44 = scmp.ne.s32.totalorder %s33, %s34
      %p45 = scmp.eq.s32.totalorder %s25, 0
      %p46 = por %p44, %p45
      %p47 = scmp.ne.s32.totalorder %s33, %s34
      %p48 = scmp.eq.s32.totalorder %s26, 1
      %p49 = por %p47, %p48
      %p51 = scmp.ne.s32.totalorder %s34, %s50
      %p52 = scmp.eq.s32.totalorder %s26, 0
      %p53 = por %p51, %p52
      %s55 = sadd.s32 %s54, 1
      %p58 = scmp.eq.s32.totalorder %s20, 1
      %p59 = scmp.ne.s32.totalorder %s54, %s56
      %p60 = scmp.eq.s32.totalorder %s20, 0
      %p61 = por %p59, %p60
      %p62 = scmp.ne.s32.totalorder %s54, %s56
      %p63 = scmp.eq.s32.totalorder %s25, 1
      %p64 = por %p62, %p63
      %p65 = scmp.ne.s32.totalorder %s56, %s57
      %p66 = scmp.eq.s32.totalorder %s25, 0
      %p67 = por %p65, %p66
      %p68 = scmp.ne.s32.totalorder %s56, %s57
      %p69 = scmp.eq.s32.totalorder %s26, 1
      %p70 = por %p68, %p69
      %p72 = scmp.ne.s32.totalorder %s57, %s71
      %p73 = scmp.eq.s32.totalorder %s26, 0
      %p74 = por %p72, %p73
      %s76 = sadd.s32 %s75, 1
      %p79 = scmp.eq.s32.totalorder %s20, 1
      %p80 = scmp.ne.s32.totalorder %s75, %s77
      %p81 = scmp.eq.s32.totalorder %s20, 0
      %p82 = por %p80, %p81
      %p83 = scmp.ne.s32.totalorder %s75, %s77
      %p84 = scmp.eq.s32.totalorder %s25, 1
      %p85 = por %p83, %p84
      %p86 = scmp.ne.s32.totalorder %s77, %s78
      %p87 = scmp.eq.s32.totalorder %s25, 0
      %p88 = por %p86, %p87
      %p89 = scmp.ne.s32.totalorder %s77, %s78
      %p90 = scmp.eq.s32.totalorder %s26, 1
      %p91 = por %p89, %p90
      %p93 = scmp.ne.s32.totalorder %s78, %s92
      %p94 = scmp.eq.s32.totalorder %s26, 0
      %p95 = por %p93, %p94
      %s97 = sadd.s32 %s96, 1
      %p100 = scmp.eq.s32.totalorder %s20, 1
      %p101 = scmp.ne.s32.totalorder %s96, %s98
      %p102 = scmp.eq.s32.totalorder %s20, 0
      %p103 = por %p101, %p102
      %p104 = scmp.ne.s32.totalorder %s96, %s98
      %p105 = scmp.eq.s32.totalorder %s25, 1
      %p106 = por %p104, %p105
      %p107 = scmp.ne.s32.totalorder %s98, %s99
      %p108 = scmp.eq.s32.totalorder %s25, 0
      %p109 = por %p107, %p108
      %p110 = scmp.ne.s32.totalorder %s98, %s99
      %p111 = scmp.eq.s32.totalorder %s26, 1
      %p112 = por %p110, %p111
      %p114 = scmp.ne.s32.totalorder %s99, %s113
      %p115 = scmp.eq.s32.totalorder %s26, 0
      %p116 = por %p114, %p115
      %s118 = sadd.s32 %s117, 1
      %p121 = scmp.eq.s32.totalorder %s20, 1
      %p122 = scmp.ne.s32.totalorder %s117, %s119
      %p123 = scmp.eq.s32.totalorder %s20, 0
      %p124 = por %p122, %p123
      %p125 = scmp.ne.s32.totalorder %s117, %s119
      %p126 = scmp.eq.s32.totalorder %s25, 1
      %p127 = por %p125, %p126
      %p128 = scmp.ne.s32.totalorder %s119, %s120
      %p129 = scmp.eq.s32.totalorder %s25, 0
      %p130 = por %p128, %p129
      %p131 = scmp.ne.s32.totalorder %s119, %s120
      %p132 = scmp.eq.s32.totalorder %s26, 1
      %p133 = por %p131, %p132
      %p135 = scmp.ne.s32.totalorder %s120, %s134
      %p136 = scmp.eq.s32.totalorder %s26, 0
      %p137 = por %p135, %p136
      %s139 = sadd.s32 %s138, 1
      %p142 = scmp.eq.s32.totalorder %s20, 1
      %p143 = scmp.ne.s32.totalorder %s138, %s140
      %p144 = scmp.eq.s32.totalorder %s20, 0
      %p145 = por %p143, %p144
      %p146 = scmp.ne.s32.totalorder %s138, %s140
      %p147 = scmp.eq.s32.totalorder %s25, 1
      %p148 = por %p146, %p147
      %p149 = scmp.ne.s32.totalorder %s140, %s141
      %p150 = scmp.eq.s32.totalorder %s25, 0
      %p151 = por %p149, %p150
      %p152 = scmp.ne.s32.totalorder %s140, %s141
      %p153 = scmp.eq.s32.totalorder %s26, 1
      %p154 = por %p152, %p153
      %p156 = scmp.ne.s32.totalorder %s141, %s155
      %p157 = scmp.eq.s32.totalorder %s26, 0
      %p158 = por %p156, %p157
      %s160 = sadd.s32 %s159, 1
      %p163 = scmp.eq.s32.totalorder %s20, 1
      %p164 = scmp.ne.s32.totalorder %s159, %s161
      %p165 = scmp.eq.s32.totalorder %s20, 0
      %p166 = por %p164, %p165
      %p167 = scmp.ne.s32.totalorder %s159, %s161
      %p168 = scmp.eq.s32.totalorder %s25, 1
      %p169 = por %p167, %p168
      %p170 = scmp.ne.s32.totalorder %s161, %s162
      %p171 = scmp.eq.s32.totalorder %s25, 0
      %p172 = por %p170, %p171
      %p173 = scmp.ne.s32.totalorder %s161, %s162
      %p174 = scmp.eq.s32.totalorder %s26, 1
      %p175 = por %p173, %p174
      %p177 = scmp.ne.s32.totalorder %s162, %s176
      %p178 = scmp.eq.s32.totalorder %s26, 0
      %p179 = por %p177, %p178
      %s181 = sadd.s32 %s180, 1
      %p184 = scmp.eq.s32.totalorder %s20, 1
      %p185 = scmp.ne.s32.totalorder %s180, %s182
      %p186 = scmp.eq.s32.totalorder %s20, 0
      %p187 = por %p185, %p186
      %p188 = scmp.ne.s32.totalorder %s180, %s182
      %p189 = scmp.eq.s32.totalorder %s25, 1
      %p190 = por %p188, %p189
      %p191 = scmp.ne.s32.totalorder %s182, %s183
      %p192 = scmp.eq.s32.totalorder %s25, 0
      %p193 = por %p191, %p192
      %p194 = scmp.ne.s32.totalorder %s182, %s183
      %p195 = scmp.eq.s32.totalorder %s26, 1
      %p196 = por %p194, %p195
      %p198 = scmp.ne.s32.totalorder %s183, %s197
      %p199 = scmp.eq.s32.totalorder %s26, 0
      %p200 = por %p198, %p199
      %s202 = sadd.s32 %s201, 1
      %p205 = scmp.eq.s32.totalorder %s20, 1
      %p206 = scmp.ne.s32.totalorder %s201, %s203
      %p207 = scmp.eq.s32.totalorder %s20, 0
      %p208 = por %p206, %p207
      %p209 = scmp.ne.s32.totalorder %s201, %s203
      %p210 = scmp.eq.s32.totalorder %s25, 1
      %p211 = por %p209, %p210
      %p212 = scmp.ne.s32.totalorder %s203, %s204
      %p213 = scmp.eq.s32.totalorder %s25, 0
      %p214 = por %p212, %p213
      %p215 = scmp.ne.s32.totalorder %s203, %s204
      %p216 = scmp.eq.s32.totalorder %s26, 1
      %p217 = por %p215, %p216
      %p219 = scmp.ne.s32.totalorder %s204, %s218
      %p220 = scmp.eq.s32.totalorder %s26, 0
      %p221 = por %p219, %p220
      %s223 = sadd.s32 %s222, 1
      %p226 = scmp.eq.s32.totalorder %s20, 1
      %p227 = scmp.ne.s32.totalorder %s222, %s224
      %p228 = scmp.eq.s32.totalorder %s20, 0
      %p229 = por %p227, %p228
      %p230 = scmp.ne.s32.totalorder %s222, %s224
      %p231 = scmp.eq.s32.totalorder %s25, 1
      %p232 = por %p230, %p231
      %p233 = scmp.ne.s32.totalorder %s224, %s225
      %p234 = scmp.eq.s32.totalorder %s25, 0
      %p235 = por %p233, %p234
      %p236 = scmp.ne.s32.totalorder %s224, %s225
      %p237 = scmp.eq.s32.totalorder %s26, 1
      %p238 = por %p236, %p237
      %p240 = scmp.ne.s32.totalorder %s225, %s239
      %p241 = scmp.eq.s32.totalorder %s26, 0
      %p242 = por %p240, %p241
      %s244 = sadd.s32 %s243, 1
      %p247 = scmp.eq.s32.totalorder %s20, 1
      %p248 = scmp.ne.s32.totalorder %s243, %s245
      %p249 = scmp.eq.s32.totalorder %s20, 0
      %p250 = por %p248, %p249
      %p251 = scmp.ne.s32.totalorder %s243, %s245
      %p252 = scmp.eq.s32.totalorder %s25, 1
      %p253 = por %p251, %p252
      %p254 = scmp.ne.s32.totalorder %s245, %s246
      %p255 = scmp.eq.s32.totalorder %s25, 0
      %p256 = por %p254, %p255
      %p257 = scmp.ne.s32.totalorder %s245, %s246
      %p258 = scmp.eq.s32.totalorder %s26, 1
      %p259 = por %p257, %p258
      %p261 = scmp.ne.s32.totalorder %s246, %s260
      %p262 = scmp.eq.s32.totalorder %s26, 0
      %p263 = por %p261, %p262
      %s264 = ssub.s32 %s20, %s27
      %p265 = scmp.eq.s32.totalorder %s264, 0
      %s267 = sadd.s32 %s266, 1
      %s268 = scalar_select %p265, %s266, %s267
      %p271 = pneg %p265
      %p272 = scmp.eq.s32.totalorder %s20, 1
      %p273 = por %p271, %p272
      %p274 = scmp.ne.s32.totalorder %s266, %s269
      %p275 = scmp.eq.s32.totalorder %s20, 0
      %p276 = por %p274, %p275
      %p277 = scmp.ne.s32.totalorder %s266, %s269
      %p278 = scmp.eq.s32.totalorder %s25, 1
      %p279 = por %p277, %p278
      %p280 = scmp.ne.s32.totalorder %s269, %s270
      %p281 = scmp.eq.s32.totalorder %s25, 0
      %p282 = por %p280, %p281
      %p283 = scmp.ne.s32.totalorder %s269, %s270
      %p284 = scmp.eq.s32.totalorder %s26, 1
      %p285 = por %p283, %p284
      %p287 = scmp.ne.s32.totalorder %s270, %s286
      %p288 = scmp.eq.s32.totalorder %s26, 0
      %p289 = por %p287, %p288
      %p290 = scmp.le.s32.totalorder 1, %s20
      %p291 = scmp.lt.s32.totalorder %s20, 3
      %p292 = pnand %p290, %p291
      %p293 = pneg %p292
      // Predicated region
      $region9: #{forward.1} parent=5 // pred_check
        _
      $region10: #{forward.1} parent=5 // pred_check_branch
        %295 = sbr.rel (%p292) target = $region12
      $region11: #{forward.1} parent=5 // pred_region
        %s296 = ssub.s32 %s20, 1
        // Predicated region
        $region13: #{forward.1} parent=11 // pred_check
          %p297 = pneg %p67
        $region14: #{forward.1} parent=11 // pred_check_branch
          %299 = sbr.rel (%p297) target = $region16
        $region15: #{forward.1} parent=11 // pred_region
          _
        $region16: #{forward.1} parent=11 // pred_fallthru
          _
        // Predicated region
        $region17: #{forward.1} parent=11 // pred_check
          %p300 = pneg %p88
        $region18: #{forward.1} parent=11 // pred_check_branch
          %302 = sbr.rel (%p300) target = $region20
        $region19: #{forward.1} parent=11 // pred_region
          _
        $region20: #{forward.1} parent=11 // pred_fallthru
          _
        // Predicated region
        $region21: #{forward.1} parent=11 // pred_check
          %p303 = pneg %p109
        $region22: #{forward.1} parent=11 // pred_check_branch
          %305 = sbr.rel (%p303) target = $region24
        $region23: #{forward.1} parent=11 // pred_region
          _
        $region24: #{forward.1} parent=11 // pred_fallthru
          _
        // Predicated region
        $region25: #{forward.1} parent=11 // pred_check
          %p306 = pneg %p130
        $region26: #{forward.1} parent=11 // pred_check_branch
          %308 = sbr.rel (%p306) target = $region28
        $region27: #{forward.1} parent=11 // pred_region
          _
        $region28: #{forward.1} parent=11 // pred_fallthru
          _
        // Predicated region
        $region29: #{forward.1} parent=11 // pred_check
          %p309 = pneg %p151
        $region30: #{forward.1} parent=11 // pred_check_branch
          %311 = sbr.rel (%p309) target = $region32
        $region31: #{forward.1} parent=11 // pred_region
          _
        $region32: #{forward.1} parent=11 // pred_fallthru
          _
        // Predicated region
        $region33: #{forward.1} parent=11 // pred_check
          %p312 = pneg %p172
        $region34: #{forward.1} parent=11 // pred_check_branch
          %314 = sbr.rel (%p312) target = $region36
        $region35: #{forward.1} parent=11 // pred_region
          _
        $region36: #{forward.1} parent=11 // pred_fallthru
          _
        // Predicated region
        $region37: #{forward.1} parent=11 // pred_check
          %p315 = pneg %p193
        $region38: #{forward.1} parent=11 // pred_check_branch
          %317 = sbr.rel (%p315) target = $region40
        $region39: #{forward.1} parent=11 // pred_region
          _
        $region40: #{forward.1} parent=11 // pred_fallthru
          _
        // Predicated region
        $region41: #{forward.1} parent=11 // pred_check
          %p318 = pneg %p214
        $region42: #{forward.1} parent=11 // pred_check_branch
          %320 = sbr.rel (%p318) target = $region44
        $region43: #{forward.1} parent=11 // pred_region
          _
        $region44: #{forward.1} parent=11 // pred_fallthru
          _
        // Predicated region
        $region45: #{forward.1} parent=11 // pred_check
          %p321 = pneg %p235
        $region46: #{forward.1} parent=11 // pred_check_branch
          %323 = sbr.rel (%p321) target = $region48
        $region47: #{forward.1} parent=11 // pred_region
          _
        $region48: #{forward.1} parent=11 // pred_fallthru
          _
        // Predicated region
        $region49: #{forward.1} parent=11 // pred_check
          %p324 = pneg %p256
        $region50: #{forward.1} parent=11 // pred_check_branch
          %326 = sbr.rel (%p324) target = $region52
        $region51: #{forward.1} parent=11 // pred_region
          _
        $region52: #{forward.1} parent=11 // pred_fallthru
          _
      $region12: #{forward.1} parent=5 // pred_fallthru
        _
      %p327 = scmp.lt.s32.totalorder %s20, 2
      // Predicated region
      $region53: #{forward.1} parent=5 // pred_check
        %p328 = pneg %p327
      $region54: #{forward.1} parent=5 // pred_check_branch
        %330 = sbr.rel (%p328) target = $region56
      $region55: #{forward.1} parent=5 // pred_region
        // Predicated region
        $region57: #{forward.1} parent=55 // pred_check
          %p331 = pneg %p40
        $region58: #{forward.1} parent=55 // pred_check_branch
          %333 = sbr.rel (%p331) target = $region60
        $region59: #{forward.1} parent=55 // pred_region
          %p334 = scmp.lt.s32.totalorder %s20, 1
          %s335 = scalar_select %p334, %s20, 1
          %s336 = smul.addr %s335, 128
          %s337 = smul.addr %s336, 4
          %s338 = scalar_lea.vmem %s0, %s337
        $region60: #{forward.1} parent=55 // pred_fallthru
          _
      $region56: #{forward.1} parent=5 // pred_fallthru
        _
      %p339 = scmp.le.s32.totalorder 1, %s20
      %p340 = scmp.lt.s32.totalorder %s20, 3
      %p341 = pnand %p339, %p340
      %p342 = pneg %p341
      // Predicated region
      $region61: #{forward.1} parent=5 // pred_check
        _
      $region62: #{forward.1} parent=5 // pred_check_branch
        %344 = sbr.rel (%p341) target = $region64
      $region63: #{forward.1} parent=5 // pred_region
        %s345 = ssub.s32 %s20, 1
        %p346 = scmp.lt.s32.totalorder %s25, 1
        %s347 = scalar_select %p346, %s25, 1
        %s348 = smul.addr %s347, 128
        %s349 = smul.addr %s348, 4
        %s350 = scalar_lea.vmem %s0, %s349
        %p351 = pneg %p46
        %p352 = pneg %p43
        %p353 = pneg %p67
        %p354 = pneg %p64
        %p355 = pneg %p88
        %p356 = pneg %p85
        %p357 = pneg %p109
        %p358 = pneg %p106
        %p359 = pneg %p130
        %p360 = pneg %p127
        %p361 = pneg %p151
        %p362 = pneg %p148
        %p363 = pneg %p172
        %p364 = pneg %p169
        %p365 = pneg %p193
        %p366 = pneg %p190
        %p367 = pneg %p214
        %p368 = pneg %p211
        %p369 = pneg %p235
        %p370 = pneg %p232
        %p371 = pneg %p256
        %p372 = pneg %p253
        %p373 = pneg %p282
        %p374 = pneg %p279
        %s375 = sand.u32 %s269, 1
        %s376 = scalar_lea.sflag [#allocation14], %s375
        %s377 = sand.u32 %s269, 1
        %s378 = scalar_lea.vmem [#allocation13], %s377
        %p379 = scmp.lt.s32.totalorder %s25, 1
        %s380 = scalar_select %p379, %s25, 1
        %s381 = smul.addr %s380, 128
        %s382 = smul.addr %s381, 4
        %s383 = scalar_lea.vmem %s0, %s382
        %v385 = vld [vmem:[%s383] sm:$0xf]
        %v386 = vld [vmem:[%s383 + $0x4] sm:$0xf]
        %v387 = vld [vmem:[%s383 + $0x8] sm:$0xf]
        %v388 = vld [vmem:[%s383 + $0xc] sm:$0xf]
        %v389 = vld [vmem:[%s383 + $0x10] sm:$0xf]
        %v390 = vld [vmem:[%s383 + $0x14] sm:$0xf]
        %v391 = vld [vmem:[%s383 + $0x18] sm:$0xf]
        %v392 = vld [vmem:[%s383 + $0x1c] sm:$0xf]
        %v393 = vld [vmem:[%s383 + $0x20] sm:$0xf]
        %v394 = vld [vmem:[%s383 + $0x24] sm:$0xf]
        %v395 = vld [vmem:[%s383 + $0x28] sm:$0xf]
        %v396 = vld [vmem:[%s383 + $0x2c] sm:$0xf]
        %v397 = vld [vmem:[%s383 + $0x30] sm:$0xf]
        %v398 = vld [vmem:[%s383 + $0x34] sm:$0xf]
        %v399 = vld [vmem:[%s383 + $0x38] sm:$0xf]
        %v400 = vld [vmem:[%s383 + $0x3c] sm:$0xf]
        %v401 = vld [vmem:[%s383 + $0x40] sm:$0xf]
        %v402 = vld [vmem:[%s383 + $0x44] sm:$0xf]
        %v403 = vld [vmem:[%s383 + $0x48] sm:$0xf]
        %v404 = vld [vmem:[%s383 + $0x4c] sm:$0xf]
        %v405 = vld [vmem:[%s383 + $0x50] sm:$0xf]
        %v406 = vld [vmem:[%s383 + $0x54] sm:$0xf]
        %v407 = vld [vmem:[%s383 + $0x58] sm:$0xf]
        %v408 = vld [vmem:[%s383 + $0x5c] sm:$0xf]
        %v409 = vld [vmem:[%s383 + $0x60] sm:$0xf]
        %v410 = vld [vmem:[%s383 + $0x64] sm:$0xf]
        %v411 = vld [vmem:[%s383 + $0x68] sm:$0xf]
        %v412 = vld [vmem:[%s383 + $0x6c] sm:$0xf]
        %v413 = vld [vmem:[%s383 + $0x70] sm:$0xf]
        %v414 = vld [vmem:[%s383 + $0x74] sm:$0xf]
        %v415 = vld [vmem:[%s383 + $0x78] sm:$0xf]
        %v416 = vld [vmem:[%s383 + $0x7c] sm:$0xf]
        %v417 = vld [vmem:[%s383 + $0x80] sm:$0xf]
        %v418 = vld [vmem:[%s383 + $0x84] sm:$0xf]
        %v419 = vld [vmem:[%s383 + $0x88] sm:$0xf]
        %v420 = vld [vmem:[%s383 + $0x8c] sm:$0xf]
        %v421 = vld [vmem:[%s383 + $0x90] sm:$0xf]
        %v422 = vld [vmem:[%s383 + $0x94] sm:$0xf]
        %v423 = vld [vmem:[%s383 + $0x98] sm:$0xf]
        %v424 = vld [vmem:[%s383 + $0x9c] sm:$0xf]
        %v425 = vld [vmem:[%s383 + $0xa0] sm:$0xf]
        %v426 = vld [vmem:[%s383 + $0xa4] sm:$0xf]
        %v427 = vld [vmem:[%s383 + $0xa8] sm:$0xf]
        %v428 = vld [vmem:[%s383 + $0xac] sm:$0xf]
        %v429 = vld [vmem:[%s383 + $0xb0] sm:$0xf]
        %v430 = vld [vmem:[%s383 + $0xb4] sm:$0xf]
        %v431 = vld [vmem:[%s383 + $0xb8] sm:$0xf]
        %v432 = vld [vmem:[%s383 + $0xbc] sm:$0xf]
        %v433 = vld [vmem:[%s383 + $0xc0] sm:$0xf]
        %v434 = vld [vmem:[%s383 + $0xc4] sm:$0xf]
        %v435 = vld [vmem:[%s383 + $0xc8] sm:$0xf]
        %v436 = vld [vmem:[%s383 + $0xcc] sm:$0xf]
        %v437 = vld [vmem:[%s383 + $0xd0] sm:$0xf]
        %v438 = vld [vmem:[%s383 + $0xd4] sm:$0xf]
        %v439 = vld [vmem:[%s383 + $0xd8] sm:$0xf]
        %v440 = vld [vmem:[%s383 + $0xdc] sm:$0xf]
        %v441 = vld [vmem:[%s383 + $0xe0] sm:$0xf]
        %v442 = vld [vmem:[%s383 + $0xe4] sm:$0xf]
        %v443 = vld [vmem:[%s383 + $0xe8] sm:$0xf]
        %v444 = vld [vmem:[%s383 + $0xec] sm:$0xf]
        %v445 = vld [vmem:[%s383 + $0xf0] sm:$0xf]
        %v446 = vld [vmem:[%s383 + $0xf4] sm:$0xf]
        %v447 = vld [vmem:[%s383 + $0xf8] sm:$0xf]
        %v448 = vld [vmem:[%s383 + $0xfc] sm:$0xf]
        %v449 = vld [vmem:[%s383 + $0x100] sm:$0xf]
        %v450 = vld [vmem:[%s383 + $0x104] sm:$0xf]
        %v451 = vld [vmem:[%s383 + $0x108] sm:$0xf]
        %v452 = vld [vmem:[%s383 + $0x10c] sm:$0xf]
        %v453 = vld [vmem:[%s383 + $0x110] sm:$0xf]
        %v454 = vld [vmem:[%s383 + $0x114] sm:$0xf]
        %v455 = vld [vmem:[%s383 + $0x118] sm:$0xf]
        %v456 = vld [vmem:[%s383 + $0x11c] sm:$0xf]
        %v457 = vld [vmem:[%s383 + $0x120] sm:$0xf]
        %v458 = vld [vmem:[%s383 + $0x124] sm:$0xf]
        %v459 = vld [vmem:[%s383 + $0x128] sm:$0xf]
        %v460 = vld [vmem:[%s383 + $0x12c] sm:$0xf]
        %v461 = vld [vmem:[%s383 + $0x130] sm:$0xf]
        %v462 = vld [vmem:[%s383 + $0x134] sm:$0xf]
        %v463 = vld [vmem:[%s383 + $0x138] sm:$0xf]
        %v464 = vld [vmem:[%s383 + $0x13c] sm:$0xf]
        %v465 = vld [vmem:[%s383 + $0x140] sm:$0xf]
        %v466 = vld [vmem:[%s383 + $0x144] sm:$0xf]
        %v467 = vld [vmem:[%s383 + $0x148] sm:$0xf]
        %v468 = vld [vmem:[%s383 + $0x14c] sm:$0xf]
        %v469 = vld [vmem:[%s383 + $0x150] sm:$0xf]
        %v470 = vld [vmem:[%s383 + $0x154] sm:$0xf]
        %v471 = vld [vmem:[%s383 + $0x158] sm:$0xf]
        %v472 = vld [vmem:[%s383 + $0x15c] sm:$0xf]
        %v473 = vld [vmem:[%s383 + $0x160] sm:$0xf]
        %v474 = vld [vmem:[%s383 + $0x164] sm:$0xf]
        %v475 = vld [vmem:[%s383 + $0x168] sm:$0xf]
        %v476 = vld [vmem:[%s383 + $0x16c] sm:$0xf]
        %v477 = vld [vmem:[%s383 + $0x170] sm:$0xf]
        %v478 = vld [vmem:[%s383 + $0x174] sm:$0xf]
        %v479 = vld [vmem:[%s383 + $0x178] sm:$0xf]
        %v480 = vld [vmem:[%s383 + $0x17c] sm:$0xf]
        %v481 = vld [vmem:[%s383 + $0x180] sm:$0xf]
        %v482 = vld [vmem:[%s383 + $0x184] sm:$0xf]
        %v483 = vld [vmem:[%s383 + $0x188] sm:$0xf]
        %v484 = vld [vmem:[%s383 + $0x18c] sm:$0xf]
        %v485 = vld [vmem:[%s383 + $0x190] sm:$0xf]
        %v486 = vld [vmem:[%s383 + $0x194] sm:$0xf]
        %v487 = vld [vmem:[%s383 + $0x198] sm:$0xf]
        %v488 = vld [vmem:[%s383 + $0x19c] sm:$0xf]
        %v489 = vld [vmem:[%s383 + $0x1a0] sm:$0xf]
        %v490 = vld [vmem:[%s383 + $0x1a4] sm:$0xf]
        %v491 = vld [vmem:[%s383 + $0x1a8] sm:$0xf]
        %v492 = vld [vmem:[%s383 + $0x1ac] sm:$0xf]
        %v493 = vld [vmem:[%s383 + $0x1b0] sm:$0xf]
        %v494 = vld [vmem:[%s383 + $0x1b4] sm:$0xf]
        %v495 = vld [vmem:[%s383 + $0x1b8] sm:$0xf]
        %v496 = vld [vmem:[%s383 + $0x1bc] sm:$0xf]
        %v497 = vld [vmem:[%s383 + $0x1c0] sm:$0xf]
        %v498 = vld [vmem:[%s383 + $0x1c4] sm:$0xf]
        %v499 = vld [vmem:[%s383 + $0x1c8] sm:$0xf]
        %v500 = vld [vmem:[%s383 + $0x1cc] sm:$0xf]
        %v501 = vld [vmem:[%s383 + $0x1d0] sm:$0xf]
        %v502 = vld [vmem:[%s383 + $0x1d4] sm:$0xf]
        %v503 = vld [vmem:[%s383 + $0x1d8] sm:$0xf]
        %v504 = vld [vmem:[%s383 + $0x1dc] sm:$0xf]
        %v505 = vld [vmem:[%s383 + $0x1e0] sm:$0xf]
        %v506 = vld [vmem:[%s383 + $0x1e4] sm:$0xf]
        %v507 = vld [vmem:[%s383 + $0x1e8] sm:$0xf]
        %v508 = vld [vmem:[%s383 + $0x1ec] sm:$0xf]
        %v509 = vld [vmem:[%s383 + $0x1f0] sm:$0xf]
        %v510 = vld [vmem:[%s383 + $0x1f4] sm:$0xf]
        %v511 = vld [vmem:[%s383 + $0x1f8] sm:$0xf]
        %v512 = vld [vmem:[%s383 + $0x1fc] sm:$0xf]
        %v513 = vld [vmem:[%s1] sm:$0xf]
        %v514 = vld [vmem:[%s1 + $0x4] sm:$0xf]
        %v515 = vld [vmem:[%s1 + $0x8] sm:$0xf]
        %v516 = vld [vmem:[%s1 + $0xc] sm:$0xf]
        %v517 = vld [vmem:[%s2] sm:$0x1]
        %v519 = vperm.slane %v517, 0
        %v649 = vunpack.c.l.b16 %v385
        %v650 = vunpack.c.l.b16 %v386
        %v651 = vunpack.c.l.b16 %v387
        %v652 = vunpack.c.l.b16 %v388
        %v653 = vunpack.c.l.b16 %v389
        %v654 = vunpack.c.l.b16 %v390
        %v655 = vunpack.c.l.b16 %v391
        %v656 = vunpack.c.l.b16 %v392
        %v657 = vunpack.c.l.b16 %v393
        %v658 = vunpack.c.l.b16 %v394
        %v659 = vunpack.c.l.b16 %v395
        %v660 = vunpack.c.l.b16 %v396
        %v661 = vunpack.c.l.b16 %v397
        %v662 = vunpack.c.l.b16 %v398
        %v663 = vunpack.c.l.b16 %v399
        %v664 = vunpack.c.l.b16 %v400
        %v665 = vunpack.c.l.b16 %v401
        %v666 = vunpack.c.l.b16 %v402
        %v667 = vunpack.c.l.b16 %v403
        %v668 = vunpack.c.l.b16 %v404
        %v669 = vunpack.c.l.b16 %v405
        %v670 = vunpack.c.l.b16 %v406
        %v671 = vunpack.c.l.b16 %v407
        %v672 = vunpack.c.l.b16 %v408
        %v673 = vunpack.c.l.b16 %v409
        %v674 = vunpack.c.l.b16 %v410
        %v675 = vunpack.c.l.b16 %v411
        %v676 = vunpack.c.l.b16 %v412
        %v677 = vunpack.c.l.b16 %v413
        %v678 = vunpack.c.l.b16 %v414
        %v679 = vunpack.c.l.b16 %v415
        %v680 = vunpack.c.l.b16 %v416
        %v681 = vunpack.c.l.b16 %v417
        %v682 = vunpack.c.l.b16 %v418
        %v683 = vunpack.c.l.b16 %v419
        %v684 = vunpack.c.l.b16 %v420
        %v685 = vunpack.c.l.b16 %v421
        %v686 = vunpack.c.l.b16 %v422
        %v687 = vunpack.c.l.b16 %v423
        %v688 = vunpack.c.l.b16 %v424
        %v689 = vunpack.c.l.b16 %v425
        %v690 = vunpack.c.l.b16 %v426
        %v691 = vunpack.c.l.b16 %v427
        %v692 = vunpack.c.l.b16 %v428
        %v693 = vunpack.c.l.b16 %v429
        %v694 = vunpack.c.l.b16 %v430
        %v695 = vunpack.c.l.b16 %v431
        %v696 = vunpack.c.l.b16 %v432
        %v697 = vunpack.c.l.b16 %v433
        %v698 = vunpack.c.l.b16 %v434
        %v699 = vunpack.c.l.b16 %v435
        %v700 = vunpack.c.l.b16 %v436
        %v701 = vunpack.c.l.b16 %v437
        %v702 = vunpack.c.l.b16 %v438
        %v703 = vunpack.c.l.b16 %v439
        %v704 = vunpack.c.l.b16 %v440
        %v705 = vunpack.c.l.b16 %v441
        %v706 = vunpack.c.l.b16 %v442
        %v707 = vunpack.c.l.b16 %v443
        %v708 = vunpack.c.l.b16 %v444
        %v709 = vunpack.c.l.b16 %v445
        %v710 = vunpack.c.l.b16 %v446
        %v711 = vunpack.c.l.b16 %v447
        %v712 = vunpack.c.l.b16 %v448
        %v713 = vunpack.c.l.b16 %v449
        %v714 = vunpack.c.l.b16 %v450
        %v715 = vunpack.c.l.b16 %v451
        %v716 = vunpack.c.l.b16 %v452
        %v717 = vunpack.c.l.b16 %v453
        %v718 = vunpack.c.l.b16 %v454
        %v719 = vunpack.c.l.b16 %v455
        %v720 = vunpack.c.l.b16 %v456
        %v721 = vunpack.c.l.b16 %v457
        %v722 = vunpack.c.l.b16 %v458
        %v723 = vunpack.c.l.b16 %v459
        %v724 = vunpack.c.l.b16 %v460
        %v725 = vunpack.c.l.b16 %v461
        %v726 = vunpack.c.l.b16 %v462
        %v727 = vunpack.c.l.b16 %v463
        %v728 = vunpack.c.l.b16 %v464
        %v729 = vunpack.c.l.b16 %v465
        %v730 = vunpack.c.l.b16 %v466
        %v731 = vunpack.c.l.b16 %v467
        %v732 = vunpack.c.l.b16 %v468
        %v733 = vunpack.c.l.b16 %v469
        %v734 = vunpack.c.l.b16 %v470
        %v735 = vunpack.c.l.b16 %v471
        %v736 = vunpack.c.l.b16 %v472
        %v737 = vunpack.c.l.b16 %v473
        %v738 = vunpack.c.l.b16 %v474
        %v739 = vunpack.c.l.b16 %v475
        %v740 = vunpack.c.l.b16 %v476
        %v741 = vunpack.c.l.b16 %v477
        %v742 = vunpack.c.l.b16 %v478
        %v743 = vunpack.c.l.b16 %v479
        %v744 = vunpack.c.l.b16 %v480
        %v745 = vunpack.c.l.b16 %v481
        %v746 = vunpack.c.l.b16 %v482
        %v747 = vunpack.c.l.b16 %v483
        %v748 = vunpack.c.l.b16 %v484
        %v749 = vunpack.c.l.b16 %v485
        %v750 = vunpack.c.l.b16 %v486
        %v751 = vunpack.c.l.b16 %v487
        %v752 = vunpack.c.l.b16 %v488
        %v753 = vunpack.c.l.b16 %v489
        %v754 = vunpack.c.l.b16 %v490
        %v755 = vunpack.c.l.b16 %v491
        %v756 = vunpack.c.l.b16 %v492
        %v757 = vunpack.c.l.b16 %v493
        %v758 = vunpack.c.l.b16 %v494
        %v759 = vunpack.c.l.b16 %v495
        %v760 = vunpack.c.l.b16 %v496
        %v761 = vunpack.c.l.b16 %v497
        %v762 = vunpack.c.l.b16 %v498
        %v763 = vunpack.c.l.b16 %v499
        %v764 = vunpack.c.l.b16 %v500
        %v765 = vunpack.c.l.b16 %v501
        %v766 = vunpack.c.l.b16 %v502
        %v767 = vunpack.c.l.b16 %v503
        %v768 = vunpack.c.l.b16 %v504
        %v769 = vunpack.c.l.b16 %v505
        %v770 = vunpack.c.l.b16 %v506
        %v771 = vunpack.c.l.b16 %v507
        %v772 = vunpack.c.l.b16 %v508
        %v773 = vunpack.c.l.b16 %v509
        %v774 = vunpack.c.l.b16 %v510
        %v775 = vunpack.c.l.b16 %v511
        %v776 = vunpack.c.l.b16 %v512
        %v777 = vpack.c.b16 %v650, %v649
        %v778 = vpack.c.b16 %v652, %v651
        %v779 = vpack.c.b16 %v654, %v653
        %v780 = vpack.c.b16 %v656, %v655
        %v781 = vpack.c.b16 %v658, %v657
        %v782 = vpack.c.b16 %v660, %v659
        %v783 = vpack.c.b16 %v662, %v661
        %v784 = vpack.c.b16 %v664, %v663
        %v785 = vpack.c.b16 %v666, %v665
        %v786 = vpack.c.b16 %v668, %v667
        %v787 = vpack.c.b16 %v670, %v669
        %v788 = vpack.c.b16 %v672, %v671
        %v789 = vpack.c.b16 %v674, %v673
        %v790 = vpack.c.b16 %v676, %v675
        %v791 = vpack.c.b16 %v678, %v677
        %v792 = vpack.c.b16 %v680, %v679
        %v793 = vpack.c.b16 %v682, %v681
        %v794 = vpack.c.b16 %v684, %v683
        %v795 = vpack.c.b16 %v686, %v685
        %v796 = vpack.c.b16 %v688, %v687
        %v797 = vpack.c.b16 %v690, %v689
        %v798 = vpack.c.b16 %v692, %v691
        %v799 = vpack.c.b16 %v694, %v693
        %v800 = vpack.c.b16 %v696, %v695
        %v801 = vpack.c.b16 %v698, %v697
        %v802 = vpack.c.b16 %v700, %v699
        %v803 = vpack.c.b16 %v702, %v701
        %v804 = vpack.c.b16 %v704, %v703
        %v805 = vpack.c.b16 %v706, %v705
        %v806 = vpack.c.b16 %v708, %v707
        %v807 = vpack.c.b16 %v710, %v709
        %v808 = vpack.c.b16 %v712, %v711
        %v809 = vpack.c.b16 %v714, %v713
        %v810 = vpack.c.b16 %v716, %v715
        %v811 = vpack.c.b16 %v718, %v717
        %v812 = vpack.c.b16 %v720, %v719
        %v813 = vpack.c.b16 %v722, %v721
        %v814 = vpack.c.b16 %v724, %v723
        %v815 = vpack.c.b16 %v726, %v725
        %v816 = vpack.c.b16 %v728, %v727
        %v817 = vpack.c.b16 %v730, %v729
        %v818 = vpack.c.b16 %v732, %v731
        %v819 = vpack.c.b16 %v734, %v733
        %v820 = vpack.c.b16 %v736, %v735
        %v821 = vpack.c.b16 %v738, %v737
        %v822 = vpack.c.b16 %v740, %v739
        %v823 = vpack.c.b16 %v742, %v741
        %v824 = vpack.c.b16 %v744, %v743
        %v825 = vpack.c.b16 %v746, %v745
        %v826 = vpack.c.b16 %v748, %v747
        %v827 = vpack.c.b16 %v750, %v749
        %v828 = vpack.c.b16 %v752, %v751
        %v829 = vpack.c.b16 %v754, %v753
        %v830 = vpack.c.b16 %v756, %v755
        %v831 = vpack.c.b16 %v758, %v757
        %v832 = vpack.c.b16 %v760, %v759
        %v833 = vpack.c.b16 %v762, %v761
        %v834 = vpack.c.b16 %v764, %v763
        %v835 = vpack.c.b16 %v766, %v765
        %v836 = vpack.c.b16 %v768, %v767
        %v837 = vpack.c.b16 %v770, %v769
        %v838 = vpack.c.b16 %v772, %v771
        %v839 = vpack.c.b16 %v774, %v773
        %v840 = vpack.c.b16 %v776, %v775
        %v845 = vunpack.c.l.b16 %v513
        %v846 = vunpack.c.l.b16 %v514
        %v847 = vunpack.c.l.b16 %v515
        %v848 = vunpack.c.l.b16 %v516
        %v849 = vpack.c.b16 %v846, %v845
        %v850 = vpack.c.b16 %v848, %v847
        %vm853 = vcmask 261120
        %v855 = vsel %vm853, %v777, 0
        %v858 = vsel %vm853, %v778, 0
        %v861 = vsel %vm853, %v779, 0
        %v864 = vsel %vm853, %v780, 0
        %v867 = vsel %vm853, %v781, 0
        %v870 = vsel %vm853, %v782, 0
        %v873 = vsel %vm853, %v783, 0
        %v876 = vsel %vm853, %v784, 0
        %v879 = vsel %vm853, %v785, 0
        %v882 = vsel %vm853, %v786, 0
        %v885 = vsel %vm853, %v787, 0
        %v888 = vsel %vm853, %v788, 0
        %v891 = vsel %vm853, %v789, 0
        %v894 = vsel %vm853, %v790, 0
        %v897 = vsel %vm853, %v791, 0
        %v900 = vsel %vm853, %v792, 0
        %v903 = vsel %vm853, %v793, 0
        %v906 = vsel %vm853, %v794, 0
        %v909 = vsel %vm853, %v795, 0
        %v912 = vsel %vm853, %v796, 0
        %v915 = vsel %vm853, %v797, 0
        %v918 = vsel %vm853, %v798, 0
        %v921 = vsel %vm853, %v799, 0
        %v924 = vsel %vm853, %v800, 0
        %v927 = vsel %vm853, %v801, 0
        %v930 = vsel %vm853, %v802, 0
        %v933 = vsel %vm853, %v803, 0
        %v936 = vsel %vm853, %v804, 0
        %v939 = vsel %vm853, %v805, 0
        %v942 = vsel %vm853, %v806, 0
        %v945 = vsel %vm853, %v807, 0
        %v948 = vsel %vm853, %v808, 0
        %v951 = vsel %vm853, %v809, 0
        %v954 = vsel %vm853, %v810, 0
        %v957 = vsel %vm853, %v811, 0
        %v960 = vsel %vm853, %v812, 0
        %v963 = vsel %vm853, %v813, 0
        %v966 = vsel %vm853, %v814, 0
        %v969 = vsel %vm853, %v815, 0
        %v972 = vsel %vm853, %v816, 0
        %v975 = vsel %vm853, %v817, 0
        %v978 = vsel %vm853, %v818, 0
        %v981 = vsel %vm853, %v819, 0
        %v984 = vsel %vm853, %v820, 0
        %v987 = vsel %vm853, %v821, 0
        %v990 = vsel %vm853, %v822, 0
        %v993 = vsel %vm853, %v823, 0
        %v996 = vsel %vm853, %v824, 0
        %v999 = vsel %vm853, %v825, 0
        %v1002 = vsel %vm853, %v826, 0
        %v1005 = vsel %vm853, %v827, 0
        %v1008 = vsel %vm853, %v828, 0
        %v1011 = vsel %vm853, %v829, 0
        %v1014 = vsel %vm853, %v830, 0
        %v1017 = vsel %vm853, %v831, 0
        %v1020 = vsel %vm853, %v832, 0
        %v1023 = vsel %vm853, %v833, 0
        %v1026 = vsel %vm853, %v834, 0
        %v1029 = vsel %vm853, %v835, 0
        %v1032 = vsel %vm853, %v836, 0
        %v1035 = vsel %vm853, %v837, 0
        %v1038 = vsel %vm853, %v838, 0
        %v1041 = vsel %vm853, %v839, 0
        %v1044 = vsel %vm853, %v840, 0
        %1046 = vmatpush.bf16.msra.mxu0 0
        %1047 = vmatpush.bf16.msra.mxu0 0
        %1048 = vmatpush.bf16.msra.mxu0 0
        %1049 = vmatpush.bf16.msra.mxu0 0
        %1050 = vmatpush.bf16.msra.mxu0 0
        %1051 = vmatpush.bf16.msra.mxu0 0
        %1052 = vmatpush.bf16.msra.mxu0 %v850
        %1053 = vmatpush.bf16.msra.mxu0 %v849
        %1054 = vmatmul.bf16.gmra.mxu0 %v855
        %v1055 = vpop.f32.mrf.mxu0
        %v1056 = vadd.f32 %v519, %v1055
        %v1057 = vpop.f32.mrf.mxu0
        %v1058 = vadd.f32 %v519, %v1057
        %1059 = vmatmul.bf16.gmra.mxu0 %v858
        %v1060 = vpop.f32.mrf.mxu0
        %v1061 = vadd.f32 %v519, %v1060
        %v1062 = vpop.f32.mrf.mxu0
        %v1063 = vadd.f32 %v519, %v1062
        %1064 = vmatmul.bf16.gmra.mxu0 %v861
        %v1065 = vpop.f32.mrf.mxu0
        %v1066 = vadd.f32 %v519, %v1065
        %v1067 = vpop.f32.mrf.mxu0
        %v1068 = vadd.f32 %v519, %v1067
        %1069 = vmatmul.bf16.gmra.mxu0 %v864
        %v1070 = vpop.f32.mrf.mxu0
        %v1071 = vadd.f32 %v519, %v1070
        %v1072 = vpop.f32.mrf.mxu0
        %v1073 = vadd.f32 %v519, %v1072
        %1074 = vmatmul.bf16.gmra.mxu0 %v867
        %v1075 = vpop.f32.mrf.mxu0
        %v1076 = vadd.f32 %v519, %v1075
        %v1077 = vpop.f32.mrf.mxu0
        %v1078 = vadd.f32 %v519, %v1077
        %1079 = vmatmul.bf16.gmra.mxu0 %v870
        %v1080 = vpop.f32.mrf.mxu0
        %v1081 = vadd.f32 %v519, %v1080
        %v1082 = vpop.f32.mrf.mxu0
        %v1083 = vadd.f32 %v519, %v1082
        %1084 = vmatmul.bf16.gmra.mxu0 %v873
        %v1085 = vpop.f32.mrf.mxu0
        %v1086 = vadd.f32 %v519, %v1085
        %v1087 = vpop.f32.mrf.mxu0
        %v1088 = vadd.f32 %v519, %v1087
        %1089 = vmatmul.bf16.gmra.mxu0 %v876
        %v1090 = vpop.f32.mrf.mxu0
        %v1091 = vadd.f32 %v519, %v1090
        %v1092 = vpop.f32.mrf.mxu0
        %v1093 = vadd.f32 %v519, %v1092
        %1094 = vmatmul.bf16.gmra.mxu0 %v879
        %v1095 = vpop.f32.mrf.mxu0
        %v1096 = vadd.f32 %v519, %v1095
        %v1097 = vpop.f32.mrf.mxu0
        %v1098 = vadd.f32 %v519, %v1097
        %1099 = vmatmul.bf16.gmra.mxu0 %v882
        %v1100 = vpop.f32.mrf.mxu0
        %v1101 = vadd.f32 %v519, %v1100
        %v1102 = vpop.f32.mrf.mxu0
        %v1103 = vadd.f32 %v519, %v1102
        %1104 = vmatmul.bf16.gmra.mxu0 %v885
        %v1105 = vpop.f32.mrf.mxu0
        %v1106 = vadd.f32 %v519, %v1105
        %v1107 = vpop.f32.mrf.mxu0
        %v1108 = vadd.f32 %v519, %v1107
        %1109 = vmatmul.bf16.gmra.mxu0 %v888
        %v1110 = vpop.f32.mrf.mxu0
        %v1111 = vadd.f32 %v519, %v1110
        %v1112 = vpop.f32.mrf.mxu0
        %v1113 = vadd.f32 %v519, %v1112
        %1114 = vmatmul.bf16.gmra.mxu0 %v891
        %v1115 = vpop.f32.mrf.mxu0
        %v1116 = vadd.f32 %v519, %v1115
        %v1117 = vpop.f32.mrf.mxu0
        %v1118 = vadd.f32 %v519, %v1117
        %1119 = vmatmul.bf16.gmra.mxu0 %v894
        %v1120 = vpop.f32.mrf.mxu0
        %v1121 = vadd.f32 %v519, %v1120
        %v1122 = vpop.f32.mrf.mxu0
        %v1123 = vadd.f32 %v519, %v1122
        %1124 = vmatmul.bf16.gmra.mxu0 %v897
        %v1125 = vpop.f32.mrf.mxu0
        %v1126 = vadd.f32 %v519, %v1125
        %v1127 = vpop.f32.mrf.mxu0
        %v1128 = vadd.f32 %v519, %v1127
        %1129 = vmatmul.bf16.gmra.mxu0 %v900
        %v1130 = vpop.f32.mrf.mxu0
        %v1131 = vadd.f32 %v519, %v1130
        %v1132 = vpop.f32.mrf.mxu0
        %v1133 = vadd.f32 %v519, %v1132
        %1134 = vmatmul.bf16.gmra.mxu0 %v903
        %v1135 = vpop.f32.mrf.mxu0
        %v1136 = vadd.f32 %v519, %v1135
        %v1137 = vpop.f32.mrf.mxu0
        %v1138 = vadd.f32 %v519, %v1137
        %1139 = vmatmul.bf16.gmra.mxu0 %v906
        %v1140 = vpop.f32.mrf.mxu0
        %v1141 = vadd.f32 %v519, %v1140
        %v1142 = vpop.f32.mrf.mxu0
        %v1143 = vadd.f32 %v519, %v1142
        %1144 = vmatmul.bf16.gmra.mxu0 %v909
        %v1145 = vpop.f32.mrf.mxu0
        %v1146 = vadd.f32 %v519, %v1145
        %v1147 = vpop.f32.mrf.mxu0
        %v1148 = vadd.f32 %v519, %v1147
        %1149 = vmatmul.bf16.gmra.mxu0 %v912
        %v1150 = vpop.f32.mrf.mxu0
        %v1151 = vadd.f32 %v519, %v1150
        %v1152 = vpop.f32.mrf.mxu0
        %v1153 = vadd.f32 %v519, %v1152
        %1154 = vmatmul.bf16.gmra.mxu0 %v915
        %v1155 = vpop.f32.mrf.mxu0
        %v1156 = vadd.f32 %v519, %v1155
        %v1157 = vpop.f32.mrf.mxu0
        %v1158 = vadd.f32 %v519, %v1157
        %1159 = vmatmul.bf16.gmra.mxu0 %v918
        %v1160 = vpop.f32.mrf.mxu0
        %v1161 = vadd.f32 %v519, %v1160
        %v1162 = vpop.f32.mrf.mxu0
        %v1163 = vadd.f32 %v519, %v1162
        %1164 = vmatmul.bf16.gmra.mxu0 %v921
        %v1165 = vpop.f32.mrf.mxu0
        %v1166 = vadd.f32 %v519, %v1165
        %v1167 = vpop.f32.mrf.mxu0
        %v1168 = vadd.f32 %v519, %v1167
        %1169 = vmatmul.bf16.gmra.mxu0 %v924
        %v1170 = vpop.f32.mrf.mxu0
        %v1171 = vadd.f32 %v519, %v1170
        %v1172 = vpop.f32.mrf.mxu0
        %v1173 = vadd.f32 %v519, %v1172
        %1174 = vmatmul.bf16.gmra.mxu0 %v927
        %v1175 = vpop.f32.mrf.mxu0
        %v1176 = vadd.f32 %v519, %v1175
        %v1177 = vpop.f32.mrf.mxu0
        %v1178 = vadd.f32 %v519, %v1177
        %1179 = vmatmul.bf16.gmra.mxu0 %v930
        %v1180 = vpop.f32.mrf.mxu0
        %v1181 = vadd.f32 %v519, %v1180
        %v1182 = vpop.f32.mrf.mxu0
        %v1183 = vadd.f32 %v519, %v1182
        %1184 = vmatmul.bf16.gmra.mxu0 %v933
        %v1185 = vpop.f32.mrf.mxu0
        %v1186 = vadd.f32 %v519, %v1185
        %v1187 = vpop.f32.mrf.mxu0
        %v1188 = vadd.f32 %v519, %v1187
        %1189 = vmatmul.bf16.gmra.mxu0 %v936
        %v1190 = vpop.f32.mrf.mxu0
        %v1191 = vadd.f32 %v519, %v1190
        %v1192 = vpop.f32.mrf.mxu0
        %v1193 = vadd.f32 %v519, %v1192
        %1194 = vmatmul.bf16.gmra.mxu0 %v939
        %v1195 = vpop.f32.mrf.mxu0
        %v1196 = vadd.f32 %v519, %v1195
        %v1197 = vpop.f32.mrf.mxu0
        %v1198 = vadd.f32 %v519, %v1197
        %1199 = vmatmul.bf16.gmra.mxu0 %v942
        %v1200 = vpop.f32.mrf.mxu0
        %v1201 = vadd.f32 %v519, %v1200
        %v1202 = vpop.f32.mrf.mxu0
        %v1203 = vadd.f32 %v519, %v1202
        %1204 = vmatmul.bf16.gmra.mxu0 %v945
        %v1205 = vpop.f32.mrf.mxu0
        %v1206 = vadd.f32 %v519, %v1205
        %v1207 = vpop.f32.mrf.mxu0
        %v1208 = vadd.f32 %v519, %v1207
        %1209 = vmatmul.bf16.gmra.mxu0 %v948
        %v1210 = vpop.f32.mrf.mxu0
        %v1211 = vadd.f32 %v519, %v1210
        %v1212 = vpop.f32.mrf.mxu0
        %v1213 = vadd.f32 %v519, %v1212
        %1214 = vmatmul.bf16.gmra.mxu0 %v951
        %v1215 = vpop.f32.mrf.mxu0
        %v1216 = vadd.f32 %v519, %v1215
        %v1217 = vpop.f32.mrf.mxu0
        %v1218 = vadd.f32 %v519, %v1217
        %1219 = vmatmul.bf16.gmra.mxu0 %v954
        %v1220 = vpop.f32.mrf.mxu0
        %v1221 = vadd.f32 %v519, %v1220
        %v1222 = vpop.f32.mrf.mxu0
        %v1223 = vadd.f32 %v519, %v1222
        %1224 = vmatmul.bf16.gmra.mxu0 %v957
        %v1225 = vpop.f32.mrf.mxu0
        %v1226 = vadd.f32 %v519, %v1225
        %v1227 = vpop.f32.mrf.mxu0
        %v1228 = vadd.f32 %v519, %v1227
        %1229 = vmatmul.bf16.gmra.mxu0 %v960
        %v1230 = vpop.f32.mrf.mxu0
        %v1231 = vadd.f32 %v519, %v1230
        %v1232 = vpop.f32.mrf.mxu0
        %v1233 = vadd.f32 %v519, %v1232
        %1234 = vmatmul.bf16.gmra.mxu0 %v963
        %v1235 = vpop.f32.mrf.mxu0
        %v1236 = vadd.f32 %v519, %v1235
        %v1237 = vpop.f32.mrf.mxu0
        %v1238 = vadd.f32 %v519, %v1237
        %1239 = vmatmul.bf16.gmra.mxu0 %v966
        %v1240 = vpop.f32.mrf.mxu0
        %v1241 = vadd.f32 %v519, %v1240
        %v1242 = vpop.f32.mrf.mxu0
        %v1243 = vadd.f32 %v519, %v1242
        %1244 = vmatmul.bf16.gmra.mxu0 %v969
        %v1245 = vpop.f32.mrf.mxu0
        %v1246 = vadd.f32 %v519, %v1245
        %v1247 = vpop.f32.mrf.mxu0
        %v1248 = vadd.f32 %v519, %v1247
        %1249 = vmatmul.bf16.gmra.mxu0 %v972
        %v1250 = vpop.f32.mrf.mxu0
        %v1251 = vadd.f32 %v519, %v1250
        %v1252 = vpop.f32.mrf.mxu0
        %v1253 = vadd.f32 %v519, %v1252
        %1254 = vmatmul.bf16.gmra.mxu0 %v975
        %v1255 = vpop.f32.mrf.mxu0
        %v1256 = vadd.f32 %v519, %v1255
        %v1257 = vpop.f32.mrf.mxu0
        %v1258 = vadd.f32 %v519, %v1257
        %1259 = vmatmul.bf16.gmra.mxu0 %v978
        %v1260 = vpop.f32.mrf.mxu0
        %v1261 = vadd.f32 %v519, %v1260
        %v1262 = vpop.f32.mrf.mxu0
        %v1263 = vadd.f32 %v519, %v1262
        %1264 = vmatmul.bf16.gmra.mxu0 %v981
        %v1265 = vpop.f32.mrf.mxu0
        %v1266 = vadd.f32 %v519, %v1265
        %v1267 = vpop.f32.mrf.mxu0
        %v1268 = vadd.f32 %v519, %v1267
        %1269 = vmatmul.bf16.gmra.mxu0 %v984
        %v1270 = vpop.f32.mrf.mxu0
        %v1271 = vadd.f32 %v519, %v1270
        %v1272 = vpop.f32.mrf.mxu0
        %v1273 = vadd.f32 %v519, %v1272
        %1274 = vmatmul.bf16.gmra.mxu0 %v987
        %v1275 = vpop.f32.mrf.mxu0
        %v1276 = vadd.f32 %v519, %v1275
        %v1277 = vpop.f32.mrf.mxu0
        %v1278 = vadd.f32 %v519, %v1277
        %1279 = vmatmul.bf16.gmra.mxu0 %v990
        %v1280 = vpop.f32.mrf.mxu0
        %v1281 = vadd.f32 %v519, %v1280
        %v1282 = vpop.f32.mrf.mxu0
        %v1283 = vadd.f32 %v519, %v1282
        %1284 = vmatmul.bf16.gmra.mxu0 %v993
        %v1285 = vpop.f32.mrf.mxu0
        %v1286 = vadd.f32 %v519, %v1285
        %v1287 = vpop.f32.mrf.mxu0
        %v1288 = vadd.f32 %v519, %v1287
        %1289 = vmatmul.bf16.gmra.mxu0 %v996
        %v1290 = vpop.f32.mrf.mxu0
        %v1291 = vadd.f32 %v519, %v1290
        %v1292 = vpop.f32.mrf.mxu0
        %v1293 = vadd.f32 %v519, %v1292
        %1294 = vmatmul.bf16.gmra.mxu0 %v999
        %v1295 = vpop.f32.mrf.mxu0
        %v1296 = vadd.f32 %v519, %v1295
        %v1297 = vpop.f32.mrf.mxu0
        %v1298 = vadd.f32 %v519, %v1297
        %1299 = vmatmul.bf16.gmra.mxu0 %v1002
        %v1300 = vpop.f32.mrf.mxu0
        %v1301 = vadd.f32 %v519, %v1300
        %v1302 = vpop.f32.mrf.mxu0
        %v1303 = vadd.f32 %v519, %v1302
        %1304 = vmatmul.bf16.gmra.mxu0 %v1005
        %v1305 = vpop.f32.mrf.mxu0
        %v1306 = vadd.f32 %v519, %v1305
        %v1307 = vpop.f32.mrf.mxu0
        %v1308 = vadd.f32 %v519, %v1307
        %1309 = vmatmul.bf16.gmra.mxu0 %v1008
        %v1310 = vpop.f32.mrf.mxu0
        %v1311 = vadd.f32 %v519, %v1310
        %v1312 = vpop.f32.mrf.mxu0
        %v1313 = vadd.f32 %v519, %v1312
        %1314 = vmatmul.bf16.gmra.mxu0 %v1011
        %v1315 = vpop.f32.mrf.mxu0
        %v1316 = vadd.f32 %v519, %v1315
        %v1317 = vpop.f32.mrf.mxu0
        %v1318 = vadd.f32 %v519, %v1317
        %1319 = vmatmul.bf16.gmra.mxu0 %v1014
        %v1320 = vpop.f32.mrf.mxu0
        %v1321 = vadd.f32 %v519, %v1320
        %v1322 = vpop.f32.mrf.mxu0
        %v1323 = vadd.f32 %v519, %v1322
        %1324 = vmatmul.bf16.gmra.mxu0 %v1017
        %v1325 = vpop.f32.mrf.mxu0
        %v1326 = vadd.f32 %v519, %v1325
        %v1327 = vpop.f32.mrf.mxu0
        %v1328 = vadd.f32 %v519, %v1327
        %1329 = vmatmul.bf16.gmra.mxu0 %v1020
        %v1330 = vpop.f32.mrf.mxu0
        %v1331 = vadd.f32 %v519, %v1330
        %v1332 = vpop.f32.mrf.mxu0
        %v1333 = vadd.f32 %v519, %v1332
        %1334 = vmatmul.bf16.gmra.mxu0 %v1023
        %v1335 = vpop.f32.mrf.mxu0
        %v1336 = vadd.f32 %v519, %v1335
        %v1337 = vpop.f32.mrf.mxu0
        %v1338 = vadd.f32 %v519, %v1337
        %1339 = vmatmul.bf16.gmra.mxu0 %v1026
        %v1340 = vpop.f32.mrf.mxu0
        %v1341 = vadd.f32 %v519, %v1340
        %v1342 = vpop.f32.mrf.mxu0
        %v1343 = vadd.f32 %v519, %v1342
        %1344 = vmatmul.bf16.gmra.mxu0 %v1029
        %v1345 = vpop.f32.mrf.mxu0
        %v1346 = vadd.f32 %v519, %v1345
        %v1347 = vpop.f32.mrf.mxu0
        %v1348 = vadd.f32 %v519, %v1347
        %1349 = vmatmul.bf16.gmra.mxu0 %v1032
        %v1350 = vpop.f32.mrf.mxu0
        %v1351 = vadd.f32 %v519, %v1350
        %v1352 = vpop.f32.mrf.mxu0
        %v1353 = vadd.f32 %v519, %v1352
        %1354 = vmatmul.bf16.gmra.mxu0 %v1035
        %v1355 = vpop.f32.mrf.mxu0
        %v1356 = vadd.f32 %v519, %v1355
        %v1357 = vpop.f32.mrf.mxu0
        %v1358 = vadd.f32 %v519, %v1357
        %1359 = vmatmul.bf16.gmra.mxu0 %v1038
        %v1360 = vpop.f32.mrf.mxu0
        %v1361 = vadd.f32 %v519, %v1360
        %v1362 = vpop.f32.mrf.mxu0
        %v1363 = vadd.f32 %v519, %v1362
        %1364 = vmatmul.bf16.gmra.mxu0 %v1041
        %v1365 = vpop.f32.mrf.mxu0
        %v1366 = vadd.f32 %v519, %v1365
        %v1367 = vpop.f32.mrf.mxu0
        %v1368 = vadd.f32 %v519, %v1367
        %1369 = vmatmul.bf16.gmra.mxu0 %v1044
        %v1370 = vpop.f32.mrf.mxu0
        %v1371 = vadd.f32 %v519, %v1370
        %v1372 = vpop.f32.mrf.mxu0
        %v1373 = vadd.f32 %v519, %v1372
        %1374 = vdwg.mxu0
        %vm1375 = vcmp.ge.f32.partialorder %v1056, 0.0
        %vm1376 = vcmp.ge.f32.partialorder %v1058, 0.0
        %vm1377 = vcmp.ge.f32.partialorder %v1061, 0.0
        %vm1378 = vcmp.ge.f32.partialorder %v1063, 0.0
        %vm1379 = vcmp.ge.f32.partialorder %v1066, 0.0
        %vm1380 = vcmp.ge.f32.partialorder %v1068, 0.0
        %vm1381 = vcmp.ge.f32.partialorder %v1071, 0.0
        %vm1382 = vcmp.ge.f32.partialorder %v1073, 0.0
        %vm1383 = vcmp.ge.f32.partialorder %v1076, 0.0
        %vm1384 = vcmp.ge.f32.partialorder %v1078, 0.0
        %vm1385 = vcmp.ge.f32.partialorder %v1081, 0.0
        %vm1386 = vcmp.ge.f32.partialorder %v1083, 0.0
        %vm1387 = vcmp.ge.f32.partialorder %v1086, 0.0
        %vm1388 = vcmp.ge.f32.partialorder %v1088, 0.0
        %vm1389 = vcmp.ge.f32.partialorder %v1091, 0.0
        %vm1390 = vcmp.ge.f32.partialorder %v1093, 0.0
        %vm1391 = vcmp.ge.f32.partialorder %v1096, 0.0
        %vm1392 = vcmp.ge.f32.partialorder %v1098, 0.0
        %vm1393 = vcmp.ge.f32.partialorder %v1101, 0.0
        %vm1394 = vcmp.ge.f32.partialorder %v1103, 0.0
        %vm1395 = vcmp.ge.f32.partialorder %v1106, 0.0
        %vm1396 = vcmp.ge.f32.partialorder %v1108, 0.0
        %vm1397 = vcmp.ge.f32.partialorder %v1111, 0.0
        %vm1398 = vcmp.ge.f32.partialorder %v1113, 0.0
        %vm1399 = vcmp.ge.f32.partialorder %v1116, 0.0
        %vm1400 = vcmp.ge.f32.partialorder %v1118, 0.0
        %vm1401 = vcmp.ge.f32.partialorder %v1121, 0.0
        %vm1402 = vcmp.ge.f32.partialorder %v1123, 0.0
        %vm1403 = vcmp.ge.f32.partialorder %v1126, 0.0
        %vm1404 = vcmp.ge.f32.partialorder %v1128, 0.0
        %vm1405 = vcmp.ge.f32.partialorder %v1131, 0.0
        %vm1406 = vcmp.ge.f32.partialorder %v1133, 0.0
        %vm1407 = vcmp.ge.f32.partialorder %v1136, 0.0
        %vm1408 = vcmp.ge.f32.partialorder %v1138, 0.0
        %vm1409 = vcmp.ge.f32.partialorder %v1141, 0.0
        %vm1410 = vcmp.ge.f32.partialorder %v1143, 0.0
        %vm1411 = vcmp.ge.f32.partialorder %v1146, 0.0
        %vm1412 = vcmp.ge.f32.partialorder %v1148, 0.0
        %vm1413 = vcmp.ge.f32.partialorder %v1151, 0.0
        %vm1414 = vcmp.ge.f32.partialorder %v1153, 0.0
        %vm1415 = vcmp.ge.f32.partialorder %v1156, 0.0
        %vm1416 = vcmp.ge.f32.partialorder %v1158, 0.0
        %vm1417 = vcmp.ge.f32.partialorder %v1161, 0.0
        %vm1418 = vcmp.ge.f32.partialorder %v1163, 0.0
        %vm1419 = vcmp.ge.f32.partialorder %v1166, 0.0
        %vm1420 = vcmp.ge.f32.partialorder %v1168, 0.0
        %vm1421 = vcmp.ge.f32.partialorder %v1171, 0.0
        %vm1422 = vcmp.ge.f32.partialorder %v1173, 0.0
        %vm1423 = vcmp.ge.f32.partialorder %v1176, 0.0
        %vm1424 = vcmp.ge.f32.partialorder %v1178, 0.0
        %vm1425 = vcmp.ge.f32.partialorder %v1181, 0.0
        %vm1426 = vcmp.ge.f32.partialorder %v1183, 0.0
        %vm1427 = vcmp.ge.f32.partialorder %v1186, 0.0
        %vm1428 = vcmp.ge.f32.partialorder %v1188, 0.0
        %vm1429 = vcmp.ge.f32.partialorder %v1191, 0.0
        %vm1430 = vcmp.ge.f32.partialorder %v1193, 0.0
        %vm1431 = vcmp.ge.f32.partialorder %v1196, 0.0
        %vm1432 = vcmp.ge.f32.partialorder %v1198, 0.0
        %vm1433 = vcmp.ge.f32.partialorder %v1201, 0.0
        %vm1434 = vcmp.ge.f32.partialorder %v1203, 0.0
        %vm1435 = vcmp.ge.f32.partialorder %v1206, 0.0
        %vm1436 = vcmp.ge.f32.partialorder %v1208, 0.0
        %vm1437 = vcmp.ge.f32.partialorder %v1211, 0.0
        %vm1438 = vcmp.ge.f32.partialorder %v1213, 0.0
        %vm1439 = vcmp.ge.f32.partialorder %v1216, 0.0
        %vm1440 = vcmp.ge.f32.partialorder %v1218, 0.0
        %vm1441 = vcmp.ge.f32.partialorder %v1221, 0.0
        %vm1442 = vcmp.ge.f32.partialorder %v1223, 0.0
        %vm1443 = vcmp.ge.f32.partialorder %v1226, 0.0
        %vm1444 = vcmp.ge.f32.partialorder %v1228, 0.0
        %vm1445 = vcmp.ge.f32.partialorder %v1231, 0.0
        %vm1446 = vcmp.ge.f32.partialorder %v1233, 0.0
        %vm1447 = vcmp.ge.f32.partialorder %v1236, 0.0
        %vm1448 = vcmp.ge.f32.partialorder %v1238, 0.0
        %vm1449 = vcmp.ge.f32.partialorder %v1241, 0.0
        %vm1450 = vcmp.ge.f32.partialorder %v1243, 0.0
        %vm1451 = vcmp.ge.f32.partialorder %v1246, 0.0
        %vm1452 = vcmp.ge.f32.partialorder %v1248, 0.0
        %vm1453 = vcmp.ge.f32.partialorder %v1251, 0.0
        %vm1454 = vcmp.ge.f32.partialorder %v1253, 0.0
        %vm1455 = vcmp.ge.f32.partialorder %v1256, 0.0
        %vm1456 = vcmp.ge.f32.partialorder %v1258, 0.0
        %vm1457 = vcmp.ge.f32.partialorder %v1261, 0.0
        %vm1458 = vcmp.ge.f32.partialorder %v1263, 0.0
        %vm1459 = vcmp.ge.f32.partialorder %v1266, 0.0
        %vm1460 = vcmp.ge.f32.partialorder %v1268, 0.0
        %vm1461 = vcmp.ge.f32.partialorder %v1271, 0.0
        %vm1462 = vcmp.ge.f32.partialorder %v1273, 0.0
        %vm1463 = vcmp.ge.f32.partialorder %v1276, 0.0
        %vm1464 = vcmp.ge.f32.partialorder %v1278, 0.0
        %vm1465 = vcmp.ge.f32.partialorder %v1281, 0.0
        %vm1466 = vcmp.ge.f32.partialorder %v1283, 0.0
        %vm1467 = vcmp.ge.f32.partialorder %v1286, 0.0
        %vm1468 = vcmp.ge.f32.partialorder %v1288, 0.0
        %vm1469 = vcmp.ge.f32.partialorder %v1291, 0.0
        %vm1470 = vcmp.ge.f32.partialorder %v1293, 0.0
        %vm1471 = vcmp.ge.f32.partialorder %v1296, 0.0
        %vm1472 = vcmp.ge.f32.partialorder %v1298, 0.0
        %vm1473 = vcmp.ge.f32.partialorder %v1301, 0.0
        %vm1474 = vcmp.ge.f32.partialorder %v1303, 0.0
        %vm1475 = vcmp.ge.f32.partialorder %v1306, 0.0
        %vm1476 = vcmp.ge.f32.partialorder %v1308, 0.0
        %vm1477 = vcmp.ge.f32.partialorder %v1311, 0.0
        %vm1478 = vcmp.ge.f32.partialorder %v1313, 0.0
        %vm1479 = vcmp.ge.f32.partialorder %v1316, 0.0
        %vm1480 = vcmp.ge.f32.partialorder %v1318, 0.0
        %vm1481 = vcmp.ge.f32.partialorder %v1321, 0.0
        %vm1482 = vcmp.ge.f32.partialorder %v1323, 0.0
        %vm1483 = vcmp.ge.f32.partialorder %v1326, 0.0
        %vm1484 = vcmp.ge.f32.partialorder %v1328, 0.0
        %vm1485 = vcmp.ge.f32.partialorder %v1331, 0.0
        %vm1486 = vcmp.ge.f32.partialorder %v1333, 0.0
        %vm1487 = vcmp.ge.f32.partialorder %v1336, 0.0
        %vm1488 = vcmp.ge.f32.partialorder %v1338, 0.0
        %vm1489 = vcmp.ge.f32.partialorder %v1341, 0.0
        %vm1490 = vcmp.ge.f32.partialorder %v1343, 0.0
        %vm1491 = vcmp.ge.f32.partialorder %v1346, 0.0
        %vm1492 = vcmp.ge.f32.partialorder %v1348, 0.0
        %vm1493 = vcmp.ge.f32.partialorder %v1351, 0.0
        %vm1494 = vcmp.ge.f32.partialorder %v1353, 0.0
        %vm1495 = vcmp.ge.f32.partialorder %v1356, 0.0
        %vm1496 = vcmp.ge.f32.partialorder %v1358, 0.0
        %vm1497 = vcmp.ge.f32.partialorder %v1361, 0.0
        %vm1498 = vcmp.ge.f32.partialorder %v1363, 0.0
        %vm1499 = vcmp.ge.f32.partialorder %v1366, 0.0
        %vm1500 = vcmp.ge.f32.partialorder %v1368, 0.0
        %vm1501 = vcmp.ge.f32.partialorder %v1371, 0.0
        %vm1502 = vcmp.ge.f32.partialorder %v1373, 0.0
        %v1503 = vmul.f32 %v1056, 0.01
        %v1504 = vmul.f32 %v1058, 0.01
        %v1505 = vmul.f32 %v1061, 0.01
        %v1506 = vmul.f32 %v1063, 0.01
        %v1507 = vmul.f32 %v1066, 0.01
        %v1508 = vmul.f32 %v1068, 0.01
        %v1509 = vmul.f32 %v1071, 0.01
        %v1510 = vmul.f32 %v1073, 0.01
        %v1511 = vmul.f32 %v1076, 0.01
        %v1512 = vmul.f32 %v1078, 0.01
        %v1513 = vmul.f32 %v1081, 0.01
        %v1514 = vmul.f32 %v1083, 0.01
        %v1515 = vmul.f32 %v1086, 0.01
        %v1516 = vmul.f32 %v1088, 0.01
        %v1517 = vmul.f32 %v1091, 0.01
        %v1518 = vmul.f32 %v1093, 0.01
        %v1519 = vmul.f32 %v1096, 0.01
        %v1520 = vmul.f32 %v1098, 0.01
        %v1521 = vmul.f32 %v1101, 0.01
        %v1522 = vmul.f32 %v1103, 0.01
        %v1523 = vmul.f32 %v1106, 0.01
        %v1524 = vmul.f32 %v1108, 0.01
        %v1525 = vmul.f32 %v1111, 0.01
        %v1526 = vmul.f32 %v1113, 0.01
        %v1527 = vmul.f32 %v1116, 0.01
        %v1528 = vmul.f32 %v1118, 0.01
        %v1529 = vmul.f32 %v1121, 0.01
        %v1530 = vmul.f32 %v1123, 0.01
        %v1531 = vmul.f32 %v1126, 0.01
        %v1532 = vmul.f32 %v1128, 0.01
        %v1533 = vmul.f32 %v1131, 0.01
        %v1534 = vmul.f32 %v1133, 0.01
        %v1535 = vmul.f32 %v1136, 0.01
        %v1536 = vmul.f32 %v1138, 0.01
        %v1537 = vmul.f32 %v1141, 0.01
        %v1538 = vmul.f32 %v1143, 0.01
        %v1539 = vmul.f32 %v1146, 0.01
        %v1540 = vmul.f32 %v1148, 0.01
        %v1541 = vmul.f32 %v1151, 0.01
        %v1542 = vmul.f32 %v1153, 0.01
        %v1543 = vmul.f32 %v1156, 0.01
        %v1544 = vmul.f32 %v1158, 0.01
        %v1545 = vmul.f32 %v1161, 0.01
        %v1546 = vmul.f32 %v1163, 0.01
        %v1547 = vmul.f32 %v1166, 0.01
        %v1548 = vmul.f32 %v1168, 0.01
        %v1549 = vmul.f32 %v1171, 0.01
        %v1550 = vmul.f32 %v1173, 0.01
        %v1551 = vmul.f32 %v1176, 0.01
        %v1552 = vmul.f32 %v1178, 0.01
        %v1553 = vmul.f32 %v1181, 0.01
        %v1554 = vmul.f32 %v1183, 0.01
        %v1555 = vmul.f32 %v1186, 0.01
        %v1556 = vmul.f32 %v1188, 0.01
        %v1557 = vmul.f32 %v1191, 0.01
        %v1558 = vmul.f32 %v1193, 0.01
        %v1559 = vmul.f32 %v1196, 0.01
        %v1560 = vmul.f32 %v1198, 0.01
        %v1561 = vmul.f32 %v1201, 0.01
        %v1562 = vmul.f32 %v1203, 0.01
        %v1563 = vmul.f32 %v1206, 0.01
        %v1564 = vmul.f32 %v1208, 0.01
        %v1565 = vmul.f32 %v1211, 0.01
        %v1566 = vmul.f32 %v1213, 0.01
        %v1567 = vmul.f32 %v1216, 0.01
        %v1568 = vmul.f32 %v1218, 0.01
        %v1569 = vmul.f32 %v1221, 0.01
        %v1570 = vmul.f32 %v1223, 0.01
        %v1571 = vmul.f32 %v1226, 0.01
        %v1572 = vmul.f32 %v1228, 0.01
        %v1573 = vmul.f32 %v1231, 0.01
        %v1574 = vmul.f32 %v1233, 0.01
        %v1575 = vmul.f32 %v1236, 0.01
        %v1576 = vmul.f32 %v1238, 0.01
        %v1577 = vmul.f32 %v1241, 0.01
        %v1578 = vmul.f32 %v1243, 0.01
        %v1579 = vmul.f32 %v1246, 0.01
        %v1580 = vmul.f32 %v1248, 0.01
        %v1581 = vmul.f32 %v1251, 0.01
        %v1582 = vmul.f32 %v1253, 0.01
        %v1583 = vmul.f32 %v1256, 0.01
        %v1584 = vmul.f32 %v1258, 0.01
        %v1585 = vmul.f32 %v1261, 0.01
        %v1586 = vmul.f32 %v1263, 0.01
        %v1587 = vmul.f32 %v1266, 0.01
        %v1588 = vmul.f32 %v1268, 0.01
        %v1589 = vmul.f32 %v1271, 0.01
        %v1590 = vmul.f32 %v1273, 0.01
        %v1591 = vmul.f32 %v1276, 0.01
        %v1592 = vmul.f32 %v1278, 0.01
        %v1593 = vmul.f32 %v1281, 0.01
        %v1594 = vmul.f32 %v1283, 0.01
        %v1595 = vmul.f32 %v1286, 0.01
        %v1596 = vmul.f32 %v1288, 0.01
        %v1597 = vmul.f32 %v1291, 0.01
        %v1598 = vmul.f32 %v1293, 0.01
        %v1599 = vmul.f32 %v1296, 0.01
        %v1600 = vmul.f32 %v1298, 0.01
        %v1601 = vmul.f32 %v1301, 0.01
        %v1602 = vmul.f32 %v1303, 0.01
        %v1603 = vmul.f32 %v1306, 0.01
        %v1604 = vmul.f32 %v1308, 0.01
        %v1605 = vmul.f32 %v1311, 0.01
        %v1606 = vmul.f32 %v1313, 0.01
        %v1607 = vmul.f32 %v1316, 0.01
        %v1608 = vmul.f32 %v1318, 0.01
        %v1609 = vmul.f32 %v1321, 0.01
        %v1610 = vmul.f32 %v1323, 0.01
        %v1611 = vmul.f32 %v1326, 0.01
        %v1612 = vmul.f32 %v1328, 0.01
        %v1613 = vmul.f32 %v1331, 0.01
        %v1614 = vmul.f32 %v1333, 0.01
        %v1615 = vmul.f32 %v1336, 0.01
        %v1616 = vmul.f32 %v1338, 0.01
        %v1617 = vmul.f32 %v1341, 0.01
        %v1618 = vmul.f32 %v1343, 0.01
        %v1619 = vmul.f32 %v1346, 0.01
        %v1620 = vmul.f32 %v1348, 0.01
        %v1621 = vmul.f32 %v1351, 0.01
        %v1622 = vmul.f32 %v1353, 0.01
        %v1623 = vmul.f32 %v1356, 0.01
        %v1624 = vmul.f32 %v1358, 0.01
        %v1625 = vmul.f32 %v1361, 0.01
        %v1626 = vmul.f32 %v1363, 0.01
        %v1627 = vmul.f32 %v1366, 0.01
        %v1628 = vmul.f32 %v1368, 0.01
        %v1629 = vmul.f32 %v1371, 0.01
        %v1630 = vmul.f32 %v1373, 0.01
        %v1631 = vsel %vm1375, %v1056, %v1503
        %v1632 = vsel %vm1376, %v1058, %v1504
        %v1633 = vsel %vm1377, %v1061, %v1505
        %v1634 = vsel %vm1378, %v1063, %v1506
        %v1635 = vsel %vm1379, %v1066, %v1507
        %v1636 = vsel %vm1380, %v1068, %v1508
        %v1637 = vsel %vm1381, %v1071, %v1509
        %v1638 = vsel %vm1382, %v1073, %v1510
        %v1639 = vsel %vm1383, %v1076, %v1511
        %v1640 = vsel %vm1384, %v1078, %v1512
        %v1641 = vsel %vm1385, %v1081, %v1513
        %v1642 = vsel %vm1386, %v1083, %v1514
        %v1643 = vsel %vm1387, %v1086, %v1515
        %v1644 = vsel %vm1388, %v1088, %v1516
        %v1645 = vsel %vm1389, %v1091, %v1517
        %v1646 = vsel %vm1390, %v1093, %v1518
        %v1647 = vsel %vm1391, %v1096, %v1519
        %v1648 = vsel %vm1392, %v1098, %v1520
        %v1649 = vsel %vm1393, %v1101, %v1521
        %v1650 = vsel %vm1394, %v1103, %v1522
        %v1651 = vsel %vm1395, %v1106, %v1523
        %v1652 = vsel %vm1396, %v1108, %v1524
        %v1653 = vsel %vm1397, %v1111, %v1525
        %v1654 = vsel %vm1398, %v1113, %v1526
        %v1655 = vsel %vm1399, %v1116, %v1527
        %v1656 = vsel %vm1400, %v1118, %v1528
        %v1657 = vsel %vm1401, %v1121, %v1529
        %v1658 = vsel %vm1402, %v1123, %v1530
        %v1659 = vsel %vm1403, %v1126, %v1531
        %v1660 = vsel %vm1404, %v1128, %v1532
        %v1661 = vsel %vm1405, %v1131, %v1533
        %v1662 = vsel %vm1406, %v1133, %v1534
        %v1663 = vsel %vm1407, %v1136, %v1535
        %v1664 = vsel %vm1408, %v1138, %v1536
        %v1665 = vsel %vm1409, %v1141, %v1537
        %v1666 = vsel %vm1410, %v1143, %v1538
        %v1667 = vsel %vm1411, %v1146, %v1539
        %v1668 = vsel %vm1412, %v1148, %v1540
        %v1669 = vsel %vm1413, %v1151, %v1541
        %v1670 = vsel %vm1414, %v1153, %v1542
        %v1671 = vsel %vm1415, %v1156, %v1543
        %v1672 = vsel %vm1416, %v1158, %v1544
        %v1673 = vsel %vm1417, %v1161, %v1545
        %v1674 = vsel %vm1418, %v1163, %v1546
        %v1675 = vsel %vm1419, %v1166, %v1547
        %v1676 = vsel %vm1420, %v1168, %v1548
        %v1677 = vsel %vm1421, %v1171, %v1549
        %v1678 = vsel %vm1422, %v1173, %v1550
        %v1679 = vsel %vm1423, %v1176, %v1551
        %v1680 = vsel %vm1424, %v1178, %v1552
        %v1681 = vsel %vm1425, %v1181, %v1553
        %v1682 = vsel %vm1426, %v1183, %v1554
        %v1683 = vsel %vm1427, %v1186, %v1555
        %v1684 = vsel %vm1428, %v1188, %v1556
        %v1685 = vsel %vm1429, %v1191, %v1557
        %v1686 = vsel %vm1430, %v1193, %v1558
        %v1687 = vsel %vm1431, %v1196, %v1559
        %v1688 = vsel %vm1432, %v1198, %v1560
        %v1689 = vsel %vm1433, %v1201, %v1561
        %v1690 = vsel %vm1434, %v1203, %v1562
        %v1691 = vsel %vm1435, %v1206, %v1563
        %v1692 = vsel %vm1436, %v1208, %v1564
        %v1693 = vsel %vm1437, %v1211, %v1565
        %v1694 = vsel %vm1438, %v1213, %v1566
        %v1695 = vsel %vm1439, %v1216, %v1567
        %v1696 = vsel %vm1440, %v1218, %v1568
        %v1697 = vsel %vm1441, %v1221, %v1569
        %v1698 = vsel %vm1442, %v1223, %v1570
        %v1699 = vsel %vm1443, %v1226, %v1571
        %v1700 = vsel %vm1444, %v1228, %v1572
        %v1701 = vsel %vm1445, %v1231, %v1573
        %v1702 = vsel %vm1446, %v1233, %v1574
        %v1703 = vsel %vm1447, %v1236, %v1575
        %v1704 = vsel %vm1448, %v1238, %v1576
        %v1705 = vsel %vm1449, %v1241, %v1577
        %v1706 = vsel %vm1450, %v1243, %v1578
        %v1707 = vsel %vm1451, %v1246, %v1579
        %v1708 = vsel %vm1452, %v1248, %v1580
        %v1709 = vsel %vm1453, %v1251, %v1581
        %v1710 = vsel %vm1454, %v1253, %v1582
        %v1711 = vsel %vm1455, %v1256, %v1583
        %v1712 = vsel %vm1456, %v1258, %v1584
        %v1713 = vsel %vm1457, %v1261, %v1585
        %v1714 = vsel %vm1458, %v1263, %v1586
        %v1715 = vsel %vm1459, %v1266, %v1587
        %v1716 = vsel %vm1460, %v1268, %v1588
        %v1717 = vsel %vm1461, %v1271, %v1589
        %v1718 = vsel %vm1462, %v1273, %v1590
        %v1719 = vsel %vm1463, %v1276, %v1591
        %v1720 = vsel %vm1464, %v1278, %v1592
        %v1721 = vsel %vm1465, %v1281, %v1593
        %v1722 = vsel %vm1466, %v1283, %v1594
        %v1723 = vsel %vm1467, %v1286, %v1595
        %v1724 = vsel %vm1468, %v1288, %v1596
        %v1725 = vsel %vm1469, %v1291, %v1597
        %v1726 = vsel %vm1470, %v1293, %v1598
        %v1727 = vsel %vm1471, %v1296, %v1599
        %v1728 = vsel %vm1472, %v1298, %v1600
        %v1729 = vsel %vm1473, %v1301, %v1601
        %v1730 = vsel %vm1474, %v1303, %v1602
        %v1731 = vsel %vm1475, %v1306, %v1603
        %v1732 = vsel %vm1476, %v1308, %v1604
        %v1733 = vsel %vm1477, %v1311, %v1605
        %v1734 = vsel %vm1478, %v1313, %v1606
        %v1735 = vsel %vm1479, %v1316, %v1607
        %v1736 = vsel %vm1480, %v1318, %v1608
        %v1737 = vsel %vm1481, %v1321, %v1609
        %v1738 = vsel %vm1482, %v1323, %v1610
        %v1739 = vsel %vm1483, %v1326, %v1611
        %v1740 = vsel %vm1484, %v1328, %v1612
        %v1741 = vsel %vm1485, %v1331, %v1613
        %v1742 = vsel %vm1486, %v1333, %v1614
        %v1743 = vsel %vm1487, %v1336, %v1615
        %v1744 = vsel %vm1488, %v1338, %v1616
        %v1745 = vsel %vm1489, %v1341, %v1617
        %v1746 = vsel %vm1490, %v1343, %v1618
        %v1747 = vsel %vm1491, %v1346, %v1619
        %v1748 = vsel %vm1492, %v1348, %v1620
        %v1749 = vsel %vm1493, %v1351, %v1621
        %v1750 = vsel %vm1494, %v1353, %v1622
        %v1751 = vsel %vm1495, %v1356, %v1623
        %v1752 = vsel %vm1496, %v1358, %v1624
        %v1753 = vsel %vm1497, %v1361, %v1625
        %v1754 = vsel %vm1498, %v1363, %v1626
        %v1755 = vsel %vm1499, %v1366, %v1627
        %v1756 = vsel %vm1500, %v1368, %v1628
        %v1757 = vsel %vm1501, %v1371, %v1629
        %v1758 = vsel %vm1502, %v1373, %v1630
        %1759 = vst.msk [vmem:[#allocation7] sm:$0xff] %vm853, %v1631
        %1760 = vst.msk [vmem:[#allocation7 + $0x8] sm:$0xff] %vm853, %v1632
        %1761 = vst.msk [vmem:[#allocation7 + $0x10] sm:$0xff] %vm853, %v1633
        %1762 = vst.msk [vmem:[#allocation7 + $0x18] sm:$0xff] %vm853, %v1634
        %1763 = vst.msk [vmem:[#allocation7 + $0x20] sm:$0xff] %vm853, %v1635
        %1764 = vst.msk [vmem:[#allocation7 + $0x28] sm:$0xff] %vm853, %v1636
        %1765 = vst.msk [vmem:[#allocation7 + $0x30] sm:$0xff] %vm853, %v1637
        %1766 = vst.msk [vmem:[#allocation7 + $0x38] sm:$0xff] %vm853, %v1638
        %1767 = vst.msk [vmem:[#allocation7 + $0x40] sm:$0xff] %vm853, %v1639
        %1768 = vst.msk [vmem:[#allocation7 + $0x48] sm:$0xff] %vm853, %v1640
        %1769 = vst.msk [vmem:[#allocation7 + $0x50] sm:$0xff] %vm853, %v1641
        %1770 = vst.msk [vmem:[#allocation7 + $0x58] sm:$0xff] %vm853, %v1642
        %1771 = vst.msk [vmem:[#allocation7 + $0x60] sm:$0xff] %vm853, %v1643
        %1772 = vst.msk [vmem:[#allocation7 + $0x68] sm:$0xff] %vm853, %v1644
        %1773 = vst.msk [vmem:[#allocation7 + $0x70] sm:$0xff] %vm853, %v1645
        %1774 = vst.msk [vmem:[#allocation7 + $0x78] sm:$0xff] %vm853, %v1646
        %1775 = vst.msk [vmem:[#allocation7 + $0x80] sm:$0xff] %vm853, %v1647
        %1776 = vst.msk [vmem:[#allocation7 + $0x88] sm:$0xff] %vm853, %v1648
        %1777 = vst.msk [vmem:[#allocation7 + $0x90] sm:$0xff] %vm853, %v1649
        %1778 = vst.msk [vmem:[#allocation7 + $0x98] sm:$0xff] %vm853, %v1650
        %1779 = vst.msk [vmem:[#allocation7 + $0xa0] sm:$0xff] %vm853, %v1651
        %1780 = vst.msk [vmem:[#allocation7 + $0xa8] sm:$0xff] %vm853, %v1652
        %1781 = vst.msk [vmem:[#allocation7 + $0xb0] sm:$0xff] %vm853, %v1653
        %1782 = vst.msk [vmem:[#allocation7 + $0xb8] sm:$0xff] %vm853, %v1654
        %1783 = vst.msk [vmem:[#allocation7 + $0xc0] sm:$0xff] %vm853, %v1655
        %1784 = vst.msk [vmem:[#allocation7 + $0xc8] sm:$0xff] %vm853, %v1656
        %1785 = vst.msk [vmem:[#allocation7 + $0xd0] sm:$0xff] %vm853, %v1657
        %1786 = vst.msk [vmem:[#allocation7 + $0xd8] sm:$0xff] %vm853, %v1658
        %1787 = vst.msk [vmem:[#allocation7 + $0xe0] sm:$0xff] %vm853, %v1659
        %1788 = vst.msk [vmem:[#allocation7 + $0xe8] sm:$0xff] %vm853, %v1660
        %1789 = vst.msk [vmem:[#allocation7 + $0xf0] sm:$0xff] %vm853, %v1661
        %1790 = vst.msk [vmem:[#allocation7 + $0xf8] sm:$0xff] %vm853, %v1662
        %1791 = vst.msk [vmem:[#allocation7 + $0x100] sm:$0xff] %vm853, %v1663
        %1792 = vst.msk [vmem:[#allocation7 + $0x108] sm:$0xff] %vm853, %v1664
        %1793 = vst.msk [vmem:[#allocation7 + $0x110] sm:$0xff] %vm853, %v1665
        %1794 = vst.msk [vmem:[#allocation7 + $0x118] sm:$0xff] %vm853, %v1666
        %1795 = vst.msk [vmem:[#allocation7 + $0x120] sm:$0xff] %vm853, %v1667
        %1796 = vst.msk [vmem:[#allocation7 + $0x128] sm:$0xff] %vm853, %v1668
        %1797 = vst.msk [vmem:[#allocation7 + $0x130] sm:$0xff] %vm853, %v1669
        %1798 = vst.msk [vmem:[#allocation7 + $0x138] sm:$0xff] %vm853, %v1670
        %1799 = vst.msk [vmem:[#allocation7 + $0x140] sm:$0xff] %vm853, %v1671
        %1800 = vst.msk [vmem:[#allocation7 + $0x148] sm:$0xff] %vm853, %v1672
        %1801 = vst.msk [vmem:[#allocation7 + $0x150] sm:$0xff] %vm853, %v1673
        %1802 = vst.msk [vmem:[#allocation7 + $0x158] sm:$0xff] %vm853, %v1674
        %1803 = vst.msk [vmem:[#allocation7 + $0x160] sm:$0xff] %vm853, %v1675
        %1804 = vst.msk [vmem:[#allocation7 + $0x168] sm:$0xff] %vm853, %v1676
        %1805 = vst.msk [vmem:[#allocation7 + $0x170] sm:$0xff] %vm853, %v1677
        %1806 = vst.msk [vmem:[#allocation7 + $0x178] sm:$0xff] %vm853, %v1678
        %1807 = vst.msk [vmem:[#allocation7 + $0x180] sm:$0xff] %vm853, %v1679
        %1808 = vst.msk [vmem:[#allocation7 + $0x188] sm:$0xff] %vm853, %v1680
        %1809 = vst.msk [vmem:[#allocation7 + $0x190] sm:$0xff] %vm853, %v1681
        %1810 = vst.msk [vmem:[#allocation7 + $0x198] sm:$0xff] %vm853, %v1682
        %1811 = vst.msk [vmem:[#allocation7 + $0x1a0] sm:$0xff] %vm853, %v1683
        %1812 = vst.msk [vmem:[#allocation7 + $0x1a8] sm:$0xff] %vm853, %v1684
        %1813 = vst.msk [vmem:[#allocation7 + $0x1b0] sm:$0xff] %vm853, %v1685
        %1814 = vst.msk [vmem:[#allocation7 + $0x1b8] sm:$0xff] %vm853, %v1686
        %1815 = vst.msk [vmem:[#allocation7 + $0x1c0] sm:$0xff] %vm853, %v1687
        %1816 = vst.msk [vmem:[#allocation7 + $0x1c8] sm:$0xff] %vm853, %v1688
        %1817 = vst.msk [vmem:[#allocation7 + $0x1d0] sm:$0xff] %vm853, %v1689
        %1818 = vst.msk [vmem:[#allocation7 + $0x1d8] sm:$0xff] %vm853, %v1690
        %1819 = vst.msk [vmem:[#allocation7 + $0x1e0] sm:$0xff] %vm853, %v1691
        %1820 = vst.msk [vmem:[#allocation7 + $0x1e8] sm:$0xff] %vm853, %v1692
        %1821 = vst.msk [vmem:[#allocation7 + $0x1f0] sm:$0xff] %vm853, %v1693
        %1822 = vst.msk [vmem:[#allocation7 + $0x1f8] sm:$0xff] %vm853, %v1694
        %1823 = vst.msk [vmem:[#allocation7 + $0x200] sm:$0xff] %vm853, %v1695
        %1824 = vst.msk [vmem:[#allocation7 + $0x208] sm:$0xff] %vm853, %v1696
        %1825 = vst.msk [vmem:[#allocation7 + $0x210] sm:$0xff] %vm853, %v1697
        %1826 = vst.msk [vmem:[#allocation7 + $0x218] sm:$0xff] %vm853, %v1698
        %1827 = vst.msk [vmem:[#allocation7 + $0x220] sm:$0xff] %vm853, %v1699
        %1828 = vst.msk [vmem:[#allocation7 + $0x228] sm:$0xff] %vm853, %v1700
        %1829 = vst.msk [vmem:[#allocation7 + $0x230] sm:$0xff] %vm853, %v1701
        %1830 = vst.msk [vmem:[#allocation7 + $0x238] sm:$0xff] %vm853, %v1702
        %1831 = vst.msk [vmem:[#allocation7 + $0x240] sm:$0xff] %vm853, %v1703
        %1832 = vst.msk [vmem:[#allocation7 + $0x248] sm:$0xff] %vm853, %v1704
        %1833 = vst.msk [vmem:[#allocation7 + $0x250] sm:$0xff] %vm853, %v1705
        %1834 = vst.msk [vmem:[#allocation7 + $0x258] sm:$0xff] %vm853, %v1706
        %1835 = vst.msk [vmem:[#allocation7 + $0x260] sm:$0xff] %vm853, %v1707
        %1836 = vst.msk [vmem:[#allocation7 + $0x268] sm:$0xff] %vm853, %v1708
        %1837 = vst.msk [vmem:[#allocation7 + $0x270] sm:$0xff] %vm853, %v1709
        %1838 = vst.msk [vmem:[#allocation7 + $0x278] sm:$0xff] %vm853, %v1710
        %1839 = vst.msk [vmem:[#allocation7 + $0x280] sm:$0xff] %vm853, %v1711
        %1840 = vst.msk [vmem:[#allocation7 + $0x288] sm:$0xff] %vm853, %v1712
        %1841 = vst.msk [vmem:[#allocation7 + $0x290] sm:$0xff] %vm853, %v1713
        %1842 = vst.msk [vmem:[#allocation7 + $0x298] sm:$0xff] %vm853, %v1714
        %1843 = vst.msk [vmem:[#allocation7 + $0x2a0] sm:$0xff] %vm853, %v1715
        %1844 = vst.msk [vmem:[#allocation7 + $0x2a8] sm:$0xff] %vm853, %v1716
        %1845 = vst.msk [vmem:[#allocation7 + $0x2b0] sm:$0xff] %vm853, %v1717
        %1846 = vst.msk [vmem:[#allocation7 + $0x2b8] sm:$0xff] %vm853, %v1718
        %1847 = vst.msk [vmem:[#allocation7 + $0x2c0] sm:$0xff] %vm853, %v1719
        %1848 = vst.msk [vmem:[#allocation7 + $0x2c8] sm:$0xff] %vm853, %v1720
        %1849 = vst.msk [vmem:[#allocation7 + $0x2d0] sm:$0xff] %vm853, %v1721
        %1850 = vst.msk [vmem:[#allocation7 + $0x2d8] sm:$0xff] %vm853, %v1722
        %1851 = vst.msk [vmem:[#allocation7 + $0x2e0] sm:$0xff] %vm853, %v1723
        %1852 = vst.msk [vmem:[#allocation7 + $0x2e8] sm:$0xff] %vm853, %v1724
        %1853 = vst.msk [vmem:[#allocation7 + $0x2f0] sm:$0xff] %vm853, %v1725
        %1854 = vst.msk [vmem:[#allocation7 + $0x2f8] sm:$0xff] %vm853, %v1726
        %1855 = vst.msk [vmem:[#allocation7 + $0x300] sm:$0xff] %vm853, %v1727
        %1856 = vst.msk [vmem:[#allocation7 + $0x308] sm:$0xff] %vm853, %v1728
        %1857 = vst.msk [vmem:[#allocation7 + $0x310] sm:$0xff] %vm853, %v1729
        %1858 = vst.msk [vmem:[#allocation7 + $0x318] sm:$0xff] %vm853, %v1730
        %1859 = vst.msk [vmem:[#allocation7 + $0x320] sm:$0xff] %vm853, %v1731
        %1860 = vst.msk [vmem:[#allocation7 + $0x328] sm:$0xff] %vm853, %v1732
        %1861 = vst.msk [vmem:[#allocation7 + $0x330] sm:$0xff] %vm853, %v1733
        %1862 = vst.msk [vmem:[#allocation7 + $0x338] sm:$0xff] %vm853, %v1734
        %1863 = vst.msk [vmem:[#allocation7 + $0x340] sm:$0xff] %vm853, %v1735
        %1864 = vst.msk [vmem:[#allocation7 + $0x348] sm:$0xff] %vm853, %v1736
        %1865 = vst.msk [vmem:[#allocation7 + $0x350] sm:$0xff] %vm853, %v1737
        %1866 = vst.msk [vmem:[#allocation7 + $0x358] sm:$0xff] %vm853, %v1738
        %1867 = vst.msk [vmem:[#allocation7 + $0x360] sm:$0xff] %vm853, %v1739
        %1868 = vst.msk [vmem:[#allocation7 + $0x368] sm:$0xff] %vm853, %v1740
        %1869 = vst.msk [vmem:[#allocation7 + $0x370] sm:$0xff] %vm853, %v1741
        %1870 = vst.msk [vmem:[#allocation7 + $0x378] sm:$0xff] %vm853, %v1742
        %1871 = vst.msk [vmem:[#allocation7 + $0x380] sm:$0xff] %vm853, %v1743
        %1872 = vst.msk [vmem:[#allocation7 + $0x388] sm:$0xff] %vm853, %v1744
        %1873 = vst.msk [vmem:[#allocation7 + $0x390] sm:$0xff] %vm853, %v1745
        %1874 = vst.msk [vmem:[#allocation7 + $0x398] sm:$0xff] %vm853, %v1746
        %1875 = vst.msk [vmem:[#allocation7 + $0x3a0] sm:$0xff] %vm853, %v1747
        %1876 = vst.msk [vmem:[#allocation7 + $0x3a8] sm:$0xff] %vm853, %v1748
        %1877 = vst.msk [vmem:[#allocation7 + $0x3b0] sm:$0xff] %vm853, %v1749
        %1878 = vst.msk [vmem:[#allocation7 + $0x3b8] sm:$0xff] %vm853, %v1750
        %1879 = vst.msk [vmem:[#allocation7 + $0x3c0] sm:$0xff] %vm853, %v1751
        %1880 = vst.msk [vmem:[#allocation7 + $0x3c8] sm:$0xff] %vm853, %v1752
        %1881 = vst.msk [vmem:[#allocation7 + $0x3d0] sm:$0xff] %vm853, %v1753
        %1882 = vst.msk [vmem:[#allocation7 + $0x3d8] sm:$0xff] %vm853, %v1754
        %1883 = vst.msk [vmem:[#allocation7 + $0x3e0] sm:$0xff] %vm853, %v1755
        %1884 = vst.msk [vmem:[#allocation7 + $0x3e8] sm:$0xff] %vm853, %v1756
        %1885 = vst.msk [vmem:[#allocation7 + $0x3f0] sm:$0xff] %vm853, %v1757
        %1886 = vst.msk [vmem:[#allocation7 + $0x3f8] sm:$0xff] %vm853, %v1758
        %v1887 = vld [vmem:[#allocation7] ss:$2 sm:$0xff]
        %s1888 = scalar_lea.vmem [#allocation7], 16
        %v1889 = vld [vmem:[%s1888] ss:$2 sm:$0xff]
        %s1890 = scalar_lea.vmem [#allocation7], 32
        %v1891 = vld [vmem:[%s1890] ss:$2 sm:$0xff]
        %s1892 = scalar_lea.vmem [#allocation7], 48
        %v1893 = vld [vmem:[%s1892] ss:$2 sm:$0xff]
        %s1894 = scalar_lea.vmem [#allocation7], 64
        %v1895 = vld [vmem:[%s1894] ss:$2 sm:$0xff]
        %s1896 = scalar_lea.vmem [#allocation7], 80
        %v1897 = vld [vmem:[%s1896] ss:$2 sm:$0xff]
        %s1898 = scalar_lea.vmem [#allocation7], 96
        %v1899 = vld [vmem:[%s1898] ss:$2 sm:$0xff]
        %s1900 = scalar_lea.vmem [#allocation7], 112
        %v1901 = vld [vmem:[%s1900] ss:$2 sm:$0xff]
        %s1902 = scalar_lea.vmem [#allocation7], 128
        %v1903 = vld [vmem:[%s1902] ss:$2 sm:$0xff]
        %s1904 = scalar_lea.vmem [#allocation7], 144
        %v1905 = vld [vmem:[%s1904] ss:$2 sm:$0xff]
        %s1906 = scalar_lea.vmem [#allocation7], 160
        %v1907 = vld [vmem:[%s1906] ss:$2 sm:$0xff]
        %s1908 = scalar_lea.vmem [#allocation7], 176
        %v1909 = vld [vmem:[%s1908] ss:$2 sm:$0xff]
        %s1910 = scalar_lea.vmem [#allocation7], 192
        %v1911 = vld [vmem:[%s1910] ss:$2 sm:$0xff]
        %s1912 = scalar_lea.vmem [#allocation7], 208
        %v1913 = vld [vmem:[%s1912] ss:$2 sm:$0xff]
        %s1914 = scalar_lea.vmem [#allocation7], 224
        %v1915 = vld [vmem:[%s1914] ss:$2 sm:$0xff]
        %s1916 = scalar_lea.vmem [#allocation7], 240
        %v1917 = vld [vmem:[%s1916] ss:$2 sm:$0xff]
        %s1918 = scalar_lea.vmem [#allocation7], 256
        %v1919 = vld [vmem:[%s1918] ss:$2 sm:$0xff]
        %s1920 = scalar_lea.vmem [#allocation7], 272
        %v1921 = vld [vmem:[%s1920] ss:$2 sm:$0xff]
        %s1922 = scalar_lea.vmem [#allocation7], 288
        %v1923 = vld [vmem:[%s1922] ss:$2 sm:$0xff]
        %s1924 = scalar_lea.vmem [#allocation7], 304
        %v1925 = vld [vmem:[%s1924] ss:$2 sm:$0xff]
        %s1926 = scalar_lea.vmem [#allocation7], 320
        %v1927 = vld [vmem:[%s1926] ss:$2 sm:$0xff]
        %s1928 = scalar_lea.vmem [#allocation7], 336
        %v1929 = vld [vmem:[%s1928] ss:$2 sm:$0xff]
        %s1930 = scalar_lea.vmem [#allocation7], 352
        %v1931 = vld [vmem:[%s1930] ss:$2 sm:$0xff]
        %s1932 = scalar_lea.vmem [#allocation7], 368
        %v1933 = vld [vmem:[%s1932] ss:$2 sm:$0xff]
        %s1934 = scalar_lea.vmem [#allocation7], 384
        %v1935 = vld [vmem:[%s1934] ss:$2 sm:$0xff]
        %s1936 = scalar_lea.vmem [#allocation7], 400
        %v1937 = vld [vmem:[%s1936] ss:$2 sm:$0xff]
        %s1938 = scalar_lea.vmem [#allocation7], 416
        %v1939 = vld [vmem:[%s1938] ss:$2 sm:$0xff]
        %s1940 = scalar_lea.vmem [#allocation7], 432
        %v1941 = vld [vmem:[%s1940] ss:$2 sm:$0xff]
        %s1942 = scalar_lea.vmem [#allocation7], 448
        %v1943 = vld [vmem:[%s1942] ss:$2 sm:$0xff]
        %s1944 = scalar_lea.vmem [#allocation7], 464
        %v1945 = vld [vmem:[%s1944] ss:$2 sm:$0xff]
        %s1946 = scalar_lea.vmem [#allocation7], 480
        %v1947 = vld [vmem:[%s1946] ss:$2 sm:$0xff]
        %s1948 = scalar_lea.vmem [#allocation7], 496
        %v1949 = vld [vmem:[%s1948] ss:$2 sm:$0xff]
        %s1950 = scalar_lea.vmem [#allocation7], 512
        %v1951 = vld [vmem:[%s1950] ss:$2 sm:$0xff]
        %s1952 = scalar_lea.vmem [#allocation7], 528
        %v1953 = vld [vmem:[%s1952] ss:$2 sm:$0xff]
        %s1954 = scalar_lea.vmem [#allocation7], 544
        %v1955 = vld [vmem:[%s1954] ss:$2 sm:$0xff]
        %s1956 = scalar_lea.vmem [#allocation7], 560
        %v1957 = vld [vmem:[%s1956] ss:$2 sm:$0xff]
        %s1958 = scalar_lea.vmem [#allocation7], 576
        %v1959 = vld [vmem:[%s1958] ss:$2 sm:$0xff]
        %s1960 = scalar_lea.vmem [#allocation7], 592
        %v1961 = vld [vmem:[%s1960] ss:$2 sm:$0xff]
        %s1962 = scalar_lea.vmem [#allocation7], 608
        %v1963 = vld [vmem:[%s1962] ss:$2 sm:$0xff]
        %s1964 = scalar_lea.vmem [#allocation7], 624
        %v1965 = vld [vmem:[%s1964] ss:$2 sm:$0xff]
        %s1966 = scalar_lea.vmem [#allocation7], 640
        %v1967 = vld [vmem:[%s1966] ss:$2 sm:$0xff]
        %s1968 = scalar_lea.vmem [#allocation7], 656
        %v1969 = vld [vmem:[%s1968] ss:$2 sm:$0xff]
        %s1970 = scalar_lea.vmem [#allocation7], 672
        %v1971 = vld [vmem:[%s1970] ss:$2 sm:$0xff]
        %s1972 = scalar_lea.vmem [#allocation7], 688
        %v1973 = vld [vmem:[%s1972] ss:$2 sm:$0xff]
        %s1974 = scalar_lea.vmem [#allocation7], 704
        %v1975 = vld [vmem:[%s1974] ss:$2 sm:$0xff]
        %s1976 = scalar_lea.vmem [#allocation7], 720
        %v1977 = vld [vmem:[%s1976] ss:$2 sm:$0xff]
        %s1978 = scalar_lea.vmem [#allocation7], 736
        %v1979 = vld [vmem:[%s1978] ss:$2 sm:$0xff]
        %s1980 = scalar_lea.vmem [#allocation7], 752
        %v1981 = vld [vmem:[%s1980] ss:$2 sm:$0xff]
        %s1982 = scalar_lea.vmem [#allocation7], 768
        %v1983 = vld [vmem:[%s1982] ss:$2 sm:$0xff]
        %s1984 = scalar_lea.vmem [#allocation7], 784
        %v1985 = vld [vmem:[%s1984] ss:$2 sm:$0xff]
        %s1986 = scalar_lea.vmem [#allocation7], 800
        %v1987 = vld [vmem:[%s1986] ss:$2 sm:$0xff]
        %s1988 = scalar_lea.vmem [#allocation7], 816
        %v1989 = vld [vmem:[%s1988] ss:$2 sm:$0xff]
        %s1990 = scalar_lea.vmem [#allocation7], 832
        %v1991 = vld [vmem:[%s1990] ss:$2 sm:$0xff]
        %s1992 = scalar_lea.vmem [#allocation7], 848
        %v1993 = vld [vmem:[%s1992] ss:$2 sm:$0xff]
        %s1994 = scalar_lea.vmem [#allocation7], 864
        %v1995 = vld [vmem:[%s1994] ss:$2 sm:$0xff]
        %s1996 = scalar_lea.vmem [#allocation7], 880
        %v1997 = vld [vmem:[%s1996] ss:$2 sm:$0xff]
        %s1998 = scalar_lea.vmem [#allocation7], 896
        %v1999 = vld [vmem:[%s1998] ss:$2 sm:$0xff]
        %s2000 = scalar_lea.vmem [#allocation7], 912
        %v2001 = vld [vmem:[%s2000] ss:$2 sm:$0xff]
        %s2002 = scalar_lea.vmem [#allocation7], 928
        %v2003 = vld [vmem:[%s2002] ss:$2 sm:$0xff]
        %s2004 = scalar_lea.vmem [#allocation7], 944
        %v2005 = vld [vmem:[%s2004] ss:$2 sm:$0xff]
        %s2006 = scalar_lea.vmem [#allocation7], 960
        %v2007 = vld [vmem:[%s2006] ss:$2 sm:$0xff]
        %s2008 = scalar_lea.vmem [#allocation7], 976
        %v2009 = vld [vmem:[%s2008] ss:$2 sm:$0xff]
        %s2010 = scalar_lea.vmem [#allocation7], 992
        %v2011 = vld [vmem:[%s2010] ss:$2 sm:$0xff]
        %s2012 = scalar_lea.vmem [#allocation7], 1008
        %v2013 = vld [vmem:[%s2012] ss:$2 sm:$0xff]
        %s2014 = scalar_lea.vmem [#allocation7], 1
        %v2015 = vld [vmem:[%s2014] ss:$2 sm:$0xff]
        %s2016 = scalar_lea.vmem [#allocation7], 17
        %v2017 = vld [vmem:[%s2016] ss:$2 sm:$0xff]
        %s2018 = scalar_lea.vmem [#allocation7], 33
        %v2019 = vld [vmem:[%s2018] ss:$2 sm:$0xff]
        %s2020 = scalar_lea.vmem [#allocation7], 49
        %v2021 = vld [vmem:[%s2020] ss:$2 sm:$0xff]
        %s2022 = scalar_lea.vmem [#allocation7], 65
        %v2023 = vld [vmem:[%s2022] ss:$2 sm:$0xff]
        %s2024 = scalar_lea.vmem [#allocation7], 81
        %v2025 = vld [vmem:[%s2024] ss:$2 sm:$0xff]
        %s2026 = scalar_lea.vmem [#allocation7], 97
        %v2027 = vld [vmem:[%s2026] ss:$2 sm:$0xff]
        %s2028 = scalar_lea.vmem [#allocation7], 113
        %v2029 = vld [vmem:[%s2028] ss:$2 sm:$0xff]
        %s2030 = scalar_lea.vmem [#allocation7], 129
        %v2031 = vld [vmem:[%s2030] ss:$2 sm:$0xff]
        %s2032 = scalar_lea.vmem [#allocation7], 145
        %v2033 = vld [vmem:[%s2032] ss:$2 sm:$0xff]
        %s2034 = scalar_lea.vmem [#allocation7], 161
        %v2035 = vld [vmem:[%s2034] ss:$2 sm:$0xff]
        %s2036 = scalar_lea.vmem [#allocation7], 177
        %v2037 = vld [vmem:[%s2036] ss:$2 sm:$0xff]
        %s2038 = scalar_lea.vmem [#allocation7], 193
        %v2039 = vld [vmem:[%s2038] ss:$2 sm:$0xff]
        %s2040 = scalar_lea.vmem [#allocation7], 209
        %v2041 = vld [vmem:[%s2040] ss:$2 sm:$0xff]
        %s2042 = scalar_lea.vmem [#allocation7], 225
        %v2043 = vld [vmem:[%s2042] ss:$2 sm:$0xff]
        %s2044 = scalar_lea.vmem [#allocation7], 241
        %v2045 = vld [vmem:[%s2044] ss:$2 sm:$0xff]
        %s2046 = scalar_lea.vmem [#allocation7], 257
        %v2047 = vld [vmem:[%s2046] ss:$2 sm:$0xff]
        %s2048 = scalar_lea.vmem [#allocation7], 273
        %v2049 = vld [vmem:[%s2048] ss:$2 sm:$0xff]
        %s2050 = scalar_lea.vmem [#allocation7], 289
        %v2051 = vld [vmem:[%s2050] ss:$2 sm:$0xff]
        %s2052 = scalar_lea.vmem [#allocation7], 305
        %v2053 = vld [vmem:[%s2052] ss:$2 sm:$0xff]
        %s2054 = scalar_lea.vmem [#allocation7], 321
        %v2055 = vld [vmem:[%s2054] ss:$2 sm:$0xff]
        %s2056 = scalar_lea.vmem [#allocation7], 337
        %v2057 = vld [vmem:[%s2056] ss:$2 sm:$0xff]
        %s2058 = scalar_lea.vmem [#allocation7], 353
        %v2059 = vld [vmem:[%s2058] ss:$2 sm:$0xff]
        %s2060 = scalar_lea.vmem [#allocation7], 369
        %v2061 = vld [vmem:[%s2060] ss:$2 sm:$0xff]
        %s2062 = scalar_lea.vmem [#allocation7], 385
        %v2063 = vld [vmem:[%s2062] ss:$2 sm:$0xff]
        %s2064 = scalar_lea.vmem [#allocation7], 401
        %v2065 = vld [vmem:[%s2064] ss:$2 sm:$0xff]
        %s2066 = scalar_lea.vmem [#allocation7], 417
        %v2067 = vld [vmem:[%s2066] ss:$2 sm:$0xff]
        %s2068 = scalar_lea.vmem [#allocation7], 433
        %v2069 = vld [vmem:[%s2068] ss:$2 sm:$0xff]
        %s2070 = scalar_lea.vmem [#allocation7], 449
        %v2071 = vld [vmem:[%s2070] ss:$2 sm:$0xff]
        %s2072 = scalar_lea.vmem [#allocation7], 465
        %v2073 = vld [vmem:[%s2072] ss:$2 sm:$0xff]
        %s2074 = scalar_lea.vmem [#allocation7], 481
        %v2075 = vld [vmem:[%s2074] ss:$2 sm:$0xff]
        %s2076 = scalar_lea.vmem [#allocation7], 497
        %v2077 = vld [vmem:[%s2076] ss:$2 sm:$0xff]
        %s2078 = scalar_lea.vmem [#allocation7], 513
        %v2079 = vld [vmem:[%s2078] ss:$2 sm:$0xff]
        %s2080 = scalar_lea.vmem [#allocation7], 529
        %v2081 = vld [vmem:[%s2080] ss:$2 sm:$0xff]
        %s2082 = scalar_lea.vmem [#allocation7], 545
        %v2083 = vld [vmem:[%s2082] ss:$2 sm:$0xff]
        %s2084 = scalar_lea.vmem [#allocation7], 561
        %v2085 = vld [vmem:[%s2084] ss:$2 sm:$0xff]
        %s2086 = scalar_lea.vmem [#allocation7], 577
        %v2087 = vld [vmem:[%s2086] ss:$2 sm:$0xff]
        %s2088 = scalar_lea.vmem [#allocation7], 593
        %v2089 = vld [vmem:[%s2088] ss:$2 sm:$0xff]
        %s2090 = scalar_lea.vmem [#allocation7], 609
        %v2091 = vld [vmem:[%s2090] ss:$2 sm:$0xff]
        %s2092 = scalar_lea.vmem [#allocation7], 625
        %v2093 = vld [vmem:[%s2092] ss:$2 sm:$0xff]
        %s2094 = scalar_lea.vmem [#allocation7], 641
        %v2095 = vld [vmem:[%s2094] ss:$2 sm:$0xff]
        %s2096 = scalar_lea.vmem [#allocation7], 657
        %v2097 = vld [vmem:[%s2096] ss:$2 sm:$0xff]
        %s2098 = scalar_lea.vmem [#allocation7], 673
        %v2099 = vld [vmem:[%s2098] ss:$2 sm:$0xff]
        %s2100 = scalar_lea.vmem [#allocation7], 689
        %v2101 = vld [vmem:[%s2100] ss:$2 sm:$0xff]
        %s2102 = scalar_lea.vmem [#allocation7], 705
        %v2103 = vld [vmem:[%s2102] ss:$2 sm:$0xff]
        %s2104 = scalar_lea.vmem [#allocation7], 721
        %v2105 = vld [vmem:[%s2104] ss:$2 sm:$0xff]
        %s2106 = scalar_lea.vmem [#allocation7], 737
        %v2107 = vld [vmem:[%s2106] ss:$2 sm:$0xff]
        %s2108 = scalar_lea.vmem [#allocation7], 753
        %v2109 = vld [vmem:[%s2108] ss:$2 sm:$0xff]
        %s2110 = scalar_lea.vmem [#allocation7], 769
        %v2111 = vld [vmem:[%s2110] ss:$2 sm:$0xff]
        %s2112 = scalar_lea.vmem [#allocation7], 785
        %v2113 = vld [vmem:[%s2112] ss:$2 sm:$0xff]
        %s2114 = scalar_lea.vmem [#allocation7], 801
        %v2115 = vld [vmem:[%s2114] ss:$2 sm:$0xff]
        %s2116 = scalar_lea.vmem [#allocation7], 817
        %v2117 = vld [vmem:[%s2116] ss:$2 sm:$0xff]
        %s2118 = scalar_lea.vmem [#allocation7], 833
        %v2119 = vld [vmem:[%s2118] ss:$2 sm:$0xff]
        %s2120 = scalar_lea.vmem [#allocation7], 849
        %v2121 = vld [vmem:[%s2120] ss:$2 sm:$0xff]
        %s2122 = scalar_lea.vmem [#allocation7], 865
        %v2123 = vld [vmem:[%s2122] ss:$2 sm:$0xff]
        %s2124 = scalar_lea.vmem [#allocation7], 881
        %v2125 = vld [vmem:[%s2124] ss:$2 sm:$0xff]
        %s2126 = scalar_lea.vmem [#allocation7], 897
        %v2127 = vld [vmem:[%s2126] ss:$2 sm:$0xff]
        %s2128 = scalar_lea.vmem [#allocation7], 913
        %v2129 = vld [vmem:[%s2128] ss:$2 sm:$0xff]
        %s2130 = scalar_lea.vmem [#allocation7], 929
        %v2131 = vld [vmem:[%s2130] ss:$2 sm:$0xff]
        %s2132 = scalar_lea.vmem [#allocation7], 945
        %v2133 = vld [vmem:[%s2132] ss:$2 sm:$0xff]
        %s2134 = scalar_lea.vmem [#allocation7], 961
        %v2135 = vld [vmem:[%s2134] ss:$2 sm:$0xff]
        %s2136 = scalar_lea.vmem [#allocation7], 977
        %v2137 = vld [vmem:[%s2136] ss:$2 sm:$0xff]
        %s2138 = scalar_lea.vmem [#allocation7], 993
        %v2139 = vld [vmem:[%s2138] ss:$2 sm:$0xff]
        %s2140 = scalar_lea.vmem [#allocation7], 1009
        %v2141 = vld [vmem:[%s2140] ss:$2 sm:$0xff]
        %v2142 = vadd.f32 %v1887, %v2015
        %v2143 = vadd.f32 %v1889, %v2017
        %v2144 = vadd.f32 %v1891, %v2019
        %v2145 = vadd.f32 %v1893, %v2021
        %v2146 = vadd.f32 %v1895, %v2023
        %v2147 = vadd.f32 %v1897, %v2025
        %v2148 = vadd.f32 %v1899, %v2027
        %v2149 = vadd.f32 %v1901, %v2029
        %v2150 = vadd.f32 %v1903, %v2031
        %v2151 = vadd.f32 %v1905, %v2033
        %v2152 = vadd.f32 %v1907, %v2035
        %v2153 = vadd.f32 %v1909, %v2037
        %v2154 = vadd.f32 %v1911, %v2039
        %v2155 = vadd.f32 %v1913, %v2041
        %v2156 = vadd.f32 %v1915, %v2043
        %v2157 = vadd.f32 %v1917, %v2045
        %v2158 = vadd.f32 %v1919, %v2047
        %v2159 = vadd.f32 %v1921, %v2049
        %v2160 = vadd.f32 %v1923, %v2051
        %v2161 = vadd.f32 %v1925, %v2053
        %v2162 = vadd.f32 %v1927, %v2055
        %v2163 = vadd.f32 %v1929, %v2057
        %v2164 = vadd.f32 %v1931, %v2059
        %v2165 = vadd.f32 %v1933, %v2061
        %v2166 = vadd.f32 %v1935, %v2063
        %v2167 = vadd.f32 %v1937, %v2065
        %v2168 = vadd.f32 %v1939, %v2067
        %v2169 = vadd.f32 %v1941, %v2069
        %v2170 = vadd.f32 %v1943, %v2071
        %v2171 = vadd.f32 %v1945, %v2073
        %v2172 = vadd.f32 %v1947, %v2075
        %v2173 = vadd.f32 %v1949, %v2077
        %v2174 = vadd.f32 %v1951, %v2079
        %v2175 = vadd.f32 %v1953, %v2081
        %v2176 = vadd.f32 %v1955, %v2083
        %v2177 = vadd.f32 %v1957, %v2085
        %v2178 = vadd.f32 %v1959, %v2087
        %v2179 = vadd.f32 %v1961, %v2089
        %v2180 = vadd.f32 %v1963, %v2091
        %v2181 = vadd.f32 %v1965, %v2093
        %v2182 = vadd.f32 %v1967, %v2095
        %v2183 = vadd.f32 %v1969, %v2097
        %v2184 = vadd.f32 %v1971, %v2099
        %v2185 = vadd.f32 %v1973, %v2101
        %v2186 = vadd.f32 %v1975, %v2103
        %v2187 = vadd.f32 %v1977, %v2105
        %v2188 = vadd.f32 %v1979, %v2107
        %v2189 = vadd.f32 %v1981, %v2109
        %v2190 = vadd.f32 %v1983, %v2111
        %v2191 = vadd.f32 %v1985, %v2113
        %v2192 = vadd.f32 %v1987, %v2115
        %v2193 = vadd.f32 %v1989, %v2117
        %v2194 = vadd.f32 %v1991, %v2119
        %v2195 = vadd.f32 %v1993, %v2121
        %v2196 = vadd.f32 %v1995, %v2123
        %v2197 = vadd.f32 %v1997, %v2125
        %v2198 = vadd.f32 %v1999, %v2127
        %v2199 = vadd.f32 %v2001, %v2129
        %v2200 = vadd.f32 %v2003, %v2131
        %v2201 = vadd.f32 %v2005, %v2133
        %v2202 = vadd.f32 %v2007, %v2135
        %v2203 = vadd.f32 %v2009, %v2137
        %v2204 = vadd.f32 %v2011, %v2139
        %v2205 = vadd.f32 %v2013, %v2141
        %2206 = vst.msk [vmem:[#allocation8] sm:$0xff] %vm853, %v2142
        %2207 = vst.msk [vmem:[#allocation8 + $0x8] sm:$0xff] %vm853, %v2143
        %2208 = vst.msk [vmem:[#allocation8 + $0x10] sm:$0xff] %vm853, %v2144
        %2209 = vst.msk [vmem:[#allocation8 + $0x18] sm:$0xff] %vm853, %v2145
        %2210 = vst.msk [vmem:[#allocation8 + $0x20] sm:$0xff] %vm853, %v2146
        %2211 = vst.msk [vmem:[#allocation8 + $0x28] sm:$0xff] %vm853, %v2147
        %2212 = vst.msk [vmem:[#allocation8 + $0x30] sm:$0xff] %vm853, %v2148
        %2213 = vst.msk [vmem:[#allocation8 + $0x38] sm:$0xff] %vm853, %v2149
        %2214 = vst.msk [vmem:[#allocation8 + $0x40] sm:$0xff] %vm853, %v2150
        %2215 = vst.msk [vmem:[#allocation8 + $0x48] sm:$0xff] %vm853, %v2151
        %2216 = vst.msk [vmem:[#allocation8 + $0x50] sm:$0xff] %vm853, %v2152
        %2217 = vst.msk [vmem:[#allocation8 + $0x58] sm:$0xff] %vm853, %v2153
        %2218 = vst.msk [vmem:[#allocation8 + $0x60] sm:$0xff] %vm853, %v2154
        %2219 = vst.msk [vmem:[#allocation8 + $0x68] sm:$0xff] %vm853, %v2155
        %2220 = vst.msk [vmem:[#allocation8 + $0x70] sm:$0xff] %vm853, %v2156
        %2221 = vst.msk [vmem:[#allocation8 + $0x78] sm:$0xff] %vm853, %v2157
        %2222 = vst.msk [vmem:[#allocation8 + $0x80] sm:$0xff] %vm853, %v2158
        %2223 = vst.msk [vmem:[#allocation8 + $0x88] sm:$0xff] %vm853, %v2159
        %2224 = vst.msk [vmem:[#allocation8 + $0x90] sm:$0xff] %vm853, %v2160
        %2225 = vst.msk [vmem:[#allocation8 + $0x98] sm:$0xff] %vm853, %v2161
        %2226 = vst.msk [vmem:[#allocation8 + $0xa0] sm:$0xff] %vm853, %v2162
        %2227 = vst.msk [vmem:[#allocation8 + $0xa8] sm:$0xff] %vm853, %v2163
        %2228 = vst.msk [vmem:[#allocation8 + $0xb0] sm:$0xff] %vm853, %v2164
        %2229 = vst.msk [vmem:[#allocation8 + $0xb8] sm:$0xff] %vm853, %v2165
        %2230 = vst.msk [vmem:[#allocation8 + $0xc0] sm:$0xff] %vm853, %v2166
        %2231 = vst.msk [vmem:[#allocation8 + $0xc8] sm:$0xff] %vm853, %v2167
        %2232 = vst.msk [vmem:[#allocation8 + $0xd0] sm:$0xff] %vm853, %v2168
        %2233 = vst.msk [vmem:[#allocation8 + $0xd8] sm:$0xff] %vm853, %v2169
        %2234 = vst.msk [vmem:[#allocation8 + $0xe0] sm:$0xff] %vm853, %v2170
        %2235 = vst.msk [vmem:[#allocation8 + $0xe8] sm:$0xff] %vm853, %v2171
        %2236 = vst.msk [vmem:[#allocation8 + $0xf0] sm:$0xff] %vm853, %v2172
        %2237 = vst.msk [vmem:[#allocation8 + $0xf8] sm:$0xff] %vm853, %v2173
        %2238 = vst.msk [vmem:[#allocation8 + $0x100] sm:$0xff] %vm853, %v2174
        %2239 = vst.msk [vmem:[#allocation8 + $0x108] sm:$0xff] %vm853, %v2175
        %2240 = vst.msk [vmem:[#allocation8 + $0x110] sm:$0xff] %vm853, %v2176
        %2241 = vst.msk [vmem:[#allocation8 + $0x118] sm:$0xff] %vm853, %v2177
        %2242 = vst.msk [vmem:[#allocation8 + $0x120] sm:$0xff] %vm853, %v2178
        %2243 = vst.msk [vmem:[#allocation8 + $0x128] sm:$0xff] %vm853, %v2179
        %2244 = vst.msk [vmem:[#allocation8 + $0x130] sm:$0xff] %vm853, %v2180
        %2245 = vst.msk [vmem:[#allocation8 + $0x138] sm:$0xff] %vm853, %v2181
        %2246 = vst.msk [vmem:[#allocation8 + $0x140] sm:$0xff] %vm853, %v2182
        %2247 = vst.msk [vmem:[#allocation8 + $0x148] sm:$0xff] %vm853, %v2183
        %2248 = vst.msk [vmem:[#allocation8 + $0x150] sm:$0xff] %vm853, %v2184
        %2249 = vst.msk [vmem:[#allocation8 + $0x158] sm:$0xff] %vm853, %v2185
        %2250 = vst.msk [vmem:[#allocation8 + $0x160] sm:$0xff] %vm853, %v2186
        %2251 = vst.msk [vmem:[#allocation8 + $0x168] sm:$0xff] %vm853, %v2187
        %2252 = vst.msk [vmem:[#allocation8 + $0x170] sm:$0xff] %vm853, %v2188
        %2253 = vst.msk [vmem:[#allocation8 + $0x178] sm:$0xff] %vm853, %v2189
        %2254 = vst.msk [vmem:[#allocation8 + $0x180] sm:$0xff] %vm853, %v2190
        %2255 = vst.msk [vmem:[#allocation8 + $0x188] sm:$0xff] %vm853, %v2191
        %2256 = vst.msk [vmem:[#allocation8 + $0x190] sm:$0xff] %vm853, %v2192
        %2257 = vst.msk [vmem:[#allocation8 + $0x198] sm:$0xff] %vm853, %v2193
        %2258 = vst.msk [vmem:[#allocation8 + $0x1a0] sm:$0xff] %vm853, %v2194
        %2259 = vst.msk [vmem:[#allocation8 + $0x1a8] sm:$0xff] %vm853, %v2195
        %2260 = vst.msk [vmem:[#allocation8 + $0x1b0] sm:$0xff] %vm853, %v2196
        %2261 = vst.msk [vmem:[#allocation8 + $0x1b8] sm:$0xff] %vm853, %v2197
        %2262 = vst.msk [vmem:[#allocation8 + $0x1c0] sm:$0xff] %vm853, %v2198
        %2263 = vst.msk [vmem:[#allocation8 + $0x1c8] sm:$0xff] %vm853, %v2199
        %2264 = vst.msk [vmem:[#allocation8 + $0x1d0] sm:$0xff] %vm853, %v2200
        %2265 = vst.msk [vmem:[#allocation8 + $0x1d8] sm:$0xff] %vm853, %v2201
        %2266 = vst.msk [vmem:[#allocation8 + $0x1e0] sm:$0xff] %vm853, %v2202
        %2267 = vst.msk [vmem:[#allocation8 + $0x1e8] sm:$0xff] %vm853, %v2203
        %2268 = vst.msk [vmem:[#allocation8 + $0x1f0] sm:$0xff] %vm853, %v2204
        %2269 = vst.msk [vmem:[#allocation8 + $0x1f8] sm:$0xff] %vm853, %v2205
        %v2270 = vld [vmem:[#allocation8] sm:$0xff]
        %v2271 = vld [vmem:[#allocation8 + $0x8] sm:$0xff]
        %v2272 = vld [vmem:[#allocation8 + $0x20] sm:$0xff]
        %v2273 = vld [vmem:[#allocation8 + $0x28] sm:$0xff]
        %v2274 = vld [vmem:[#allocation8 + $0x40] sm:$0xff]
        %v2275 = vld [vmem:[#allocation8 + $0x48] sm:$0xff]
        %v2276 = vld [vmem:[#allocation8 + $0x60] sm:$0xff]
        %v2277 = vld [vmem:[#allocation8 + $0x68] sm:$0xff]
        %v2278 = vld [vmem:[#allocation8 + $0x80] sm:$0xff]
        %v2279 = vld [vmem:[#allocation8 + $0x88] sm:$0xff]
        %v2280 = vld [vmem:[#allocation8 + $0xa0] sm:$0xff]
        %v2281 = vld [vmem:[#allocation8 + $0xa8] sm:$0xff]
        %v2282 = vld [vmem:[#allocation8 + $0xc0] sm:$0xff]
        %v2283 = vld [vmem:[#allocation8 + $0xc8] sm:$0xff]
        %v2284 = vld [vmem:[#allocation8 + $0xe0] sm:$0xff]
        %v2285 = vld [vmem:[#allocation8 + $0xe8] sm:$0xff]
        %v2286 = vld [vmem:[#allocation8 + $0x100] sm:$0xff]
        %v2287 = vld [vmem:[#allocation8 + $0x108] sm:$0xff]
        %v2288 = vld [vmem:[#allocation8 + $0x120] sm:$0xff]
        %v2289 = vld [vmem:[#allocation8 + $0x128] sm:$0xff]
        %v2290 = vld [vmem:[#allocation8 + $0x140] sm:$0xff]
        %v2291 = vld [vmem:[#allocation8 + $0x148] sm:$0xff]
        %v2292 = vld [vmem:[#allocation8 + $0x160] sm:$0xff]
        %v2293 = vld [vmem:[#allocation8 + $0x168] sm:$0xff]
        %v2294 = vld [vmem:[#allocation8 + $0x180] sm:$0xff]
        %v2295 = vld [vmem:[#allocation8 + $0x188] sm:$0xff]
        %v2296 = vld [vmem:[#allocation8 + $0x1a0] sm:$0xff]
        %v2297 = vld [vmem:[#allocation8 + $0x1a8] sm:$0xff]
        %v2298 = vld [vmem:[#allocation8 + $0x1c0] sm:$0xff]
        %v2299 = vld [vmem:[#allocation8 + $0x1c8] sm:$0xff]
        %v2300 = vld [vmem:[#allocation8 + $0x1e0] sm:$0xff]
        %v2301 = vld [vmem:[#allocation8 + $0x1e8] sm:$0xff]
        %s2302 = scalar_lea.vmem [#allocation8], 16
        %v2303 = vld [vmem:[%s2302] sm:$0xff]
        %v2304 = vld [vmem:[%s2302 + $0x8] sm:$0xff]
        %v2305 = vld [vmem:[%s2302 + $0x20] sm:$0xff]
        %v2306 = vld [vmem:[%s2302 + $0x28] sm:$0xff]
        %v2307 = vld [vmem:[%s2302 + $0x40] sm:$0xff]
        %v2308 = vld [vmem:[%s2302 + $0x48] sm:$0xff]
        %v2309 = vld [vmem:[%s2302 + $0x60] sm:$0xff]
        %v2310 = vld [vmem:[%s2302 + $0x68] sm:$0xff]
        %v2311 = vld [vmem:[%s2302 + $0x80] sm:$0xff]
        %v2312 = vld [vmem:[%s2302 + $0x88] sm:$0xff]
        %v2313 = vld [vmem:[%s2302 + $0xa0] sm:$0xff]
        %v2314 = vld [vmem:[%s2302 + $0xa8] sm:$0xff]
        %v2315 = vld [vmem:[%s2302 + $0xc0] sm:$0xff]
        %v2316 = vld [vmem:[%s2302 + $0xc8] sm:$0xff]
        %v2317 = vld [vmem:[%s2302 + $0xe0] sm:$0xff]
        %v2318 = vld [vmem:[%s2302 + $0xe8] sm:$0xff]
        %v2319 = vld [vmem:[%s2302 + $0x100] sm:$0xff]
        %v2320 = vld [vmem:[%s2302 + $0x108] sm:$0xff]
        %v2321 = vld [vmem:[%s2302 + $0x120] sm:$0xff]
        %v2322 = vld [vmem:[%s2302 + $0x128] sm:$0xff]
        %v2323 = vld [vmem:[%s2302 + $0x140] sm:$0xff]
        %v2324 = vld [vmem:[%s2302 + $0x148] sm:$0xff]
        %v2325 = vld [vmem:[%s2302 + $0x160] sm:$0xff]
        %v2326 = vld [vmem:[%s2302 + $0x168] sm:$0xff]
        %v2327 = vld [vmem:[%s2302 + $0x180] sm:$0xff]
        %v2328 = vld [vmem:[%s2302 + $0x188] sm:$0xff]
        %v2329 = vld [vmem:[%s2302 + $0x1a0] sm:$0xff]
        %v2330 = vld [vmem:[%s2302 + $0x1a8] sm:$0xff]
        %v2331 = vld [vmem:[%s2302 + $0x1c0] sm:$0xff]
        %v2332 = vld [vmem:[%s2302 + $0x1c8] sm:$0xff]
        %v2333 = vld [vmem:[%s2302 + $0x1e0] sm:$0xff]
        %v2334 = vld [vmem:[%s2302 + $0x1e8] sm:$0xff]
        %v2335 = vadd.f32 %v2270, %v2303
        %v2336 = vadd.f32 %v2271, %v2304
        %v2337 = vadd.f32 %v2272, %v2305
        %v2338 = vadd.f32 %v2273, %v2306
        %v2339 = vadd.f32 %v2274, %v2307
        %v2340 = vadd.f32 %v2275, %v2308
        %v2341 = vadd.f32 %v2276, %v2309
        %v2342 = vadd.f32 %v2277, %v2310
        %v2343 = vadd.f32 %v2278, %v2311
        %v2344 = vadd.f32 %v2279, %v2312
        %v2345 = vadd.f32 %v2280, %v2313
        %v2346 = vadd.f32 %v2281, %v2314
        %v2347 = vadd.f32 %v2282, %v2315
        %v2348 = vadd.f32 %v2283, %v2316
        %v2349 = vadd.f32 %v2284, %v2317
        %v2350 = vadd.f32 %v2285, %v2318
        %v2351 = vadd.f32 %v2286, %v2319
        %v2352 = vadd.f32 %v2287, %v2320
        %v2353 = vadd.f32 %v2288, %v2321
        %v2354 = vadd.f32 %v2289, %v2322
        %v2355 = vadd.f32 %v2290, %v2323
        %v2356 = vadd.f32 %v2291, %v2324
        %v2357 = vadd.f32 %v2292, %v2325
        %v2358 = vadd.f32 %v2293, %v2326
        %v2359 = vadd.f32 %v2294, %v2327
        %v2360 = vadd.f32 %v2295, %v2328
        %v2361 = vadd.f32 %v2296, %v2329
        %v2362 = vadd.f32 %v2297, %v2330
        %v2363 = vadd.f32 %v2298, %v2331
        %v2364 = vadd.f32 %v2299, %v2332
        %v2365 = vadd.f32 %v2300, %v2333
        %v2366 = vadd.f32 %v2301, %v2334
        %2367 = vst.msk [vmem:[#allocation2] sm:$0xff] %vm853, 0.0
        %2368 = vst.msk [vmem:[#allocation2 + $0x8] sm:$0xff] %vm853, 0.0
        %vm2369 = vcmask 254976
        %2370 = vst.msk [vmem:[#allocation2 + $0x10] sm:$0x3] %vm2369, 0.0
        %2371 = vst.msk [vmem:[#allocation2 + $0x18] sm:$0xff] %vm853, 0.0
        %2372 = vst.msk [vmem:[#allocation2 + $0x20] sm:$0xff] %vm853, 0.0
        %2373 = vst.msk [vmem:[#allocation2 + $0x28] sm:$0x3] %vm2369, 0.0
        %2374 = vst.msk [vmem:[#allocation2 + $0x30] sm:$0xff] %vm853, 0.0
        %2375 = vst.msk [vmem:[#allocation2 + $0x38] sm:$0xff] %vm853, 0.0
        %2376 = vst.msk [vmem:[#allocation2 + $0x40] sm:$0x3] %vm2369, 0.0
        %2377 = vst.msk [vmem:[#allocation2 + $0x48] sm:$0xff] %vm853, 0.0
        %2378 = vst.msk [vmem:[#allocation2 + $0x50] sm:$0xff] %vm853, 0.0
        %2379 = vst.msk [vmem:[#allocation2 + $0x58] sm:$0x3] %vm2369, 0.0
        %2380 = vst.msk [vmem:[#allocation2 + $0x60] sm:$0xff] %vm853, 0.0
        %2381 = vst.msk [vmem:[#allocation2 + $0x68] sm:$0xff] %vm853, 0.0
        %2382 = vst.msk [vmem:[#allocation2 + $0x70] sm:$0x3] %vm2369, 0.0
        %2383 = vst.msk [vmem:[#allocation2 + $0x78] sm:$0xff] %vm853, 0.0
        %2384 = vst.msk [vmem:[#allocation2 + $0x80] sm:$0xff] %vm853, 0.0
        %2385 = vst.msk [vmem:[#allocation2 + $0x88] sm:$0x3] %vm2369, 0.0
        %2386 = vst.msk [vmem:[#allocation2 + $0x90] sm:$0xff] %vm853, 0.0
        %2387 = vst.msk [vmem:[#allocation2 + $0x98] sm:$0xff] %vm853, 0.0
        %2388 = vst.msk [vmem:[#allocation2 + $0xa0] sm:$0x3] %vm2369, 0.0
        %2389 = vst.msk [vmem:[#allocation2 + $0xa8] sm:$0xff] %vm853, 0.0
        %2390 = vst.msk [vmem:[#allocation2 + $0xb0] sm:$0xff] %vm853, 0.0
        %2391 = vst.msk [vmem:[#allocation2 + $0xb8] sm:$0x3] %vm2369, 0.0
        %2392 = vst.msk [vmem:[#allocation2 + $0xc0] sm:$0xff] %vm853, 0.0
        %2393 = vst.msk [vmem:[#allocation2 + $0xc8] sm:$0xff] %vm853, 0.0
        %2394 = vst.msk [vmem:[#allocation2 + $0xd0] sm:$0x3] %vm2369, 0.0
        %2395 = vst.msk [vmem:[#allocation2 + $0xd8] sm:$0xff] %vm853, 0.0
        %2396 = vst.msk [vmem:[#allocation2 + $0xe0] sm:$0xff] %vm853, 0.0
        %2397 = vst.msk [vmem:[#allocation2 + $0xe8] sm:$0x3] %vm2369, 0.0
        %2398 = vst.msk [vmem:[#allocation2 + $0xf0] sm:$0xff] %vm853, 0.0
        %2399 = vst.msk [vmem:[#allocation2 + $0xf8] sm:$0xff] %vm853, 0.0
        %2400 = vst.msk [vmem:[#allocation2 + $0x100] sm:$0x3] %vm2369, 0.0
        %2401 = vst.msk [vmem:[#allocation2 + $0x108] sm:$0xff] %vm853, 0.0
        %2402 = vst.msk [vmem:[#allocation2 + $0x110] sm:$0xff] %vm853, 0.0
        %2403 = vst.msk [vmem:[#allocation2 + $0x118] sm:$0x3] %vm2369, 0.0
        %2404 = vst.msk [vmem:[#allocation2 + $0x120] sm:$0xff] %vm853, 0.0
        %2405 = vst.msk [vmem:[#allocation2 + $0x128] sm:$0xff] %vm853, 0.0
        %2406 = vst.msk [vmem:[#allocation2 + $0x130] sm:$0x3] %vm2369, 0.0
        %2407 = vst.msk [vmem:[#allocation2 + $0x138] sm:$0xff] %vm853, 0.0
        %2408 = vst.msk [vmem:[#allocation2 + $0x140] sm:$0xff] %vm853, 0.0
        %2409 = vst.msk [vmem:[#allocation2 + $0x148] sm:$0x3] %vm2369, 0.0
        %2410 = vst.msk [vmem:[#allocation2 + $0x150] sm:$0xff] %vm853, 0.0
        %2411 = vst.msk [vmem:[#allocation2 + $0x158] sm:$0xff] %vm853, 0.0
        %2412 = vst.msk [vmem:[#allocation2 + $0x160] sm:$0x3] %vm2369, 0.0
        %2413 = vst.msk [vmem:[#allocation2 + $0x168] sm:$0xff] %vm853, 0.0
        %2414 = vst.msk [vmem:[#allocation2 + $0x170] sm:$0xff] %vm853, 0.0
        %2415 = vst.msk [vmem:[#allocation2 + $0x178] sm:$0x3] %vm2369, 0.0
        %2416 = vst.msk [vmem:[#allocation2 + $0x180] sm:$0xff] %vm853, 0.0
        %2417 = vst.msk [vmem:[#allocation2 + $0x188] sm:$0xff] %vm853, 0.0
        %2418 = vst.msk [vmem:[#allocation2 + $0x190] sm:$0x3] %vm2369, 0.0
        %2419 = vst.msk [vmem:[#allocation2 + $0x198] sm:$0xff] %vm853, 0.0
        %2420 = vst.msk [vmem:[#allocation2 + $0x1a0] sm:$0xff] %vm853, 0.0
        %2421 = vst.msk [vmem:[#allocation2 + $0x1a8] sm:$0x3] %vm2369, 0.0
        %s2422 = scalar_lea.vmem [#allocation2], 24
        %2423 = vst.msk [vmem:[%s2422 + $0x1] sm:$0xff] %vm853, %v2335
        %2424 = vst.msk [vmem:[%s2422 + $0x9] sm:$0xff] %vm853, %v2336
        %2425 = vst.msk [vmem:[%s2422 + $0x19] sm:$0xff] %vm853, %v2337
        %2426 = vst.msk [vmem:[%s2422 + $0x21] sm:$0xff] %vm853, %v2338
        %2427 = vst.msk [vmem:[%s2422 + $0x31] sm:$0xff] %vm853, %v2339
        %2428 = vst.msk [vmem:[%s2422 + $0x39] sm:$0xff] %vm853, %v2340
        %2429 = vst.msk [vmem:[%s2422 + $0x49] sm:$0xff] %vm853, %v2341
        %2430 = vst.msk [vmem:[%s2422 + $0x51] sm:$0xff] %vm853, %v2342
        %2431 = vst.msk [vmem:[%s2422 + $0x61] sm:$0xff] %vm853, %v2343
        %2432 = vst.msk [vmem:[%s2422 + $0x69] sm:$0xff] %vm853, %v2344
        %2433 = vst.msk [vmem:[%s2422 + $0x79] sm:$0xff] %vm853, %v2345
        %2434 = vst.msk [vmem:[%s2422 + $0x81] sm:$0xff] %vm853, %v2346
        %2435 = vst.msk [vmem:[%s2422 + $0x91] sm:$0xff] %vm853, %v2347
        %2436 = vst.msk [vmem:[%s2422 + $0x99] sm:$0xff] %vm853, %v2348
        %2437 = vst.msk [vmem:[%s2422 + $0xa9] sm:$0xff] %vm853, %v2349
        %2438 = vst.msk [vmem:[%s2422 + $0xb1] sm:$0xff] %vm853, %v2350
        %2439 = vst.msk [vmem:[%s2422 + $0xc1] sm:$0xff] %vm853, %v2351
        %2440 = vst.msk [vmem:[%s2422 + $0xc9] sm:$0xff] %vm853, %v2352
        %2441 = vst.msk [vmem:[%s2422 + $0xd9] sm:$0xff] %vm853, %v2353
        %2442 = vst.msk [vmem:[%s2422 + $0xe1] sm:$0xff] %vm853, %v2354
        %2443 = vst.msk [vmem:[%s2422 + $0xf1] sm:$0xff] %vm853, %v2355
        %2444 = vst.msk [vmem:[%s2422 + $0xf9] sm:$0xff] %vm853, %v2356
        %2445 = vst.msk [vmem:[%s2422 + $0x109] sm:$0xff] %vm853, %v2357
        %2446 = vst.msk [vmem:[%s2422 + $0x111] sm:$0xff] %vm853, %v2358
        %2447 = vst.msk [vmem:[%s2422 + $0x121] sm:$0xff] %vm853, %v2359
        %2448 = vst.msk [vmem:[%s2422 + $0x129] sm:$0xff] %vm853, %v2360
        %2449 = vst.msk [vmem:[%s2422 + $0x139] sm:$0xff] %vm853, %v2361
        %2450 = vst.msk [vmem:[%s2422 + $0x141] sm:$0xff] %vm853, %v2362
        %2451 = vst.msk [vmem:[%s2422 + $0x151] sm:$0xff] %vm853, %v2363
        %2452 = vst.msk [vmem:[%s2422 + $0x159] sm:$0xff] %vm853, %v2364
        %2453 = vst.msk [vmem:[%s2422 + $0x169] sm:$0xff] %vm853, %v2365
        %2454 = vst.msk [vmem:[%s2422 + $0x171] sm:$0xff] %vm853, %v2366
        %v2455 = vld [vmem:[#allocation2] sm:$0xff]
        %v2456 = vld [vmem:[#allocation2 + $0x8] sm:$0xff]
        %v2457 = vld [vmem:[#allocation2 + $0x18] sm:$0xff]
        %v2458 = vld [vmem:[#allocation2 + $0x20] sm:$0xff]
        %v2459 = vld [vmem:[#allocation2 + $0x30] sm:$0xff]
        %v2460 = vld [vmem:[#allocation2 + $0x38] sm:$0xff]
        %v2461 = vld [vmem:[#allocation2 + $0x48] sm:$0xff]
        %v2462 = vld [vmem:[#allocation2 + $0x50] sm:$0xff]
        %v2463 = vld [vmem:[#allocation2 + $0x60] sm:$0xff]
        %v2464 = vld [vmem:[#allocation2 + $0x68] sm:$0xff]
        %v2465 = vld [vmem:[#allocation2 + $0x78] sm:$0xff]
        %v2466 = vld [vmem:[#allocation2 + $0x80] sm:$0xff]
        %v2467 = vld [vmem:[#allocation2 + $0x90] sm:$0xff]
        %v2468 = vld [vmem:[#allocation2 + $0x98] sm:$0xff]
        %v2469 = vld [vmem:[#allocation2 + $0xa8] sm:$0xff]
        %v2470 = vld [vmem:[#allocation2 + $0xb0] sm:$0xff]
        %v2471 = vld [vmem:[#allocation2 + $0xc0] sm:$0xff]
        %v2472 = vld [vmem:[#allocation2 + $0xc8] sm:$0xff]
        %v2473 = vld [vmem:[#allocation2 + $0xd8] sm:$0xff]
        %v2474 = vld [vmem:[#allocation2 + $0xe0] sm:$0xff]
        %v2475 = vld [vmem:[#allocation2 + $0xf0] sm:$0xff]
        %v2476 = vld [vmem:[#allocation2 + $0xf8] sm:$0xff]
        %v2477 = vld [vmem:[#allocation2 + $0x108] sm:$0xff]
        %v2478 = vld [vmem:[#allocation2 + $0x110] sm:$0xff]
        %v2479 = vld [vmem:[#allocation2 + $0x120] sm:$0xff]
        %v2480 = vld [vmem:[#allocation2 + $0x128] sm:$0xff]
        %v2481 = vld [vmem:[#allocation2 + $0x138] sm:$0xff]
        %v2482 = vld [vmem:[#allocation2 + $0x140] sm:$0xff]
        %v2483 = vld [vmem:[#allocation2 + $0x150] sm:$0xff]
        %v2484 = vld [vmem:[#allocation2 + $0x158] sm:$0xff]
        %v2485 = vld [vmem:[#allocation2 + $0x168] sm:$0xff]
        %v2486 = vld [vmem:[#allocation2 + $0x170] sm:$0xff]
        %2487 = vst.msk [vmem:[#allocation4] sm:$0xff] %vm853, %v2455
        %2488 = vst.msk [vmem:[#allocation4 + $0x18] sm:$0xff] %vm853, %v2456
        %2489 = vst.msk [vmem:[#allocation4 + $0x30] sm:$0xff] %vm853, %v2457
        %2490 = vst.msk [vmem:[#allocation4 + $0x48] sm:$0xff] %vm853, %v2458
        %2491 = vst.msk [vmem:[#allocation4 + $0x60] sm:$0xff] %vm853, %v2459
        %2492 = vst.msk [vmem:[#allocation4 + $0x78] sm:$0xff] %vm853, %v2460
        %2493 = vst.msk [vmem:[#allocation4 + $0x90] sm:$0xff] %vm853, %v2461
        %2494 = vst.msk [vmem:[#allocation4 + $0xa8] sm:$0xff] %vm853, %v2462
        %2495 = vst.msk [vmem:[#allocation4 + $0xc0] sm:$0xff] %vm853, %v2463
        %2496 = vst.msk [vmem:[#allocation4 + $0xd8] sm:$0xff] %vm853, %v2464
        %2497 = vst.msk [vmem:[#allocation4 + $0xf0] sm:$0xff] %vm853, %v2465
        %2498 = vst.msk [vmem:[#allocation4 + $0x108] sm:$0xff] %vm853, %v2466
        %2499 = vst.msk [vmem:[#allocation4 + $0x120] sm:$0xff] %vm853, %v2467
        %2500 = vst.msk [vmem:[#allocation4 + $0x138] sm:$0xff] %vm853, %v2468
        %2501 = vst.msk [vmem:[#allocation4 + $0x150] sm:$0xff] %vm853, %v2469
        %2502 = vst.msk [vmem:[#allocation4 + $0x168] sm:$0xff] %vm853, %v2470
        %2503 = vst.msk [vmem:[#allocation4 + $0x180] sm:$0xff] %vm853, %v2471
        %2504 = vst.msk [vmem:[#allocation4 + $0x198] sm:$0xff] %vm853, %v2472
        %2505 = vst.msk [vmem:[#allocation4 + $0x1b0] sm:$0xff] %vm853, %v2473
        %2506 = vst.msk [vmem:[#allocation4 + $0x1c8] sm:$0xff] %vm853, %v2474
        %2507 = vst.msk [vmem:[#allocation4 + $0x1e0] sm:$0xff] %vm853, %v2475
        %2508 = vst.msk [vmem:[#allocation4 + $0x1f8] sm:$0xff] %vm853, %v2476
        %2509 = vst.msk [vmem:[#allocation4 + $0x210] sm:$0xff] %vm853, %v2477
        %2510 = vst.msk [vmem:[#allocation4 + $0x228] sm:$0xff] %vm853, %v2478
        %2511 = vst.msk [vmem:[#allocation4 + $0x240] sm:$0xff] %vm853, %v2479
        %2512 = vst.msk [vmem:[#allocation4 + $0x258] sm:$0xff] %vm853, %v2480
        %2513 = vst.msk [vmem:[#allocation4 + $0x270] sm:$0xff] %vm853, %v2481
        %2514 = vst.msk [vmem:[#allocation4 + $0x288] sm:$0xff] %vm853, %v2482
        %2515 = vst.msk [vmem:[#allocation4 + $0x2a0] sm:$0xff] %vm853, %v2483
        %2516 = vst.msk [vmem:[#allocation4 + $0x2b8] sm:$0xff] %vm853, %v2484
        %2517 = vst.msk [vmem:[#allocation4 + $0x2d0] sm:$0xff] %vm853, %v2485
        %2518 = vst.msk [vmem:[#allocation4 + $0x2e8] sm:$0xff] %vm853, %v2486
        %v2519 = vld [vmem:[#allocation2 + $0x1] sm:$0xff]
        %v2520 = vld [vmem:[#allocation2 + $0x9] sm:$0xff]
        %v2521 = vld [vmem:[#allocation2 + $0x19] sm:$0xff]
        %v2522 = vld [vmem:[#allocation2 + $0x21] sm:$0xff]
        %v2523 = vld [vmem:[#allocation2 + $0x31] sm:$0xff]
        %v2524 = vld [vmem:[#allocation2 + $0x39] sm:$0xff]
        %v2525 = vld [vmem:[#allocation2 + $0x49] sm:$0xff]
        %v2526 = vld [vmem:[#allocation2 + $0x51] sm:$0xff]
        %v2527 = vld [vmem:[#allocation2 + $0x61] sm:$0xff]
        %v2528 = vld [vmem:[#allocation2 + $0x69] sm:$0xff]
        %v2529 = vld [vmem:[#allocation2 + $0x79] sm:$0xff]
        %v2530 = vld [vmem:[#allocation2 + $0x81] sm:$0xff]
        %v2531 = vld [vmem:[#allocation2 + $0x91] sm:$0xff]
        %v2532 = vld [vmem:[#allocation2 + $0x99] sm:$0xff]
        %v2533 = vld [vmem:[#allocation2 + $0xa9] sm:$0xff]
        %v2534 = vld [vmem:[#allocation2 + $0xb1] sm:$0xff]
        %v2535 = vld [vmem:[#allocation2 + $0xc1] sm:$0xff]
        %v2536 = vld [vmem:[#allocation2 + $0xc9] sm:$0xff]
        %v2537 = vld [vmem:[#allocation2 + $0xd9] sm:$0xff]
        %v2538 = vld [vmem:[#allocation2 + $0xe1] sm:$0xff]
        %v2539 = vld [vmem:[#allocation2 + $0xf1] sm:$0xff]
        %v2540 = vld [vmem:[#allocation2 + $0xf9] sm:$0xff]
        %v2541 = vld [vmem:[#allocation2 + $0x109] sm:$0xff]
        %v2542 = vld [vmem:[#allocation2 + $0x111] sm:$0xff]
        %v2543 = vld [vmem:[#allocation2 + $0x121] sm:$0xff]
        %v2544 = vld [vmem:[#allocation2 + $0x129] sm:$0xff]
        %v2545 = vld [vmem:[#allocation2 + $0x139] sm:$0xff]
        %v2546 = vld [vmem:[#allocation2 + $0x141] sm:$0xff]
        %v2547 = vld [vmem:[#allocation2 + $0x151] sm:$0xff]
        %v2548 = vld [vmem:[#allocation2 + $0x159] sm:$0xff]
        %v2549 = vld [vmem:[#allocation2 + $0x169] sm:$0xff]
        %v2550 = vld [vmem:[#allocation2 + $0x171] sm:$0xff]
        %2583 = vrot.lane.b32.xlu0 %v2519, 32
        %v2584 = vpop.permute.xlu0 %2583
        %2585 = vrot.lane.b32.xlu0 %v2520, 32
        %v2586 = vpop.permute.xlu0 %2585
        %2587 = vrot.lane.b32.xlu0 %v2521, 32
        %v2588 = vpop.permute.xlu0 %2587
        %2589 = vrot.lane.b32.xlu0 %v2522, 32
        %v2590 = vpop.permute.xlu0 %2589
        %2591 = vrot.lane.b32.xlu0 %v2523, 32
        %v2592 = vpop.permute.xlu0 %2591
        %2593 = vrot.lane.b32.xlu0 %v2524, 32
        %v2594 = vpop.permute.xlu0 %2593
        %2595 = vrot.lane.b32.xlu0 %v2525, 32
        %v2596 = vpop.permute.xlu0 %2595
        %2597 = vrot.lane.b32.xlu0 %v2526, 32
        %v2598 = vpop.permute.xlu0 %2597
        %2599 = vrot.lane.b32.xlu0 %v2527, 32
        %v2600 = vpop.permute.xlu0 %2599
        %2601 = vrot.lane.b32.xlu0 %v2528, 32
        %v2602 = vpop.permute.xlu0 %2601
        %2603 = vrot.lane.b32.xlu0 %v2529, 32
        %v2604 = vpop.permute.xlu0 %2603
        %2605 = vrot.lane.b32.xlu0 %v2530, 32
        %v2606 = vpop.permute.xlu0 %2605
        %2607 = vrot.lane.b32.xlu0 %v2531, 32
        %v2608 = vpop.permute.xlu0 %2607
        %2609 = vrot.lane.b32.xlu0 %v2532, 32
        %v2610 = vpop.permute.xlu0 %2609
        %2611 = vrot.lane.b32.xlu0 %v2533, 32
        %v2612 = vpop.permute.xlu0 %2611
        %2613 = vrot.lane.b32.xlu0 %v2534, 32
        %v2614 = vpop.permute.xlu0 %2613
        %2615 = vrot.lane.b32.xlu0 %v2535, 32
        %v2616 = vpop.permute.xlu0 %2615
        %2617 = vrot.lane.b32.xlu0 %v2536, 32
        %v2618 = vpop.permute.xlu0 %2617
        %2619 = vrot.lane.b32.xlu0 %v2537, 32
        %v2620 = vpop.permute.xlu0 %2619
        %2621 = vrot.lane.b32.xlu0 %v2538, 32
        %v2622 = vpop.permute.xlu0 %2621
        %2623 = vrot.lane.b32.xlu0 %v2539, 32
        %v2624 = vpop.permute.xlu0 %2623
        %2625 = vrot.lane.b32.xlu0 %v2540, 32
        %v2626 = vpop.permute.xlu0 %2625
        %2627 = vrot.lane.b32.xlu0 %v2541, 32
        %v2628 = vpop.permute.xlu0 %2627
        %2629 = vrot.lane.b32.xlu0 %v2542, 32
        %v2630 = vpop.permute.xlu0 %2629
        %2631 = vrot.lane.b32.xlu0 %v2543, 32
        %v2632 = vpop.permute.xlu0 %2631
        %2633 = vrot.lane.b32.xlu0 %v2544, 32
        %v2634 = vpop.permute.xlu0 %2633
        %2635 = vrot.lane.b32.xlu0 %v2545, 32
        %v2636 = vpop.permute.xlu0 %2635
        %2637 = vrot.lane.b32.xlu0 %v2546, 32
        %v2638 = vpop.permute.xlu0 %2637
        %2639 = vrot.lane.b32.xlu0 %v2547, 32
        %v2640 = vpop.permute.xlu0 %2639
        %2641 = vrot.lane.b32.xlu0 %v2548, 32
        %v2642 = vpop.permute.xlu0 %2641
        %2643 = vrot.lane.b32.xlu0 %v2549, 32
        %v2644 = vpop.permute.xlu0 %2643
        %2645 = vrot.lane.b32.xlu0 %v2550, 32
        %v2646 = vpop.permute.xlu0 %2645
        %vm2679 = vcmask 523520
        %2680 = vst.msk [vmem:[#allocation4] sm:$0xff] %vm2679, %v2584
        %2681 = vst.msk [vmem:[#allocation4 + $0x18] sm:$0xff] %vm2679, %v2586
        %2682 = vst.msk [vmem:[#allocation4 + $0x30] sm:$0xff] %vm2679, %v2588
        %2683 = vst.msk [vmem:[#allocation4 + $0x48] sm:$0xff] %vm2679, %v2590
        %2684 = vst.msk [vmem:[#allocation4 + $0x60] sm:$0xff] %vm2679, %v2592
        %2685 = vst.msk [vmem:[#allocation4 + $0x78] sm:$0xff] %vm2679, %v2594
        %2686 = vst.msk [vmem:[#allocation4 + $0x90] sm:$0xff] %vm2679, %v2596
        %2687 = vst.msk [vmem:[#allocation4 + $0xa8] sm:$0xff] %vm2679, %v2598
        %2688 = vst.msk [vmem:[#allocation4 + $0xc0] sm:$0xff] %vm2679, %v2600
        %2689 = vst.msk [vmem:[#allocation4 + $0xd8] sm:$0xff] %vm2679, %v2602
        %2690 = vst.msk [vmem:[#allocation4 + $0xf0] sm:$0xff] %vm2679, %v2604
        %2691 = vst.msk [vmem:[#allocation4 + $0x108] sm:$0xff] %vm2679, %v2606
        %2692 = vst.msk [vmem:[#allocation4 + $0x120] sm:$0xff] %vm2679, %v2608
        %2693 = vst.msk [vmem:[#allocation4 + $0x138] sm:$0xff] %vm2679, %v2610
        %2694 = vst.msk [vmem:[#allocation4 + $0x150] sm:$0xff] %vm2679, %v2612
        %2695 = vst.msk [vmem:[#allocation4 + $0x168] sm:$0xff] %vm2679, %v2614
        %2696 = vst.msk [vmem:[#allocation4 + $0x180] sm:$0xff] %vm2679, %v2616
        %2697 = vst.msk [vmem:[#allocation4 + $0x198] sm:$0xff] %vm2679, %v2618
        %2698 = vst.msk [vmem:[#allocation4 + $0x1b0] sm:$0xff] %vm2679, %v2620
        %2699 = vst.msk [vmem:[#allocation4 + $0x1c8] sm:$0xff] %vm2679, %v2622
        %2700 = vst.msk [vmem:[#allocation4 + $0x1e0] sm:$0xff] %vm2679, %v2624
        %2701 = vst.msk [vmem:[#allocation4 + $0x1f8] sm:$0xff] %vm2679, %v2626
        %2702 = vst.msk [vmem:[#allocation4 + $0x210] sm:$0xff] %vm2679, %v2628
        %2703 = vst.msk [vmem:[#allocation4 + $0x228] sm:$0xff] %vm2679, %v2630
        %2704 = vst.msk [vmem:[#allocation4 + $0x240] sm:$0xff] %vm2679, %v2632
        %2705 = vst.msk [vmem:[#allocation4 + $0x258] sm:$0xff] %vm2679, %v2634
        %2706 = vst.msk [vmem:[#allocation4 + $0x270] sm:$0xff] %vm2679, %v2636
        %2707 = vst.msk [vmem:[#allocation4 + $0x288] sm:$0xff] %vm2679, %v2638
        %2708 = vst.msk [vmem:[#allocation4 + $0x2a0] sm:$0xff] %vm2679, %v2640
        %2709 = vst.msk [vmem:[#allocation4 + $0x2b8] sm:$0xff] %vm2679, %v2642
        %2710 = vst.msk [vmem:[#allocation4 + $0x2d0] sm:$0xff] %vm2679, %v2644
        %2711 = vst.msk [vmem:[#allocation4 + $0x2e8] sm:$0xff] %vm2679, %v2646
        %v2712 = vld [vmem:[#allocation2 + $0x2] sm:$0xff]
        %v2713 = vld [vmem:[#allocation2 + $0xa] sm:$0xff]
        %v2714 = vld [vmem:[#allocation2 + $0x1a] sm:$0xff]
        %v2715 = vld [vmem:[#allocation2 + $0x22] sm:$0xff]
        %v2716 = vld [vmem:[#allocation2 + $0x32] sm:$0xff]
        %v2717 = vld [vmem:[#allocation2 + $0x3a] sm:$0xff]
        %v2718 = vld [vmem:[#allocation2 + $0x4a] sm:$0xff]
        %v2719 = vld [vmem:[#allocation2 + $0x52] sm:$0xff]
        %v2720 = vld [vmem:[#allocation2 + $0x62] sm:$0xff]
        %v2721 = vld [vmem:[#allocation2 + $0x6a] sm:$0xff]
        %v2722 = vld [vmem:[#allocation2 + $0x7a] sm:$0xff]
        %v2723 = vld [vmem:[#allocation2 + $0x82] sm:$0xff]
        %v2724 = vld [vmem:[#allocation2 + $0x92] sm:$0xff]
        %v2725 = vld [vmem:[#allocation2 + $0x9a] sm:$0xff]
        %v2726 = vld [vmem:[#allocation2 + $0xaa] sm:$0xff]
        %v2727 = vld [vmem:[#allocation2 + $0xb2] sm:$0xff]
        %v2728 = vld [vmem:[#allocation2 + $0xc2] sm:$0xff]
        %v2729 = vld [vmem:[#allocation2 + $0xca] sm:$0xff]
        %v2730 = vld [vmem:[#allocation2 + $0xda] sm:$0xff]
        %v2731 = vld [vmem:[#allocation2 + $0xe2] sm:$0xff]
        %v2732 = vld [vmem:[#allocation2 + $0xf2] sm:$0xff]
        %v2733 = vld [vmem:[#allocation2 + $0xfa] sm:$0xff]
        %v2734 = vld [vmem:[#allocation2 + $0x10a] sm:$0xff]
        %v2735 = vld [vmem:[#allocation2 + $0x112] sm:$0xff]
        %v2736 = vld [vmem:[#allocation2 + $0x122] sm:$0xff]
        %v2737 = vld [vmem:[#allocation2 + $0x12a] sm:$0xff]
        %v2738 = vld [vmem:[#allocation2 + $0x13a] sm:$0xff]
        %v2739 = vld [vmem:[#allocation2 + $0x142] sm:$0xff]
        %v2740 = vld [vmem:[#allocation2 + $0x152] sm:$0xff]
        %v2741 = vld [vmem:[#allocation2 + $0x15a] sm:$0xff]
        %v2742 = vld [vmem:[#allocation2 + $0x16a] sm:$0xff]
        %v2743 = vld [vmem:[#allocation2 + $0x172] sm:$0xff]
        %2776 = vrot.lane.b32.xlu0 %v2712, 64
        %v2777 = vpop.permute.xlu0 %2776
        %2778 = vrot.lane.b32.xlu0 %v2713, 64
        %v2779 = vpop.permute.xlu0 %2778
        %2780 = vrot.lane.b32.xlu0 %v2714, 64
        %v2781 = vpop.permute.xlu0 %2780
        %2782 = vrot.lane.b32.xlu0 %v2715, 64
        %v2783 = vpop.permute.xlu0 %2782
        %2784 = vrot.lane.b32.xlu0 %v2716, 64
        %v2785 = vpop.permute.xlu0 %2784
        %2786 = vrot.lane.b32.xlu0 %v2717, 64
        %v2787 = vpop.permute.xlu0 %2786
        %2788 = vrot.lane.b32.xlu0 %v2718, 64
        %v2789 = vpop.permute.xlu0 %2788
        %2790 = vrot.lane.b32.xlu0 %v2719, 64
        %v2791 = vpop.permute.xlu0 %2790
        %2792 = vrot.lane.b32.xlu0 %v2720, 64
        %v2793 = vpop.permute.xlu0 %2792
        %2794 = vrot.lane.b32.xlu0 %v2721, 64
        %v2795 = vpop.permute.xlu0 %2794
        %2796 = vrot.lane.b32.xlu0 %v2722, 64
        %v2797 = vpop.permute.xlu0 %2796
        %2798 = vrot.lane.b32.xlu0 %v2723, 64
        %v2799 = vpop.permute.xlu0 %2798
        %2800 = vrot.lane.b32.xlu0 %v2724, 64
        %v2801 = vpop.permute.xlu0 %2800
        %2802 = vrot.lane.b32.xlu0 %v2725, 64
        %v2803 = vpop.permute.xlu0 %2802
        %2804 = vrot.lane.b32.xlu0 %v2726, 64
        %v2805 = vpop.permute.xlu0 %2804
        %2806 = vrot.lane.b32.xlu0 %v2727, 64
        %v2807 = vpop.permute.xlu0 %2806
        %2808 = vrot.lane.b32.xlu0 %v2728, 64
        %v2809 = vpop.permute.xlu0 %2808
        %2810 = vrot.lane.b32.xlu0 %v2729, 64
        %v2811 = vpop.permute.xlu0 %2810
        %2812 = vrot.lane.b32.xlu0 %v2730, 64
        %v2813 = vpop.permute.xlu0 %2812
        %2814 = vrot.lane.b32.xlu0 %v2731, 64
        %v2815 = vpop.permute.xlu0 %2814
        %2816 = vrot.lane.b32.xlu0 %v2732, 64
        %v2817 = vpop.permute.xlu0 %2816
        %2818 = vrot.lane.b32.xlu0 %v2733, 64
        %v2819 = vpop.permute.xlu0 %2818
        %2820 = vrot.lane.b32.xlu0 %v2734, 64
        %v2821 = vpop.permute.xlu0 %2820
        %2822 = vrot.lane.b32.xlu0 %v2735, 64
        %v2823 = vpop.permute.xlu0 %2822
        %2824 = vrot.lane.b32.xlu0 %v2736, 64
        %v2825 = vpop.permute.xlu0 %2824
        %2826 = vrot.lane.b32.xlu0 %v2737, 64
        %v2827 = vpop.permute.xlu0 %2826
        %2828 = vrot.lane.b32.xlu0 %v2738, 64
        %v2829 = vpop.permute.xlu0 %2828
        %2830 = vrot.lane.b32.xlu0 %v2739, 64
        %v2831 = vpop.permute.xlu0 %2830
        %2832 = vrot.lane.b32.xlu0 %v2740, 64
        %v2833 = vpop.permute.xlu0 %2832
        %2834 = vrot.lane.b32.xlu0 %v2741, 64
        %v2835 = vpop.permute.xlu0 %2834
        %2836 = vrot.lane.b32.xlu0 %v2742, 64
        %v2837 = vpop.permute.xlu0 %2836
        %2838 = vrot.lane.b32.xlu0 %v2743, 64
        %v2839 = vpop.permute.xlu0 %2838
        %vm2872 = vcmask 785920
        %2873 = vst.msk [vmem:[#allocation4] sm:$0xff] %vm2872, %v2777
        %2874 = vst.msk [vmem:[#allocation4 + $0x18] sm:$0xff] %vm2872, %v2779
        %2875 = vst.msk [vmem:[#allocation4 + $0x30] sm:$0xff] %vm2872, %v2781
        %2876 = vst.msk [vmem:[#allocation4 + $0x48] sm:$0xff] %vm2872, %v2783
        %2877 = vst.msk [vmem:[#allocation4 + $0x60] sm:$0xff] %vm2872, %v2785
        %2878 = vst.msk [vmem:[#allocation4 + $0x78] sm:$0xff] %vm2872, %v2787
        %2879 = vst.msk [vmem:[#allocation4 + $0x90] sm:$0xff] %vm2872, %v2789
        %2880 = vst.msk [vmem:[#allocation4 + $0xa8] sm:$0xff] %vm2872, %v2791
        %2881 = vst.msk [vmem:[#allocation4 + $0xc0] sm:$0xff] %vm2872, %v2793
        %2882 = vst.msk [vmem:[#allocation4 + $0xd8] sm:$0xff] %vm2872, %v2795
        %2883 = vst.msk [vmem:[#allocation4 + $0xf0] sm:$0xff] %vm2872, %v2797
        %2884 = vst.msk [vmem:[#allocation4 + $0x108] sm:$0xff] %vm2872, %v2799
        %2885 = vst.msk [vmem:[#allocation4 + $0x120] sm:$0xff] %vm2872, %v2801
        %2886 = vst.msk [vmem:[#allocation4 + $0x138] sm:$0xff] %vm2872, %v2803
        %2887 = vst.msk [vmem:[#allocation4 + $0x150] sm:$0xff] %vm2872, %v2805
        %2888 = vst.msk [vmem:[#allocation4 + $0x168] sm:$0xff] %vm2872, %v2807
        %2889 = vst.msk [vmem:[#allocation4 + $0x180] sm:$0xff] %vm2872, %v2809
        %2890 = vst.msk [vmem:[#allocation4 + $0x198] sm:$0xff] %vm2872, %v2811
        %2891 = vst.msk [vmem:[#allocation4 + $0x1b0] sm:$0xff] %vm2872, %v2813
        %2892 = vst.msk [vmem:[#allocation4 + $0x1c8] sm:$0xff] %vm2872, %v2815
        %2893 = vst.msk [vmem:[#allocation4 + $0x1e0] sm:$0xff] %vm2872, %v2817
        %2894 = vst.msk [vmem:[#allocation4 + $0x1f8] sm:$0xff] %vm2872, %v2819
        %2895 = vst.msk [vmem:[#allocation4 + $0x210] sm:$0xff] %vm2872, %v2821
        %2896 = vst.msk [vmem:[#allocation4 + $0x228] sm:$0xff] %vm2872, %v2823
        %2897 = vst.msk [vmem:[#allocation4 + $0x240] sm:$0xff] %vm2872, %v2825
        %2898 = vst.msk [vmem:[#allocation4 + $0x258] sm:$0xff] %vm2872, %v2827
        %2899 = vst.msk [vmem:[#allocation4 + $0x270] sm:$0xff] %vm2872, %v2829
        %2900 = vst.msk [vmem:[#allocation4 + $0x288] sm:$0xff] %vm2872, %v2831
        %2901 = vst.msk [vmem:[#allocation4 + $0x2a0] sm:$0xff] %vm2872, %v2833
        %2902 = vst.msk [vmem:[#allocation4 + $0x2b8] sm:$0xff] %vm2872, %v2835
        %2903 = vst.msk [vmem:[#allocation4 + $0x2d0] sm:$0xff] %vm2872, %v2837
        %2904 = vst.msk [vmem:[#allocation4 + $0x2e8] sm:$0xff] %vm2872, %v2839
        %v2905 = vld [vmem:[%s2422] sm:$0xff]
        %v2906 = vld [vmem:[%s2422 + $0x8] sm:$0xff]
        %v2907 = vld [vmem:[%s2422 + $0x18] sm:$0xff]
        %v2908 = vld [vmem:[%s2422 + $0x20] sm:$0xff]
        %v2909 = vld [vmem:[%s2422 + $0x30] sm:$0xff]
        %v2910 = vld [vmem:[%s2422 + $0x38] sm:$0xff]
        %v2911 = vld [vmem:[%s2422 + $0x48] sm:$0xff]
        %v2912 = vld [vmem:[%s2422 + $0x50] sm:$0xff]
        %v2913 = vld [vmem:[%s2422 + $0x60] sm:$0xff]
        %v2914 = vld [vmem:[%s2422 + $0x68] sm:$0xff]
        %v2915 = vld [vmem:[%s2422 + $0x78] sm:$0xff]
        %v2916 = vld [vmem:[%s2422 + $0x80] sm:$0xff]
        %v2917 = vld [vmem:[%s2422 + $0x90] sm:$0xff]
        %v2918 = vld [vmem:[%s2422 + $0x98] sm:$0xff]
        %v2919 = vld [vmem:[%s2422 + $0xa8] sm:$0xff]
        %v2920 = vld [vmem:[%s2422 + $0xb0] sm:$0xff]
        %v2921 = vld [vmem:[%s2422 + $0xc0] sm:$0xff]
        %v2922 = vld [vmem:[%s2422 + $0xc8] sm:$0xff]
        %v2923 = vld [vmem:[%s2422 + $0xd8] sm:$0xff]
        %v2924 = vld [vmem:[%s2422 + $0xe0] sm:$0xff]
        %v2925 = vld [vmem:[%s2422 + $0xf0] sm:$0xff]
        %v2926 = vld [vmem:[%s2422 + $0xf8] sm:$0xff]
        %v2927 = vld [vmem:[%s2422 + $0x108] sm:$0xff]
        %v2928 = vld [vmem:[%s2422 + $0x110] sm:$0xff]
        %v2929 = vld [vmem:[%s2422 + $0x120] sm:$0xff]
        %v2930 = vld [vmem:[%s2422 + $0x128] sm:$0xff]
        %v2931 = vld [vmem:[%s2422 + $0x138] sm:$0xff]
        %v2932 = vld [vmem:[%s2422 + $0x140] sm:$0xff]
        %v2933 = vld [vmem:[%s2422 + $0x150] sm:$0xff]
        %v2934 = vld [vmem:[%s2422 + $0x158] sm:$0xff]
        %v2935 = vld [vmem:[%s2422 + $0x168] sm:$0xff]
        %v2936 = vld [vmem:[%s2422 + $0x170] sm:$0xff]
        %2969 = vrot.lane.b32.xlu0 %v2905, 96
        %v2970 = vpop.permute.xlu0 %2969
        %2971 = vrot.lane.b32.xlu0 %v2906, 96
        %v2972 = vpop.permute.xlu0 %2971
        %2973 = vrot.lane.b32.xlu0 %v2907, 96
        %v2974 = vpop.permute.xlu0 %2973
        %2975 = vrot.lane.b32.xlu0 %v2908, 96
        %v2976 = vpop.permute.xlu0 %2975
        %2977 = vrot.lane.b32.xlu0 %v2909, 96
        %v2978 = vpop.permute.xlu0 %2977
        %2979 = vrot.lane.b32.xlu0 %v2910, 96
        %v2980 = vpop.permute.xlu0 %2979
        %2981 = vrot.lane.b32.xlu0 %v2911, 96
        %v2982 = vpop.permute.xlu0 %2981
        %2983 = vrot.lane.b32.xlu0 %v2912, 96
        %v2984 = vpop.permute.xlu0 %2983
        %2985 = vrot.lane.b32.xlu0 %v2913, 96
        %v2986 = vpop.permute.xlu0 %2985
        %2987 = vrot.lane.b32.xlu0 %v2914, 96
        %v2988 = vpop.permute.xlu0 %2987
        %2989 = vrot.lane.b32.xlu0 %v2915, 96
        %v2990 = vpop.permute.xlu0 %2989
        %2991 = vrot.lane.b32.xlu0 %v2916, 96
        %v2992 = vpop.permute.xlu0 %2991
        %2993 = vrot.lane.b32.xlu0 %v2917, 96
        %v2994 = vpop.permute.xlu0 %2993
        %2995 = vrot.lane.b32.xlu0 %v2918, 96
        %v2996 = vpop.permute.xlu0 %2995
        %2997 = vrot.lane.b32.xlu0 %v2919, 96
        %v2998 = vpop.permute.xlu0 %2997
        %2999 = vrot.lane.b32.xlu0 %v2920, 96
        %v3000 = vpop.permute.xlu0 %2999
        %3001 = vrot.lane.b32.xlu0 %v2921, 96
        %v3002 = vpop.permute.xlu0 %3001
        %3003 = vrot.lane.b32.xlu0 %v2922, 96
        %v3004 = vpop.permute.xlu0 %3003
        %3005 = vrot.lane.b32.xlu0 %v2923, 96
        %v3006 = vpop.permute.xlu0 %3005
        %3007 = vrot.lane.b32.xlu0 %v2924, 96
        %v3008 = vpop.permute.xlu0 %3007
        %3009 = vrot.lane.b32.xlu0 %v2925, 96
        %v3010 = vpop.permute.xlu0 %3009
        %3011 = vrot.lane.b32.xlu0 %v2926, 96
        %v3012 = vpop.permute.xlu0 %3011
        %3013 = vrot.lane.b32.xlu0 %v2927, 96
        %v3014 = vpop.permute.xlu0 %3013
        %3015 = vrot.lane.b32.xlu0 %v2928, 96
        %v3016 = vpop.permute.xlu0 %3015
        %3017 = vrot.lane.b32.xlu0 %v2929, 96
        %v3018 = vpop.permute.xlu0 %3017
        %3019 = vrot.lane.b32.xlu0 %v2930, 96
        %v3020 = vpop.permute.xlu0 %3019
        %3021 = vrot.lane.b32.xlu0 %v2931, 96
        %v3022 = vpop.permute.xlu0 %3021
        %3023 = vrot.lane.b32.xlu0 %v2932, 96
        %v3024 = vpop.permute.xlu0 %3023
        %3025 = vrot.lane.b32.xlu0 %v2933, 96
        %v3026 = vpop.permute.xlu0 %3025
        %3027 = vrot.lane.b32.xlu0 %v2934, 96
        %v3028 = vpop.permute.xlu0 %3027
        %3029 = vrot.lane.b32.xlu0 %v2935, 96
        %v3030 = vpop.permute.xlu0 %3029
        %3031 = vrot.lane.b32.xlu0 %v2936, 96
        %v3032 = vpop.permute.xlu0 %3031
        %vm3065 = vcmask 1048320
        %3066 = vst.msk [vmem:[#allocation4] sm:$0xff] %vm3065, %v2970
        %3067 = vst.msk [vmem:[#allocation4 + $0x18] sm:$0xff] %vm3065, %v2972
        %3068 = vst.msk [vmem:[#allocation4 + $0x30] sm:$0xff] %vm3065, %v2974
        %3069 = vst.msk [vmem:[#allocation4 + $0x48] sm:$0xff] %vm3065, %v2976
        %3070 = vst.msk [vmem:[#allocation4 + $0x60] sm:$0xff] %vm3065, %v2978
        %3071 = vst.msk [vmem:[#allocation4 + $0x78] sm:$0xff] %vm3065, %v2980
        %3072 = vst.msk [vmem:[#allocation4 + $0x90] sm:$0xff] %vm3065, %v2982
        %3073 = vst.msk [vmem:[#allocation4 + $0xa8] sm:$0xff] %vm3065, %v2984
        %3074 = vst.msk [vmem:[#allocation4 + $0xc0] sm:$0xff] %vm3065, %v2986
        %3075 = vst.msk [vmem:[#allocation4 + $0xd8] sm:$0xff] %vm3065, %v2988
        %3076 = vst.msk [vmem:[#allocation4 + $0xf0] sm:$0xff] %vm3065, %v2990
        %3077 = vst.msk [vmem:[#allocation4 + $0x108] sm:$0xff] %vm3065, %v2992
        %3078 = vst.msk [vmem:[#allocation4 + $0x120] sm:$0xff] %vm3065, %v2994
        %3079 = vst.msk [vmem:[#allocation4 + $0x138] sm:$0xff] %vm3065, %v2996
        %3080 = vst.msk [vmem:[#allocation4 + $0x150] sm:$0xff] %vm3065, %v2998
        %3081 = vst.msk [vmem:[#allocation4 + $0x168] sm:$0xff] %vm3065, %v3000
        %3082 = vst.msk [vmem:[#allocation4 + $0x180] sm:$0xff] %vm3065, %v3002
        %3083 = vst.msk [vmem:[#allocation4 + $0x198] sm:$0xff] %vm3065, %v3004
        %3084 = vst.msk [vmem:[#allocation4 + $0x1b0] sm:$0xff] %vm3065, %v3006
        %3085 = vst.msk [vmem:[#allocation4 + $0x1c8] sm:$0xff] %vm3065, %v3008
        %3086 = vst.msk [vmem:[#allocation4 + $0x1e0] sm:$0xff] %vm3065, %v3010
        %3087 = vst.msk [vmem:[#allocation4 + $0x1f8] sm:$0xff] %vm3065, %v3012
        %3088 = vst.msk [vmem:[#allocation4 + $0x210] sm:$0xff] %vm3065, %v3014
        %3089 = vst.msk [vmem:[#allocation4 + $0x228] sm:$0xff] %vm3065, %v3016
        %3090 = vst.msk [vmem:[#allocation4 + $0x240] sm:$0xff] %vm3065, %v3018
        %3091 = vst.msk [vmem:[#allocation4 + $0x258] sm:$0xff] %vm3065, %v3020
        %3092 = vst.msk [vmem:[#allocation4 + $0x270] sm:$0xff] %vm3065, %v3022
        %3093 = vst.msk [vmem:[#allocation4 + $0x288] sm:$0xff] %vm3065, %v3024
        %3094 = vst.msk [vmem:[#allocation4 + $0x2a0] sm:$0xff] %vm3065, %v3026
        %3095 = vst.msk [vmem:[#allocation4 + $0x2b8] sm:$0xff] %vm3065, %v3028
        %3096 = vst.msk [vmem:[#allocation4 + $0x2d0] sm:$0xff] %vm3065, %v3030
        %3097 = vst.msk [vmem:[#allocation4 + $0x2e8] sm:$0xff] %vm3065, %v3032
        %v3098 = vld [vmem:[%s2422 + $0x1] sm:$0xff]
        %v3099 = vld [vmem:[%s2422 + $0x9] sm:$0xff]
        %v3100 = vld [vmem:[%s2422 + $0x19] sm:$0xff]
        %v3101 = vld [vmem:[%s2422 + $0x21] sm:$0xff]
        %v3102 = vld [vmem:[%s2422 + $0x31] sm:$0xff]
        %v3103 = vld [vmem:[%s2422 + $0x39] sm:$0xff]
        %v3104 = vld [vmem:[%s2422 + $0x49] sm:$0xff]
        %v3105 = vld [vmem:[%s2422 + $0x51] sm:$0xff]
        %v3106 = vld [vmem:[%s2422 + $0x61] sm:$0xff]
        %v3107 = vld [vmem:[%s2422 + $0x69] sm:$0xff]
        %v3108 = vld [vmem:[%s2422 + $0x79] sm:$0xff]
        %v3109 = vld [vmem:[%s2422 + $0x81] sm:$0xff]
        %v3110 = vld [vmem:[%s2422 + $0x91] sm:$0xff]
        %v3111 = vld [vmem:[%s2422 + $0x99] sm:$0xff]
        %v3112 = vld [vmem:[%s2422 + $0xa9] sm:$0xff]
        %v3113 = vld [vmem:[%s2422 + $0xb1] sm:$0xff]
        %v3114 = vld [vmem:[%s2422 + $0xc1] sm:$0xff]
        %v3115 = vld [vmem:[%s2422 + $0xc9] sm:$0xff]
        %v3116 = vld [vmem:[%s2422 + $0xd9] sm:$0xff]
        %v3117 = vld [vmem:[%s2422 + $0xe1] sm:$0xff]
        %v3118 = vld [vmem:[%s2422 + $0xf1] sm:$0xff]
        %v3119 = vld [vmem:[%s2422 + $0xf9] sm:$0xff]
        %v3120 = vld [vmem:[%s2422 + $0x109] sm:$0xff]
        %v3121 = vld [vmem:[%s2422 + $0x111] sm:$0xff]
        %v3122 = vld [vmem:[%s2422 + $0x121] sm:$0xff]
        %v3123 = vld [vmem:[%s2422 + $0x129] sm:$0xff]
        %v3124 = vld [vmem:[%s2422 + $0x139] sm:$0xff]
        %v3125 = vld [vmem:[%s2422 + $0x141] sm:$0xff]
        %v3126 = vld [vmem:[%s2422 + $0x151] sm:$0xff]
        %v3127 = vld [vmem:[%s2422 + $0x159] sm:$0xff]
        %v3128 = vld [vmem:[%s2422 + $0x169] sm:$0xff]
        %v3129 = vld [vmem:[%s2422 + $0x171] sm:$0xff]
        %3130 = vst.msk [vmem:[#allocation4 + $0x8] sm:$0xff] %vm853, %v3098
        %3131 = vst.msk [vmem:[#allocation4 + $0x20] sm:$0xff] %vm853, %v3099
        %3132 = vst.msk [vmem:[#allocation4 + $0x38] sm:$0xff] %vm853, %v3100
        %3133 = vst.msk [vmem:[#allocation4 + $0x50] sm:$0xff] %vm853, %v3101
        %3134 = vst.msk [vmem:[#allocation4 + $0x68] sm:$0xff] %vm853, %v3102
        %3135 = vst.msk [vmem:[#allocation4 + $0x80] sm:$0xff] %vm853, %v3103
        %3136 = vst.msk [vmem:[#allocation4 + $0x98] sm:$0xff] %vm853, %v3104
        %3137 = vst.msk [vmem:[#allocation4 + $0xb0] sm:$0xff] %vm853, %v3105
        %3138 = vst.msk [vmem:[#allocation4 + $0xc8] sm:$0xff] %vm853, %v3106
        %3139 = vst.msk [vmem:[#allocation4 + $0xe0] sm:$0xff] %vm853, %v3107
        %3140 = vst.msk [vmem:[#allocation4 + $0xf8] sm:$0xff] %vm853, %v3108
        %3141 = vst.msk [vmem:[#allocation4 + $0x110] sm:$0xff] %vm853, %v3109
        %3142 = vst.msk [vmem:[#allocation4 + $0x128] sm:$0xff] %vm853, %v3110
        %3143 = vst.msk [vmem:[#allocation4 + $0x140] sm:$0xff] %vm853, %v3111
        %3144 = vst.msk [vmem:[#allocation4 + $0x158] sm:$0xff] %vm853, %v3112
        %3145 = vst.msk [vmem:[#allocation4 + $0x170] sm:$0xff] %vm853, %v3113
        %3146 = vst.msk [vmem:[#allocation4 + $0x188] sm:$0xff] %vm853, %v3114
        %3147 = vst.msk [vmem:[#allocation4 + $0x1a0] sm:$0xff] %vm853, %v3115
        %3148 = vst.msk [vmem:[#allocation4 + $0x1b8] sm:$0xff] %vm853, %v3116
        %3149 = vst.msk [vmem:[#allocation4 + $0x1d0] sm:$0xff] %vm853, %v3117
        %3150 = vst.msk [vmem:[#allocation4 + $0x1e8] sm:$0xff] %vm853, %v3118
        %3151 = vst.msk [vmem:[#allocation4 + $0x200] sm:$0xff] %vm853, %v3119
        %3152 = vst.msk [vmem:[#allocation4 + $0x218] sm:$0xff] %vm853, %v3120
        %3153 = vst.msk [vmem:[#allocation4 + $0x230] sm:$0xff] %vm853, %v3121
        %3154 = vst.msk [vmem:[#allocation4 + $0x248] sm:$0xff] %vm853, %v3122
        %3155 = vst.msk [vmem:[#allocation4 + $0x260] sm:$0xff] %vm853, %v3123
        %3156 = vst.msk [vmem:[#allocation4 + $0x278] sm:$0xff] %vm853, %v3124
        %3157 = vst.msk [vmem:[#allocation4 + $0x290] sm:$0xff] %vm853, %v3125
        %3158 = vst.msk [vmem:[#allocation4 + $0x2a8] sm:$0xff] %vm853, %v3126
        %3159 = vst.msk [vmem:[#allocation4 + $0x2c0] sm:$0xff] %vm853, %v3127
        %3160 = vst.msk [vmem:[#allocation4 + $0x2d8] sm:$0xff] %vm853, %v3128
        %3161 = vst.msk [vmem:[#allocation4 + $0x2f0] sm:$0xff] %vm853, %v3129
        %v3162 = vld [vmem:[%s2422 + $0x2] sm:$0xff]
        %v3163 = vld [vmem:[%s2422 + $0xa] sm:$0xff]
        %v3164 = vld [vmem:[%s2422 + $0x1a] sm:$0xff]
        %v3165 = vld [vmem:[%s2422 + $0x22] sm:$0xff]
        %v3166 = vld [vmem:[%s2422 + $0x32] sm:$0xff]
        %v3167 = vld [vmem:[%s2422 + $0x3a] sm:$0xff]
        %v3168 = vld [vmem:[%s2422 + $0x4a] sm:$0xff]
        %v3169 = vld [vmem:[%s2422 + $0x52] sm:$0xff]
        %v3170 = vld [vmem:[%s2422 + $0x62] sm:$0xff]
        %v3171 = vld [vmem:[%s2422 + $0x6a] sm:$0xff]
        %v3172 = vld [vmem:[%s2422 + $0x7a] sm:$0xff]
        %v3173 = vld [vmem:[%s2422 + $0x82] sm:$0xff]
        %v3174 = vld [vmem:[%s2422 + $0x92] sm:$0xff]
        %v3175 = vld [vmem:[%s2422 + $0x9a] sm:$0xff]
        %v3176 = vld [vmem:[%s2422 + $0xaa] sm:$0xff]
        %v3177 = vld [vmem:[%s2422 + $0xb2] sm:$0xff]
        %v3178 = vld [vmem:[%s2422 + $0xc2] sm:$0xff]
        %v3179 = vld [vmem:[%s2422 + $0xca] sm:$0xff]
        %v3180 = vld [vmem:[%s2422 + $0xda] sm:$0xff]
        %v3181 = vld [vmem:[%s2422 + $0xe2] sm:$0xff]
        %v3182 = vld [vmem:[%s2422 + $0xf2] sm:$0xff]
        %v3183 = vld [vmem:[%s2422 + $0xfa] sm:$0xff]
        %v3184 = vld [vmem:[%s2422 + $0x10a] sm:$0xff]
        %v3185 = vld [vmem:[%s2422 + $0x112] sm:$0xff]
        %v3186 = vld [vmem:[%s2422 + $0x122] sm:$0xff]
        %v3187 = vld [vmem:[%s2422 + $0x12a] sm:$0xff]
        %v3188 = vld [vmem:[%s2422 + $0x13a] sm:$0xff]
        %v3189 = vld [vmem:[%s2422 + $0x142] sm:$0xff]
        %v3190 = vld [vmem:[%s2422 + $0x152] sm:$0xff]
        %v3191 = vld [vmem:[%s2422 + $0x15a] sm:$0xff]
        %v3192 = vld [vmem:[%s2422 + $0x16a] sm:$0xff]
        %v3193 = vld [vmem:[%s2422 + $0x172] sm:$0xff]
        %3226 = vrot.lane.b32.xlu0 %v3162, 32
        %v3227 = vpop.permute.xlu0 %3226
        %3228 = vrot.lane.b32.xlu0 %v3163, 32
        %v3229 = vpop.permute.xlu0 %3228
        %3230 = vrot.lane.b32.xlu0 %v3164, 32
        %v3231 = vpop.permute.xlu0 %3230
        %3232 = vrot.lane.b32.xlu0 %v3165, 32
        %v3233 = vpop.permute.xlu0 %3232
        %3234 = vrot.lane.b32.xlu0 %v3166, 32
        %v3235 = vpop.permute.xlu0 %3234
        %3236 = vrot.lane.b32.xlu0 %v3167, 32
        %v3237 = vpop.permute.xlu0 %3236
        %3238 = vrot.lane.b32.xlu0 %v3168, 32
        %v3239 = vpop.permute.xlu0 %3238
        %3240 = vrot.lane.b32.xlu0 %v3169, 32
        %v3241 = vpop.permute.xlu0 %3240
        %3242 = vrot.lane.b32.xlu0 %v3170, 32
        %v3243 = vpop.permute.xlu0 %3242
        %3244 = vrot.lane.b32.xlu0 %v3171, 32
        %v3245 = vpop.permute.xlu0 %3244
        %3246 = vrot.lane.b32.xlu0 %v3172, 32
        %v3247 = vpop.permute.xlu0 %3246
        %3248 = vrot.lane.b32.xlu0 %v3173, 32
        %v3249 = vpop.permute.xlu0 %3248
        %3250 = vrot.lane.b32.xlu0 %v3174, 32
        %v3251 = vpop.permute.xlu0 %3250
        %3252 = vrot.lane.b32.xlu0 %v3175, 32
        %v3253 = vpop.permute.xlu0 %3252
        %3254 = vrot.lane.b32.xlu0 %v3176, 32
        %v3255 = vpop.permute.xlu0 %3254
        %3256 = vrot.lane.b32.xlu0 %v3177, 32
        %v3257 = vpop.permute.xlu0 %3256
        %3258 = vrot.lane.b32.xlu0 %v3178, 32
        %v3259 = vpop.permute.xlu0 %3258
        %3260 = vrot.lane.b32.xlu0 %v3179, 32
        %v3261 = vpop.permute.xlu0 %3260
        %3262 = vrot.lane.b32.xlu0 %v3180, 32
        %v3263 = vpop.permute.xlu0 %3262
        %3264 = vrot.lane.b32.xlu0 %v3181, 32
        %v3265 = vpop.permute.xlu0 %3264
        %3266 = vrot.lane.b32.xlu0 %v3182, 32
        %v3267 = vpop.permute.xlu0 %3266
        %3268 = vrot.lane.b32.xlu0 %v3183, 32
        %v3269 = vpop.permute.xlu0 %3268
        %3270 = vrot.lane.b32.xlu0 %v3184, 32
        %v3271 = vpop.permute.xlu0 %3270
        %3272 = vrot.lane.b32.xlu0 %v3185, 32
        %v3273 = vpop.permute.xlu0 %3272
        %3274 = vrot.lane.b32.xlu0 %v3186, 32
        %v3275 = vpop.permute.xlu0 %3274
        %3276 = vrot.lane.b32.xlu0 %v3187, 32
        %v3277 = vpop.permute.xlu0 %3276
        %3278 = vrot.lane.b32.xlu0 %v3188, 32
        %v3279 = vpop.permute.xlu0 %3278
        %3280 = vrot.lane.b32.xlu0 %v3189, 32
        %v3281 = vpop.permute.xlu0 %3280
        %3282 = vrot.lane.b32.xlu0 %v3190, 32
        %v3283 = vpop.permute.xlu0 %3282
        %3284 = vrot.lane.b32.xlu0 %v3191, 32
        %v3285 = vpop.permute.xlu0 %3284
        %3286 = vrot.lane.b32.xlu0 %v3192, 32
        %v3287 = vpop.permute.xlu0 %3286
        %3288 = vrot.lane.b32.xlu0 %v3193, 32
        %v3289 = vpop.permute.xlu0 %3288
        %3322 = vst.msk [vmem:[#allocation4 + $0x8] sm:$0xff] %vm2679, %v3227
        %3323 = vst.msk [vmem:[#allocation4 + $0x20] sm:$0xff] %vm2679, %v3229
        %3324 = vst.msk [vmem:[#allocation4 + $0x38] sm:$0xff] %vm2679, %v3231
        %3325 = vst.msk [vmem:[#allocation4 + $0x50] sm:$0xff] %vm2679, %v3233
        %3326 = vst.msk [vmem:[#allocation4 + $0x68] sm:$0xff] %vm2679, %v3235
        %3327 = vst.msk [vmem:[#allocation4 + $0x80] sm:$0xff] %vm2679, %v3237
        %3328 = vst.msk [vmem:[#allocation4 + $0x98] sm:$0xff] %vm2679, %v3239
        %3329 = vst.msk [vmem:[#allocation4 + $0xb0] sm:$0xff] %vm2679, %v3241
        %3330 = vst.msk [vmem:[#allocation4 + $0xc8] sm:$0xff] %vm2679, %v3243
        %3331 = vst.msk [vmem:[#allocation4 + $0xe0] sm:$0xff] %vm2679, %v3245
        %3332 = vst.msk [vmem:[#allocation4 + $0xf8] sm:$0xff] %vm2679, %v3247
        %3333 = vst.msk [vmem:[#allocation4 + $0x110] sm:$0xff] %vm2679, %v3249
        %3334 = vst.msk [vmem:[#allocation4 + $0x128] sm:$0xff] %vm2679, %v3251
        %3335 = vst.msk [vmem:[#allocation4 + $0x140] sm:$0xff] %vm2679, %v3253
        %3336 = vst.msk [vmem:[#allocation4 + $0x158] sm:$0xff] %vm2679, %v3255
        %3337 = vst.msk [vmem:[#allocation4 + $0x170] sm:$0xff] %vm2679, %v3257
        %3338 = vst.msk [vmem:[#allocation4 + $0x188] sm:$0xff] %vm2679, %v3259
        %3339 = vst.msk [vmem:[#allocation4 + $0x1a0] sm:$0xff] %vm2679, %v3261
        %3340 = vst.msk [vmem:[#allocation4 + $0x1b8] sm:$0xff] %vm2679, %v3263
        %3341 = vst.msk [vmem:[#allocation4 + $0x1d0] sm:$0xff] %vm2679, %v3265
        %3342 = vst.msk [vmem:[#allocation4 + $0x1e8] sm:$0xff] %vm2679, %v3267
        %3343 = vst.msk [vmem:[#allocation4 + $0x200] sm:$0xff] %vm2679, %v3269
        %3344 = vst.msk [vmem:[#allocation4 + $0x218] sm:$0xff] %vm2679, %v3271
        %3345 = vst.msk [vmem:[#allocation4 + $0x230] sm:$0xff] %vm2679, %v3273
        %3346 = vst.msk [vmem:[#allocation4 + $0x248] sm:$0xff] %vm2679, %v3275
        %3347 = vst.msk [vmem:[#allocation4 + $0x260] sm:$0xff] %vm2679, %v3277
        %3348 = vst.msk [vmem:[#allocation4 + $0x278] sm:$0xff] %vm2679, %v3279
        %3349 = vst.msk [vmem:[#allocation4 + $0x290] sm:$0xff] %vm2679, %v3281
        %3350 = vst.msk [vmem:[#allocation4 + $0x2a8] sm:$0xff] %vm2679, %v3283
        %3351 = vst.msk [vmem:[#allocation4 + $0x2c0] sm:$0xff] %vm2679, %v3285
        %3352 = vst.msk [vmem:[#allocation4 + $0x2d8] sm:$0xff] %vm2679, %v3287
        %3353 = vst.msk [vmem:[#allocation4 + $0x2f0] sm:$0xff] %vm2679, %v3289
        %s3354 = scalar_lea.vmem [#allocation2], 48
        %v3355 = vld [vmem:[%s3354] sm:$0xff]
        %v3356 = vld [vmem:[%s3354 + $0x8] sm:$0xff]
        %v3357 = vld [vmem:[%s3354 + $0x18] sm:$0xff]
        %v3358 = vld [vmem:[%s3354 + $0x20] sm:$0xff]
        %v3359 = vld [vmem:[%s3354 + $0x30] sm:$0xff]
        %v3360 = vld [vmem:[%s3354 + $0x38] sm:$0xff]
        %v3361 = vld [vmem:[%s3354 + $0x48] sm:$0xff]
        %v3362 = vld [vmem:[%s3354 + $0x50] sm:$0xff]
        %v3363 = vld [vmem:[%s3354 + $0x60] sm:$0xff]
        %v3364 = vld [vmem:[%s3354 + $0x68] sm:$0xff]
        %v3365 = vld [vmem:[%s3354 + $0x78] sm:$0xff]
        %v3366 = vld [vmem:[%s3354 + $0x80] sm:$0xff]
        %v3367 = vld [vmem:[%s3354 + $0x90] sm:$0xff]
        %v3368 = vld [vmem:[%s3354 + $0x98] sm:$0xff]
        %v3369 = vld [vmem:[%s3354 + $0xa8] sm:$0xff]
        %v3370 = vld [vmem:[%s3354 + $0xb0] sm:$0xff]
        %v3371 = vld [vmem:[%s3354 + $0xc0] sm:$0xff]
        %v3372 = vld [vmem:[%s3354 + $0xc8] sm:$0xff]
        %v3373 = vld [vmem:[%s3354 + $0xd8] sm:$0xff]
        %v3374 = vld [vmem:[%s3354 + $0xe0] sm:$0xff]
        %v3375 = vld [vmem:[%s3354 + $0xf0] sm:$0xff]
        %v3376 = vld [vmem:[%s3354 + $0xf8] sm:$0xff]
        %v3377 = vld [vmem:[%s3354 + $0x108] sm:$0xff]
        %v3378 = vld [vmem:[%s3354 + $0x110] sm:$0xff]
        %v3379 = vld [vmem:[%s3354 + $0x120] sm:$0xff]
        %v3380 = vld [vmem:[%s3354 + $0x128] sm:$0xff]
        %v3381 = vld [vmem:[%s3354 + $0x138] sm:$0xff]
        %v3382 = vld [vmem:[%s3354 + $0x140] sm:$0xff]
        %v3383 = vld [vmem:[%s3354 + $0x150] sm:$0xff]
        %v3384 = vld [vmem:[%s3354 + $0x158] sm:$0xff]
        %v3385 = vld [vmem:[%s3354 + $0x168] sm:$0xff]
        %v3386 = vld [vmem:[%s3354 + $0x170] sm:$0xff]
        %3419 = vrot.lane.b32.xlu0 %v3355, 64
        %v3420 = vpop.permute.xlu0 %3419
        %3421 = vrot.lane.b32.xlu0 %v3356, 64
        %v3422 = vpop.permute.xlu0 %3421
        %3423 = vrot.lane.b32.xlu0 %v3357, 64
        %v3424 = vpop.permute.xlu0 %3423
        %3425 = vrot.lane.b32.xlu0 %v3358, 64
        %v3426 = vpop.permute.xlu0 %3425
        %3427 = vrot.lane.b32.xlu0 %v3359, 64
        %v3428 = vpop.permute.xlu0 %3427
        %3429 = vrot.lane.b32.xlu0 %v3360, 64
        %v3430 = vpop.permute.xlu0 %3429
        %3431 = vrot.lane.b32.xlu0 %v3361, 64
        %v3432 = vpop.permute.xlu0 %3431
        %3433 = vrot.lane.b32.xlu0 %v3362, 64
        %v3434 = vpop.permute.xlu0 %3433
        %3435 = vrot.lane.b32.xlu0 %v3363, 64
        %v3436 = vpop.permute.xlu0 %3435
        %3437 = vrot.lane.b32.xlu0 %v3364, 64
        %v3438 = vpop.permute.xlu0 %3437
        %3439 = vrot.lane.b32.xlu0 %v3365, 64
        %v3440 = vpop.permute.xlu0 %3439
        %3441 = vrot.lane.b32.xlu0 %v3366, 64
        %v3442 = vpop.permute.xlu0 %3441
        %3443 = vrot.lane.b32.xlu0 %v3367, 64
        %v3444 = vpop.permute.xlu0 %3443
        %3445 = vrot.lane.b32.xlu0 %v3368, 64
        %v3446 = vpop.permute.xlu0 %3445
        %3447 = vrot.lane.b32.xlu0 %v3369, 64
        %v3448 = vpop.permute.xlu0 %3447
        %3449 = vrot.lane.b32.xlu0 %v3370, 64
        %v3450 = vpop.permute.xlu0 %3449
        %3451 = vrot.lane.b32.xlu0 %v3371, 64
        %v3452 = vpop.permute.xlu0 %3451
        %3453 = vrot.lane.b32.xlu0 %v3372, 64
        %v3454 = vpop.permute.xlu0 %3453
        %3455 = vrot.lane.b32.xlu0 %v3373, 64
        %v3456 = vpop.permute.xlu0 %3455
        %3457 = vrot.lane.b32.xlu0 %v3374, 64
        %v3458 = vpop.permute.xlu0 %3457
        %3459 = vrot.lane.b32.xlu0 %v3375, 64
        %v3460 = vpop.permute.xlu0 %3459
        %3461 = vrot.lane.b32.xlu0 %v3376, 64
        %v3462 = vpop.permute.xlu0 %3461
        %3463 = vrot.lane.b32.xlu0 %v3377, 64
        %v3464 = vpop.permute.xlu0 %3463
        %3465 = vrot.lane.b32.xlu0 %v3378, 64
        %v3466 = vpop.permute.xlu0 %3465
        %3467 = vrot.lane.b32.xlu0 %v3379, 64
        %v3468 = vpop.permute.xlu0 %3467
        %3469 = vrot.lane.b32.xlu0 %v3380, 64
        %v3470 = vpop.permute.xlu0 %3469
        %3471 = vrot.lane.b32.xlu0 %v3381, 64
        %v3472 = vpop.permute.xlu0 %3471
        %3473 = vrot.lane.b32.xlu0 %v3382, 64
        %v3474 = vpop.permute.xlu0 %3473
        %3475 = vrot.lane.b32.xlu0 %v3383, 64
        %v3476 = vpop.permute.xlu0 %3475
        %3477 = vrot.lane.b32.xlu0 %v3384, 64
        %v3478 = vpop.permute.xlu0 %3477
        %3479 = vrot.lane.b32.xlu0 %v3385, 64
        %v3480 = vpop.permute.xlu0 %3479
        %3481 = vrot.lane.b32.xlu0 %v3386, 64
        %v3482 = vpop.permute.xlu0 %3481
        %3515 = vst.msk [vmem:[#allocation4 + $0x8] sm:$0xff] %vm2872, %v3420
        %3516 = vst.msk [vmem:[#allocation4 + $0x20] sm:$0xff] %vm2872, %v3422
        %3517 = vst.msk [vmem:[#allocation4 + $0x38] sm:$0xff] %vm2872, %v3424
        %3518 = vst.msk [vmem:[#allocation4 + $0x50] sm:$0xff] %vm2872, %v3426
        %3519 = vst.msk [vmem:[#allocation4 + $0x68] sm:$0xff] %vm2872, %v3428
        %3520 = vst.msk [vmem:[#allocation4 + $0x80] sm:$0xff] %vm2872, %v3430
        %3521 = vst.msk [vmem:[#allocation4 + $0x98] sm:$0xff] %vm2872, %v3432
        %3522 = vst.msk [vmem:[#allocation4 + $0xb0] sm:$0xff] %vm2872, %v3434
        %3523 = vst.msk [vmem:[#allocation4 + $0xc8] sm:$0xff] %vm2872, %v3436
        %3524 = vst.msk [vmem:[#allocation4 + $0xe0] sm:$0xff] %vm2872, %v3438
        %3525 = vst.msk [vmem:[#allocation4 + $0xf8] sm:$0xff] %vm2872, %v3440
        %3526 = vst.msk [vmem:[#allocation4 + $0x110] sm:$0xff] %vm2872, %v3442
        %3527 = vst.msk [vmem:[#allocation4 + $0x128] sm:$0xff] %vm2872, %v3444
        %3528 = vst.msk [vmem:[#allocation4 + $0x140] sm:$0xff] %vm2872, %v3446
        %3529 = vst.msk [vmem:[#allocation4 + $0x158] sm:$0xff] %vm2872, %v3448
        %3530 = vst.msk [vmem:[#allocation4 + $0x170] sm:$0xff] %vm2872, %v3450
        %3531 = vst.msk [vmem:[#allocation4 + $0x188] sm:$0xff] %vm2872, %v3452
        %3532 = vst.msk [vmem:[#allocation4 + $0x1a0] sm:$0xff] %vm2872, %v3454
        %3533 = vst.msk [vmem:[#allocation4 + $0x1b8] sm:$0xff] %vm2872, %v3456
        %3534 = vst.msk [vmem:[#allocation4 + $0x1d0] sm:$0xff] %vm2872, %v3458
        %3535 = vst.msk [vmem:[#allocation4 + $0x1e8] sm:$0xff] %vm2872, %v3460
        %3536 = vst.msk [vmem:[#allocation4 + $0x200] sm:$0xff] %vm2872, %v3462
        %3537 = vst.msk [vmem:[#allocation4 + $0x218] sm:$0xff] %vm2872, %v3464
        %3538 = vst.msk [vmem:[#allocation4 + $0x230] sm:$0xff] %vm2872, %v3466
        %3539 = vst.msk [vmem:[#allocation4 + $0x248] sm:$0xff] %vm2872, %v3468
        %3540 = vst.msk [vmem:[#allocation4 + $0x260] sm:$0xff] %vm2872, %v3470
        %3541 = vst.msk [vmem:[#allocation4 + $0x278] sm:$0xff] %vm2872, %v3472
        %3542 = vst.msk [vmem:[#allocation4 + $0x290] sm:$0xff] %vm2872, %v3474
        %3543 = vst.msk [vmem:[#allocation4 + $0x2a8] sm:$0xff] %vm2872, %v3476
        %3544 = vst.msk [vmem:[#allocation4 + $0x2c0] sm:$0xff] %vm2872, %v3478
        %3545 = vst.msk [vmem:[#allocation4 + $0x2d8] sm:$0xff] %vm2872, %v3480
        %3546 = vst.msk [vmem:[#allocation4 + $0x2f0] sm:$0xff] %vm2872, %v3482
        %v3547 = vld [vmem:[%s3354 + $0x1] sm:$0xff]
        %v3548 = vld [vmem:[%s3354 + $0x9] sm:$0xff]
        %v3549 = vld [vmem:[%s3354 + $0x19] sm:$0xff]
        %v3550 = vld [vmem:[%s3354 + $0x21] sm:$0xff]
        %v3551 = vld [vmem:[%s3354 + $0x31] sm:$0xff]
        %v3552 = vld [vmem:[%s3354 + $0x39] sm:$0xff]
        %v3553 = vld [vmem:[%s3354 + $0x49] sm:$0xff]
        %v3554 = vld [vmem:[%s3354 + $0x51] sm:$0xff]
        %v3555 = vld [vmem:[%s3354 + $0x61] sm:$0xff]
        %v3556 = vld [vmem:[%s3354 + $0x69] sm:$0xff]
        %v3557 = vld [vmem:[%s3354 + $0x79] sm:$0xff]
        %v3558 = vld [vmem:[%s3354 + $0x81] sm:$0xff]
        %v3559 = vld [vmem:[%s3354 + $0x91] sm:$0xff]
        %v3560 = vld [vmem:[%s3354 + $0x99] sm:$0xff]
        %v3561 = vld [vmem:[%s3354 + $0xa9] sm:$0xff]
        %v3562 = vld [vmem:[%s3354 + $0xb1] sm:$0xff]
        %v3563 = vld [vmem:[%s3354 + $0xc1] sm:$0xff]
        %v3564 = vld [vmem:[%s3354 + $0xc9] sm:$0xff]
        %v3565 = vld [vmem:[%s3354 + $0xd9] sm:$0xff]
        %v3566 = vld [vmem:[%s3354 + $0xe1] sm:$0xff]
        %v3567 = vld [vmem:[%s3354 + $0xf1] sm:$0xff]
        %v3568 = vld [vmem:[%s3354 + $0xf9] sm:$0xff]
        %v3569 = vld [vmem:[%s3354 + $0x109] sm:$0xff]
        %v3570 = vld [vmem:[%s3354 + $0x111] sm:$0xff]
        %v3571 = vld [vmem:[%s3354 + $0x121] sm:$0xff]
        %v3572 = vld [vmem:[%s3354 + $0x129] sm:$0xff]
        %v3573 = vld [vmem:[%s3354 + $0x139] sm:$0xff]
        %v3574 = vld [vmem:[%s3354 + $0x141] sm:$0xff]
        %v3575 = vld [vmem:[%s3354 + $0x151] sm:$0xff]
        %v3576 = vld [vmem:[%s3354 + $0x159] sm:$0xff]
        %v3577 = vld [vmem:[%s3354 + $0x169] sm:$0xff]
        %v3578 = vld [vmem:[%s3354 + $0x171] sm:$0xff]
        %3611 = vrot.lane.b32.xlu0 %v3547, 96
        %v3612 = vpop.permute.xlu0 %3611
        %3613 = vrot.lane.b32.xlu0 %v3548, 96
        %v3614 = vpop.permute.xlu0 %3613
        %3615 = vrot.lane.b32.xlu0 %v3549, 96
        %v3616 = vpop.permute.xlu0 %3615
        %3617 = vrot.lane.b32.xlu0 %v3550, 96
        %v3618 = vpop.permute.xlu0 %3617
        %3619 = vrot.lane.b32.xlu0 %v3551, 96
        %v3620 = vpop.permute.xlu0 %3619
        %3621 = vrot.lane.b32.xlu0 %v3552, 96
        %v3622 = vpop.permute.xlu0 %3621
        %3623 = vrot.lane.b32.xlu0 %v3553, 96
        %v3624 = vpop.permute.xlu0 %3623
        %3625 = vrot.lane.b32.xlu0 %v3554, 96
        %v3626 = vpop.permute.xlu0 %3625
        %3627 = vrot.lane.b32.xlu0 %v3555, 96
        %v3628 = vpop.permute.xlu0 %3627
        %3629 = vrot.lane.b32.xlu0 %v3556, 96
        %v3630 = vpop.permute.xlu0 %3629
        %3631 = vrot.lane.b32.xlu0 %v3557, 96
        %v3632 = vpop.permute.xlu0 %3631
        %3633 = vrot.lane.b32.xlu0 %v3558, 96
        %v3634 = vpop.permute.xlu0 %3633
        %3635 = vrot.lane.b32.xlu0 %v3559, 96
        %v3636 = vpop.permute.xlu0 %3635
        %3637 = vrot.lane.b32.xlu0 %v3560, 96
        %v3638 = vpop.permute.xlu0 %3637
        %3639 = vrot.lane.b32.xlu0 %v3561, 96
        %v3640 = vpop.permute.xlu0 %3639
        %3641 = vrot.lane.b32.xlu0 %v3562, 96
        %v3642 = vpop.permute.xlu0 %3641
        %3643 = vrot.lane.b32.xlu0 %v3563, 96
        %v3644 = vpop.permute.xlu0 %3643
        %3645 = vrot.lane.b32.xlu0 %v3564, 96
        %v3646 = vpop.permute.xlu0 %3645
        %3647 = vrot.lane.b32.xlu0 %v3565, 96
        %v3648 = vpop.permute.xlu0 %3647
        %3649 = vrot.lane.b32.xlu0 %v3566, 96
        %v3650 = vpop.permute.xlu0 %3649
        %3651 = vrot.lane.b32.xlu0 %v3567, 96
        %v3652 = vpop.permute.xlu0 %3651
        %3653 = vrot.lane.b32.xlu0 %v3568, 96
        %v3654 = vpop.permute.xlu0 %3653
        %3655 = vrot.lane.b32.xlu0 %v3569, 96
        %v3656 = vpop.permute.xlu0 %3655
        %3657 = vrot.lane.b32.xlu0 %v3570, 96
        %v3658 = vpop.permute.xlu0 %3657
        %3659 = vrot.lane.b32.xlu0 %v3571, 96
        %v3660 = vpop.permute.xlu0 %3659
        %3661 = vrot.lane.b32.xlu0 %v3572, 96
        %v3662 = vpop.permute.xlu0 %3661
        %3663 = vrot.lane.b32.xlu0 %v3573, 96
        %v3664 = vpop.permute.xlu0 %3663
        %3665 = vrot.lane.b32.xlu0 %v3574, 96
        %v3666 = vpop.permute.xlu0 %3665
        %3667 = vrot.lane.b32.xlu0 %v3575, 96
        %v3668 = vpop.permute.xlu0 %3667
        %3669 = vrot.lane.b32.xlu0 %v3576, 96
        %v3670 = vpop.permute.xlu0 %3669
        %3671 = vrot.lane.b32.xlu0 %v3577, 96
        %v3672 = vpop.permute.xlu0 %3671
        %3673 = vrot.lane.b32.xlu0 %v3578, 96
        %v3674 = vpop.permute.xlu0 %3673
        %3707 = vst.msk [vmem:[#allocation4 + $0x8] sm:$0xff] %vm3065, %v3612
        %3708 = vst.msk [vmem:[#allocation4 + $0x20] sm:$0xff] %vm3065, %v3614
        %3709 = vst.msk [vmem:[#allocation4 + $0x38] sm:$0xff] %vm3065, %v3616
        %3710 = vst.msk [vmem:[#allocation4 + $0x50] sm:$0xff] %vm3065, %v3618
        %3711 = vst.msk [vmem:[#allocation4 + $0x68] sm:$0xff] %vm3065, %v3620
        %3712 = vst.msk [vmem:[#allocation4 + $0x80] sm:$0xff] %vm3065, %v3622
        %3713 = vst.msk [vmem:[#allocation4 + $0x98] sm:$0xff] %vm3065, %v3624
        %3714 = vst.msk [vmem:[#allocation4 + $0xb0] sm:$0xff] %vm3065, %v3626
        %3715 = vst.msk [vmem:[#allocation4 + $0xc8] sm:$0xff] %vm3065, %v3628
        %3716 = vst.msk [vmem:[#allocation4 + $0xe0] sm:$0xff] %vm3065, %v3630
        %3717 = vst.msk [vmem:[#allocation4 + $0xf8] sm:$0xff] %vm3065, %v3632
        %3718 = vst.msk [vmem:[#allocation4 + $0x110] sm:$0xff] %vm3065, %v3634
        %3719 = vst.msk [vmem:[#allocation4 + $0x128] sm:$0xff] %vm3065, %v3636
        %3720 = vst.msk [vmem:[#allocation4 + $0x140] sm:$0xff] %vm3065, %v3638
        %3721 = vst.msk [vmem:[#allocation4 + $0x158] sm:$0xff] %vm3065, %v3640
        %3722 = vst.msk [vmem:[#allocation4 + $0x170] sm:$0xff] %vm3065, %v3642
        %3723 = vst.msk [vmem:[#allocation4 + $0x188] sm:$0xff] %vm3065, %v3644
        %3724 = vst.msk [vmem:[#allocation4 + $0x1a0] sm:$0xff] %vm3065, %v3646
        %3725 = vst.msk [vmem:[#allocation4 + $0x1b8] sm:$0xff] %vm3065, %v3648
        %3726 = vst.msk [vmem:[#allocation4 + $0x1d0] sm:$0xff] %vm3065, %v3650
        %3727 = vst.msk [vmem:[#allocation4 + $0x1e8] sm:$0xff] %vm3065, %v3652
        %3728 = vst.msk [vmem:[#allocation4 + $0x200] sm:$0xff] %vm3065, %v3654
        %3729 = vst.msk [vmem:[#allocation4 + $0x218] sm:$0xff] %vm3065, %v3656
        %3730 = vst.msk [vmem:[#allocation4 + $0x230] sm:$0xff] %vm3065, %v3658
        %3731 = vst.msk [vmem:[#allocation4 + $0x248] sm:$0xff] %vm3065, %v3660
        %3732 = vst.msk [vmem:[#allocation4 + $0x260] sm:$0xff] %vm3065, %v3662
        %3733 = vst.msk [vmem:[#allocation4 + $0x278] sm:$0xff] %vm3065, %v3664
        %3734 = vst.msk [vmem:[#allocation4 + $0x290] sm:$0xff] %vm3065, %v3666
        %3735 = vst.msk [vmem:[#allocation4 + $0x2a8] sm:$0xff] %vm3065, %v3668
        %3736 = vst.msk [vmem:[#allocation4 + $0x2c0] sm:$0xff] %vm3065, %v3670
        %3737 = vst.msk [vmem:[#allocation4 + $0x2d8] sm:$0xff] %vm3065, %v3672
        %3738 = vst.msk [vmem:[#allocation4 + $0x2f0] sm:$0xff] %vm3065, %v3674
        %v3739 = vld [vmem:[%s3354 + $0x2] sm:$0xff]
        %v3740 = vld [vmem:[%s3354 + $0xa] sm:$0xff]
        %v3741 = vld [vmem:[%s3354 + $0x1a] sm:$0xff]
        %v3742 = vld [vmem:[%s3354 + $0x22] sm:$0xff]
        %v3743 = vld [vmem:[%s3354 + $0x32] sm:$0xff]
        %v3744 = vld [vmem:[%s3354 + $0x3a] sm:$0xff]
        %v3745 = vld [vmem:[%s3354 + $0x4a] sm:$0xff]
        %v3746 = vld [vmem:[%s3354 + $0x52] sm:$0xff]
        %v3747 = vld [vmem:[%s3354 + $0x62] sm:$0xff]
        %v3748 = vld [vmem:[%s3354 + $0x6a] sm:$0xff]
        %v3749 = vld [vmem:[%s3354 + $0x7a] sm:$0xff]
        %v3750 = vld [vmem:[%s3354 + $0x82] sm:$0xff]
        %v3751 = vld [vmem:[%s3354 + $0x92] sm:$0xff]
        %v3752 = vld [vmem:[%s3354 + $0x9a] sm:$0xff]
        %v3753 = vld [vmem:[%s3354 + $0xaa] sm:$0xff]
        %v3754 = vld [vmem:[%s3354 + $0xb2] sm:$0xff]
        %v3755 = vld [vmem:[%s3354 + $0xc2] sm:$0xff]
        %v3756 = vld [vmem:[%s3354 + $0xca] sm:$0xff]
        %v3757 = vld [vmem:[%s3354 + $0xda] sm:$0xff]
        %v3758 = vld [vmem:[%s3354 + $0xe2] sm:$0xff]
        %v3759 = vld [vmem:[%s3354 + $0xf2] sm:$0xff]
        %v3760 = vld [vmem:[%s3354 + $0xfa] sm:$0xff]
        %v3761 = vld [vmem:[%s3354 + $0x10a] sm:$0xff]
        %v3762 = vld [vmem:[%s3354 + $0x112] sm:$0xff]
        %v3763 = vld [vmem:[%s3354 + $0x122] sm:$0xff]
        %v3764 = vld [vmem:[%s3354 + $0x12a] sm:$0xff]
        %v3765 = vld [vmem:[%s3354 + $0x13a] sm:$0xff]
        %v3766 = vld [vmem:[%s3354 + $0x142] sm:$0xff]
        %v3767 = vld [vmem:[%s3354 + $0x152] sm:$0xff]
        %v3768 = vld [vmem:[%s3354 + $0x15a] sm:$0xff]
        %v3769 = vld [vmem:[%s3354 + $0x16a] sm:$0xff]
        %v3770 = vld [vmem:[%s3354 + $0x172] sm:$0xff]
        %3771 = vst.msk [vmem:[#allocation4 + $0x10] sm:$0xff] %vm853, %v3739
        %3772 = vst.msk [vmem:[#allocation4 + $0x28] sm:$0xff] %vm853, %v3740
        %3773 = vst.msk [vmem:[#allocation4 + $0x40] sm:$0xff] %vm853, %v3741
        %3774 = vst.msk [vmem:[#allocation4 + $0x58] sm:$0xff] %vm853, %v3742
        %3775 = vst.msk [vmem:[#allocation4 + $0x70] sm:$0xff] %vm853, %v3743
        %3776 = vst.msk [vmem:[#allocation4 + $0x88] sm:$0xff] %vm853, %v3744
        %3777 = vst.msk [vmem:[#allocation4 + $0xa0] sm:$0xff] %vm853, %v3745
        %3778 = vst.msk [vmem:[#allocation4 + $0xb8] sm:$0xff] %vm853, %v3746
        %3779 = vst.msk [vmem:[#allocation4 + $0xd0] sm:$0xff] %vm853, %v3747
        %3780 = vst.msk [vmem:[#allocation4 + $0xe8] sm:$0xff] %vm853, %v3748
        %3781 = vst.msk [vmem:[#allocation4 + $0x100] sm:$0xff] %vm853, %v3749
        %3782 = vst.msk [vmem:[#allocation4 + $0x118] sm:$0xff] %vm853, %v3750
        %3783 = vst.msk [vmem:[#allocation4 + $0x130] sm:$0xff] %vm853, %v3751
        %3784 = vst.msk [vmem:[#allocation4 + $0x148] sm:$0xff] %vm853, %v3752
        %3785 = vst.msk [vmem:[#allocation4 + $0x160] sm:$0xff] %vm853, %v3753
        %3786 = vst.msk [vmem:[#allocation4 + $0x178] sm:$0xff] %vm853, %v3754
        %3787 = vst.msk [vmem:[#allocation4 + $0x190] sm:$0xff] %vm853, %v3755
        %3788 = vst.msk [vmem:[#allocation4 + $0x1a8] sm:$0xff] %vm853, %v3756
        %3789 = vst.msk [vmem:[#allocation4 + $0x1c0] sm:$0xff] %vm853, %v3757
        %3790 = vst.msk [vmem:[#allocation4 + $0x1d8] sm:$0xff] %vm853, %v3758
        %3791 = vst.msk [vmem:[#allocation4 + $0x1f0] sm:$0xff] %vm853, %v3759
        %3792 = vst.msk [vmem:[#allocation4 + $0x208] sm:$0xff] %vm853, %v3760
        %3793 = vst.msk [vmem:[#allocation4 + $0x220] sm:$0xff] %vm853, %v3761
        %3794 = vst.msk [vmem:[#allocation4 + $0x238] sm:$0xff] %vm853, %v3762
        %3795 = vst.msk [vmem:[#allocation4 + $0x250] sm:$0xff] %vm853, %v3763
        %3796 = vst.msk [vmem:[#allocation4 + $0x268] sm:$0xff] %vm853, %v3764
        %3797 = vst.msk [vmem:[#allocation4 + $0x280] sm:$0xff] %vm853, %v3765
        %3798 = vst.msk [vmem:[#allocation4 + $0x298] sm:$0xff] %vm853, %v3766
        %3799 = vst.msk [vmem:[#allocation4 + $0x2b0] sm:$0xff] %vm853, %v3767
        %3800 = vst.msk [vmem:[#allocation4 + $0x2c8] sm:$0xff] %vm853, %v3768
        %3801 = vst.msk [vmem:[#allocation4 + $0x2e0] sm:$0xff] %vm853, %v3769
        %3802 = vst.msk [vmem:[#allocation4 + $0x2f8] sm:$0xff] %vm853, %v3770
        %v3803 = vld [vmem:[#allocation4] sm:$0xff]
        %v3804 = vld [vmem:[#allocation4 + $0x8] sm:$0xff]
        %v3805 = vld [vmem:[#allocation4 + $0x10] sm:$0xff]
        %v3806 = vld [vmem:[#allocation4 + $0x18] sm:$0xff]
        %v3807 = vld [vmem:[#allocation4 + $0x20] sm:$0xff]
        %v3808 = vld [vmem:[#allocation4 + $0x28] sm:$0xff]
        %v3809 = vld [vmem:[#allocation4 + $0x30] sm:$0xff]
        %v3810 = vld [vmem:[#allocation4 + $0x38] sm:$0xff]
        %v3811 = vld [vmem:[#allocation4 + $0x40] sm:$0xff]
        %v3812 = vld [vmem:[#allocation4 + $0x48] sm:$0xff]
        %v3813 = vld [vmem:[#allocation4 + $0x50] sm:$0xff]
        %v3814 = vld [vmem:[#allocation4 + $0x58] sm:$0xff]
        %v3815 = vld [vmem:[#allocation4 + $0x60] sm:$0xff]
        %v3816 = vld [vmem:[#allocation4 + $0x68] sm:$0xff]
        %v3817 = vld [vmem:[#allocation4 + $0x70] sm:$0xff]
        %v3818 = vld [vmem:[#allocation4 + $0x78] sm:$0xff]
        %v3819 = vld [vmem:[#allocation4 + $0x80] sm:$0xff]
        %v3820 = vld [vmem:[#allocation4 + $0x88] sm:$0xff]
        %v3821 = vld [vmem:[#allocation4 + $0x90] sm:$0xff]
        %v3822 = vld [vmem:[#allocation4 + $0x98] sm:$0xff]
        %v3823 = vld [vmem:[#allocation4 + $0xa0] sm:$0xff]
        %v3824 = vld [vmem:[#allocation4 + $0xa8] sm:$0xff]
        %v3825 = vld [vmem:[#allocation4 + $0xb0] sm:$0xff]
        %v3826 = vld [vmem:[#allocation4 + $0xb8] sm:$0xff]
        %v3827 = vld [vmem:[#allocation4 + $0xc0] sm:$0xff]
        %v3828 = vld [vmem:[#allocation4 + $0xc8] sm:$0xff]
        %v3829 = vld [vmem:[#allocation4 + $0xd0] sm:$0xff]
        %v3830 = vld [vmem:[#allocation4 + $0xd8] sm:$0xff]
        %v3831 = vld [vmem:[#allocation4 + $0xe0] sm:$0xff]
        %v3832 = vld [vmem:[#allocation4 + $0xe8] sm:$0xff]
        %v3833 = vld [vmem:[#allocation4 + $0xf0] sm:$0xff]
        %v3834 = vld [vmem:[#allocation4 + $0xf8] sm:$0xff]
        %v3835 = vld [vmem:[#allocation4 + $0x100] sm:$0xff]
        %v3836 = vld [vmem:[#allocation4 + $0x108] sm:$0xff]
        %v3837 = vld [vmem:[#allocation4 + $0x110] sm:$0xff]
        %v3838 = vld [vmem:[#allocation4 + $0x118] sm:$0xff]
        %v3839 = vld [vmem:[#allocation4 + $0x120] sm:$0xff]
        %v3840 = vld [vmem:[#allocation4 + $0x128] sm:$0xff]
        %v3841 = vld [vmem:[#allocation4 + $0x130] sm:$0xff]
        %v3842 = vld [vmem:[#allocation4 + $0x138] sm:$0xff]
        %v3843 = vld [vmem:[#allocation4 + $0x140] sm:$0xff]
        %v3844 = vld [vmem:[#allocation4 + $0x148] sm:$0xff]
        %v3845 = vld [vmem:[#allocation4 + $0x150] sm:$0xff]
        %v3846 = vld [vmem:[#allocation4 + $0x158] sm:$0xff]
        %v3847 = vld [vmem:[#allocation4 + $0x160] sm:$0xff]
        %v3848 = vld [vmem:[#allocation4 + $0x168] sm:$0xff]
        %v3849 = vld [vmem:[#allocation4 + $0x170] sm:$0xff]
        %v3850 = vld [vmem:[#allocation4 + $0x178] sm:$0xff]
        %v3851 = vld [vmem:[#allocation4 + $0x180] sm:$0xff]
        %v3852 = vld [vmem:[#allocation4 + $0x188] sm:$0xff]
        %v3853 = vld [vmem:[#allocation4 + $0x190] sm:$0xff]
        %v3854 = vld [vmem:[#allocation4 + $0x198] sm:$0xff]
        %v3855 = vld [vmem:[#allocation4 + $0x1a0] sm:$0xff]
        %v3856 = vld [vmem:[#allocation4 + $0x1a8] sm:$0xff]
        %v3857 = vld [vmem:[#allocation4 + $0x1b0] sm:$0xff]
        %v3858 = vld [vmem:[#allocation4 + $0x1b8] sm:$0xff]
        %v3859 = vld [vmem:[#allocation4 + $0x1c0] sm:$0xff]
        %v3860 = vld [vmem:[#allocation4 + $0x1c8] sm:$0xff]
        %v3861 = vld [vmem:[#allocation4 + $0x1d0] sm:$0xff]
        %v3862 = vld [vmem:[#allocation4 + $0x1d8] sm:$0xff]
        %v3863 = vld [vmem:[#allocation4 + $0x1e0] sm:$0xff]
        %v3864 = vld [vmem:[#allocation4 + $0x1e8] sm:$0xff]
        %v3865 = vld [vmem:[#allocation4 + $0x1f0] sm:$0xff]
        %v3866 = vld [vmem:[#allocation4 + $0x1f8] sm:$0xff]
        %v3867 = vld [vmem:[#allocation4 + $0x200] sm:$0xff]
        %v3868 = vld [vmem:[#allocation4 + $0x208] sm:$0xff]
        %v3869 = vld [vmem:[#allocation4 + $0x210] sm:$0xff]
        %v3870 = vld [vmem:[#allocation4 + $0x218] sm:$0xff]
        %v3871 = vld [vmem:[#allocation4 + $0x220] sm:$0xff]
        %v3872 = vld [vmem:[#allocation4 + $0x228] sm:$0xff]
        %v3873 = vld [vmem:[#allocation4 + $0x230] sm:$0xff]
        %v3874 = vld [vmem:[#allocation4 + $0x238] sm:$0xff]
        %v3875 = vld [vmem:[#allocation4 + $0x240] sm:$0xff]
        %v3876 = vld [vmem:[#allocation4 + $0x248] sm:$0xff]
        %v3877 = vld [vmem:[#allocation4 + $0x250] sm:$0xff]
        %v3878 = vld [vmem:[#allocation4 + $0x258] sm:$0xff]
        %v3879 = vld [vmem:[#allocation4 + $0x260] sm:$0xff]
        %v3880 = vld [vmem:[#allocation4 + $0x268] sm:$0xff]
        %v3881 = vld [vmem:[#allocation4 + $0x270] sm:$0xff]
        %v3882 = vld [vmem:[#allocation4 + $0x278] sm:$0xff]
        %v3883 = vld [vmem:[#allocation4 + $0x280] sm:$0xff]
        %v3884 = vld [vmem:[#allocation4 + $0x288] sm:$0xff]
        %v3885 = vld [vmem:[#allocation4 + $0x290] sm:$0xff]
        %v3886 = vld [vmem:[#allocation4 + $0x298] sm:$0xff]
        %v3887 = vld [vmem:[#allocation4 + $0x2a0] sm:$0xff]
        %v3888 = vld [vmem:[#allocation4 + $0x2a8] sm:$0xff]
        %v3889 = vld [vmem:[#allocation4 + $0x2b0] sm:$0xff]
        %v3890 = vld [vmem:[#allocation4 + $0x2b8] sm:$0xff]
        %v3891 = vld [vmem:[#allocation4 + $0x2c0] sm:$0xff]
        %v3892 = vld [vmem:[#allocation4 + $0x2c8] sm:$0xff]
        %v3893 = vld [vmem:[#allocation4 + $0x2d0] sm:$0xff]
        %v3894 = vld [vmem:[#allocation4 + $0x2d8] sm:$0xff]
        %v3895 = vld [vmem:[#allocation4 + $0x2e0] sm:$0xff]
        %v3896 = vld [vmem:[#allocation4 + $0x2e8] sm:$0xff]
        %v3897 = vld [vmem:[#allocation4 + $0x2f0] sm:$0xff]
        %v3898 = vld [vmem:[#allocation4 + $0x2f8] sm:$0xff]
        %v3899 = vpack.c.bf16 %v3806, %v3803
        %v3900 = vpack.c.bf16 %v3807, %v3804
        %v3901 = vpack.c.bf16 %v3808, %v3805
        %v3902 = vpack.c.bf16 %v3812, %v3809
        %v3903 = vpack.c.bf16 %v3813, %v3810
        %v3904 = vpack.c.bf16 %v3814, %v3811
        %v3905 = vpack.c.bf16 %v3818, %v3815
        %v3906 = vpack.c.bf16 %v3819, %v3816
        %v3907 = vpack.c.bf16 %v3820, %v3817
        %v3908 = vpack.c.bf16 %v3824, %v3821
        %v3909 = vpack.c.bf16 %v3825, %v3822
        %v3910 = vpack.c.bf16 %v3826, %v3823
        %v3911 = vpack.c.bf16 %v3830, %v3827
        %v3912 = vpack.c.bf16 %v3831, %v3828
        %v3913 = vpack.c.bf16 %v3832, %v3829
        %v3914 = vpack.c.bf16 %v3836, %v3833
        %v3915 = vpack.c.bf16 %v3837, %v3834
        %v3916 = vpack.c.bf16 %v3838, %v3835
        %v3917 = vpack.c.bf16 %v3842, %v3839
        %v3918 = vpack.c.bf16 %v3843, %v3840
        %v3919 = vpack.c.bf16 %v3844, %v3841
        %v3920 = vpack.c.bf16 %v3848, %v3845
        %v3921 = vpack.c.bf16 %v3849, %v3846
        %v3922 = vpack.c.bf16 %v3850, %v3847
        %v3923 = vpack.c.bf16 %v3854, %v3851
        %v3924 = vpack.c.bf16 %v3855, %v3852
        %v3925 = vpack.c.bf16 %v3856, %v3853
        %v3926 = vpack.c.bf16 %v3860, %v3857
        %v3927 = vpack.c.bf16 %v3861, %v3858
        %v3928 = vpack.c.bf16 %v3862, %v3859
        %v3929 = vpack.c.bf16 %v3866, %v3863
        %v3930 = vpack.c.bf16 %v3867, %v3864
        %v3931 = vpack.c.bf16 %v3868, %v3865
        %v3932 = vpack.c.bf16 %v3872, %v3869
        %v3933 = vpack.c.bf16 %v3873, %v3870
        %v3934 = vpack.c.bf16 %v3874, %v3871
        %v3935 = vpack.c.bf16 %v3878, %v3875
        %v3936 = vpack.c.bf16 %v3879, %v3876
        %v3937 = vpack.c.bf16 %v3880, %v3877
        %v3938 = vpack.c.bf16 %v3884, %v3881
        %v3939 = vpack.c.bf16 %v3885, %v3882
        %v3940 = vpack.c.bf16 %v3886, %v3883
        %v3941 = vpack.c.bf16 %v3890, %v3887
        %v3942 = vpack.c.bf16 %v3891, %v3888
        %v3943 = vpack.c.bf16 %v3892, %v3889
        %v3944 = vpack.c.bf16 %v3896, %v3893
        %v3945 = vpack.c.bf16 %v3897, %v3894
        %v3946 = vpack.c.bf16 %v3898, %v3895
        %v3947 = vld [vmem:[%s3] sm:$0xf]
        %v3948 = vld [vmem:[%s3 + $0x4] sm:$0xf]
        %v3949 = vld [vmem:[%s3 + $0x8] sm:$0xf]
        %v3950 = vld [vmem:[%s3 + $0xc] sm:$0xf]
        %v3951 = vld [vmem:[%s3 + $0x10] sm:$0xf]
        %v3952 = vld [vmem:[%s3 + $0x14] sm:$0xf]
        %v3953 = vld [vmem:[%s3 + $0x18] sm:$0xf]
        %v3954 = vld [vmem:[%s3 + $0x1c] sm:$0xf]
        %v3955 = vld [vmem:[%s3 + $0x20] sm:$0xf]
        %v3956 = vld [vmem:[%s3 + $0x24] sm:$0xf]
        %v3957 = vld [vmem:[%s3 + $0x28] sm:$0xf]
        %v3958 = vld [vmem:[%s3 + $0x2c] sm:$0xf]
        %v3959 = vld [vmem:[%s3 + $0x30] sm:$0xf]
        %v3960 = vld [vmem:[%s3 + $0x34] sm:$0xf]
        %v3961 = vld [vmem:[%s3 + $0x38] sm:$0xf]
        %v3962 = vld [vmem:[%s3 + $0x3c] sm:$0xf]
        %v3963 = vld [vmem:[%s3 + $0x40] sm:$0xf]
        %v3964 = vld [vmem:[%s3 + $0x44] sm:$0xf]
        %v3965 = vld [vmem:[%s3 + $0x48] sm:$0xf]
        %v3966 = vld [vmem:[%s3 + $0x4c] sm:$0xf]
        %v3967 = vld [vmem:[%s3 + $0x50] sm:$0xf]
        %v3968 = vld [vmem:[%s3 + $0x54] sm:$0xf]
        %v3969 = vld [vmem:[%s3 + $0x58] sm:$0xf]
        %v3970 = vld [vmem:[%s3 + $0x5c] sm:$0xf]
        %v3971 = vld [vmem:[%s3 + $0x60] sm:$0xf]
        %v3972 = vld [vmem:[%s3 + $0x64] sm:$0xf]
        %v3973 = vld [vmem:[%s3 + $0x68] sm:$0xf]
        %v3974 = vld [vmem:[%s3 + $0x6c] sm:$0xf]
        %v3975 = vld [vmem:[%s3 + $0x70] sm:$0xf]
        %v3976 = vld [vmem:[%s3 + $0x74] sm:$0xf]
        %v3977 = vld [vmem:[%s3 + $0x78] sm:$0xf]
        %v3978 = vld [vmem:[%s3 + $0x7c] sm:$0xf]
        %v3979 = vld [vmem:[%s3 + $0x80] sm:$0xf]
        %v3980 = vld [vmem:[%s3 + $0x84] sm:$0xf]
        %v3981 = vld [vmem:[%s3 + $0x88] sm:$0xf]
        %v3982 = vld [vmem:[%s3 + $0x8c] sm:$0xf]
        %v3983 = vld [vmem:[%s4] sm:$0x1]
        %v3985 = vperm.slane %v3983, 0
        %v4023 = vunpack.c.l.b16 %v3947
        %v4024 = vunpack.c.l.b16 %v3948
        %v4025 = vunpack.c.l.b16 %v3949
        %v4026 = vunpack.c.l.b16 %v3950
        %v4027 = vunpack.c.l.b16 %v3951
        %v4028 = vunpack.c.l.b16 %v3952
        %v4029 = vunpack.c.l.b16 %v3953
        %v4030 = vunpack.c.l.b16 %v3954
        %v4031 = vunpack.c.l.b16 %v3955
        %v4032 = vunpack.c.l.b16 %v3956
        %v4033 = vunpack.c.l.b16 %v3957
        %v4034 = vunpack.c.l.b16 %v3958
        %v4035 = vunpack.c.l.b16 %v3959
        %v4036 = vunpack.c.l.b16 %v3960
        %v4037 = vunpack.c.l.b16 %v3961
        %v4038 = vunpack.c.l.b16 %v3962
        %v4039 = vunpack.c.l.b16 %v3963
        %v4040 = vunpack.c.l.b16 %v3964
        %v4041 = vunpack.c.l.b16 %v3965
        %v4042 = vunpack.c.l.b16 %v3966
        %v4043 = vunpack.c.l.b16 %v3967
        %v4044 = vunpack.c.l.b16 %v3968
        %v4045 = vunpack.c.l.b16 %v3969
        %v4046 = vunpack.c.l.b16 %v3970
        %v4047 = vunpack.c.l.b16 %v3971
        %v4048 = vunpack.c.l.b16 %v3972
        %v4049 = vunpack.c.l.b16 %v3973
        %v4050 = vunpack.c.l.b16 %v3974
        %v4051 = vunpack.c.l.b16 %v3975
        %v4052 = vunpack.c.l.b16 %v3976
        %v4053 = vunpack.c.l.b16 %v3977
        %v4054 = vunpack.c.l.b16 %v3978
        %v4055 = vunpack.c.l.b16 %v3979
        %v4056 = vunpack.c.l.b16 %v3980
        %v4057 = vunpack.c.l.b16 %v3981
        %v4058 = vunpack.c.l.b16 %v3982
        %v4059 = vpack.c.b16 %v4024, %v4023
        %v4060 = vpack.c.b16 %v4026, %v4025
        %v4061 = vpack.c.b16 %v4028, %v4027
        %v4062 = vpack.c.b16 %v4030, %v4029
        %v4063 = vpack.c.b16 %v4032, %v4031
        %v4064 = vpack.c.b16 %v4034, %v4033
        %v4065 = vpack.c.b16 %v4036, %v4035
        %v4066 = vpack.c.b16 %v4038, %v4037
        %v4067 = vpack.c.b16 %v4040, %v4039
        %v4068 = vpack.c.b16 %v4042, %v4041
        %v4069 = vpack.c.b16 %v4044, %v4043
        %v4070 = vpack.c.b16 %v4046, %v4045
        %v4071 = vpack.c.b16 %v4048, %v4047
        %v4072 = vpack.c.b16 %v4050, %v4049
        %v4073 = vpack.c.b16 %v4052, %v4051
        %v4074 = vpack.c.b16 %v4054, %v4053
        %v4075 = vpack.c.b16 %v4056, %v4055
        %v4076 = vpack.c.b16 %v4058, %v4057
        %v4096 = vsel %vm853, %v3901, 0
        %v4099 = vsel %vm853, %v3904, 0
        %v4102 = vsel %vm853, %v3907, 0
        %v4105 = vsel %vm853, %v3910, 0
        %v4108 = vsel %vm853, %v3913, 0
        %v4111 = vsel %vm853, %v3916, 0
        %v4114 = vsel %vm853, %v3919, 0
        %v4117 = vsel %vm853, %v3922, 0
        %v4120 = vsel %vm853, %v3925, 0
        %v4123 = vsel %vm853, %v3928, 0
        %v4126 = vsel %vm853, %v3931, 0
        %v4129 = vsel %vm853, %v3934, 0
        %v4132 = vsel %vm853, %v3937, 0
        %v4135 = vsel %vm853, %v3940, 0
        %v4138 = vsel %vm853, %v3943, 0
        %v4141 = vsel %vm853, %v3946, 0
        %4143 = vmatpush.bf16.msra.mxu0 %v4066
        %4144 = vmatpush.bf16.msra.mxu0 %v4065
        %4145 = vmatpush.bf16.msra.mxu0 %v4064
        %4146 = vmatpush.bf16.msra.mxu0 %v4063
        %4147 = vmatpush.bf16.msra.mxu0 %v4062
        %4148 = vmatpush.bf16.msra.mxu0 %v4061
        %4149 = vmatpush.bf16.msra.mxu0 %v4060
        %4150 = vmatpush.bf16.msra.mxu0 %v4059
        %4151 = vmatmul.bf16.gmra.mxu0 %v3899
        %v4152 = vpop.f32.mrf.mxu0
        %v4153 = vadd.f32 %v3985, %v4152
        %v4154 = vpop.f32.mrf.mxu0
        %v4155 = vadd.f32 %v3985, %v4154
        %4156 = vmatmul.bf16.gmra.mxu0 %v3902
        %v4157 = vpop.f32.mrf.mxu0
        %v4158 = vadd.f32 %v3985, %v4157
        %v4159 = vpop.f32.mrf.mxu0
        %v4160 = vadd.f32 %v3985, %v4159
        %4161 = vmatmul.bf16.gmra.mxu0 %v3905
        %v4162 = vpop.f32.mrf.mxu0
        %v4163 = vadd.f32 %v3985, %v4162
        %v4164 = vpop.f32.mrf.mxu0
        %v4165 = vadd.f32 %v3985, %v4164
        %4166 = vmatmul.bf16.gmra.mxu0 %v3908
        %v4167 = vpop.f32.mrf.mxu0
        %v4168 = vadd.f32 %v3985, %v4167
        %v4169 = vpop.f32.mrf.mxu0
        %v4170 = vadd.f32 %v3985, %v4169
        %4171 = vmatmul.bf16.gmra.mxu0 %v3911
        %v4172 = vpop.f32.mrf.mxu0
        %v4173 = vadd.f32 %v3985, %v4172
        %v4174 = vpop.f32.mrf.mxu0
        %v4175 = vadd.f32 %v3985, %v4174
        %4176 = vmatmul.bf16.gmra.mxu0 %v3914
        %v4177 = vpop.f32.mrf.mxu0
        %v4178 = vadd.f32 %v3985, %v4177
        %v4179 = vpop.f32.mrf.mxu0
        %v4180 = vadd.f32 %v3985, %v4179
        %4181 = vmatmul.bf16.gmra.mxu0 %v3917
        %v4182 = vpop.f32.mrf.mxu0
        %v4183 = vadd.f32 %v3985, %v4182
        %v4184 = vpop.f32.mrf.mxu0
        %v4185 = vadd.f32 %v3985, %v4184
        %4186 = vmatmul.bf16.gmra.mxu0 %v3920
        %v4187 = vpop.f32.mrf.mxu0
        %v4188 = vadd.f32 %v3985, %v4187
        %v4189 = vpop.f32.mrf.mxu0
        %v4190 = vadd.f32 %v3985, %v4189
        %4191 = vmatmul.bf16.gmra.mxu0 %v3923
        %v4192 = vpop.f32.mrf.mxu0
        %v4193 = vadd.f32 %v3985, %v4192
        %v4194 = vpop.f32.mrf.mxu0
        %v4195 = vadd.f32 %v3985, %v4194
        %4196 = vmatmul.bf16.gmra.mxu0 %v3926
        %v4197 = vpop.f32.mrf.mxu0
        %v4198 = vadd.f32 %v3985, %v4197
        %v4199 = vpop.f32.mrf.mxu0
        %v4200 = vadd.f32 %v3985, %v4199
        %4201 = vmatmul.bf16.gmra.mxu0 %v3929
        %v4202 = vpop.f32.mrf.mxu0
        %v4203 = vadd.f32 %v3985, %v4202
        %v4204 = vpop.f32.mrf.mxu0
        %v4205 = vadd.f32 %v3985, %v4204
        %4206 = vmatmul.bf16.gmra.mxu0 %v3932
        %v4207 = vpop.f32.mrf.mxu0
        %v4208 = vadd.f32 %v3985, %v4207
        %v4209 = vpop.f32.mrf.mxu0
        %v4210 = vadd.f32 %v3985, %v4209
        %4211 = vmatmul.bf16.gmra.mxu0 %v3935
        %v4212 = vpop.f32.mrf.mxu0
        %v4213 = vadd.f32 %v3985, %v4212
        %v4214 = vpop.f32.mrf.mxu0
        %v4215 = vadd.f32 %v3985, %v4214
        %4216 = vmatmul.bf16.gmra.mxu0 %v3938
        %v4217 = vpop.f32.mrf.mxu0
        %v4218 = vadd.f32 %v3985, %v4217
        %v4219 = vpop.f32.mrf.mxu0
        %v4220 = vadd.f32 %v3985, %v4219
        %4221 = vmatmul.bf16.gmra.mxu0 %v3941
        %v4222 = vpop.f32.mrf.mxu0
        %v4223 = vadd.f32 %v3985, %v4222
        %v4224 = vpop.f32.mrf.mxu0
        %v4225 = vadd.f32 %v3985, %v4224
        %4226 = vmatmul.bf16.gmra.mxu0 %v3944
        %v4227 = vpop.f32.mrf.mxu0
        %v4228 = vadd.f32 %v3985, %v4227
        %v4229 = vpop.f32.mrf.mxu0
        %v4230 = vadd.f32 %v3985, %v4229
        %4231 = vdwg.mxu0
        %4232 = vmatpush.bf16.msra.mxu0 %v4074
        %4233 = vmatpush.bf16.msra.mxu0 %v4073
        %4234 = vmatpush.bf16.msra.mxu0 %v4072
        %4235 = vmatpush.bf16.msra.mxu0 %v4071
        %4236 = vmatpush.bf16.msra.mxu0 %v4070
        %4237 = vmatpush.bf16.msra.mxu0 %v4069
        %4238 = vmatpush.bf16.msra.mxu0 %v4068
        %4239 = vmatpush.bf16.msra.mxu0 %v4067
        %4240 = vmatmul.bf16.gmra.mxu0 %v3900
        %v4241 = vpop.f32.mrf.mxu0
        %v4242 = vadd.f32 %v4153, %v4241
        %v4243 = vpop.f32.mrf.mxu0
        %v4244 = vadd.f32 %v4155, %v4243
        %4245 = vmatmul.bf16.gmra.mxu0 %v3903
        %v4246 = vpop.f32.mrf.mxu0
        %v4247 = vadd.f32 %v4158, %v4246
        %v4248 = vpop.f32.mrf.mxu0
        %v4249 = vadd.f32 %v4160, %v4248
        %4250 = vmatmul.bf16.gmra.mxu0 %v3906
        %v4251 = vpop.f32.mrf.mxu0
        %v4252 = vadd.f32 %v4163, %v4251
        %v4253 = vpop.f32.mrf.mxu0
        %v4254 = vadd.f32 %v4165, %v4253
        %4255 = vmatmul.bf16.gmra.mxu0 %v3909
        %v4256 = vpop.f32.mrf.mxu0
        %v4257 = vadd.f32 %v4168, %v4256
        %v4258 = vpop.f32.mrf.mxu0
        %v4259 = vadd.f32 %v4170, %v4258
        %4260 = vmatmul.bf16.gmra.mxu0 %v3912
        %v4261 = vpop.f32.mrf.mxu0
        %v4262 = vadd.f32 %v4173, %v4261
        %v4263 = vpop.f32.mrf.mxu0
        %v4264 = vadd.f32 %v4175, %v4263
        %4265 = vmatmul.bf16.gmra.mxu0 %v3915
        %v4266 = vpop.f32.mrf.mxu0
        %v4267 = vadd.f32 %v4178, %v4266
        %v4268 = vpop.f32.mrf.mxu0
        %v4269 = vadd.f32 %v4180, %v4268
        %4270 = vmatmul.bf16.gmra.mxu0 %v3918
        %v4271 = vpop.f32.mrf.mxu0
        %v4272 = vadd.f32 %v4183, %v4271
        %v4273 = vpop.f32.mrf.mxu0
        %v4274 = vadd.f32 %v4185, %v4273
        %4275 = vmatmul.bf16.gmra.mxu0 %v3921
        %v4276 = vpop.f32.mrf.mxu0
        %v4277 = vadd.f32 %v4188, %v4276
        %v4278 = vpop.f32.mrf.mxu0
        %v4279 = vadd.f32 %v4190, %v4278
        %4280 = vmatmul.bf16.gmra.mxu0 %v3924
        %v4281 = vpop.f32.mrf.mxu0
        %v4282 = vadd.f32 %v4193, %v4281
        %v4283 = vpop.f32.mrf.mxu0
        %v4284 = vadd.f32 %v4195, %v4283
        %4285 = vmatmul.bf16.gmra.mxu0 %v3927
        %v4286 = vpop.f32.mrf.mxu0
        %v4287 = vadd.f32 %v4198, %v4286
        %v4288 = vpop.f32.mrf.mxu0
        %v4289 = vadd.f32 %v4200, %v4288
        %4290 = vmatmul.bf16.gmra.mxu0 %v3930
        %v4291 = vpop.f32.mrf.mxu0
        %v4292 = vadd.f32 %v4203, %v4291
        %v4293 = vpop.f32.mrf.mxu0
        %v4294 = vadd.f32 %v4205, %v4293
        %4295 = vmatmul.bf16.gmra.mxu0 %v3933
        %v4296 = vpop.f32.mrf.mxu0
        %v4297 = vadd.f32 %v4208, %v4296
        %v4298 = vpop.f32.mrf.mxu0
        %v4299 = vadd.f32 %v4210, %v4298
        %4300 = vmatmul.bf16.gmra.mxu0 %v3936
        %v4301 = vpop.f32.mrf.mxu0
        %v4302 = vadd.f32 %v4213, %v4301
        %v4303 = vpop.f32.mrf.mxu0
        %v4304 = vadd.f32 %v4215, %v4303
        %4305 = vmatmul.bf16.gmra.mxu0 %v3939
        %v4306 = vpop.f32.mrf.mxu0
        %v4307 = vadd.f32 %v4218, %v4306
        %v4308 = vpop.f32.mrf.mxu0
        %v4309 = vadd.f32 %v4220, %v4308
        %4310 = vmatmul.bf16.gmra.mxu0 %v3942
        %v4311 = vpop.f32.mrf.mxu0
        %v4312 = vadd.f32 %v4223, %v4311
        %v4313 = vpop.f32.mrf.mxu0
        %v4314 = vadd.f32 %v4225, %v4313
        %4315 = vmatmul.bf16.gmra.mxu0 %v3945
        %v4316 = vpop.f32.mrf.mxu0
        %v4317 = vadd.f32 %v4228, %v4316
        %v4318 = vpop.f32.mrf.mxu0
        %v4319 = vadd.f32 %v4230, %v4318
        %4320 = vdwg.mxu0
        %4321 = vmatpush.bf16.msra.mxu0 0
        %4322 = vmatpush.bf16.msra.mxu0 0
        %4323 = vmatpush.bf16.msra.mxu0 0
        %4324 = vmatpush.bf16.msra.mxu0 0
        %4325 = vmatpush.bf16.msra.mxu0 0
        %4326 = vmatpush.bf16.msra.mxu0 0
        %4327 = vmatpush.bf16.msra.mxu0 %v4076
        %4328 = vmatpush.bf16.msra.mxu0 %v4075
        %4329 = vmatmul.bf16.gmra.mxu0 %v4096
        %v4330 = vpop.f32.mrf.mxu0
        %v4331 = vadd.f32 %v4242, %v4330
        %v4332 = vpop.f32.mrf.mxu0
        %v4333 = vadd.f32 %v4244, %v4332
        %4334 = vmatmul.bf16.gmra.mxu0 %v4099
        %v4335 = vpop.f32.mrf.mxu0
        %v4336 = vadd.f32 %v4247, %v4335
        %v4337 = vpop.f32.mrf.mxu0
        %v4338 = vadd.f32 %v4249, %v4337
        %4339 = vmatmul.bf16.gmra.mxu0 %v4102
        %v4340 = vpop.f32.mrf.mxu0
        %v4341 = vadd.f32 %v4252, %v4340
        %v4342 = vpop.f32.mrf.mxu0
        %v4343 = vadd.f32 %v4254, %v4342
        %4344 = vmatmul.bf16.gmra.mxu0 %v4105
        %v4345 = vpop.f32.mrf.mxu0
        %v4346 = vadd.f32 %v4257, %v4345
        %v4347 = vpop.f32.mrf.mxu0
        %v4348 = vadd.f32 %v4259, %v4347
        %4349 = vmatmul.bf16.gmra.mxu0 %v4108
        %v4350 = vpop.f32.mrf.mxu0
        %v4351 = vadd.f32 %v4262, %v4350
        %v4352 = vpop.f32.mrf.mxu0
        %v4353 = vadd.f32 %v4264, %v4352
        %4354 = vmatmul.bf16.gmra.mxu0 %v4111
        %v4355 = vpop.f32.mrf.mxu0
        %v4356 = vadd.f32 %v4267, %v4355
        %v4357 = vpop.f32.mrf.mxu0
        %v4358 = vadd.f32 %v4269, %v4357
        %4359 = vmatmul.bf16.gmra.mxu0 %v4114
        %v4360 = vpop.f32.mrf.mxu0
        %v4361 = vadd.f32 %v4272, %v4360
        %v4362 = vpop.f32.mrf.mxu0
        %v4363 = vadd.f32 %v4274, %v4362
        %4364 = vmatmul.bf16.gmra.mxu0 %v4117
        %v4365 = vpop.f32.mrf.mxu0
        %v4366 = vadd.f32 %v4277, %v4365
        %v4367 = vpop.f32.mrf.mxu0
        %v4368 = vadd.f32 %v4279, %v4367
        %4369 = vmatmul.bf16.gmra.mxu0 %v4120
        %v4370 = vpop.f32.mrf.mxu0
        %v4371 = vadd.f32 %v4282, %v4370
        %v4372 = vpop.f32.mrf.mxu0
        %v4373 = vadd.f32 %v4284, %v4372
        %4374 = vmatmul.bf16.gmra.mxu0 %v4123
        %v4375 = vpop.f32.mrf.mxu0
        %v4376 = vadd.f32 %v4287, %v4375
        %v4377 = vpop.f32.mrf.mxu0
        %v4378 = vadd.f32 %v4289, %v4377
        %4379 = vmatmul.bf16.gmra.mxu0 %v4126
        %v4380 = vpop.f32.mrf.mxu0
        %v4381 = vadd.f32 %v4292, %v4380
        %v4382 = vpop.f32.mrf.mxu0
        %v4383 = vadd.f32 %v4294, %v4382
        %4384 = vmatmul.bf16.gmra.mxu0 %v4129
        %v4385 = vpop.f32.mrf.mxu0
        %v4386 = vadd.f32 %v4297, %v4385
        %v4387 = vpop.f32.mrf.mxu0
        %v4388 = vadd.f32 %v4299, %v4387
        %4389 = vmatmul.bf16.gmra.mxu0 %v4132
        %v4390 = vpop.f32.mrf.mxu0
        %v4391 = vadd.f32 %v4302, %v4390
        %v4392 = vpop.f32.mrf.mxu0
        %v4393 = vadd.f32 %v4304, %v4392
        %4394 = vmatmul.bf16.gmra.mxu0 %v4135
        %v4395 = vpop.f32.mrf.mxu0
        %v4396 = vadd.f32 %v4307, %v4395
        %v4397 = vpop.f32.mrf.mxu0
        %v4398 = vadd.f32 %v4309, %v4397
        %4399 = vmatmul.bf16.gmra.mxu0 %v4138
        %v4400 = vpop.f32.mrf.mxu0
        %v4401 = vadd.f32 %v4312, %v4400
        %v4402 = vpop.f32.mrf.mxu0
        %v4403 = vadd.f32 %v4314, %v4402
        %4404 = vmatmul.bf16.gmra.mxu0 %v4141
        %v4405 = vpop.f32.mrf.mxu0
        %v4406 = vadd.f32 %v4317, %v4405
        %v4407 = vpop.f32.mrf.mxu0
        %v4408 = vadd.f32 %v4319, %v4407
        %4409 = vdwg.mxu0
        %vm4410 = vcmp.ge.f32.partialorder %v4331, 0.0
        %vm4411 = vcmp.ge.f32.partialorder %v4333, 0.0
        %vm4412 = vcmp.ge.f32.partialorder %v4336, 0.0
        %vm4413 = vcmp.ge.f32.partialorder %v4338, 0.0
        %vm4414 = vcmp.ge.f32.partialorder %v4341, 0.0
        %vm4415 = vcmp.ge.f32.partialorder %v4343, 0.0
        %vm4416 = vcmp.ge.f32.partialorder %v4346, 0.0
        %vm4417 = vcmp.ge.f32.partialorder %v4348, 0.0
        %vm4418 = vcmp.ge.f32.partialorder %v4351, 0.0
        %vm4419 = vcmp.ge.f32.partialorder %v4353, 0.0
        %vm4420 = vcmp.ge.f32.partialorder %v4356, 0.0
        %vm4421 = vcmp.ge.f32.partialorder %v4358, 0.0
        %vm4422 = vcmp.ge.f32.partialorder %v4361, 0.0
        %vm4423 = vcmp.ge.f32.partialorder %v4363, 0.0
        %vm4424 = vcmp.ge.f32.partialorder %v4366, 0.0
        %vm4425 = vcmp.ge.f32.partialorder %v4368, 0.0
        %vm4426 = vcmp.ge.f32.partialorder %v4371, 0.0
        %vm4427 = vcmp.ge.f32.partialorder %v4373, 0.0
        %vm4428 = vcmp.ge.f32.partialorder %v4376, 0.0
        %vm4429 = vcmp.ge.f32.partialorder %v4378, 0.0
        %vm4430 = vcmp.ge.f32.partialorder %v4381, 0.0
        %vm4431 = vcmp.ge.f32.partialorder %v4383, 0.0
        %vm4432 = vcmp.ge.f32.partialorder %v4386, 0.0
        %vm4433 = vcmp.ge.f32.partialorder %v4388, 0.0
        %vm4434 = vcmp.ge.f32.partialorder %v4391, 0.0
        %vm4435 = vcmp.ge.f32.partialorder %v4393, 0.0
        %vm4436 = vcmp.ge.f32.partialorder %v4396, 0.0
        %vm4437 = vcmp.ge.f32.partialorder %v4398, 0.0
        %vm4438 = vcmp.ge.f32.partialorder %v4401, 0.0
        %vm4439 = vcmp.ge.f32.partialorder %v4403, 0.0
        %vm4440 = vcmp.ge.f32.partialorder %v4406, 0.0
        %vm4441 = vcmp.ge.f32.partialorder %v4408, 0.0
        %v4442 = vmul.f32 %v4331, 0.01
        %v4443 = vmul.f32 %v4333, 0.01
        %v4444 = vmul.f32 %v4336, 0.01
        %v4445 = vmul.f32 %v4338, 0.01
        %v4446 = vmul.f32 %v4341, 0.01
        %v4447 = vmul.f32 %v4343, 0.01
        %v4448 = vmul.f32 %v4346, 0.01
        %v4449 = vmul.f32 %v4348, 0.01
        %v4450 = vmul.f32 %v4351, 0.01
        %v4451 = vmul.f32 %v4353, 0.01
        %v4452 = vmul.f32 %v4356, 0.01
        %v4453 = vmul.f32 %v4358, 0.01
        %v4454 = vmul.f32 %v4361, 0.01
        %v4455 = vmul.f32 %v4363, 0.01
        %v4456 = vmul.f32 %v4366, 0.01
        %v4457 = vmul.f32 %v4368, 0.01
        %v4458 = vmul.f32 %v4371, 0.01
        %v4459 = vmul.f32 %v4373, 0.01
        %v4460 = vmul.f32 %v4376, 0.01
        %v4461 = vmul.f32 %v4378, 0.01
        %v4462 = vmul.f32 %v4381, 0.01
        %v4463 = vmul.f32 %v4383, 0.01
        %v4464 = vmul.f32 %v4386, 0.01
        %v4465 = vmul.f32 %v4388, 0.01
        %v4466 = vmul.f32 %v4391, 0.01
        %v4467 = vmul.f32 %v4393, 0.01
        %v4468 = vmul.f32 %v4396, 0.01
        %v4469 = vmul.f32 %v4398, 0.01
        %v4470 = vmul.f32 %v4401, 0.01
        %v4471 = vmul.f32 %v4403, 0.01
        %v4472 = vmul.f32 %v4406, 0.01
        %v4473 = vmul.f32 %v4408, 0.01
        %v4474 = vsel %vm4410, %v4331, %v4442
        %v4475 = vsel %vm4411, %v4333, %v4443
        %v4476 = vsel %vm4412, %v4336, %v4444
        %v4477 = vsel %vm4413, %v4338, %v4445
        %v4478 = vsel %vm4414, %v4341, %v4446
        %v4479 = vsel %vm4415, %v4343, %v4447
        %v4480 = vsel %vm4416, %v4346, %v4448
        %v4481 = vsel %vm4417, %v4348, %v4449
        %v4482 = vsel %vm4418, %v4351, %v4450
        %v4483 = vsel %vm4419, %v4353, %v4451
        %v4484 = vsel %vm4420, %v4356, %v4452
        %v4485 = vsel %vm4421, %v4358, %v4453
        %v4486 = vsel %vm4422, %v4361, %v4454
        %v4487 = vsel %vm4423, %v4363, %v4455
        %v4488 = vsel %vm4424, %v4366, %v4456
        %v4489 = vsel %vm4425, %v4368, %v4457
        %v4490 = vsel %vm4426, %v4371, %v4458
        %v4491 = vsel %vm4427, %v4373, %v4459
        %v4492 = vsel %vm4428, %v4376, %v4460
        %v4493 = vsel %vm4429, %v4378, %v4461
        %v4494 = vsel %vm4430, %v4381, %v4462
        %v4495 = vsel %vm4431, %v4383, %v4463
        %v4496 = vsel %vm4432, %v4386, %v4464
        %v4497 = vsel %vm4433, %v4388, %v4465
        %v4498 = vsel %vm4434, %v4391, %v4466
        %v4499 = vsel %vm4435, %v4393, %v4467
        %v4500 = vsel %vm4436, %v4396, %v4468
        %v4501 = vsel %vm4437, %v4398, %v4469
        %v4502 = vsel %vm4438, %v4401, %v4470
        %v4503 = vsel %vm4439, %v4403, %v4471
        %v4504 = vsel %vm4440, %v4406, %v4472
        %v4505 = vsel %vm4441, %v4408, %v4473
        %vm4506 = vcmask 523264
        %4507 = vst.msk [vmem:[#allocation9] sm:$0xff] %vm4506, %v4474
        %4508 = vst.msk [vmem:[#allocation9 + $0x8] sm:$0xff] %vm4506, %v4475
        %4509 = vst.msk [vmem:[#allocation9 + $0x10] sm:$0xff] %vm4506, %v4476
        %4510 = vst.msk [vmem:[#allocation9 + $0x18] sm:$0xff] %vm4506, %v4477
        %4511 = vst.msk [vmem:[#allocation9 + $0x20] sm:$0xff] %vm4506, %v4478
        %4512 = vst.msk [vmem:[#allocation9 + $0x28] sm:$0xff] %vm4506, %v4479
        %4513 = vst.msk [vmem:[#allocation9 + $0x30] sm:$0xff] %vm4506, %v4480
        %4514 = vst.msk [vmem:[#allocation9 + $0x38] sm:$0xff] %vm4506, %v4481
        %4515 = vst.msk [vmem:[#allocation9 + $0x40] sm:$0xff] %vm4506, %v4482
        %4516 = vst.msk [vmem:[#allocation9 + $0x48] sm:$0xff] %vm4506, %v4483
        %4517 = vst.msk [vmem:[#allocation9 + $0x50] sm:$0xff] %vm4506, %v4484
        %4518 = vst.msk [vmem:[#allocation9 + $0x58] sm:$0xff] %vm4506, %v4485
        %4519 = vst.msk [vmem:[#allocation9 + $0x60] sm:$0xff] %vm4506, %v4486
        %4520 = vst.msk [vmem:[#allocation9 + $0x68] sm:$0xff] %vm4506, %v4487
        %4521 = vst.msk [vmem:[#allocation9 + $0x70] sm:$0xff] %vm4506, %v4488
        %4522 = vst.msk [vmem:[#allocation9 + $0x78] sm:$0xff] %vm4506, %v4489
        %4523 = vst.msk [vmem:[#allocation9 + $0x80] sm:$0xff] %vm4506, %v4490
        %4524 = vst.msk [vmem:[#allocation9 + $0x88] sm:$0xff] %vm4506, %v4491
        %4525 = vst.msk [vmem:[#allocation9 + $0x90] sm:$0xff] %vm4506, %v4492
        %4526 = vst.msk [vmem:[#allocation9 + $0x98] sm:$0xff] %vm4506, %v4493
        %4527 = vst.msk [vmem:[#allocation9 + $0xa0] sm:$0xff] %vm4506, %v4494
        %4528 = vst.msk [vmem:[#allocation9 + $0xa8] sm:$0xff] %vm4506, %v4495
        %4529 = vst.msk [vmem:[#allocation9 + $0xb0] sm:$0xff] %vm4506, %v4496
        %4530 = vst.msk [vmem:[#allocation9 + $0xb8] sm:$0xff] %vm4506, %v4497
        %4531 = vst.msk [vmem:[#allocation9 + $0xc0] sm:$0xff] %vm4506, %v4498
        %4532 = vst.msk [vmem:[#allocation9 + $0xc8] sm:$0xff] %vm4506, %v4499
        %4533 = vst.msk [vmem:[#allocation9 + $0xd0] sm:$0xff] %vm4506, %v4500
        %4534 = vst.msk [vmem:[#allocation9 + $0xd8] sm:$0xff] %vm4506, %v4501
        %4535 = vst.msk [vmem:[#allocation9 + $0xe0] sm:$0xff] %vm4506, %v4502
        %4536 = vst.msk [vmem:[#allocation9 + $0xe8] sm:$0xff] %vm4506, %v4503
        %4537 = vst.msk [vmem:[#allocation9 + $0xf0] sm:$0xff] %vm4506, %v4504
        %4538 = vst.msk [vmem:[#allocation9 + $0xf8] sm:$0xff] %vm4506, %v4505
        %v4539 = vld [vmem:[#allocation9] ss:$2 sm:$0xff]
        %s4540 = scalar_lea.vmem [#allocation9], 16
        %v4541 = vld [vmem:[%s4540] ss:$2 sm:$0xff]
        %s4542 = scalar_lea.vmem [#allocation9], 32
        %v4543 = vld [vmem:[%s4542] ss:$2 sm:$0xff]
        %s4544 = scalar_lea.vmem [#allocation9], 48
        %v4545 = vld [vmem:[%s4544] ss:$2 sm:$0xff]
        %s4546 = scalar_lea.vmem [#allocation9], 64
        %v4547 = vld [vmem:[%s4546] ss:$2 sm:$0xff]
        %s4548 = scalar_lea.vmem [#allocation9], 80
        %v4549 = vld [vmem:[%s4548] ss:$2 sm:$0xff]
        %s4550 = scalar_lea.vmem [#allocation9], 96
        %v4551 = vld [vmem:[%s4550] ss:$2 sm:$0xff]
        %s4552 = scalar_lea.vmem [#allocation9], 112
        %v4553 = vld [vmem:[%s4552] ss:$2 sm:$0xff]
        %s4554 = scalar_lea.vmem [#allocation9], 128
        %v4555 = vld [vmem:[%s4554] ss:$2 sm:$0xff]
        %s4556 = scalar_lea.vmem [#allocation9], 144
        %v4557 = vld [vmem:[%s4556] ss:$2 sm:$0xff]
        %s4558 = scalar_lea.vmem [#allocation9], 160
        %v4559 = vld [vmem:[%s4558] ss:$2 sm:$0xff]
        %s4560 = scalar_lea.vmem [#allocation9], 176
        %v4561 = vld [vmem:[%s4560] ss:$2 sm:$0xff]
        %s4562 = scalar_lea.vmem [#allocation9], 192
        %v4563 = vld [vmem:[%s4562] ss:$2 sm:$0xff]
        %s4564 = scalar_lea.vmem [#allocation9], 208
        %v4565 = vld [vmem:[%s4564] ss:$2 sm:$0xff]
        %s4566 = scalar_lea.vmem [#allocation9], 224
        %v4567 = vld [vmem:[%s4566] ss:$2 sm:$0xff]
        %s4568 = scalar_lea.vmem [#allocation9], 240
        %v4569 = vld [vmem:[%s4568] ss:$2 sm:$0xff]
        %s4570 = scalar_lea.vmem [#allocation9], 1
        %v4571 = vld [vmem:[%s4570] ss:$2 sm:$0xff]
        %s4572 = scalar_lea.vmem [#allocation9], 17
        %v4573 = vld [vmem:[%s4572] ss:$2 sm:$0xff]
        %s4574 = scalar_lea.vmem [#allocation9], 33
        %v4575 = vld [vmem:[%s4574] ss:$2 sm:$0xff]
        %s4576 = scalar_lea.vmem [#allocation9], 49
        %v4577 = vld [vmem:[%s4576] ss:$2 sm:$0xff]
        %s4578 = scalar_lea.vmem [#allocation9], 65
        %v4579 = vld [vmem:[%s4578] ss:$2 sm:$0xff]
        %s4580 = scalar_lea.vmem [#allocation9], 81
        %v4581 = vld [vmem:[%s4580] ss:$2 sm:$0xff]
        %s4582 = scalar_lea.vmem [#allocation9], 97
        %v4583 = vld [vmem:[%s4582] ss:$2 sm:$0xff]
        %s4584 = scalar_lea.vmem [#allocation9], 113
        %v4585 = vld [vmem:[%s4584] ss:$2 sm:$0xff]
        %s4586 = scalar_lea.vmem [#allocation9], 129
        %v4587 = vld [vmem:[%s4586] ss:$2 sm:$0xff]
        %s4588 = scalar_lea.vmem [#allocation9], 145
        %v4589 = vld [vmem:[%s4588] ss:$2 sm:$0xff]
        %s4590 = scalar_lea.vmem [#allocation9], 161
        %v4591 = vld [vmem:[%s4590] ss:$2 sm:$0xff]
        %s4592 = scalar_lea.vmem [#allocation9], 177
        %v4593 = vld [vmem:[%s4592] ss:$2 sm:$0xff]
        %s4594 = scalar_lea.vmem [#allocation9], 193
        %v4595 = vld [vmem:[%s4594] ss:$2 sm:$0xff]
        %s4596 = scalar_lea.vmem [#allocation9], 209
        %v4597 = vld [vmem:[%s4596] ss:$2 sm:$0xff]
        %s4598 = scalar_lea.vmem [#allocation9], 225
        %v4599 = vld [vmem:[%s4598] ss:$2 sm:$0xff]
        %s4600 = scalar_lea.vmem [#allocation9], 241
        %v4601 = vld [vmem:[%s4600] ss:$2 sm:$0xff]
        %v4602 = vadd.f32 %v4539, %v4571
        %v4603 = vadd.f32 %v4541, %v4573
        %v4604 = vadd.f32 %v4543, %v4575
        %v4605 = vadd.f32 %v4545, %v4577
        %v4606 = vadd.f32 %v4547, %v4579
        %v4607 = vadd.f32 %v4549, %v4581
        %v4608 = vadd.f32 %v4551, %v4583
        %v4609 = vadd.f32 %v4553, %v4585
        %v4610 = vadd.f32 %v4555, %v4587
        %v4611 = vadd.f32 %v4557, %v4589
        %v4612 = vadd.f32 %v4559, %v4591
        %v4613 = vadd.f32 %v4561, %v4593
        %v4614 = vadd.f32 %v4563, %v4595
        %v4615 = vadd.f32 %v4565, %v4597
        %v4616 = vadd.f32 %v4567, %v4599
        %v4617 = vadd.f32 %v4569, %v4601
        %4618 = vst.msk [vmem:[#allocation10] sm:$0xff] %vm4506, %v4602
        %4619 = vst.msk [vmem:[#allocation10 + $0x8] sm:$0xff] %vm4506, %v4603
        %4620 = vst.msk [vmem:[#allocation10 + $0x10] sm:$0xff] %vm4506, %v4604
        %4621 = vst.msk [vmem:[#allocation10 + $0x18] sm:$0xff] %vm4506, %v4605
        %4622 = vst.msk [vmem:[#allocation10 + $0x20] sm:$0xff] %vm4506, %v4606
        %4623 = vst.msk [vmem:[#allocation10 + $0x28] sm:$0xff] %vm4506, %v4607
        %4624 = vst.msk [vmem:[#allocation10 + $0x30] sm:$0xff] %vm4506, %v4608
        %4625 = vst.msk [vmem:[#allocation10 + $0x38] sm:$0xff] %vm4506, %v4609
        %4626 = vst.msk [vmem:[#allocation10 + $0x40] sm:$0xff] %vm4506, %v4610
        %4627 = vst.msk [vmem:[#allocation10 + $0x48] sm:$0xff] %vm4506, %v4611
        %4628 = vst.msk [vmem:[#allocation10 + $0x50] sm:$0xff] %vm4506, %v4612
        %4629 = vst.msk [vmem:[#allocation10 + $0x58] sm:$0xff] %vm4506, %v4613
        %4630 = vst.msk [vmem:[#allocation10 + $0x60] sm:$0xff] %vm4506, %v4614
        %4631 = vst.msk [vmem:[#allocation10 + $0x68] sm:$0xff] %vm4506, %v4615
        %4632 = vst.msk [vmem:[#allocation10 + $0x70] sm:$0xff] %vm4506, %v4616
        %4633 = vst.msk [vmem:[#allocation10 + $0x78] sm:$0xff] %vm4506, %v4617
        %v4634 = vld [vmem:[#allocation10] sm:$0xff]
        %v4635 = vld [vmem:[#allocation10 + $0x10] sm:$0xff]
        %v4636 = vld [vmem:[#allocation10 + $0x20] sm:$0xff]
        %v4637 = vld [vmem:[#allocation10 + $0x30] sm:$0xff]
        %v4638 = vld [vmem:[#allocation10 + $0x40] sm:$0xff]
        %v4639 = vld [vmem:[#allocation10 + $0x50] sm:$0xff]
        %v4640 = vld [vmem:[#allocation10 + $0x60] sm:$0xff]
        %v4641 = vld [vmem:[#allocation10 + $0x70] sm:$0xff]
        %s4642 = scalar_lea.vmem [#allocation10], 8
        %v4643 = vld [vmem:[%s4642] sm:$0xff]
        %v4644 = vld [vmem:[%s4642 + $0x10] sm:$0xff]
        %v4645 = vld [vmem:[%s4642 + $0x20] sm:$0xff]
        %v4646 = vld [vmem:[%s4642 + $0x30] sm:$0xff]
        %v4647 = vld [vmem:[%s4642 + $0x40] sm:$0xff]
        %v4648 = vld [vmem:[%s4642 + $0x50] sm:$0xff]
        %v4649 = vld [vmem:[%s4642 + $0x60] sm:$0xff]
        %v4650 = vld [vmem:[%s4642 + $0x70] sm:$0xff]
        %v4651 = vadd.f32 %v4634, %v4643
        %v4652 = vadd.f32 %v4635, %v4644
        %v4653 = vadd.f32 %v4636, %v4645
        %v4654 = vadd.f32 %v4637, %v4646
        %v4655 = vadd.f32 %v4638, %v4647
        %v4656 = vadd.f32 %v4639, %v4648
        %v4657 = vadd.f32 %v4640, %v4649
        %v4658 = vadd.f32 %v4641, %v4650
        %4659 = vst.msk [vmem:[#allocation3] sm:$0xff] %vm4506, 0.0
        %vm4660 = vcmask 517120
        %4661 = vst.msk [vmem:[#allocation3 + $0x8] sm:$0x3] %vm4660, 0.0
        %4662 = vst.msk [vmem:[#allocation3 + $0x10] sm:$0xff] %vm4506, 0.0
        %4663 = vst.msk [vmem:[#allocation3 + $0x18] sm:$0x3] %vm4660, 0.0
        %4664 = vst.msk [vmem:[#allocation3 + $0x20] sm:$0xff] %vm4506, 0.0
        %4665 = vst.msk [vmem:[#allocation3 + $0x28] sm:$0x3] %vm4660, 0.0
        %4666 = vst.msk [vmem:[#allocation3 + $0x30] sm:$0xff] %vm4506, 0.0
        %4667 = vst.msk [vmem:[#allocation3 + $0x38] sm:$0x3] %vm4660, 0.0
        %4668 = vst.msk [vmem:[#allocation3 + $0x40] sm:$0xff] %vm4506, 0.0
        %4669 = vst.msk [vmem:[#allocation3 + $0x48] sm:$0x3] %vm4660, 0.0
        %4670 = vst.msk [vmem:[#allocation3 + $0x50] sm:$0xff] %vm4506, 0.0
        %4671 = vst.msk [vmem:[#allocation3 + $0x58] sm:$0x3] %vm4660, 0.0
        %4672 = vst.msk [vmem:[#allocation3 + $0x60] sm:$0xff] %vm4506, 0.0
        %4673 = vst.msk [vmem:[#allocation3 + $0x68] sm:$0x3] %vm4660, 0.0
        %4674 = vst.msk [vmem:[#allocation3 + $0x70] sm:$0xff] %vm4506, 0.0
        %4675 = vst.msk [vmem:[#allocation3 + $0x78] sm:$0x3] %vm4660, 0.0
        %4676 = vst.msk [vmem:[#allocation3 + $0x80] sm:$0xff] %vm4506, 0.0
        %4677 = vst.msk [vmem:[#allocation3 + $0x88] sm:$0x3] %vm4660, 0.0
        %4678 = vst.msk [vmem:[#allocation3 + $0x90] sm:$0xff] %vm4506, 0.0
        %4679 = vst.msk [vmem:[#allocation3 + $0x98] sm:$0x3] %vm4660, 0.0
        %s4680 = scalar_lea.vmem [#allocation3], 16
        %4681 = vst.msk [vmem:[%s4680 + $0x1] sm:$0xff] %vm4506, %v4651
        %4682 = vst.msk [vmem:[%s4680 + $0x11] sm:$0xff] %vm4506, %v4652
        %4683 = vst.msk [vmem:[%s4680 + $0x21] sm:$0xff] %vm4506, %v4653
        %4684 = vst.msk [vmem:[%s4680 + $0x31] sm:$0xff] %vm4506, %v4654
        %4685 = vst.msk [vmem:[%s4680 + $0x41] sm:$0xff] %vm4506, %v4655
        %4686 = vst.msk [vmem:[%s4680 + $0x51] sm:$0xff] %vm4506, %v4656
        %4687 = vst.msk [vmem:[%s4680 + $0x61] sm:$0xff] %vm4506, %v4657
        %4688 = vst.msk [vmem:[%s4680 + $0x71] sm:$0xff] %vm4506, %v4658
        %v4689 = vld [vmem:[#allocation3] sm:$0xff]
        %v4690 = vld [vmem:[#allocation3 + $0x10] sm:$0xff]
        %v4691 = vld [vmem:[#allocation3 + $0x20] sm:$0xff]
        %v4692 = vld [vmem:[#allocation3 + $0x30] sm:$0xff]
        %v4693 = vld [vmem:[#allocation3 + $0x40] sm:$0xff]
        %v4694 = vld [vmem:[#allocation3 + $0x50] sm:$0xff]
        %v4695 = vld [vmem:[#allocation3 + $0x60] sm:$0xff]
        %v4696 = vld [vmem:[#allocation3 + $0x70] sm:$0xff]
        %4697 = vst.msk [vmem:[#allocation5] sm:$0xff] %vm4506, %v4689
        %4698 = vst.msk [vmem:[#allocation5 + $0x28] sm:$0xff] %vm4506, %v4690
        %4699 = vst.msk [vmem:[#allocation5 + $0x50] sm:$0xff] %vm4506, %v4691
        %4700 = vst.msk [vmem:[#allocation5 + $0x78] sm:$0xff] %vm4506, %v4692
        %4701 = vst.msk [vmem:[#allocation5 + $0xa0] sm:$0xff] %vm4506, %v4693
        %4702 = vst.msk [vmem:[#allocation5 + $0xc8] sm:$0xff] %vm4506, %v4694
        %4703 = vst.msk [vmem:[#allocation5 + $0xf0] sm:$0xff] %vm4506, %v4695
        %4704 = vst.msk [vmem:[#allocation5 + $0x118] sm:$0xff] %vm4506, %v4696
        %v4705 = vld [vmem:[#allocation3 + $0x1] sm:$0xff]
        %v4706 = vld [vmem:[#allocation3 + $0x11] sm:$0xff]
        %v4707 = vld [vmem:[#allocation3 + $0x21] sm:$0xff]
        %v4708 = vld [vmem:[#allocation3 + $0x31] sm:$0xff]
        %v4709 = vld [vmem:[#allocation3 + $0x41] sm:$0xff]
        %v4710 = vld [vmem:[#allocation3 + $0x51] sm:$0xff]
        %v4711 = vld [vmem:[#allocation3 + $0x61] sm:$0xff]
        %v4712 = vld [vmem:[#allocation3 + $0x71] sm:$0xff]
        %4721 = vrot.lane.b32.xlu0 %v4705, 64
        %v4722 = vpop.permute.xlu0 %4721
        %4723 = vrot.lane.b32.xlu0 %v4706, 64
        %v4724 = vpop.permute.xlu0 %4723
        %4725 = vrot.lane.b32.xlu0 %v4707, 64
        %v4726 = vpop.permute.xlu0 %4725
        %4727 = vrot.lane.b32.xlu0 %v4708, 64
        %v4728 = vpop.permute.xlu0 %4727
        %4729 = vrot.lane.b32.xlu0 %v4709, 64
        %v4730 = vpop.permute.xlu0 %4729
        %4731 = vrot.lane.b32.xlu0 %v4710, 64
        %v4732 = vpop.permute.xlu0 %4731
        %4733 = vrot.lane.b32.xlu0 %v4711, 64
        %v4734 = vpop.permute.xlu0 %4733
        %4735 = vrot.lane.b32.xlu0 %v4712, 64
        %v4736 = vpop.permute.xlu0 %4735
        %vm4745 = vcmask 1048064
        %4746 = vst.msk [vmem:[#allocation5] sm:$0xff] %vm4745, %v4722
        %4747 = vst.msk [vmem:[#allocation5 + $0x28] sm:$0xff] %vm4745, %v4724
        %4748 = vst.msk [vmem:[#allocation5 + $0x50] sm:$0xff] %vm4745, %v4726
        %4749 = vst.msk [vmem:[#allocation5 + $0x78] sm:$0xff] %vm4745, %v4728
        %4750 = vst.msk [vmem:[#allocation5 + $0xa0] sm:$0xff] %vm4745, %v4730
        %4751 = vst.msk [vmem:[#allocation5 + $0xc8] sm:$0xff] %vm4745, %v4732
        %4752 = vst.msk [vmem:[#allocation5 + $0xf0] sm:$0xff] %vm4745, %v4734
        %4753 = vst.msk [vmem:[#allocation5 + $0x118] sm:$0xff] %vm4745, %v4736
        %v4754 = vld [vmem:[#allocation3 + $0x2] sm:$0xff]
        %v4755 = vld [vmem:[#allocation3 + $0x12] sm:$0xff]
        %v4756 = vld [vmem:[#allocation3 + $0x22] sm:$0xff]
        %v4757 = vld [vmem:[#allocation3 + $0x32] sm:$0xff]
        %v4758 = vld [vmem:[#allocation3 + $0x42] sm:$0xff]
        %v4759 = vld [vmem:[#allocation3 + $0x52] sm:$0xff]
        %v4760 = vld [vmem:[#allocation3 + $0x62] sm:$0xff]
        %v4761 = vld [vmem:[#allocation3 + $0x72] sm:$0xff]
        %4762 = vst.msk [vmem:[#allocation5 + $0x8] sm:$0xff] %vm4506, %v4754
        %4763 = vst.msk [vmem:[#allocation5 + $0x30] sm:$0xff] %vm4506, %v4755
        %4764 = vst.msk [vmem:[#allocation5 + $0x58] sm:$0xff] %vm4506, %v4756
        %4765 = vst.msk [vmem:[#allocation5 + $0x80] sm:$0xff] %vm4506, %v4757
        %4766 = vst.msk [vmem:[#allocation5 + $0xa8] sm:$0xff] %vm4506, %v4758
        %4767 = vst.msk [vmem:[#allocation5 + $0xd0] sm:$0xff] %vm4506, %v4759
        %4768 = vst.msk [vmem:[#allocation5 + $0xf8] sm:$0xff] %vm4506, %v4760
        %4769 = vst.msk [vmem:[#allocation5 + $0x120] sm:$0xff] %vm4506, %v4761
        %v4770 = vld [vmem:[%s4680] sm:$0xff]
        %v4771 = vld [vmem:[%s4680 + $0x10] sm:$0xff]
        %v4772 = vld [vmem:[%s4680 + $0x20] sm:$0xff]
        %v4773 = vld [vmem:[%s4680 + $0x30] sm:$0xff]
        %v4774 = vld [vmem:[%s4680 + $0x40] sm:$0xff]
        %v4775 = vld [vmem:[%s4680 + $0x50] sm:$0xff]
        %v4776 = vld [vmem:[%s4680 + $0x60] sm:$0xff]
        %v4777 = vld [vmem:[%s4680 + $0x70] sm:$0xff]
        %4786 = vrot.lane.b32.xlu0 %v4770, 64
        %v4787 = vpop.permute.xlu0 %4786
        %4788 = vrot.lane.b32.xlu0 %v4771, 64
        %v4789 = vpop.permute.xlu0 %4788
        %4790 = vrot.lane.b32.xlu0 %v4772, 64
        %v4791 = vpop.permute.xlu0 %4790
        %4792 = vrot.lane.b32.xlu0 %v4773, 64
        %v4793 = vpop.permute.xlu0 %4792
        %4794 = vrot.lane.b32.xlu0 %v4774, 64
        %v4795 = vpop.permute.xlu0 %4794
        %4796 = vrot.lane.b32.xlu0 %v4775, 64
        %v4797 = vpop.permute.xlu0 %4796
        %4798 = vrot.lane.b32.xlu0 %v4776, 64
        %v4799 = vpop.permute.xlu0 %4798
        %4800 = vrot.lane.b32.xlu0 %v4777, 64
        %v4801 = vpop.permute.xlu0 %4800
        %4810 = vst.msk [vmem:[#allocation5 + $0x8] sm:$0xff] %vm4745, %v4787
        %4811 = vst.msk [vmem:[#allocation5 + $0x30] sm:$0xff] %vm4745, %v4789
        %4812 = vst.msk [vmem:[#allocation5 + $0x58] sm:$0xff] %vm4745, %v4791
        %4813 = vst.msk [vmem:[#allocation5 + $0x80] sm:$0xff] %vm4745, %v4793
        %4814 = vst.msk [vmem:[#allocation5 + $0xa8] sm:$0xff] %vm4745, %v4795
        %4815 = vst.msk [vmem:[#allocation5 + $0xd0] sm:$0xff] %vm4745, %v4797
        %4816 = vst.msk [vmem:[#allocation5 + $0xf8] sm:$0xff] %vm4745, %v4799
        %4817 = vst.msk [vmem:[#allocation5 + $0x120] sm:$0xff] %vm4745, %v4801
        %v4818 = vld [vmem:[%s4680 + $0x1] sm:$0xff]
        %v4819 = vld [vmem:[%s4680 + $0x11] sm:$0xff]
        %v4820 = vld [vmem:[%s4680 + $0x21] sm:$0xff]
        %v4821 = vld [vmem:[%s4680 + $0x31] sm:$0xff]
        %v4822 = vld [vmem:[%s4680 + $0x41] sm:$0xff]
        %v4823 = vld [vmem:[%s4680 + $0x51] sm:$0xff]
        %v4824 = vld [vmem:[%s4680 + $0x61] sm:$0xff]
        %v4825 = vld [vmem:[%s4680 + $0x71] sm:$0xff]
        %4826 = vst.msk [vmem:[#allocation5 + $0x10] sm:$0xff] %vm4506, %v4818
        %4827 = vst.msk [vmem:[#allocation5 + $0x38] sm:$0xff] %vm4506, %v4819
        %4828 = vst.msk [vmem:[#allocation5 + $0x60] sm:$0xff] %vm4506, %v4820
        %4829 = vst.msk [vmem:[#allocation5 + $0x88] sm:$0xff] %vm4506, %v4821
        %4830 = vst.msk [vmem:[#allocation5 + $0xb0] sm:$0xff] %vm4506, %v4822
        %4831 = vst.msk [vmem:[#allocation5 + $0xd8] sm:$0xff] %vm4506, %v4823
        %4832 = vst.msk [vmem:[#allocation5 + $0x100] sm:$0xff] %vm4506, %v4824
        %4833 = vst.msk [vmem:[#allocation5 + $0x128] sm:$0xff] %vm4506, %v4825
        %v4834 = vld [vmem:[%s4680 + $0x2] sm:$0xff]
        %v4835 = vld [vmem:[%s4680 + $0x12] sm:$0xff]
        %v4836 = vld [vmem:[%s4680 + $0x22] sm:$0xff]
        %v4837 = vld [vmem:[%s4680 + $0x32] sm:$0xff]
        %v4838 = vld [vmem:[%s4680 + $0x42] sm:$0xff]
        %v4839 = vld [vmem:[%s4680 + $0x52] sm:$0xff]
        %v4840 = vld [vmem:[%s4680 + $0x62] sm:$0xff]
        %v4841 = vld [vmem:[%s4680 + $0x72] sm:$0xff]
        %4850 = vrot.lane.b32.xlu0 %v4834, 64
        %v4851 = vpop.permute.xlu0 %4850
        %4852 = vrot.lane.b32.xlu0 %v4835, 64
        %v4853 = vpop.permute.xlu0 %4852
        %4854 = vrot.lane.b32.xlu0 %v4836, 64
        %v4855 = vpop.permute.xlu0 %4854
        %4856 = vrot.lane.b32.xlu0 %v4837, 64
        %v4857 = vpop.permute.xlu0 %4856
        %4858 = vrot.lane.b32.xlu0 %v4838, 64
        %v4859 = vpop.permute.xlu0 %4858
        %4860 = vrot.lane.b32.xlu0 %v4839, 64
        %v4861 = vpop.permute.xlu0 %4860
        %4862 = vrot.lane.b32.xlu0 %v4840, 64
        %v4863 = vpop.permute.xlu0 %4862
        %4864 = vrot.lane.b32.xlu0 %v4841, 64
        %v4865 = vpop.permute.xlu0 %4864
        %4874 = vst.msk [vmem:[#allocation5 + $0x10] sm:$0xff] %vm4745, %v4851
        %4875 = vst.msk [vmem:[#allocation5 + $0x38] sm:$0xff] %vm4745, %v4853
        %4876 = vst.msk [vmem:[#allocation5 + $0x60] sm:$0xff] %vm4745, %v4855
        %4877 = vst.msk [vmem:[#allocation5 + $0x88] sm:$0xff] %vm4745, %v4857
        %4878 = vst.msk [vmem:[#allocation5 + $0xb0] sm:$0xff] %vm4745, %v4859
        %4879 = vst.msk [vmem:[#allocation5 + $0xd8] sm:$0xff] %vm4745, %v4861
        %4880 = vst.msk [vmem:[#allocation5 + $0x100] sm:$0xff] %vm4745, %v4863
        %4881 = vst.msk [vmem:[#allocation5 + $0x128] sm:$0xff] %vm4745, %v4865
        %s4882 = scalar_lea.vmem [#allocation3], 32
        %v4883 = vld [vmem:[%s4882] sm:$0xff]
        %v4884 = vld [vmem:[%s4882 + $0x10] sm:$0xff]
        %v4885 = vld [vmem:[%s4882 + $0x20] sm:$0xff]
        %v4886 = vld [vmem:[%s4882 + $0x30] sm:$0xff]
        %v4887 = vld [vmem:[%s4882 + $0x40] sm:$0xff]
        %v4888 = vld [vmem:[%s4882 + $0x50] sm:$0xff]
        %v4889 = vld [vmem:[%s4882 + $0x60] sm:$0xff]
        %v4890 = vld [vmem:[%s4882 + $0x70] sm:$0xff]
        %4891 = vst.msk [vmem:[#allocation5 + $0x18] sm:$0xff] %vm4506, %v4883
        %4892 = vst.msk [vmem:[#allocation5 + $0x40] sm:$0xff] %vm4506, %v4884
        %4893 = vst.msk [vmem:[#allocation5 + $0x68] sm:$0xff] %vm4506, %v4885
        %4894 = vst.msk [vmem:[#allocation5 + $0x90] sm:$0xff] %vm4506, %v4886
        %4895 = vst.msk [vmem:[#allocation5 + $0xb8] sm:$0xff] %vm4506, %v4887
        %4896 = vst.msk [vmem:[#allocation5 + $0xe0] sm:$0xff] %vm4506, %v4888
        %4897 = vst.msk [vmem:[#allocation5 + $0x108] sm:$0xff] %vm4506, %v4889
        %4898 = vst.msk [vmem:[#allocation5 + $0x130] sm:$0xff] %vm4506, %v4890
        %v4899 = vld [vmem:[%s4882 + $0x1] sm:$0xff]
        %v4900 = vld [vmem:[%s4882 + $0x11] sm:$0xff]
        %v4901 = vld [vmem:[%s4882 + $0x21] sm:$0xff]
        %v4902 = vld [vmem:[%s4882 + $0x31] sm:$0xff]
        %v4903 = vld [vmem:[%s4882 + $0x41] sm:$0xff]
        %v4904 = vld [vmem:[%s4882 + $0x51] sm:$0xff]
        %v4905 = vld [vmem:[%s4882 + $0x61] sm:$0xff]
        %v4906 = vld [vmem:[%s4882 + $0x71] sm:$0xff]
        %4915 = vrot.lane.b32.xlu0 %v4899, 64
        %v4916 = vpop.permute.xlu0 %4915
        %4917 = vrot.lane.b32.xlu0 %v4900, 64
        %v4918 = vpop.permute.xlu0 %4917
        %4919 = vrot.lane.b32.xlu0 %v4901, 64
        %v4920 = vpop.permute.xlu0 %4919
        %4921 = vrot.lane.b32.xlu0 %v4902, 64
        %v4922 = vpop.permute.xlu0 %4921
        %4923 = vrot.lane.b32.xlu0 %v4903, 64
        %v4924 = vpop.permute.xlu0 %4923
        %4925 = vrot.lane.b32.xlu0 %v4904, 64
        %v4926 = vpop.permute.xlu0 %4925
        %4927 = vrot.lane.b32.xlu0 %v4905, 64
        %v4928 = vpop.permute.xlu0 %4927
        %4929 = vrot.lane.b32.xlu0 %v4906, 64
        %v4930 = vpop.permute.xlu0 %4929
        %4939 = vst.msk [vmem:[#allocation5 + $0x18] sm:$0xff] %vm4745, %v4916
        %4940 = vst.msk [vmem:[#allocation5 + $0x40] sm:$0xff] %vm4745, %v4918
        %4941 = vst.msk [vmem:[#allocation5 + $0x68] sm:$0xff] %vm4745, %v4920
        %4942 = vst.msk [vmem:[#allocation5 + $0x90] sm:$0xff] %vm4745, %v4922
        %4943 = vst.msk [vmem:[#allocation5 + $0xb8] sm:$0xff] %vm4745, %v4924
        %4944 = vst.msk [vmem:[#allocation5 + $0xe0] sm:$0xff] %vm4745, %v4926
        %4945 = vst.msk [vmem:[#allocation5 + $0x108] sm:$0xff] %vm4745, %v4928
        %4946 = vst.msk [vmem:[#allocation5 + $0x130] sm:$0xff] %vm4745, %v4930
        %v4947 = vld [vmem:[%s4882 + $0x2] sm:$0xff]
        %v4948 = vld [vmem:[%s4882 + $0x12] sm:$0xff]
        %v4949 = vld [vmem:[%s4882 + $0x22] sm:$0xff]
        %v4950 = vld [vmem:[%s4882 + $0x32] sm:$0xff]
        %v4951 = vld [vmem:[%s4882 + $0x42] sm:$0xff]
        %v4952 = vld [vmem:[%s4882 + $0x52] sm:$0xff]
        %v4953 = vld [vmem:[%s4882 + $0x62] sm:$0xff]
        %v4954 = vld [vmem:[%s4882 + $0x72] sm:$0xff]
        %4955 = vst.msk [vmem:[#allocation5 + $0x20] sm:$0xff] %vm4506, %v4947
        %4956 = vst.msk [vmem:[#allocation5 + $0x48] sm:$0xff] %vm4506, %v4948
        %4957 = vst.msk [vmem:[#allocation5 + $0x70] sm:$0xff] %vm4506, %v4949
        %4958 = vst.msk [vmem:[#allocation5 + $0x98] sm:$0xff] %vm4506, %v4950
        %4959 = vst.msk [vmem:[#allocation5 + $0xc0] sm:$0xff] %vm4506, %v4951
        %4960 = vst.msk [vmem:[#allocation5 + $0xe8] sm:$0xff] %vm4506, %v4952
        %4961 = vst.msk [vmem:[#allocation5 + $0x110] sm:$0xff] %vm4506, %v4953
        %4962 = vst.msk [vmem:[#allocation5 + $0x138] sm:$0xff] %vm4506, %v4954
        %v4963 = vld [vmem:[#allocation5] sm:$0xff]
        %v4964 = vld [vmem:[#allocation5 + $0x8] sm:$0xff]
        %v4965 = vld [vmem:[#allocation5 + $0x10] sm:$0xff]
        %v4966 = vld [vmem:[#allocation5 + $0x18] sm:$0xff]
        %v4967 = vld [vmem:[#allocation5 + $0x20] sm:$0xff]
        %v4968 = vld [vmem:[#allocation5 + $0x28] sm:$0xff]
        %v4969 = vld [vmem:[#allocation5 + $0x30] sm:$0xff]
        %v4970 = vld [vmem:[#allocation5 + $0x38] sm:$0xff]
        %v4971 = vld [vmem:[#allocation5 + $0x40] sm:$0xff]
        %v4972 = vld [vmem:[#allocation5 + $0x48] sm:$0xff]
        %v4973 = vld [vmem:[#allocation5 + $0x50] sm:$0xff]
        %v4974 = vld [vmem:[#allocation5 + $0x58] sm:$0xff]
        %v4975 = vld [vmem:[#allocation5 + $0x60] sm:$0xff]
        %v4976 = vld [vmem:[#allocation5 + $0x68] sm:$0xff]
        %v4977 = vld [vmem:[#allocation5 + $0x70] sm:$0xff]
        %v4978 = vld [vmem:[#allocation5 + $0x78] sm:$0xff]
        %v4979 = vld [vmem:[#allocation5 + $0x80] sm:$0xff]
        %v4980 = vld [vmem:[#allocation5 + $0x88] sm:$0xff]
        %v4981 = vld [vmem:[#allocation5 + $0x90] sm:$0xff]
        %v4982 = vld [vmem:[#allocation5 + $0x98] sm:$0xff]
        %v4983 = vld [vmem:[#allocation5 + $0xa0] sm:$0xff]
        %v4984 = vld [vmem:[#allocation5 + $0xa8] sm:$0xff]
        %v4985 = vld [vmem:[#allocation5 + $0xb0] sm:$0xff]
        %v4986 = vld [vmem:[#allocation5 + $0xb8] sm:$0xff]
        %v4987 = vld [vmem:[#allocation5 + $0xc0] sm:$0xff]
        %v4988 = vld [vmem:[#allocation5 + $0xc8] sm:$0xff]
        %v4989 = vld [vmem:[#allocation5 + $0xd0] sm:$0xff]
        %v4990 = vld [vmem:[#allocation5 + $0xd8] sm:$0xff]
        %v4991 = vld [vmem:[#allocation5 + $0xe0] sm:$0xff]
        %v4992 = vld [vmem:[#allocation5 + $0xe8] sm:$0xff]
        %v4993 = vld [vmem:[#allocation5 + $0xf0] sm:$0xff]
        %v4994 = vld [vmem:[#allocation5 + $0xf8] sm:$0xff]
        %v4995 = vld [vmem:[#allocation5 + $0x100] sm:$0xff]
        %v4996 = vld [vmem:[#allocation5 + $0x108] sm:$0xff]
        %v4997 = vld [vmem:[#allocation5 + $0x110] sm:$0xff]
        %v4998 = vld [vmem:[#allocation5 + $0x118] sm:$0xff]
        %v4999 = vld [vmem:[#allocation5 + $0x120] sm:$0xff]
        %v5000 = vld [vmem:[#allocation5 + $0x128] sm:$0xff]
        %v5001 = vld [vmem:[#allocation5 + $0x130] sm:$0xff]
        %v5002 = vld [vmem:[#allocation5 + $0x138] sm:$0xff]
        %v5003 = vpack.c.bf16 %v4968, %v4963
        %v5004 = vpack.c.bf16 %v4969, %v4964
        %v5005 = vpack.c.bf16 %v4970, %v4965
        %v5006 = vpack.c.bf16 %v4971, %v4966
        %v5007 = vpack.c.bf16 %v4972, %v4967
        %v5008 = vpack.c.bf16 %v4978, %v4973
        %v5009 = vpack.c.bf16 %v4979, %v4974
        %v5010 = vpack.c.bf16 %v4980, %v4975
        %v5011 = vpack.c.bf16 %v4981, %v4976
        %v5012 = vpack.c.bf16 %v4982, %v4977
        %v5013 = vpack.c.bf16 %v4988, %v4983
        %v5014 = vpack.c.bf16 %v4989, %v4984
        %v5015 = vpack.c.bf16 %v4990, %v4985
        %v5016 = vpack.c.bf16 %v4991, %v4986
        %v5017 = vpack.c.bf16 %v4992, %v4987
        %v5018 = vpack.c.bf16 %v4998, %v4993
        %v5019 = vpack.c.bf16 %v4999, %v4994
        %v5020 = vpack.c.bf16 %v5000, %v4995
        %v5021 = vpack.c.bf16 %v5001, %v4996
        %v5022 = vpack.c.bf16 %v5002, %v4997
        %v5023 = vld [vmem:[%s5] sm:$0xf]
        %v5024 = vld [vmem:[%s5 + $0x4] sm:$0xf]
        %v5025 = vld [vmem:[%s5 + $0x8] sm:$0xf]
        %v5026 = vld [vmem:[%s5 + $0xc] sm:$0xf]
        %v5027 = vld [vmem:[%s5 + $0x10] sm:$0xf]
        %v5028 = vld [vmem:[%s5 + $0x14] sm:$0xf]
        %v5029 = vld [vmem:[%s5 + $0x18] sm:$0xf]
        %v5030 = vld [vmem:[%s5 + $0x1c] sm:$0xf]
        %v5031 = vld [vmem:[%s5 + $0x20] sm:$0xf]
        %v5032 = vld [vmem:[%s5 + $0x24] sm:$0xf]
        %v5033 = vld [vmem:[%s5 + $0x28] sm:$0xf]
        %v5034 = vld [vmem:[%s5 + $0x2c] sm:$0xf]
        %v5035 = vld [vmem:[%s5 + $0x30] sm:$0xf]
        %v5036 = vld [vmem:[%s5 + $0x34] sm:$0xf]
        %v5037 = vld [vmem:[%s5 + $0x38] sm:$0xf]
        %v5038 = vld [vmem:[%s5 + $0x3c] sm:$0xf]
        %v5039 = vld [vmem:[%s5 + $0x40] sm:$0xf]
        %v5040 = vld [vmem:[%s5 + $0x44] sm:$0xf]
        %v5041 = vld [vmem:[%s5 + $0x48] sm:$0xf]
        %v5042 = vld [vmem:[%s5 + $0x4c] sm:$0xf]
        %v5043 = vld [vmem:[%s5 + $0x50] sm:$0xf]
        %v5044 = vld [vmem:[%s5 + $0x54] sm:$0xf]
        %v5045 = vld [vmem:[%s5 + $0x58] sm:$0xf]
        %v5046 = vld [vmem:[%s5 + $0x5c] sm:$0xf]
        %v5047 = vld [vmem:[%s5 + $0x60] sm:$0xf]
        %v5048 = vld [vmem:[%s5 + $0x64] sm:$0xf]
        %v5049 = vld [vmem:[%s5 + $0x68] sm:$0xf]
        %v5050 = vld [vmem:[%s5 + $0x6c] sm:$0xf]
        %v5051 = vld [vmem:[%s5 + $0x70] sm:$0xf]
        %v5052 = vld [vmem:[%s5 + $0x74] sm:$0xf]
        %v5053 = vld [vmem:[%s5 + $0x78] sm:$0xf]
        %v5054 = vld [vmem:[%s5 + $0x7c] sm:$0xf]
        %v5055 = vld [vmem:[%s5 + $0x80] sm:$0xf]
        %v5056 = vld [vmem:[%s5 + $0x84] sm:$0xf]
        %v5057 = vld [vmem:[%s5 + $0x88] sm:$0xf]
        %v5058 = vld [vmem:[%s5 + $0x8c] sm:$0xf]
        %v5059 = vld [vmem:[%s5 + $0x90] sm:$0xf]
        %v5060 = vld [vmem:[%s5 + $0x94] sm:$0xf]
        %v5061 = vld [vmem:[%s5 + $0x98] sm:$0xf]
        %v5062 = vld [vmem:[%s5 + $0x9c] sm:$0xf]
        %v5063 = vld [vmem:[%s5 + $0xa0] sm:$0xf]
        %v5064 = vld [vmem:[%s5 + $0xa4] sm:$0xf]
        %v5065 = vld [vmem:[%s5 + $0xa8] sm:$0xf]
        %v5066 = vld [vmem:[%s5 + $0xac] sm:$0xf]
        %v5067 = vld [vmem:[%s5 + $0xb0] sm:$0xf]
        %v5068 = vld [vmem:[%s5 + $0xb4] sm:$0xf]
        %v5069 = vld [vmem:[%s5 + $0xb8] sm:$0xf]
        %v5070 = vld [vmem:[%s5 + $0xbc] sm:$0xf]
        %v5071 = vld [vmem:[%s5 + $0xc0] sm:$0xf]
        %v5072 = vld [vmem:[%s5 + $0xc4] sm:$0xf]
        %v5073 = vld [vmem:[%s5 + $0xc8] sm:$0xf]
        %v5074 = vld [vmem:[%s5 + $0xcc] sm:$0xf]
        %v5075 = vld [vmem:[%s5 + $0xd0] sm:$0xf]
        %v5076 = vld [vmem:[%s5 + $0xd4] sm:$0xf]
        %v5077 = vld [vmem:[%s5 + $0xd8] sm:$0xf]
        %v5078 = vld [vmem:[%s5 + $0xdc] sm:$0xf]
        %v5079 = vld [vmem:[%s5 + $0xe0] sm:$0xf]
        %v5080 = vld [vmem:[%s5 + $0xe4] sm:$0xf]
        %v5081 = vld [vmem:[%s5 + $0xe8] sm:$0xf]
        %v5082 = vld [vmem:[%s5 + $0xec] sm:$0xf]
        %v5083 = vld [vmem:[%s5 + $0xf0] sm:$0xf]
        %v5084 = vld [vmem:[%s5 + $0xf4] sm:$0xf]
        %v5085 = vld [vmem:[%s5 + $0xf8] sm:$0xf]
        %v5086 = vld [vmem:[%s5 + $0xfc] sm:$0xf]
        %v5087 = vld [vmem:[%s5 + $0x100] sm:$0xf]
        %v5088 = vld [vmem:[%s5 + $0x104] sm:$0xf]
        %v5089 = vld [vmem:[%s5 + $0x108] sm:$0xf]
        %v5090 = vld [vmem:[%s5 + $0x10c] sm:$0xf]
        %v5091 = vld [vmem:[%s5 + $0x110] sm:$0xf]
        %v5092 = vld [vmem:[%s5 + $0x114] sm:$0xf]
        %v5093 = vld [vmem:[%s5 + $0x118] sm:$0xf]
        %v5094 = vld [vmem:[%s5 + $0x11c] sm:$0xf]
        %v5095 = vld [vmem:[%s6] sm:$0x1]
        %v5097 = vperm.slane %v5095, 0
        %v5171 = vunpack.c.l.b16 %v5023
        %v5172 = vunpack.c.l.b16 %v5024
        %v5173 = vunpack.c.l.b16 %v5025
        %v5174 = vunpack.c.l.b16 %v5026
        %v5175 = vunpack.c.l.b16 %v5027
        %v5176 = vunpack.c.l.b16 %v5028
        %v5177 = vunpack.c.l.b16 %v5029
        %v5178 = vunpack.c.l.b16 %v5030
        %v5179 = vunpack.c.l.b16 %v5031
        %v5180 = vunpack.c.l.b16 %v5032
        %v5181 = vunpack.c.l.b16 %v5033
        %v5182 = vunpack.c.l.b16 %v5034
        %v5183 = vunpack.c.l.b16 %v5035
        %v5184 = vunpack.c.l.b16 %v5036
        %v5185 = vunpack.c.l.b16 %v5037
        %v5186 = vunpack.c.l.b16 %v5038
        %v5187 = vunpack.c.l.b16 %v5039
        %v5188 = vunpack.c.l.b16 %v5040
        %v5189 = vunpack.c.l.b16 %v5041
        %v5190 = vunpack.c.l.b16 %v5042
        %v5191 = vunpack.c.l.b16 %v5043
        %v5192 = vunpack.c.l.b16 %v5044
        %v5193 = vunpack.c.l.b16 %v5045
        %v5194 = vunpack.c.l.b16 %v5046
        %v5195 = vunpack.c.l.b16 %v5047
        %v5196 = vunpack.c.l.b16 %v5048
        %v5197 = vunpack.c.l.b16 %v5049
        %v5198 = vunpack.c.l.b16 %v5050
        %v5199 = vunpack.c.l.b16 %v5051
        %v5200 = vunpack.c.l.b16 %v5052
        %v5201 = vunpack.c.l.b16 %v5053
        %v5202 = vunpack.c.l.b16 %v5054
        %v5203 = vunpack.c.l.b16 %v5055
        %v5204 = vunpack.c.l.b16 %v5056
        %v5205 = vunpack.c.l.b16 %v5057
        %v5206 = vunpack.c.l.b16 %v5058
        %v5207 = vunpack.c.l.b16 %v5059
        %v5208 = vunpack.c.l.b16 %v5060
        %v5209 = vunpack.c.l.b16 %v5061
        %v5210 = vunpack.c.l.b16 %v5062
        %v5211 = vunpack.c.l.b16 %v5063
        %v5212 = vunpack.c.l.b16 %v5064
        %v5213 = vunpack.c.l.b16 %v5065
        %v5214 = vunpack.c.l.b16 %v5066
        %v5215 = vunpack.c.l.b16 %v5067
        %v5216 = vunpack.c.l.b16 %v5068
        %v5217 = vunpack.c.l.b16 %v5069
        %v5218 = vunpack.c.l.b16 %v5070
        %v5219 = vunpack.c.l.b16 %v5071
        %v5220 = vunpack.c.l.b16 %v5072
        %v5221 = vunpack.c.l.b16 %v5073
        %v5222 = vunpack.c.l.b16 %v5074
        %v5223 = vunpack.c.l.b16 %v5075
        %v5224 = vunpack.c.l.b16 %v5076
        %v5225 = vunpack.c.l.b16 %v5077
        %v5226 = vunpack.c.l.b16 %v5078
        %v5227 = vunpack.c.l.b16 %v5079
        %v5228 = vunpack.c.l.b16 %v5080
        %v5229 = vunpack.c.l.b16 %v5081
        %v5230 = vunpack.c.l.b16 %v5082
        %v5231 = vunpack.c.l.b16 %v5083
        %v5232 = vunpack.c.l.b16 %v5084
        %v5233 = vunpack.c.l.b16 %v5085
        %v5234 = vunpack.c.l.b16 %v5086
        %v5235 = vunpack.c.l.b16 %v5087
        %v5236 = vunpack.c.l.b16 %v5088
        %v5237 = vunpack.c.l.b16 %v5089
        %v5238 = vunpack.c.l.b16 %v5090
        %v5239 = vunpack.c.l.b16 %v5091
        %v5240 = vunpack.c.l.b16 %v5092
        %v5241 = vunpack.c.l.b16 %v5093
        %v5242 = vunpack.c.l.b16 %v5094
        %v5243 = vpack.c.b16 %v5172, %v5171
        %v5244 = vpack.c.b16 %v5174, %v5173
        %v5245 = vpack.c.b16 %v5176, %v5175
        %v5246 = vpack.c.b16 %v5178, %v5177
        %v5247 = vpack.c.b16 %v5180, %v5179
        %v5248 = vpack.c.b16 %v5182, %v5181
        %v5249 = vpack.c.b16 %v5184, %v5183
        %v5250 = vpack.c.b16 %v5186, %v5185
        %v5251 = vpack.c.b16 %v5188, %v5187
        %v5252 = vpack.c.b16 %v5190, %v5189
        %v5253 = vpack.c.b16 %v5192, %v5191
        %v5254 = vpack.c.b16 %v5194, %v5193
        %v5255 = vpack.c.b16 %v5196, %v5195
        %v5256 = vpack.c.b16 %v5198, %v5197
        %v5257 = vpack.c.b16 %v5200, %v5199
        %v5258 = vpack.c.b16 %v5202, %v5201
        %v5259 = vpack.c.b16 %v5204, %v5203
        %v5260 = vpack.c.b16 %v5206, %v5205
        %v5261 = vpack.c.b16 %v5208, %v5207
        %v5262 = vpack.c.b16 %v5210, %v5209
        %v5263 = vpack.c.b16 %v5212, %v5211
        %v5264 = vpack.c.b16 %v5214, %v5213
        %v5265 = vpack.c.b16 %v5216, %v5215
        %v5266 = vpack.c.b16 %v5218, %v5217
        %v5267 = vpack.c.b16 %v5220, %v5219
        %v5268 = vpack.c.b16 %v5222, %v5221
        %v5269 = vpack.c.b16 %v5224, %v5223
        %v5270 = vpack.c.b16 %v5226, %v5225
        %v5271 = vpack.c.b16 %v5228, %v5227
        %v5272 = vpack.c.b16 %v5230, %v5229
        %v5273 = vpack.c.b16 %v5232, %v5231
        %v5274 = vpack.c.b16 %v5234, %v5233
        %v5275 = vpack.c.b16 %v5236, %v5235
        %v5276 = vpack.c.b16 %v5238, %v5237
        %v5277 = vpack.c.b16 %v5240, %v5239
        %v5278 = vpack.c.b16 %v5242, %v5241
        %v5316 = vsel %vm4506, %v5007, 0
        %v5319 = vsel %vm4506, %v5012, 0
        %v5322 = vsel %vm4506, %v5017, 0
        %v5325 = vsel %vm4506, %v5022, 0
        %5327 = vmatpush.bf16.msra.mxu0 %v5250
        %5328 = vmatpush.bf16.msra.mxu0 %v5249
        %5329 = vmatpush.bf16.msra.mxu0 %v5248
        %5330 = vmatpush.bf16.msra.mxu0 %v5247
        %5331 = vmatpush.bf16.msra.mxu0 %v5246
        %5332 = vmatpush.bf16.msra.mxu0 %v5245
        %5333 = vmatpush.bf16.msra.mxu0 %v5244
        %5334 = vmatpush.bf16.msra.mxu0 %v5243
        %5335 = vmatmul.bf16.gmra.mxu0 %v5003
        %v5336 = vpop.f32.mrf.mxu0
        %v5337 = vadd.f32 %v5097, %v5336
        %v5338 = vpop.f32.mrf.mxu0
        %v5339 = vadd.f32 %v5097, %v5338
        %5340 = vmatmul.bf16.gmra.mxu0 %v5008
        %v5341 = vpop.f32.mrf.mxu0
        %v5342 = vadd.f32 %v5097, %v5341
        %v5343 = vpop.f32.mrf.mxu0
        %v5344 = vadd.f32 %v5097, %v5343
        %5345 = vmatmul.bf16.gmra.mxu0 %v5013
        %v5346 = vpop.f32.mrf.mxu0
        %v5347 = vadd.f32 %v5097, %v5346
        %v5348 = vpop.f32.mrf.mxu0
        %v5349 = vadd.f32 %v5097, %v5348
        %5350 = vmatmul.bf16.gmra.mxu0 %v5018
        %v5351 = vpop.f32.mrf.mxu0
        %v5352 = vadd.f32 %v5097, %v5351
        %v5353 = vpop.f32.mrf.mxu0
        %v5354 = vadd.f32 %v5097, %v5353
        %5355 = vdwg.mxu0
        %5356 = vmatpush.bf16.msra.mxu0 %v5258
        %5357 = vmatpush.bf16.msra.mxu0 %v5257
        %5358 = vmatpush.bf16.msra.mxu0 %v5256
        %5359 = vmatpush.bf16.msra.mxu0 %v5255
        %5360 = vmatpush.bf16.msra.mxu0 %v5254
        %5361 = vmatpush.bf16.msra.mxu0 %v5253
        %5362 = vmatpush.bf16.msra.mxu0 %v5252
        %5363 = vmatpush.bf16.msra.mxu0 %v5251
        %5364 = vmatmul.bf16.gmra.mxu0 %v5004
        %v5365 = vpop.f32.mrf.mxu0
        %v5366 = vadd.f32 %v5337, %v5365
        %v5367 = vpop.f32.mrf.mxu0
        %v5368 = vadd.f32 %v5339, %v5367
        %5369 = vmatmul.bf16.gmra.mxu0 %v5009
        %v5370 = vpop.f32.mrf.mxu0
        %v5371 = vadd.f32 %v5342, %v5370
        %v5372 = vpop.f32.mrf.mxu0
        %v5373 = vadd.f32 %v5344, %v5372
        %5374 = vmatmul.bf16.gmra.mxu0 %v5014
        %v5375 = vpop.f32.mrf.mxu0
        %v5376 = vadd.f32 %v5347, %v5375
        %v5377 = vpop.f32.mrf.mxu0
        %v5378 = vadd.f32 %v5349, %v5377
        %5379 = vmatmul.bf16.gmra.mxu0 %v5019
        %v5380 = vpop.f32.mrf.mxu0
        %v5381 = vadd.f32 %v5352, %v5380
        %v5382 = vpop.f32.mrf.mxu0
        %v5383 = vadd.f32 %v5354, %v5382
        %5384 = vdwg.mxu0
        %5385 = vmatpush.bf16.msra.mxu0 %v5266
        %5386 = vmatpush.bf16.msra.mxu0 %v5265
        %5387 = vmatpush.bf16.msra.mxu0 %v5264
        %5388 = vmatpush.bf16.msra.mxu0 %v5263
        %5389 = vmatpush.bf16.msra.mxu0 %v5262
        %5390 = vmatpush.bf16.msra.mxu0 %v5261
        %5391 = vmatpush.bf16.msra.mxu0 %v5260
        %5392 = vmatpush.bf16.msra.mxu0 %v5259
        %5393 = vmatmul.bf16.gmra.mxu0 %v5005
        %v5394 = vpop.f32.mrf.mxu0
        %v5395 = vadd.f32 %v5366, %v5394
        %v5396 = vpop.f32.mrf.mxu0
        %v5397 = vadd.f32 %v5368, %v5396
        %5398 = vmatmul.bf16.gmra.mxu0 %v5010
        %v5399 = vpop.f32.mrf.mxu0
        %v5400 = vadd.f32 %v5371, %v5399
        %v5401 = vpop.f32.mrf.mxu0
        %v5402 = vadd.f32 %v5373, %v5401
        %5403 = vmatmul.bf16.gmra.mxu0 %v5015
        %v5404 = vpop.f32.mrf.mxu0
        %v5405 = vadd.f32 %v5376, %v5404
        %v5406 = vpop.f32.mrf.mxu0
        %v5407 = vadd.f32 %v5378, %v5406
        %5408 = vmatmul.bf16.gmra.mxu0 %v5020
        %v5409 = vpop.f32.mrf.mxu0
        %v5410 = vadd.f32 %v5381, %v5409
        %v5411 = vpop.f32.mrf.mxu0
        %v5412 = vadd.f32 %v5383, %v5411
        %5413 = vdwg.mxu0
        %5414 = vmatpush.bf16.msra.mxu0 %v5274
        %5415 = vmatpush.bf16.msra.mxu0 %v5273
        %5416 = vmatpush.bf16.msra.mxu0 %v5272
        %5417 = vmatpush.bf16.msra.mxu0 %v5271
        %5418 = vmatpush.bf16.msra.mxu0 %v5270
        %5419 = vmatpush.bf16.msra.mxu0 %v5269
        %5420 = vmatpush.bf16.msra.mxu0 %v5268
        %5421 = vmatpush.bf16.msra.mxu0 %v5267
        %5422 = vmatmul.bf16.gmra.mxu0 %v5006
        %v5423 = vpop.f32.mrf.mxu0
        %v5424 = vadd.f32 %v5395, %v5423
        %v5425 = vpop.f32.mrf.mxu0
        %v5426 = vadd.f32 %v5397, %v5425
        %5427 = vmatmul.bf16.gmra.mxu0 %v5011
        %v5428 = vpop.f32.mrf.mxu0
        %v5429 = vadd.f32 %v5400, %v5428
        %v5430 = vpop.f32.mrf.mxu0
        %v5431 = vadd.f32 %v5402, %v5430
        %5432 = vmatmul.bf16.gmra.mxu0 %v5016
        %v5433 = vpop.f32.mrf.mxu0
        %v5434 = vadd.f32 %v5405, %v5433
        %v5435 = vpop.f32.mrf.mxu0
        %v5436 = vadd.f32 %v5407, %v5435
        %5437 = vmatmul.bf16.gmra.mxu0 %v5021
        %v5438 = vpop.f32.mrf.mxu0
        %v5439 = vadd.f32 %v5410, %v5438
        %v5440 = vpop.f32.mrf.mxu0
        %v5441 = vadd.f32 %v5412, %v5440
        %5442 = vdwg.mxu0
        %5443 = vmatpush.bf16.msra.mxu0 0
        %5444 = vmatpush.bf16.msra.mxu0 0
        %5445 = vmatpush.bf16.msra.mxu0 0
        %5446 = vmatpush.bf16.msra.mxu0 0
        %5447 = vmatpush.bf16.msra.mxu0 %v5278
        %5448 = vmatpush.bf16.msra.mxu0 %v5277
        %5449 = vmatpush.bf16.msra.mxu0 %v5276
        %5450 = vmatpush.bf16.msra.mxu0 %v5275
        %5451 = vmatmul.bf16.gmra.mxu0 %v5316
        %v5452 = vpop.f32.mrf.mxu0
        %v5453 = vadd.f32 %v5424, %v5452
        %v5454 = vpop.f32.mrf.mxu0
        %v5455 = vadd.f32 %v5426, %v5454
        %5456 = vmatmul.bf16.gmra.mxu0 %v5319
        %v5457 = vpop.f32.mrf.mxu0
        %v5458 = vadd.f32 %v5429, %v5457
        %v5459 = vpop.f32.mrf.mxu0
        %v5460 = vadd.f32 %v5431, %v5459
        %5461 = vmatmul.bf16.gmra.mxu0 %v5322
        %v5462 = vpop.f32.mrf.mxu0
        %v5463 = vadd.f32 %v5434, %v5462
        %v5464 = vpop.f32.mrf.mxu0
        %v5465 = vadd.f32 %v5436, %v5464
        %5466 = vmatmul.bf16.gmra.mxu0 %v5325
        %v5467 = vpop.f32.mrf.mxu0
        %v5468 = vadd.f32 %v5439, %v5467
        %v5469 = vpop.f32.mrf.mxu0
        %v5470 = vadd.f32 %v5441, %v5469
        %5471 = vdwg.mxu0
        %vm5472 = vcmp.ge.f32.partialorder %v5453, 0.0
        %vm5473 = vcmp.ge.f32.partialorder %v5455, 0.0
        %vm5474 = vcmp.ge.f32.partialorder %v5458, 0.0
        %vm5475 = vcmp.ge.f32.partialorder %v5460, 0.0
        %vm5476 = vcmp.ge.f32.partialorder %v5463, 0.0
        %vm5477 = vcmp.ge.f32.partialorder %v5465, 0.0
        %vm5478 = vcmp.ge.f32.partialorder %v5468, 0.0
        %vm5479 = vcmp.ge.f32.partialorder %v5470, 0.0
        %v5480 = vmul.f32 %v5453, 0.01
        %v5481 = vmul.f32 %v5455, 0.01
        %v5482 = vmul.f32 %v5458, 0.01
        %v5483 = vmul.f32 %v5460, 0.01
        %v5484 = vmul.f32 %v5463, 0.01
        %v5485 = vmul.f32 %v5465, 0.01
        %v5486 = vmul.f32 %v5468, 0.01
        %v5487 = vmul.f32 %v5470, 0.01
        %v5488 = vsel %vm5472, %v5453, %v5480
        %v5489 = vsel %vm5473, %v5455, %v5481
        %v5490 = vsel %vm5474, %v5458, %v5482
        %v5491 = vsel %vm5475, %v5460, %v5483
        %v5492 = vsel %vm5476, %v5463, %v5484
        %v5493 = vsel %vm5477, %v5465, %v5485
        %v5494 = vsel %vm5478, %v5468, %v5486
        %v5495 = vsel %vm5479, %v5470, %v5487
        %5496 = vst [vmem:[#allocation11] sm:$0xff] %v5488
        %5497 = vst [vmem:[#allocation11 + $0x8] sm:$0xff] %v5489
        %5498 = vst [vmem:[#allocation11 + $0x10] sm:$0xff] %v5490
        %5499 = vst [vmem:[#allocation11 + $0x18] sm:$0xff] %v5491
        %5500 = vst [vmem:[#allocation11 + $0x20] sm:$0xff] %v5492
        %5501 = vst [vmem:[#allocation11 + $0x28] sm:$0xff] %v5493
        %5502 = vst [vmem:[#allocation11 + $0x30] sm:$0xff] %v5494
        %5503 = vst [vmem:[#allocation11 + $0x38] sm:$0xff] %v5495
        %v5504 = vld [vmem:[#allocation11] ss:$2 sm:$0xf]
        %s5505 = scalar_lea.vmem [#allocation11], 8
        %v5506 = vld [vmem:[%s5505] ss:$2 sm:$0xf]
        %s5507 = scalar_lea.vmem [#allocation11], 16
        %v5508 = vld [vmem:[%s5507] ss:$2 sm:$0xf]
        %s5509 = scalar_lea.vmem [#allocation11], 24
        %v5510 = vld [vmem:[%s5509] ss:$2 sm:$0xf]
        %s5511 = scalar_lea.vmem [#allocation11], 32
        %v5512 = vld [vmem:[%s5511] ss:$2 sm:$0xf]
        %s5513 = scalar_lea.vmem [#allocation11], 40
        %v5514 = vld [vmem:[%s5513] ss:$2 sm:$0xf]
        %s5515 = scalar_lea.vmem [#allocation11], 48
        %v5516 = vld [vmem:[%s5515] ss:$2 sm:$0xf]
        %s5517 = scalar_lea.vmem [#allocation11], 56
        %v5518 = vld [vmem:[%s5517] ss:$2 sm:$0xf]
        %s5519 = scalar_lea.vmem [#allocation11], 1
        %v5520 = vld [vmem:[%s5519] ss:$2 sm:$0xf]
        %s5521 = scalar_lea.vmem [#allocation11], 9
        %v5522 = vld [vmem:[%s5521] ss:$2 sm:$0xf]
        %s5523 = scalar_lea.vmem [#allocation11], 17
        %v5524 = vld [vmem:[%s5523] ss:$2 sm:$0xf]
        %s5525 = scalar_lea.vmem [#allocation11], 25
        %v5526 = vld [vmem:[%s5525] ss:$2 sm:$0xf]
        %s5527 = scalar_lea.vmem [#allocation11], 33
        %v5528 = vld [vmem:[%s5527] ss:$2 sm:$0xf]
        %s5529 = scalar_lea.vmem [#allocation11], 41
        %v5530 = vld [vmem:[%s5529] ss:$2 sm:$0xf]
        %s5531 = scalar_lea.vmem [#allocation11], 49
        %v5532 = vld [vmem:[%s5531] ss:$2 sm:$0xf]
        %s5533 = scalar_lea.vmem [#allocation11], 57
        %v5534 = vld [vmem:[%s5533] ss:$2 sm:$0xf]
        %v5535 = vadd.f32 %v5504, %v5520
        %v5536 = vadd.f32 %v5506, %v5522
        %v5537 = vadd.f32 %v5508, %v5524
        %v5538 = vadd.f32 %v5510, %v5526
        %v5539 = vadd.f32 %v5512, %v5528
        %v5540 = vadd.f32 %v5514, %v5530
        %v5541 = vadd.f32 %v5516, %v5532
        %v5542 = vadd.f32 %v5518, %v5534
        %5543 = vst [vmem:[#allocation12] sm:$0xf] %v5535
        %5544 = vst [vmem:[#allocation12 + $0x4] sm:$0xf] %v5536
        %5545 = vst [vmem:[#allocation12 + $0x8] sm:$0xf] %v5537
        %5546 = vst [vmem:[#allocation12 + $0xc] sm:$0xf] %v5538
        %5547 = vst [vmem:[#allocation12 + $0x10] sm:$0xf] %v5539
        %5548 = vst [vmem:[#allocation12 + $0x14] sm:$0xf] %v5540
        %5549 = vst [vmem:[#allocation12 + $0x18] sm:$0xf] %v5541
        %5550 = vst [vmem:[#allocation12 + $0x1c] sm:$0xf] %v5542
        %v5551 = vld [vmem:[#allocation12] sm:$0xf]
        %v5552 = vld [vmem:[#allocation12 + $0x8] sm:$0xf]
        %v5553 = vld [vmem:[#allocation12 + $0x10] sm:$0xf]
        %v5554 = vld [vmem:[#allocation12 + $0x18] sm:$0xf]
        %s5555 = scalar_lea.vmem [#allocation12], 4
        %v5556 = vld [vmem:[%s5555] sm:$0xf]
        %v5557 = vld [vmem:[%s5555 + $0x8] sm:$0xf]
        %v5558 = vld [vmem:[%s5555 + $0x10] sm:$0xf]
        %v5559 = vld [vmem:[%s5555 + $0x18] sm:$0xf]
        %v5560 = vadd.f32 %v5551, %v5556
        %v5561 = vadd.f32 %v5552, %v5557
        %v5562 = vadd.f32 %v5553, %v5558
        %v5563 = vadd.f32 %v5554, %v5559
        %v5564 = vlaneseq
        %vm5565 = vcmp.ge.s32.totalorder %v5564, 0
        %vm5566 = vcmp.lt.s32.totalorder %v5564, 128
        %vm5567 = vmand %vm5565, %vm5566
        %5568 = vst.msk [vmem:[#allocation6] sm:$0x1] %vm5567, %v5560
        %5570 = vst [vmem:[#allocation1] sm:$0xff] %v5560
        %s5571 = scalar_lea.vmem [#allocation1], 1
        %v5572 = vld [vmem:[%s5571] ss:$9 sm:$0xff]
        %5574 = vst.msk [vmem:[#allocation6 + $0x1] sm:$0x1] %vm5567, %v5572
        %5575 = vst [vmem:[#allocation1] sm:$0xff] %v5560
        %s5576 = scalar_lea.vmem [#allocation1], 2
        %v5577 = vld [vmem:[%s5576] ss:$9 sm:$0xff]
        %5579 = vst.msk [vmem:[#allocation6 + $0x2] sm:$0x1] %vm5567, %v5577
        %5580 = vst [vmem:[#allocation1] sm:$0xff] %v5560
        %s5581 = scalar_lea.vmem [#allocation1], 3
        %v5582 = vld [vmem:[%s5581] ss:$9 sm:$0xff]
        %5584 = vst.msk [vmem:[#allocation6 + $0x3] sm:$0x1] %vm5567, %v5582
        %5585 = vst.msk [vmem:[#allocation6 + $0x4] sm:$0x1] %vm5567, %v5561
        %5587 = vst [vmem:[#allocation1] sm:$0xff] %v5561
        %s5588 = scalar_lea.vmem [#allocation1], 1
        %v5589 = vld [vmem:[%s5588] ss:$9 sm:$0xff]
        %5591 = vst.msk [vmem:[#allocation6 + $0x5] sm:$0x1] %vm5567, %v5589
        %5592 = vst [vmem:[#allocation1] sm:$0xff] %v5561
        %s5593 = scalar_lea.vmem [#allocation1], 2
        %v5594 = vld [vmem:[%s5593] ss:$9 sm:$0xff]
        %5596 = vst.msk [vmem:[#allocation6 + $0x6] sm:$0x1] %vm5567, %v5594
        %5597 = vst [vmem:[#allocation1] sm:$0xff] %v5561
        %s5598 = scalar_lea.vmem [#allocation1], 3
        %v5599 = vld [vmem:[%s5598] ss:$9 sm:$0xff]
        %5601 = vst.msk [vmem:[#allocation6 + $0x7] sm:$0x1] %vm5567, %v5599
        %5602 = vst.msk [vmem:[#allocation6 + $0x8] sm:$0x1] %vm5567, %v5562
        %5604 = vst [vmem:[#allocation1] sm:$0xff] %v5562
        %s5605 = scalar_lea.vmem [#allocation1], 1
        %v5606 = vld [vmem:[%s5605] ss:$9 sm:$0xff]
        %5608 = vst.msk [vmem:[#allocation6 + $0x9] sm:$0x1] %vm5567, %v5606
        %5609 = vst [vmem:[#allocation1] sm:$0xff] %v5562
        %s5610 = scalar_lea.vmem [#allocation1], 2
        %v5611 = vld [vmem:[%s5610] ss:$9 sm:$0xff]
        %5613 = vst.msk [vmem:[#allocation6 + $0xa] sm:$0x1] %vm5567, %v5611
        %5614 = vst [vmem:[#allocation1] sm:$0xff] %v5562
        %s5615 = scalar_lea.vmem [#allocation1], 3
        %v5616 = vld [vmem:[%s5615] ss:$9 sm:$0xff]
        %5618 = vst.msk [vmem:[#allocation6 + $0xb] sm:$0x1] %vm5567, %v5616
        %5619 = vst.msk [vmem:[#allocation6 + $0xc] sm:$0x1] %vm5567, %v5563
        %5621 = vst [vmem:[#allocation1] sm:$0xff] %v5563
        %s5622 = scalar_lea.vmem [#allocation1], 1
        %v5623 = vld [vmem:[%s5622] ss:$9 sm:$0xff]
        %5625 = vst.msk [vmem:[#allocation6 + $0xd] sm:$0x1] %vm5567, %v5623
        %5626 = vst [vmem:[#allocation1] sm:$0xff] %v5563
        %s5627 = scalar_lea.vmem [#allocation1], 2
        %v5628 = vld [vmem:[%s5627] ss:$9 sm:$0xff]
        %5630 = vst.msk [vmem:[#allocation6 + $0xe] sm:$0x1] %vm5567, %v5628
        %5631 = vst [vmem:[#allocation1] sm:$0xff] %v5563
        %s5632 = scalar_lea.vmem [#allocation1], 3
        %v5633 = vld [vmem:[%s5632] ss:$9 sm:$0xff]
        %5635 = vst.msk [vmem:[#allocation6 + $0xf] sm:$0x1] %vm5567, %v5633
        %v5636 = vld [vmem:[#allocation6] sm:$0xff]
        %v5637 = vld [vmem:[#allocation6 + $0x8] sm:$0xff]
        %v5640 = vperm.slane %v5636, 0
        %v5641 = vperm.slane %v5636, 1
        %v5642 = vperm.slane %v5636, 2
        %v5643 = vperm.slane %v5636, 3
        %v5644 = vperm.slane %v5636, 4
        %v5645 = vperm.slane %v5636, 5
        %v5646 = vperm.slane %v5636, 6
        %v5647 = vperm.slane %v5636, 7
        %v5648 = vperm.slane %v5637, 0
        %v5649 = vperm.slane %v5637, 1
        %v5650 = vperm.slane %v5637, 2
        %v5651 = vperm.slane %v5637, 3
        %v5652 = vperm.slane %v5637, 4
        %v5653 = vperm.slane %v5637, 5
        %v5654 = vperm.slane %v5637, 6
        %v5655 = vperm.slane %v5637, 7
        %v5672 = vpack.c.bf16 %v5640, %v5640
        %v5673 = vpack.c.bf16 %v5641, %v5641
        %v5674 = vpack.c.bf16 %v5642, %v5642
        %v5675 = vpack.c.bf16 %v5643, %v5643
        %v5676 = vpack.c.bf16 %v5644, %v5644
        %v5677 = vpack.c.bf16 %v5645, %v5645
        %v5678 = vpack.c.bf16 %v5646, %v5646
        %v5679 = vpack.c.bf16 %v5647, %v5647
        %v5680 = vpack.c.bf16 %v5648, %v5648
        %v5681 = vpack.c.bf16 %v5649, %v5649
        %v5682 = vpack.c.bf16 %v5650, %v5650
        %v5683 = vpack.c.bf16 %v5651, %v5651
        %v5684 = vpack.c.bf16 %v5652, %v5652
        %v5685 = vpack.c.bf16 %v5653, %v5653
        %v5686 = vpack.c.bf16 %v5654, %v5654
        %v5687 = vpack.c.bf16 %v5655, %v5655
        %v5688 = vld [vmem:[%s7] sm:$0xff]
        %v5689 = vld [vmem:[%s7 + $0x8] sm:$0xff]
        %v5690 = vld [vmem:[%s7 + $0x10] sm:$0xff]
        %v5691 = vld [vmem:[%s7 + $0x18] sm:$0xff]
        %v5692 = vld [vmem:[%s7 + $0x20] sm:$0xff]
        %v5693 = vld [vmem:[%s7 + $0x28] sm:$0xff]
        %v5694 = vld [vmem:[%s7 + $0x30] sm:$0xff]
        %v5695 = vld [vmem:[%s7 + $0x38] sm:$0xff]
        %v5696 = vld [vmem:[%s7 + $0x40] sm:$0xff]
        %v5697 = vld [vmem:[%s7 + $0x48] sm:$0xff]
        %v5698 = vld [vmem:[%s7 + $0x50] sm:$0xff]
        %v5699 = vld [vmem:[%s7 + $0x58] sm:$0xff]
        %v5700 = vld [vmem:[%s7 + $0x60] sm:$0xff]
        %v5701 = vld [vmem:[%s7 + $0x68] sm:$0xff]
        %v5702 = vld [vmem:[%s7 + $0x70] sm:$0xff]
        %v5703 = vld [vmem:[%s7 + $0x78] sm:$0xff]
        %v5704 = vld [vmem:[%s7 + $0x80] sm:$0xff]
        %v5705 = vld [vmem:[%s7 + $0x88] sm:$0xff]
        %v5706 = vld [vmem:[%s7 + $0x90] sm:$0xff]
        %v5707 = vld [vmem:[%s7 + $0x98] sm:$0xff]
        %v5708 = vld [vmem:[%s7 + $0xa0] sm:$0xff]
        %v5709 = vld [vmem:[%s7 + $0xa8] sm:$0xff]
        %v5710 = vld [vmem:[%s7 + $0xb0] sm:$0xff]
        %v5711 = vld [vmem:[%s7 + $0xb8] sm:$0xff]
        %v5712 = vld [vmem:[%s7 + $0xc0] sm:$0xff]
        %v5713 = vld [vmem:[%s7 + $0xc8] sm:$0xff]
        %v5714 = vld [vmem:[%s7 + $0xd0] sm:$0xff]
        %v5715 = vld [vmem:[%s7 + $0xd8] sm:$0xff]
        %v5716 = vld [vmem:[%s7 + $0xe0] sm:$0xff]
        %v5717 = vld [vmem:[%s7 + $0xe8] sm:$0xff]
        %v5718 = vld [vmem:[%s7 + $0xf0] sm:$0xff]
        %v5719 = vld [vmem:[%s7 + $0xf8] sm:$0xff]
        %v5720 = vld [vmem:[%s7 + $0x100] sm:$0xff]
        %v5721 = vld [vmem:[%s7 + $0x108] sm:$0xff]
        %v5722 = vld [vmem:[%s7 + $0x110] sm:$0xff]
        %v5723 = vld [vmem:[%s7 + $0x118] sm:$0xff]
        %v5724 = vld [vmem:[%s7 + $0x120] sm:$0xff]
        %v5725 = vld [vmem:[%s7 + $0x128] sm:$0xff]
        %v5726 = vld [vmem:[%s7 + $0x130] sm:$0xff]
        %v5727 = vld [vmem:[%s7 + $0x138] sm:$0xff]
        %v5728 = vld [vmem:[%s7 + $0x140] sm:$0xff]
        %v5729 = vld [vmem:[%s7 + $0x148] sm:$0xff]
        %v5730 = vld [vmem:[%s7 + $0x150] sm:$0xff]
        %v5731 = vld [vmem:[%s7 + $0x158] sm:$0xff]
        %v5732 = vld [vmem:[%s7 + $0x160] sm:$0xff]
        %v5733 = vld [vmem:[%s7 + $0x168] sm:$0xff]
        %v5734 = vld [vmem:[%s7 + $0x170] sm:$0xff]
        %v5735 = vld [vmem:[%s7 + $0x178] sm:$0xff]
        %v5736 = vld [vmem:[%s7 + $0x180] sm:$0xff]
        %v5737 = vld [vmem:[%s7 + $0x188] sm:$0xff]
        %v5738 = vld [vmem:[%s7 + $0x190] sm:$0xff]
        %v5739 = vld [vmem:[%s7 + $0x198] sm:$0xff]
        %v5740 = vld [vmem:[%s7 + $0x1a0] sm:$0xff]
        %v5741 = vld [vmem:[%s7 + $0x1a8] sm:$0xff]
        %v5742 = vld [vmem:[%s7 + $0x1b0] sm:$0xff]
        %v5743 = vld [vmem:[%s7 + $0x1b8] sm:$0xff]
        %v5744 = vld [vmem:[%s7 + $0x1c0] sm:$0xff]
        %v5745 = vld [vmem:[%s7 + $0x1c8] sm:$0xff]
        %v5746 = vld [vmem:[%s7 + $0x1d0] sm:$0xff]
        %v5747 = vld [vmem:[%s7 + $0x1d8] sm:$0xff]
        %v5748 = vld [vmem:[%s7 + $0x1e0] sm:$0xff]
        %v5749 = vld [vmem:[%s7 + $0x1e8] sm:$0xff]
        %v5750 = vld [vmem:[%s7 + $0x1f0] sm:$0xff]
        %v5751 = vld [vmem:[%s7 + $0x1f8] sm:$0xff]
        %v5752 = vld [vmem:[%s7 + $0x200] sm:$0xff]
        %v5753 = vld [vmem:[%s7 + $0x208] sm:$0xff]
        %v5754 = vld [vmem:[%s7 + $0x210] sm:$0xff]
        %v5755 = vld [vmem:[%s7 + $0x218] sm:$0xff]
        %v5756 = vld [vmem:[%s7 + $0x220] sm:$0xff]
        %v5757 = vld [vmem:[%s7 + $0x228] sm:$0xff]
        %v5758 = vld [vmem:[%s7 + $0x230] sm:$0xff]
        %v5759 = vld [vmem:[%s7 + $0x238] sm:$0xff]
        %v5760 = vld [vmem:[%s7 + $0x240] sm:$0xff]
        %v5761 = vld [vmem:[%s7 + $0x248] sm:$0xff]
        %v5762 = vld [vmem:[%s7 + $0x250] sm:$0xff]
        %v5763 = vld [vmem:[%s7 + $0x258] sm:$0xff]
        %v5764 = vld [vmem:[%s7 + $0x260] sm:$0xff]
        %v5765 = vld [vmem:[%s7 + $0x268] sm:$0xff]
        %v5766 = vld [vmem:[%s7 + $0x270] sm:$0xff]
        %v5767 = vld [vmem:[%s7 + $0x278] sm:$0xff]
        %v5768 = vld [vmem:[%s7 + $0x280] sm:$0xff]
        %v5769 = vld [vmem:[%s7 + $0x288] sm:$0xff]
        %v5770 = vld [vmem:[%s7 + $0x290] sm:$0xff]
        %v5771 = vld [vmem:[%s7 + $0x298] sm:$0xff]
        %v5772 = vld [vmem:[%s7 + $0x2a0] sm:$0xff]
        %v5773 = vld [vmem:[%s7 + $0x2a8] sm:$0xff]
        %v5774 = vld [vmem:[%s7 + $0x2b0] sm:$0xff]
        %v5775 = vld [vmem:[%s7 + $0x2b8] sm:$0xff]
        %v5776 = vld [vmem:[%s7 + $0x2c0] sm:$0xff]
        %v5777 = vld [vmem:[%s7 + $0x2c8] sm:$0xff]
        %v5778 = vld [vmem:[%s7 + $0x2d0] sm:$0xff]
        %v5779 = vld [vmem:[%s7 + $0x2d8] sm:$0xff]
        %v5780 = vld [vmem:[%s7 + $0x2e0] sm:$0xff]
        %v5781 = vld [vmem:[%s7 + $0x2e8] sm:$0xff]
        %v5782 = vld [vmem:[%s7 + $0x2f0] sm:$0xff]
        %v5783 = vld [vmem:[%s7 + $0x2f8] sm:$0xff]
        %v5784 = vld [vmem:[%s7 + $0x300] sm:$0xff]
        %v5785 = vld [vmem:[%s7 + $0x308] sm:$0xff]
        %v5786 = vld [vmem:[%s7 + $0x310] sm:$0xff]
        %v5787 = vld [vmem:[%s7 + $0x318] sm:$0xff]
        %v5788 = vld [vmem:[%s7 + $0x320] sm:$0xff]
        %v5789 = vld [vmem:[%s7 + $0x328] sm:$0xff]
        %v5790 = vld [vmem:[%s7 + $0x330] sm:$0xff]
        %v5791 = vld [vmem:[%s7 + $0x338] sm:$0xff]
        %v5792 = vld [vmem:[%s7 + $0x340] sm:$0xff]
        %v5793 = vld [vmem:[%s7 + $0x348] sm:$0xff]
        %v5794 = vld [vmem:[%s7 + $0x350] sm:$0xff]
        %v5795 = vld [vmem:[%s7 + $0x358] sm:$0xff]
        %v5796 = vld [vmem:[%s7 + $0x360] sm:$0xff]
        %v5797 = vld [vmem:[%s7 + $0x368] sm:$0xff]
        %v5798 = vld [vmem:[%s7 + $0x370] sm:$0xff]
        %v5799 = vld [vmem:[%s7 + $0x378] sm:$0xff]
        %v5800 = vld [vmem:[%s7 + $0x380] sm:$0xff]
        %v5801 = vld [vmem:[%s7 + $0x388] sm:$0xff]
        %v5802 = vld [vmem:[%s7 + $0x390] sm:$0xff]
        %v5803 = vld [vmem:[%s7 + $0x398] sm:$0xff]
        %v5804 = vld [vmem:[%s7 + $0x3a0] sm:$0xff]
        %v5805 = vld [vmem:[%s7 + $0x3a8] sm:$0xff]
        %v5806 = vld [vmem:[%s7 + $0x3b0] sm:$0xff]
        %v5807 = vld [vmem:[%s7 + $0x3b8] sm:$0xff]
        %v5808 = vld [vmem:[%s7 + $0x3c0] sm:$0xff]
        %v5809 = vld [vmem:[%s7 + $0x3c8] sm:$0xff]
        %v5810 = vld [vmem:[%s7 + $0x3d0] sm:$0xff]
        %v5811 = vld [vmem:[%s7 + $0x3d8] sm:$0xff]
        %v5812 = vld [vmem:[%s7 + $0x3e0] sm:$0xff]
        %v5813 = vld [vmem:[%s7 + $0x3e8] sm:$0xff]
        %v5814 = vld [vmem:[%s7 + $0x3f0] sm:$0xff]
        %v5815 = vld [vmem:[%s7 + $0x3f8] sm:$0xff]
        %v5816 = vld [vmem:[%s7 + $0x400] sm:$0xff]
        %v5817 = vld [vmem:[%s7 + $0x408] sm:$0xff]
        %v5818 = vld [vmem:[%s7 + $0x410] sm:$0xff]
        %v5819 = vld [vmem:[%s7 + $0x418] sm:$0xff]
        %v5820 = vld [vmem:[%s7 + $0x420] sm:$0xff]
        %v5821 = vld [vmem:[%s7 + $0x428] sm:$0xff]
        %v5822 = vld [vmem:[%s7 + $0x430] sm:$0xff]
        %v5823 = vld [vmem:[%s7 + $0x438] sm:$0xff]
        %v5824 = vld [vmem:[%s7 + $0x440] sm:$0xff]
        %v5825 = vld [vmem:[%s7 + $0x448] sm:$0xff]
        %v5826 = vld [vmem:[%s7 + $0x450] sm:$0xff]
        %v5827 = vld [vmem:[%s7 + $0x458] sm:$0xff]
        %v5828 = vld [vmem:[%s7 + $0x460] sm:$0xff]
        %v5829 = vld [vmem:[%s7 + $0x468] sm:$0xff]
        %v5830 = vld [vmem:[%s7 + $0x470] sm:$0xff]
        %v5831 = vld [vmem:[%s7 + $0x478] sm:$0xff]
        %v5832 = vld [vmem:[%s7 + $0x480] sm:$0xff]
        %v5833 = vld [vmem:[%s7 + $0x488] sm:$0xff]
        %v5834 = vld [vmem:[%s7 + $0x490] sm:$0xff]
        %v5835 = vld [vmem:[%s7 + $0x498] sm:$0xff]
        %v5836 = vld [vmem:[%s7 + $0x4a0] sm:$0xff]
        %v5837 = vld [vmem:[%s7 + $0x4a8] sm:$0xff]
        %v5838 = vld [vmem:[%s7 + $0x4b0] sm:$0xff]
        %v5839 = vld [vmem:[%s7 + $0x4b8] sm:$0xff]
        %v5840 = vld [vmem:[%s7 + $0x4c0] sm:$0xff]
        %v5841 = vld [vmem:[%s7 + $0x4c8] sm:$0xff]
        %v5842 = vld [vmem:[%s7 + $0x4d0] sm:$0xff]
        %v5843 = vld [vmem:[%s7 + $0x4d8] sm:$0xff]
        %v5844 = vld [vmem:[%s7 + $0x4e0] sm:$0xff]
        %v5845 = vld [vmem:[%s7 + $0x4e8] sm:$0xff]
        %v5846 = vld [vmem:[%s7 + $0x4f0] sm:$0xff]
        %v5847 = vld [vmem:[%s7 + $0x4f8] sm:$0xff]
        %v5848 = vld [vmem:[%s7 + $0x500] sm:$0xff]
        %v5849 = vld [vmem:[%s7 + $0x508] sm:$0xff]
        %v5850 = vld [vmem:[%s7 + $0x510] sm:$0xff]
        %v5851 = vld [vmem:[%s7 + $0x518] sm:$0xff]
        %v5852 = vld [vmem:[%s7 + $0x520] sm:$0xff]
        %v5853 = vld [vmem:[%s7 + $0x528] sm:$0xff]
        %v5854 = vld [vmem:[%s7 + $0x530] sm:$0xff]
        %v5855 = vld [vmem:[%s7 + $0x538] sm:$0xff]
        %v5856 = vld [vmem:[%s7 + $0x540] sm:$0xff]
        %v5857 = vld [vmem:[%s7 + $0x548] sm:$0xff]
        %v5858 = vld [vmem:[%s7 + $0x550] sm:$0xff]
        %v5859 = vld [vmem:[%s7 + $0x558] sm:$0xff]
        %v5860 = vld [vmem:[%s7 + $0x560] sm:$0xff]
        %v5861 = vld [vmem:[%s7 + $0x568] sm:$0xff]
        %v5862 = vld [vmem:[%s7 + $0x570] sm:$0xff]
        %v5863 = vld [vmem:[%s7 + $0x578] sm:$0xff]
        %v5864 = vld [vmem:[%s7 + $0x580] sm:$0xff]
        %v5865 = vld [vmem:[%s7 + $0x588] sm:$0xff]
        %v5866 = vld [vmem:[%s7 + $0x590] sm:$0xff]
        %v5867 = vld [vmem:[%s7 + $0x598] sm:$0xff]
        %v5868 = vld [vmem:[%s7 + $0x5a0] sm:$0xff]
        %v5869 = vld [vmem:[%s7 + $0x5a8] sm:$0xff]
        %v5870 = vld [vmem:[%s7 + $0x5b0] sm:$0xff]
        %v5871 = vld [vmem:[%s7 + $0x5b8] sm:$0xff]
        %v5872 = vld [vmem:[%s7 + $0x5c0] sm:$0xff]
        %v5873 = vld [vmem:[%s7 + $0x5c8] sm:$0xff]
        %v5874 = vld [vmem:[%s7 + $0x5d0] sm:$0xff]
        %v5875 = vld [vmem:[%s7 + $0x5d8] sm:$0xff]
        %v5876 = vld [vmem:[%s7 + $0x5e0] sm:$0xff]
        %v5877 = vld [vmem:[%s7 + $0x5e8] sm:$0xff]
        %v5878 = vld [vmem:[%s7 + $0x5f0] sm:$0xff]
        %v5879 = vld [vmem:[%s7 + $0x5f8] sm:$0xff]
        %v5880 = vld [vmem:[%s7 + $0x600] sm:$0xff]
        %v5881 = vld [vmem:[%s7 + $0x608] sm:$0xff]
        %v5882 = vld [vmem:[%s7 + $0x610] sm:$0xff]
        %v5883 = vld [vmem:[%s7 + $0x618] sm:$0xff]
        %v5884 = vld [vmem:[%s7 + $0x620] sm:$0xff]
        %v5885 = vld [vmem:[%s7 + $0x628] sm:$0xff]
        %v5886 = vld [vmem:[%s7 + $0x630] sm:$0xff]
        %v5887 = vld [vmem:[%s7 + $0x638] sm:$0xff]
        %v5888 = vld [vmem:[%s7 + $0x640] sm:$0xff]
        %v5889 = vld [vmem:[%s7 + $0x648] sm:$0xff]
        %v5890 = vld [vmem:[%s7 + $0x650] sm:$0xff]
        %v5891 = vld [vmem:[%s7 + $0x658] sm:$0xff]
        %v5892 = vld [vmem:[%s7 + $0x660] sm:$0xff]
        %v5893 = vld [vmem:[%s7 + $0x668] sm:$0xff]
        %v5894 = vld [vmem:[%s7 + $0x670] sm:$0xff]
        %v5895 = vld [vmem:[%s7 + $0x678] sm:$0xff]
        %v5896 = vld [vmem:[%s7 + $0x680] sm:$0xff]
        %v5897 = vld [vmem:[%s7 + $0x688] sm:$0xff]
        %v5898 = vld [vmem:[%s7 + $0x690] sm:$0xff]
        %v5899 = vld [vmem:[%s7 + $0x698] sm:$0xff]
        %v5900 = vld [vmem:[%s7 + $0x6a0] sm:$0xff]
        %v5901 = vld [vmem:[%s7 + $0x6a8] sm:$0xff]
        %v5902 = vld [vmem:[%s7 + $0x6b0] sm:$0xff]
        %v5903 = vld [vmem:[%s7 + $0x6b8] sm:$0xff]
        %v5904 = vld [vmem:[%s7 + $0x6c0] sm:$0xff]
        %v5905 = vld [vmem:[%s7 + $0x6c8] sm:$0xff]
        %v5906 = vld [vmem:[%s7 + $0x6d0] sm:$0xff]
        %v5907 = vld [vmem:[%s7 + $0x6d8] sm:$0xff]
        %v5908 = vld [vmem:[%s7 + $0x6e0] sm:$0xff]
        %v5909 = vld [vmem:[%s7 + $0x6e8] sm:$0xff]
        %v5910 = vld [vmem:[%s7 + $0x6f0] sm:$0xff]
        %v5911 = vld [vmem:[%s7 + $0x6f8] sm:$0xff]
        %v5912 = vld [vmem:[%s7 + $0x700] sm:$0xff]
        %v5913 = vld [vmem:[%s7 + $0x708] sm:$0xff]
        %v5914 = vld [vmem:[%s7 + $0x710] sm:$0xff]
        %v5915 = vld [vmem:[%s7 + $0x718] sm:$0xff]
        %v5916 = vld [vmem:[%s7 + $0x720] sm:$0xff]
        %v5917 = vld [vmem:[%s7 + $0x728] sm:$0xff]
        %v5918 = vld [vmem:[%s7 + $0x730] sm:$0xff]
        %v5919 = vld [vmem:[%s7 + $0x738] sm:$0xff]
        %v5920 = vld [vmem:[%s7 + $0x740] sm:$0xff]
        %v5921 = vld [vmem:[%s7 + $0x748] sm:$0xff]
        %v5922 = vld [vmem:[%s7 + $0x750] sm:$0xff]
        %v5923 = vld [vmem:[%s7 + $0x758] sm:$0xff]
        %v5924 = vld [vmem:[%s7 + $0x760] sm:$0xff]
        %v5925 = vld [vmem:[%s7 + $0x768] sm:$0xff]
        %v5926 = vld [vmem:[%s7 + $0x770] sm:$0xff]
        %v5927 = vld [vmem:[%s7 + $0x778] sm:$0xff]
        %v5928 = vld [vmem:[%s7 + $0x780] sm:$0xff]
        %v5929 = vld [vmem:[%s7 + $0x788] sm:$0xff]
        %v5930 = vld [vmem:[%s7 + $0x790] sm:$0xff]
        %v5931 = vld [vmem:[%s7 + $0x798] sm:$0xff]
        %v5932 = vld [vmem:[%s7 + $0x7a0] sm:$0xff]
        %v5933 = vld [vmem:[%s7 + $0x7a8] sm:$0xff]
        %v5934 = vld [vmem:[%s7 + $0x7b0] sm:$0xff]
        %v5935 = vld [vmem:[%s7 + $0x7b8] sm:$0xff]
        %v5936 = vld [vmem:[%s7 + $0x7c0] sm:$0xff]
        %v5937 = vld [vmem:[%s7 + $0x7c8] sm:$0xff]
        %v5938 = vld [vmem:[%s7 + $0x7d0] sm:$0xff]
        %v5939 = vld [vmem:[%s7 + $0x7d8] sm:$0xff]
        %v5940 = vld [vmem:[%s7 + $0x7e0] sm:$0xff]
        %v5941 = vld [vmem:[%s7 + $0x7e8] sm:$0xff]
        %v5942 = vld [vmem:[%s7 + $0x7f0] sm:$0xff]
        %v5943 = vld [vmem:[%s7 + $0x7f8] sm:$0xff]
        %v5944 = vld [vmem:[%s8] sm:$0x3]
        %v6201 = vunpack.c.l.b16 %v5688
        %v6202 = vunpack.c.h.b16 %v5688
        %v6203 = vunpack.c.l.b16 %v5689
        %v6204 = vunpack.c.h.b16 %v5689
        %v6205 = vunpack.c.l.b16 %v5690
        %v6206 = vunpack.c.h.b16 %v5690
        %v6207 = vunpack.c.l.b16 %v5691
        %v6208 = vunpack.c.h.b16 %v5691
        %v6209 = vunpack.c.l.b16 %v5692
        %v6210 = vunpack.c.h.b16 %v5692
        %v6211 = vunpack.c.l.b16 %v5693
        %v6212 = vunpack.c.h.b16 %v5693
        %v6213 = vunpack.c.l.b16 %v5694
        %v6214 = vunpack.c.h.b16 %v5694
        %v6215 = vunpack.c.l.b16 %v5695
        %v6216 = vunpack.c.h.b16 %v5695
        %v6217 = vunpack.c.l.b16 %v5696
        %v6218 = vunpack.c.h.b16 %v5696
        %v6219 = vunpack.c.l.b16 %v5697
        %v6220 = vunpack.c.h.b16 %v5697
        %v6221 = vunpack.c.l.b16 %v5698
        %v6222 = vunpack.c.h.b16 %v5698
        %v6223 = vunpack.c.l.b16 %v5699
        %v6224 = vunpack.c.h.b16 %v5699
        %v6225 = vunpack.c.l.b16 %v5700
        %v6226 = vunpack.c.h.b16 %v5700
        %v6227 = vunpack.c.l.b16 %v5701
        %v6228 = vunpack.c.h.b16 %v5701
        %v6229 = vunpack.c.l.b16 %v5702
        %v6230 = vunpack.c.h.b16 %v5702
        %v6231 = vunpack.c.l.b16 %v5703
        %v6232 = vunpack.c.h.b16 %v5703
        %v6233 = vunpack.c.l.b16 %v5704
        %v6234 = vunpack.c.h.b16 %v5704
        %v6235 = vunpack.c.l.b16 %v5705
        %v6236 = vunpack.c.h.b16 %v5705
        %v6237 = vunpack.c.l.b16 %v5706
        %v6238 = vunpack.c.h.b16 %v5706
        %v6239 = vunpack.c.l.b16 %v5707
        %v6240 = vunpack.c.h.b16 %v5707
        %v6241 = vunpack.c.l.b16 %v5708
        %v6242 = vunpack.c.h.b16 %v5708
        %v6243 = vunpack.c.l.b16 %v5709
        %v6244 = vunpack.c.h.b16 %v5709
        %v6245 = vunpack.c.l.b16 %v5710
        %v6246 = vunpack.c.h.b16 %v5710
        %v6247 = vunpack.c.l.b16 %v5711
        %v6248 = vunpack.c.h.b16 %v5711
        %v6249 = vunpack.c.l.b16 %v5712
        %v6250 = vunpack.c.h.b16 %v5712
        %v6251 = vunpack.c.l.b16 %v5713
        %v6252 = vunpack.c.h.b16 %v5713
        %v6253 = vunpack.c.l.b16 %v5714
        %v6254 = vunpack.c.h.b16 %v5714
        %v6255 = vunpack.c.l.b16 %v5715
        %v6256 = vunpack.c.h.b16 %v5715
        %v6257 = vunpack.c.l.b16 %v5716
        %v6258 = vunpack.c.h.b16 %v5716
        %v6259 = vunpack.c.l.b16 %v5717
        %v6260 = vunpack.c.h.b16 %v5717
        %v6261 = vunpack.c.l.b16 %v5718
        %v6262 = vunpack.c.h.b16 %v5718
        %v6263 = vunpack.c.l.b16 %v5719
        %v6264 = vunpack.c.h.b16 %v5719
        %v6265 = vunpack.c.l.b16 %v5720
        %v6266 = vunpack.c.h.b16 %v5720
        %v6267 = vunpack.c.l.b16 %v5721
        %v6268 = vunpack.c.h.b16 %v5721
        %v6269 = vunpack.c.l.b16 %v5722
        %v6270 = vunpack.c.h.b16 %v5722
        %v6271 = vunpack.c.l.b16 %v5723
        %v6272 = vunpack.c.h.b16 %v5723
        %v6273 = vunpack.c.l.b16 %v5724
        %v6274 = vunpack.c.h.b16 %v5724
        %v6275 = vunpack.c.l.b16 %v5725
        %v6276 = vunpack.c.h.b16 %v5725
        %v6277 = vunpack.c.l.b16 %v5726
        %v6278 = vunpack.c.h.b16 %v5726
        %v6279 = vunpack.c.l.b16 %v5727
        %v6280 = vunpack.c.h.b16 %v5727
        %v6281 = vunpack.c.l.b16 %v5728
        %v6282 = vunpack.c.h.b16 %v5728
        %v6283 = vunpack.c.l.b16 %v5729
        %v6284 = vunpack.c.h.b16 %v5729
        %v6285 = vunpack.c.l.b16 %v5730
        %v6286 = vunpack.c.h.b16 %v5730
        %v6287 = vunpack.c.l.b16 %v5731
        %v6288 = vunpack.c.h.b16 %v5731
        %v6289 = vunpack.c.l.b16 %v5732
        %v6290 = vunpack.c.h.b16 %v5732
        %v6291 = vunpack.c.l.b16 %v5733
        %v6292 = vunpack.c.h.b16 %v5733
        %v6293 = vunpack.c.l.b16 %v5734
        %v6294 = vunpack.c.h.b16 %v5734
        %v6295 = vunpack.c.l.b16 %v5735
        %v6296 = vunpack.c.h.b16 %v5735
        %v6297 = vunpack.c.l.b16 %v5736
        %v6298 = vunpack.c.h.b16 %v5736
        %v6299 = vunpack.c.l.b16 %v5737
        %v6300 = vunpack.c.h.b16 %v5737
        %v6301 = vunpack.c.l.b16 %v5738
        %v6302 = vunpack.c.h.b16 %v5738
        %v6303 = vunpack.c.l.b16 %v5739
        %v6304 = vunpack.c.h.b16 %v5739
        %v6305 = vunpack.c.l.b16 %v5740
        %v6306 = vunpack.c.h.b16 %v5740
        %v6307 = vunpack.c.l.b16 %v5741
        %v6308 = vunpack.c.h.b16 %v5741
        %v6309 = vunpack.c.l.b16 %v5742
        %v6310 = vunpack.c.h.b16 %v5742
        %v6311 = vunpack.c.l.b16 %v5743
        %v6312 = vunpack.c.h.b16 %v5743
        %v6313 = vunpack.c.l.b16 %v5744
        %v6314 = vunpack.c.h.b16 %v5744
        %v6315 = vunpack.c.l.b16 %v5745
        %v6316 = vunpack.c.h.b16 %v5745
        %v6317 = vunpack.c.l.b16 %v5746
        %v6318 = vunpack.c.h.b16 %v5746
        %v6319 = vunpack.c.l.b16 %v5747
        %v6320 = vunpack.c.h.b16 %v5747
        %v6321 = vunpack.c.l.b16 %v5748
        %v6322 = vunpack.c.h.b16 %v5748
        %v6323 = vunpack.c.l.b16 %v5749
        %v6324 = vunpack.c.h.b16 %v5749
        %v6325 = vunpack.c.l.b16 %v5750
        %v6326 = vunpack.c.h.b16 %v5750
        %v6327 = vunpack.c.l.b16 %v5751
        %v6328 = vunpack.c.h.b16 %v5751
        %v6329 = vunpack.c.l.b16 %v5752
        %v6330 = vunpack.c.h.b16 %v5752
        %v6331 = vunpack.c.l.b16 %v5753
        %v6332 = vunpack.c.h.b16 %v5753
        %v6333 = vunpack.c.l.b16 %v5754
        %v6334 = vunpack.c.h.b16 %v5754
        %v6335 = vunpack.c.l.b16 %v5755
        %v6336 = vunpack.c.h.b16 %v5755
        %v6337 = vunpack.c.l.b16 %v5756
        %v6338 = vunpack.c.h.b16 %v5756
        %v6339 = vunpack.c.l.b16 %v5757
        %v6340 = vunpack.c.h.b16 %v5757
        %v6341 = vunpack.c.l.b16 %v5758
        %v6342 = vunpack.c.h.b16 %v5758
        %v6343 = vunpack.c.l.b16 %v5759
        %v6344 = vunpack.c.h.b16 %v5759
        %v6345 = vunpack.c.l.b16 %v5760
        %v6346 = vunpack.c.h.b16 %v5760
        %v6347 = vunpack.c.l.b16 %v5761
        %v6348 = vunpack.c.h.b16 %v5761
        %v6349 = vunpack.c.l.b16 %v5762
        %v6350 = vunpack.c.h.b16 %v5762
        %v6351 = vunpack.c.l.b16 %v5763
        %v6352 = vunpack.c.h.b16 %v5763
        %v6353 = vunpack.c.l.b16 %v5764
        %v6354 = vunpack.c.h.b16 %v5764
        %v6355 = vunpack.c.l.b16 %v5765
        %v6356 = vunpack.c.h.b16 %v5765
        %v6357 = vunpack.c.l.b16 %v5766
        %v6358 = vunpack.c.h.b16 %v5766
        %v6359 = vunpack.c.l.b16 %v5767
        %v6360 = vunpack.c.h.b16 %v5767
        %v6361 = vunpack.c.l.b16 %v5768
        %v6362 = vunpack.c.h.b16 %v5768
        %v6363 = vunpack.c.l.b16 %v5769
        %v6364 = vunpack.c.h.b16 %v5769
        %v6365 = vunpack.c.l.b16 %v5770
        %v6366 = vunpack.c.h.b16 %v5770
        %v6367 = vunpack.c.l.b16 %v5771
        %v6368 = vunpack.c.h.b16 %v5771
        %v6369 = vunpack.c.l.b16 %v5772
        %v6370 = vunpack.c.h.b16 %v5772
        %v6371 = vunpack.c.l.b16 %v5773
        %v6372 = vunpack.c.h.b16 %v5773
        %v6373 = vunpack.c.l.b16 %v5774
        %v6374 = vunpack.c.h.b16 %v5774
        %v6375 = vunpack.c.l.b16 %v5775
        %v6376 = vunpack.c.h.b16 %v5775
        %v6377 = vunpack.c.l.b16 %v5776
        %v6378 = vunpack.c.h.b16 %v5776
        %v6379 = vunpack.c.l.b16 %v5777
        %v6380 = vunpack.c.h.b16 %v5777
        %v6381 = vunpack.c.l.b16 %v5778
        %v6382 = vunpack.c.h.b16 %v5778
        %v6383 = vunpack.c.l.b16 %v5779
        %v6384 = vunpack.c.h.b16 %v5779
        %v6385 = vunpack.c.l.b16 %v5780
        %v6386 = vunpack.c.h.b16 %v5780
        %v6387 = vunpack.c.l.b16 %v5781
        %v6388 = vunpack.c.h.b16 %v5781
        %v6389 = vunpack.c.l.b16 %v5782
        %v6390 = vunpack.c.h.b16 %v5782
        %v6391 = vunpack.c.l.b16 %v5783
        %v6392 = vunpack.c.h.b16 %v5783
        %v6393 = vunpack.c.l.b16 %v5784
        %v6394 = vunpack.c.h.b16 %v5784
        %v6395 = vunpack.c.l.b16 %v5785
        %v6396 = vunpack.c.h.b16 %v5785
        %v6397 = vunpack.c.l.b16 %v5786
        %v6398 = vunpack.c.h.b16 %v5786
        %v6399 = vunpack.c.l.b16 %v5787
        %v6400 = vunpack.c.h.b16 %v5787
        %v6401 = vunpack.c.l.b16 %v5788
        %v6402 = vunpack.c.h.b16 %v5788
        %v6403 = vunpack.c.l.b16 %v5789
        %v6404 = vunpack.c.h.b16 %v5789
        %v6405 = vunpack.c.l.b16 %v5790
        %v6406 = vunpack.c.h.b16 %v5790
        %v6407 = vunpack.c.l.b16 %v5791
        %v6408 = vunpack.c.h.b16 %v5791
        %v6409 = vunpack.c.l.b16 %v5792
        %v6410 = vunpack.c.h.b16 %v5792
        %v6411 = vunpack.c.l.b16 %v5793
        %v6412 = vunpack.c.h.b16 %v5793
        %v6413 = vunpack.c.l.b16 %v5794
        %v6414 = vunpack.c.h.b16 %v5794
        %v6415 = vunpack.c.l.b16 %v5795
        %v6416 = vunpack.c.h.b16 %v5795
        %v6417 = vunpack.c.l.b16 %v5796
        %v6418 = vunpack.c.h.b16 %v5796
        %v6419 = vunpack.c.l.b16 %v5797
        %v6420 = vunpack.c.h.b16 %v5797
        %v6421 = vunpack.c.l.b16 %v5798
        %v6422 = vunpack.c.h.b16 %v5798
        %v6423 = vunpack.c.l.b16 %v5799
        %v6424 = vunpack.c.h.b16 %v5799
        %v6425 = vunpack.c.l.b16 %v5800
        %v6426 = vunpack.c.h.b16 %v5800
        %v6427 = vunpack.c.l.b16 %v5801
        %v6428 = vunpack.c.h.b16 %v5801
        %v6429 = vunpack.c.l.b16 %v5802
        %v6430 = vunpack.c.h.b16 %v5802
        %v6431 = vunpack.c.l.b16 %v5803
        %v6432 = vunpack.c.h.b16 %v5803
        %v6433 = vunpack.c.l.b16 %v5804
        %v6434 = vunpack.c.h.b16 %v5804
        %v6435 = vunpack.c.l.b16 %v5805
        %v6436 = vunpack.c.h.b16 %v5805
        %v6437 = vunpack.c.l.b16 %v5806
        %v6438 = vunpack.c.h.b16 %v5806
        %v6439 = vunpack.c.l.b16 %v5807
        %v6440 = vunpack.c.h.b16 %v5807
        %v6441 = vunpack.c.l.b16 %v5808
        %v6442 = vunpack.c.h.b16 %v5808
        %v6443 = vunpack.c.l.b16 %v5809
        %v6444 = vunpack.c.h.b16 %v5809
        %v6445 = vunpack.c.l.b16 %v5810
        %v6446 = vunpack.c.h.b16 %v5810
        %v6447 = vunpack.c.l.b16 %v5811
        %v6448 = vunpack.c.h.b16 %v5811
        %v6449 = vunpack.c.l.b16 %v5812
        %v6450 = vunpack.c.h.b16 %v5812
        %v6451 = vunpack.c.l.b16 %v5813
        %v6452 = vunpack.c.h.b16 %v5813
        %v6453 = vunpack.c.l.b16 %v5814
        %v6454 = vunpack.c.h.b16 %v5814
        %v6455 = vunpack.c.l.b16 %v5815
        %v6456 = vunpack.c.h.b16 %v5815
        %v6457 = vunpack.c.l.b16 %v5816
        %v6458 = vunpack.c.h.b16 %v5816
        %v6459 = vunpack.c.l.b16 %v5817
        %v6460 = vunpack.c.h.b16 %v5817
        %v6461 = vunpack.c.l.b16 %v5818
        %v6462 = vunpack.c.h.b16 %v5818
        %v6463 = vunpack.c.l.b16 %v5819
        %v6464 = vunpack.c.h.b16 %v5819
        %v6465 = vunpack.c.l.b16 %v5820
        %v6466 = vunpack.c.h.b16 %v5820
        %v6467 = vunpack.c.l.b16 %v5821
        %v6468 = vunpack.c.h.b16 %v5821
        %v6469 = vunpack.c.l.b16 %v5822
        %v6470 = vunpack.c.h.b16 %v5822
        %v6471 = vunpack.c.l.b16 %v5823
        %v6472 = vunpack.c.h.b16 %v5823
        %v6473 = vunpack.c.l.b16 %v5824
        %v6474 = vunpack.c.h.b16 %v5824
        %v6475 = vunpack.c.l.b16 %v5825
        %v6476 = vunpack.c.h.b16 %v5825
        %v6477 = vunpack.c.l.b16 %v5826
        %v6478 = vunpack.c.h.b16 %v5826
        %v6479 = vunpack.c.l.b16 %v5827
        %v6480 = vunpack.c.h.b16 %v5827
        %v6481 = vunpack.c.l.b16 %v5828
        %v6482 = vunpack.c.h.b16 %v5828
        %v6483 = vunpack.c.l.b16 %v5829
        %v6484 = vunpack.c.h.b16 %v5829
        %v6485 = vunpack.c.l.b16 %v5830
        %v6486 = vunpack.c.h.b16 %v5830
        %v6487 = vunpack.c.l.b16 %v5831
        %v6488 = vunpack.c.h.b16 %v5831
        %v6489 = vunpack.c.l.b16 %v5832
        %v6490 = vunpack.c.h.b16 %v5832
        %v6491 = vunpack.c.l.b16 %v5833
        %v6492 = vunpack.c.h.b16 %v5833
        %v6493 = vunpack.c.l.b16 %v5834
        %v6494 = vunpack.c.h.b16 %v5834
        %v6495 = vunpack.c.l.b16 %v5835
        %v6496 = vunpack.c.h.b16 %v5835
        %v6497 = vunpack.c.l.b16 %v5836
        %v6498 = vunpack.c.h.b16 %v5836
        %v6499 = vunpack.c.l.b16 %v5837
        %v6500 = vunpack.c.h.b16 %v5837
        %v6501 = vunpack.c.l.b16 %v5838
        %v6502 = vunpack.c.h.b16 %v5838
        %v6503 = vunpack.c.l.b16 %v5839
        %v6504 = vunpack.c.h.b16 %v5839
        %v6505 = vunpack.c.l.b16 %v5840
        %v6506 = vunpack.c.h.b16 %v5840
        %v6507 = vunpack.c.l.b16 %v5841
        %v6508 = vunpack.c.h.b16 %v5841
        %v6509 = vunpack.c.l.b16 %v5842
        %v6510 = vunpack.c.h.b16 %v5842
        %v6511 = vunpack.c.l.b16 %v5843
        %v6512 = vunpack.c.h.b16 %v5843
        %v6513 = vunpack.c.l.b16 %v5844
        %v6514 = vunpack.c.h.b16 %v5844
        %v6515 = vunpack.c.l.b16 %v5845
        %v6516 = vunpack.c.h.b16 %v5845
        %v6517 = vunpack.c.l.b16 %v5846
        %v6518 = vunpack.c.h.b16 %v5846
        %v6519 = vunpack.c.l.b16 %v5847
        %v6520 = vunpack.c.h.b16 %v5847
        %v6521 = vunpack.c.l.b16 %v5848
        %v6522 = vunpack.c.h.b16 %v5848
        %v6523 = vunpack.c.l.b16 %v5849
        %v6524 = vunpack.c.h.b16 %v5849
        %v6525 = vunpack.c.l.b16 %v5850
        %v6526 = vunpack.c.h.b16 %v5850
        %v6527 = vunpack.c.l.b16 %v5851
        %v6528 = vunpack.c.h.b16 %v5851
        %v6529 = vunpack.c.l.b16 %v5852
        %v6530 = vunpack.c.h.b16 %v5852
        %v6531 = vunpack.c.l.b16 %v5853
        %v6532 = vunpack.c.h.b16 %v5853
        %v6533 = vunpack.c.l.b16 %v5854
        %v6534 = vunpack.c.h.b16 %v5854
        %v6535 = vunpack.c.l.b16 %v5855
        %v6536 = vunpack.c.h.b16 %v5855
        %v6537 = vunpack.c.l.b16 %v5856
        %v6538 = vunpack.c.h.b16 %v5856
        %v6539 = vunpack.c.l.b16 %v5857
        %v6540 = vunpack.c.h.b16 %v5857
        %v6541 = vunpack.c.l.b16 %v5858
        %v6542 = vunpack.c.h.b16 %v5858
        %v6543 = vunpack.c.l.b16 %v5859
        %v6544 = vunpack.c.h.b16 %v5859
        %v6545 = vunpack.c.l.b16 %v5860
        %v6546 = vunpack.c.h.b16 %v5860
        %v6547 = vunpack.c.l.b16 %v5861
        %v6548 = vunpack.c.h.b16 %v5861
        %v6549 = vunpack.c.l.b16 %v5862
        %v6550 = vunpack.c.h.b16 %v5862
        %v6551 = vunpack.c.l.b16 %v5863
        %v6552 = vunpack.c.h.b16 %v5863
        %v6553 = vunpack.c.l.b16 %v5864
        %v6554 = vunpack.c.h.b16 %v5864
        %v6555 = vunpack.c.l.b16 %v5865
        %v6556 = vunpack.c.h.b16 %v5865
        %v6557 = vunpack.c.l.b16 %v5866
        %v6558 = vunpack.c.h.b16 %v5866
        %v6559 = vunpack.c.l.b16 %v5867
        %v6560 = vunpack.c.h.b16 %v5867
        %v6561 = vunpack.c.l.b16 %v5868
        %v6562 = vunpack.c.h.b16 %v5868
        %v6563 = vunpack.c.l.b16 %v5869
        %v6564 = vunpack.c.h.b16 %v5869
        %v6565 = vunpack.c.l.b16 %v5870
        %v6566 = vunpack.c.h.b16 %v5870
        %v6567 = vunpack.c.l.b16 %v5871
        %v6568 = vunpack.c.h.b16 %v5871
        %v6569 = vunpack.c.l.b16 %v5872
        %v6570 = vunpack.c.h.b16 %v5872
        %v6571 = vunpack.c.l.b16 %v5873
        %v6572 = vunpack.c.h.b16 %v5873
        %v6573 = vunpack.c.l.b16 %v5874
        %v6574 = vunpack.c.h.b16 %v5874
        %v6575 = vunpack.c.l.b16 %v5875
        %v6576 = vunpack.c.h.b16 %v5875
        %v6577 = vunpack.c.l.b16 %v5876
        %v6578 = vunpack.c.h.b16 %v5876
        %v6579 = vunpack.c.l.b16 %v5877
        %v6580 = vunpack.c.h.b16 %v5877
        %v6581 = vunpack.c.l.b16 %v5878
        %v6582 = vunpack.c.h.b16 %v5878
        %v6583 = vunpack.c.l.b16 %v5879
        %v6584 = vunpack.c.h.b16 %v5879
        %v6585 = vunpack.c.l.b16 %v5880
        %v6586 = vunpack.c.h.b16 %v5880
        %v6587 = vunpack.c.l.b16 %v5881
        %v6588 = vunpack.c.h.b16 %v5881
        %v6589 = vunpack.c.l.b16 %v5882
        %v6590 = vunpack.c.h.b16 %v5882
        %v6591 = vunpack.c.l.b16 %v5883
        %v6592 = vunpack.c.h.b16 %v5883
        %v6593 = vunpack.c.l.b16 %v5884
        %v6594 = vunpack.c.h.b16 %v5884
        %v6595 = vunpack.c.l.b16 %v5885
        %v6596 = vunpack.c.h.b16 %v5885
        %v6597 = vunpack.c.l.b16 %v5886
        %v6598 = vunpack.c.h.b16 %v5886
        %v6599 = vunpack.c.l.b16 %v5887
        %v6600 = vunpack.c.h.b16 %v5887
        %v6601 = vunpack.c.l.b16 %v5888
        %v6602 = vunpack.c.h.b16 %v5888
        %v6603 = vunpack.c.l.b16 %v5889
        %v6604 = vunpack.c.h.b16 %v5889
        %v6605 = vunpack.c.l.b16 %v5890
        %v6606 = vunpack.c.h.b16 %v5890
        %v6607 = vunpack.c.l.b16 %v5891
        %v6608 = vunpack.c.h.b16 %v5891
        %v6609 = vunpack.c.l.b16 %v5892
        %v6610 = vunpack.c.h.b16 %v5892
        %v6611 = vunpack.c.l.b16 %v5893
        %v6612 = vunpack.c.h.b16 %v5893
        %v6613 = vunpack.c.l.b16 %v5894
        %v6614 = vunpack.c.h.b16 %v5894
        %v6615 = vunpack.c.l.b16 %v5895
        %v6616 = vunpack.c.h.b16 %v5895
        %v6617 = vunpack.c.l.b16 %v5896
        %v6618 = vunpack.c.h.b16 %v5896
        %v6619 = vunpack.c.l.b16 %v5897
        %v6620 = vunpack.c.h.b16 %v5897
        %v6621 = vunpack.c.l.b16 %v5898
        %v6622 = vunpack.c.h.b16 %v5898
        %v6623 = vunpack.c.l.b16 %v5899
        %v6624 = vunpack.c.h.b16 %v5899
        %v6625 = vunpack.c.l.b16 %v5900
        %v6626 = vunpack.c.h.b16 %v5900
        %v6627 = vunpack.c.l.b16 %v5901
        %v6628 = vunpack.c.h.b16 %v5901
        %v6629 = vunpack.c.l.b16 %v5902
        %v6630 = vunpack.c.h.b16 %v5902
        %v6631 = vunpack.c.l.b16 %v5903
        %v6632 = vunpack.c.h.b16 %v5903
        %v6633 = vunpack.c.l.b16 %v5904
        %v6634 = vunpack.c.h.b16 %v5904
        %v6635 = vunpack.c.l.b16 %v5905
        %v6636 = vunpack.c.h.b16 %v5905
        %v6637 = vunpack.c.l.b16 %v5906
        %v6638 = vunpack.c.h.b16 %v5906
        %v6639 = vunpack.c.l.b16 %v5907
        %v6640 = vunpack.c.h.b16 %v5907
        %v6641 = vunpack.c.l.b16 %v5908
        %v6642 = vunpack.c.h.b16 %v5908
        %v6643 = vunpack.c.l.b16 %v5909
        %v6644 = vunpack.c.h.b16 %v5909
        %v6645 = vunpack.c.l.b16 %v5910
        %v6646 = vunpack.c.h.b16 %v5910
        %v6647 = vunpack.c.l.b16 %v5911
        %v6648 = vunpack.c.h.b16 %v5911
        %v6649 = vunpack.c.l.b16 %v5912
        %v6650 = vunpack.c.h.b16 %v5912
        %v6651 = vunpack.c.l.b16 %v5913
        %v6652 = vunpack.c.h.b16 %v5913
        %v6653 = vunpack.c.l.b16 %v5914
        %v6654 = vunpack.c.h.b16 %v5914
        %v6655 = vunpack.c.l.b16 %v5915
        %v6656 = vunpack.c.h.b16 %v5915
        %v6657 = vunpack.c.l.b16 %v5916
        %v6658 = vunpack.c.h.b16 %v5916
        %v6659 = vunpack.c.l.b16 %v5917
        %v6660 = vunpack.c.h.b16 %v5917
        %v6661 = vunpack.c.l.b16 %v5918
        %v6662 = vunpack.c.h.b16 %v5918
        %v6663 = vunpack.c.l.b16 %v5919
        %v6664 = vunpack.c.h.b16 %v5919
        %v6665 = vunpack.c.l.b16 %v5920
        %v6666 = vunpack.c.h.b16 %v5920
        %v6667 = vunpack.c.l.b16 %v5921
        %v6668 = vunpack.c.h.b16 %v5921
        %v6669 = vunpack.c.l.b16 %v5922
        %v6670 = vunpack.c.h.b16 %v5922
        %v6671 = vunpack.c.l.b16 %v5923
        %v6672 = vunpack.c.h.b16 %v5923
        %v6673 = vunpack.c.l.b16 %v5924
        %v6674 = vunpack.c.h.b16 %v5924
        %v6675 = vunpack.c.l.b16 %v5925
        %v6676 = vunpack.c.h.b16 %v5925
        %v6677 = vunpack.c.l.b16 %v5926
        %v6678 = vunpack.c.h.b16 %v5926
        %v6679 = vunpack.c.l.b16 %v5927
        %v6680 = vunpack.c.h.b16 %v5927
        %v6681 = vunpack.c.l.b16 %v5928
        %v6682 = vunpack.c.h.b16 %v5928
        %v6683 = vunpack.c.l.b16 %v5929
        %v6684 = vunpack.c.h.b16 %v5929
        %v6685 = vunpack.c.l.b16 %v5930
        %v6686 = vunpack.c.h.b16 %v5930
        %v6687 = vunpack.c.l.b16 %v5931
        %v6688 = vunpack.c.h.b16 %v5931
        %v6689 = vunpack.c.l.b16 %v5932
        %v6690 = vunpack.c.h.b16 %v5932
        %v6691 = vunpack.c.l.b16 %v5933
        %v6692 = vunpack.c.h.b16 %v5933
        %v6693 = vunpack.c.l.b16 %v5934
        %v6694 = vunpack.c.h.b16 %v5934
        %v6695 = vunpack.c.l.b16 %v5935
        %v6696 = vunpack.c.h.b16 %v5935
        %v6697 = vunpack.c.l.b16 %v5936
        %v6698 = vunpack.c.h.b16 %v5936
        %v6699 = vunpack.c.l.b16 %v5937
        %v6700 = vunpack.c.h.b16 %v5937
        %v6701 = vunpack.c.l.b16 %v5938
        %v6702 = vunpack.c.h.b16 %v5938
        %v6703 = vunpack.c.l.b16 %v5939
        %v6704 = vunpack.c.h.b16 %v5939
        %v6705 = vunpack.c.l.b16 %v5940
        %v6706 = vunpack.c.h.b16 %v5940
        %v6707 = vunpack.c.l.b16 %v5941
        %v6708 = vunpack.c.h.b16 %v5941
        %v6709 = vunpack.c.l.b16 %v5942
        %v6710 = vunpack.c.h.b16 %v5942
        %v6711 = vunpack.c.l.b16 %v5943
        %v6712 = vunpack.c.h.b16 %v5943
        %v6713 = vpack.c.b16 %v6203, %v6201
        %v6714 = vpack.c.b16 %v6204, %v6202
        %v6715 = vpack.c.b16 %v6207, %v6205
        %v6716 = vpack.c.b16 %v6208, %v6206
        %v6717 = vpack.c.b16 %v6211, %v6209
        %v6718 = vpack.c.b16 %v6212, %v6210
        %v6719 = vpack.c.b16 %v6215, %v6213
        %v6720 = vpack.c.b16 %v6216, %v6214
        %v6721 = vpack.c.b16 %v6219, %v6217
        %v6722 = vpack.c.b16 %v6220, %v6218
        %v6723 = vpack.c.b16 %v6223, %v6221
        %v6724 = vpack.c.b16 %v6224, %v6222
        %v6725 = vpack.c.b16 %v6227, %v6225
        %v6726 = vpack.c.b16 %v6228, %v6226
        %v6727 = vpack.c.b16 %v6231, %v6229
        %v6728 = vpack.c.b16 %v6232, %v6230
        %v6729 = vpack.c.b16 %v6235, %v6233
        %v6730 = vpack.c.b16 %v6236, %v6234
        %v6731 = vpack.c.b16 %v6239, %v6237
        %v6732 = vpack.c.b16 %v6240, %v6238
        %v6733 = vpack.c.b16 %v6243, %v6241
        %v6734 = vpack.c.b16 %v6244, %v6242
        %v6735 = vpack.c.b16 %v6247, %v6245
        %v6736 = vpack.c.b16 %v6248, %v6246
        %v6737 = vpack.c.b16 %v6251, %v6249
        %v6738 = vpack.c.b16 %v6252, %v6250
        %v6739 = vpack.c.b16 %v6255, %v6253
        %v6740 = vpack.c.b16 %v6256, %v6254
        %v6741 = vpack.c.b16 %v6259, %v6257
        %v6742 = vpack.c.b16 %v6260, %v6258
        %v6743 = vpack.c.b16 %v6263, %v6261
        %v6744 = vpack.c.b16 %v6264, %v6262
        %v6745 = vpack.c.b16 %v6267, %v6265
        %v6746 = vpack.c.b16 %v6268, %v6266
        %v6747 = vpack.c.b16 %v6271, %v6269
        %v6748 = vpack.c.b16 %v6272, %v6270
        %v6749 = vpack.c.b16 %v6275, %v6273
        %v6750 = vpack.c.b16 %v6276, %v6274
        %v6751 = vpack.c.b16 %v6279, %v6277
        %v6752 = vpack.c.b16 %v6280, %v6278
        %v6753 = vpack.c.b16 %v6283, %v6281
        %v6754 = vpack.c.b16 %v6284, %v6282
        %v6755 = vpack.c.b16 %v6287, %v6285
        %v6756 = vpack.c.b16 %v6288, %v6286
        %v6757 = vpack.c.b16 %v6291, %v6289
        %v6758 = vpack.c.b16 %v6292, %v6290
        %v6759 = vpack.c.b16 %v6295, %v6293
        %v6760 = vpack.c.b16 %v6296, %v6294
        %v6761 = vpack.c.b16 %v6299, %v6297
        %v6762 = vpack.c.b16 %v6300, %v6298
        %v6763 = vpack.c.b16 %v6303, %v6301
        %v6764 = vpack.c.b16 %v6304, %v6302
        %v6765 = vpack.c.b16 %v6307, %v6305
        %v6766 = vpack.c.b16 %v6308, %v6306
        %v6767 = vpack.c.b16 %v6311, %v6309
        %v6768 = vpack.c.b16 %v6312, %v6310
        %v6769 = vpack.c.b16 %v6315, %v6313
        %v6770 = vpack.c.b16 %v6316, %v6314
        %v6771 = vpack.c.b16 %v6319, %v6317
        %v6772 = vpack.c.b16 %v6320, %v6318
        %v6773 = vpack.c.b16 %v6323, %v6321
        %v6774 = vpack.c.b16 %v6324, %v6322
        %v6775 = vpack.c.b16 %v6327, %v6325
        %v6776 = vpack.c.b16 %v6328, %v6326
        %v6777 = vpack.c.b16 %v6331, %v6329
        %v6778 = vpack.c.b16 %v6332, %v6330
        %v6779 = vpack.c.b16 %v6335, %v6333
        %v6780 = vpack.c.b16 %v6336, %v6334
        %v6781 = vpack.c.b16 %v6339, %v6337
        %v6782 = vpack.c.b16 %v6340, %v6338
        %v6783 = vpack.c.b16 %v6343, %v6341
        %v6784 = vpack.c.b16 %v6344, %v6342
        %v6785 = vpack.c.b16 %v6347, %v6345
        %v6786 = vpack.c.b16 %v6348, %v6346
        %v6787 = vpack.c.b16 %v6351, %v6349
        %v6788 = vpack.c.b16 %v6352, %v6350
        %v6789 = vpack.c.b16 %v6355, %v6353
        %v6790 = vpack.c.b16 %v6356, %v6354
        %v6791 = vpack.c.b16 %v6359, %v6357
        %v6792 = vpack.c.b16 %v6360, %v6358
        %v6793 = vpack.c.b16 %v6363, %v6361
        %v6794 = vpack.c.b16 %v6364, %v6362
        %v6795 = vpack.c.b16 %v6367, %v6365
        %v6796 = vpack.c.b16 %v6368, %v6366
        %v6797 = vpack.c.b16 %v6371, %v6369
        %v6798 = vpack.c.b16 %v6372, %v6370
        %v6799 = vpack.c.b16 %v6375, %v6373
        %v6800 = vpack.c.b16 %v6376, %v6374
        %v6801 = vpack.c.b16 %v6379, %v6377
        %v6802 = vpack.c.b16 %v6380, %v6378
        %v6803 = vpack.c.b16 %v6383, %v6381
        %v6804 = vpack.c.b16 %v6384, %v6382
        %v6805 = vpack.c.b16 %v6387, %v6385
        %v6806 = vpack.c.b16 %v6388, %v6386
        %v6807 = vpack.c.b16 %v6391, %v6389
        %v6808 = vpack.c.b16 %v6392, %v6390
        %v6809 = vpack.c.b16 %v6395, %v6393
        %v6810 = vpack.c.b16 %v6396, %v6394
        %v6811 = vpack.c.b16 %v6399, %v6397
        %v6812 = vpack.c.b16 %v6400, %v6398
        %v6813 = vpack.c.b16 %v6403, %v6401
        %v6814 = vpack.c.b16 %v6404, %v6402
        %v6815 = vpack.c.b16 %v6407, %v6405
        %v6816 = vpack.c.b16 %v6408, %v6406
        %v6817 = vpack.c.b16 %v6411, %v6409
        %v6818 = vpack.c.b16 %v6412, %v6410
        %v6819 = vpack.c.b16 %v6415, %v6413
        %v6820 = vpack.c.b16 %v6416, %v6414
        %v6821 = vpack.c.b16 %v6419, %v6417
        %v6822 = vpack.c.b16 %v6420, %v6418
        %v6823 = vpack.c.b16 %v6423, %v6421
        %v6824 = vpack.c.b16 %v6424, %v6422
        %v6825 = vpack.c.b16 %v6427, %v6425
        %v6826 = vpack.c.b16 %v6428, %v6426
        %v6827 = vpack.c.b16 %v6431, %v6429
        %v6828 = vpack.c.b16 %v6432, %v6430
        %v6829 = vpack.c.b16 %v6435, %v6433
        %v6830 = vpack.c.b16 %v6436, %v6434
        %v6831 = vpack.c.b16 %v6439, %v6437
        %v6832 = vpack.c.b16 %v6440, %v6438
        %v6833 = vpack.c.b16 %v6443, %v6441
        %v6834 = vpack.c.b16 %v6444, %v6442
        %v6835 = vpack.c.b16 %v6447, %v6445
        %v6836 = vpack.c.b16 %v6448, %v6446
        %v6837 = vpack.c.b16 %v6451, %v6449
        %v6838 = vpack.c.b16 %v6452, %v6450
        %v6839 = vpack.c.b16 %v6455, %v6453
        %v6840 = vpack.c.b16 %v6456, %v6454
        %v6841 = vpack.c.b16 %v6459, %v6457
        %v6842 = vpack.c.b16 %v6460, %v6458
        %v6843 = vpack.c.b16 %v6463, %v6461
        %v6844 = vpack.c.b16 %v6464, %v6462
        %v6845 = vpack.c.b16 %v6467, %v6465
        %v6846 = vpack.c.b16 %v6468, %v6466
        %v6847 = vpack.c.b16 %v6471, %v6469
        %v6848 = vpack.c.b16 %v6472, %v6470
        %v6849 = vpack.c.b16 %v6475, %v6473
        %v6850 = vpack.c.b16 %v6476, %v6474
        %v6851 = vpack.c.b16 %v6479, %v6477
        %v6852 = vpack.c.b16 %v6480, %v6478
        %v6853 = vpack.c.b16 %v6483, %v6481
        %v6854 = vpack.c.b16 %v6484, %v6482
        %v6855 = vpack.c.b16 %v6487, %v6485
        %v6856 = vpack.c.b16 %v6488, %v6486
        %v6857 = vpack.c.b16 %v6491, %v6489
        %v6858 = vpack.c.b16 %v6492, %v6490
        %v6859 = vpack.c.b16 %v6495, %v6493
        %v6860 = vpack.c.b16 %v6496, %v6494
        %v6861 = vpack.c.b16 %v6499, %v6497
        %v6862 = vpack.c.b16 %v6500, %v6498
        %v6863 = vpack.c.b16 %v6503, %v6501
        %v6864 = vpack.c.b16 %v6504, %v6502
        %v6865 = vpack.c.b16 %v6507, %v6505
        %v6866 = vpack.c.b16 %v6508, %v6506
        %v6867 = vpack.c.b16 %v6511, %v6509
        %v6868 = vpack.c.b16 %v6512, %v6510
        %v6869 = vpack.c.b16 %v6515, %v6513
        %v6870 = vpack.c.b16 %v6516, %v6514
        %v6871 = vpack.c.b16 %v6519, %v6517
        %v6872 = vpack.c.b16 %v6520, %v6518
        %v6873 = vpack.c.b16 %v6523, %v6521
        %v6874 = vpack.c.b16 %v6524, %v6522
        %v6875 = vpack.c.b16 %v6527, %v6525
        %v6876 = vpack.c.b16 %v6528, %v6526
        %v6877 = vpack.c.b16 %v6531, %v6529
        %v6878 = vpack.c.b16 %v6532, %v6530
        %v6879 = vpack.c.b16 %v6535, %v6533
        %v6880 = vpack.c.b16 %v6536, %v6534
        %v6881 = vpack.c.b16 %v6539, %v6537
        %v6882 = vpack.c.b16 %v6540, %v6538
        %v6883 = vpack.c.b16 %v6543, %v6541
        %v6884 = vpack.c.b16 %v6544, %v6542
        %v6885 = vpack.c.b16 %v6547, %v6545
        %v6886 = vpack.c.b16 %v6548, %v6546
        %v6887 = vpack.c.b16 %v6551, %v6549
        %v6888 = vpack.c.b16 %v6552, %v6550
        %v6889 = vpack.c.b16 %v6555, %v6553
        %v6890 = vpack.c.b16 %v6556, %v6554
        %v6891 = vpack.c.b16 %v6559, %v6557
        %v6892 = vpack.c.b16 %v6560, %v6558
        %v6893 = vpack.c.b16 %v6563, %v6561
        %v6894 = vpack.c.b16 %v6564, %v6562
        %v6895 = vpack.c.b16 %v6567, %v6565
        %v6896 = vpack.c.b16 %v6568, %v6566
        %v6897 = vpack.c.b16 %v6571, %v6569
        %v6898 = vpack.c.b16 %v6572, %v6570
        %v6899 = vpack.c.b16 %v6575, %v6573
        %v6900 = vpack.c.b16 %v6576, %v6574
        %v6901 = vpack.c.b16 %v6579, %v6577
        %v6902 = vpack.c.b16 %v6580, %v6578
        %v6903 = vpack.c.b16 %v6583, %v6581
        %v6904 = vpack.c.b16 %v6584, %v6582
        %v6905 = vpack.c.b16 %v6587, %v6585
        %v6906 = vpack.c.b16 %v6588, %v6586
        %v6907 = vpack.c.b16 %v6591, %v6589
        %v6908 = vpack.c.b16 %v6592, %v6590
        %v6909 = vpack.c.b16 %v6595, %v6593
        %v6910 = vpack.c.b16 %v6596, %v6594
        %v6911 = vpack.c.b16 %v6599, %v6597
        %v6912 = vpack.c.b16 %v6600, %v6598
        %v6913 = vpack.c.b16 %v6603, %v6601
        %v6914 = vpack.c.b16 %v6604, %v6602
        %v6915 = vpack.c.b16 %v6607, %v6605
        %v6916 = vpack.c.b16 %v6608, %v6606
        %v6917 = vpack.c.b16 %v6611, %v6609
        %v6918 = vpack.c.b16 %v6612, %v6610
        %v6919 = vpack.c.b16 %v6615, %v6613
        %v6920 = vpack.c.b16 %v6616, %v6614
        %v6921 = vpack.c.b16 %v6619, %v6617
        %v6922 = vpack.c.b16 %v6620, %v6618
        %v6923 = vpack.c.b16 %v6623, %v6621
        %v6924 = vpack.c.b16 %v6624, %v6622
        %v6925 = vpack.c.b16 %v6627, %v6625
        %v6926 = vpack.c.b16 %v6628, %v6626
        %v6927 = vpack.c.b16 %v6631, %v6629
        %v6928 = vpack.c.b16 %v6632, %v6630
        %v6929 = vpack.c.b16 %v6635, %v6633
        %v6930 = vpack.c.b16 %v6636, %v6634
        %v6931 = vpack.c.b16 %v6639, %v6637
        %v6932 = vpack.c.b16 %v6640, %v6638
        %v6933 = vpack.c.b16 %v6643, %v6641
        %v6934 = vpack.c.b16 %v6644, %v6642
        %v6935 = vpack.c.b16 %v6647, %v6645
        %v6936 = vpack.c.b16 %v6648, %v6646
        %v6937 = vpack.c.b16 %v6651, %v6649
        %v6938 = vpack.c.b16 %v6652, %v6650
        %v6939 = vpack.c.b16 %v6655, %v6653
        %v6940 = vpack.c.b16 %v6656, %v6654
        %v6941 = vpack.c.b16 %v6659, %v6657
        %v6942 = vpack.c.b16 %v6660, %v6658
        %v6943 = vpack.c.b16 %v6663, %v6661
        %v6944 = vpack.c.b16 %v6664, %v6662
        %v6945 = vpack.c.b16 %v6667, %v6665
        %v6946 = vpack.c.b16 %v6668, %v6666
        %v6947 = vpack.c.b16 %v6671, %v6669
        %v6948 = vpack.c.b16 %v6672, %v6670
        %v6949 = vpack.c.b16 %v6675, %v6673
        %v6950 = vpack.c.b16 %v6676, %v6674
        %v6951 = vpack.c.b16 %v6679, %v6677
        %v6952 = vpack.c.b16 %v6680, %v6678
        %v6953 = vpack.c.b16 %v6683, %v6681
        %v6954 = vpack.c.b16 %v6684, %v6682
        %v6955 = vpack.c.b16 %v6687, %v6685
        %v6956 = vpack.c.b16 %v6688, %v6686
        %v6957 = vpack.c.b16 %v6691, %v6689
        %v6958 = vpack.c.b16 %v6692, %v6690
        %v6959 = vpack.c.b16 %v6695, %v6693
        %v6960 = vpack.c.b16 %v6696, %v6694
        %v6961 = vpack.c.b16 %v6699, %v6697
        %v6962 = vpack.c.b16 %v6700, %v6698
        %v6963 = vpack.c.b16 %v6703, %v6701
        %v6964 = vpack.c.b16 %v6704, %v6702
        %v6965 = vpack.c.b16 %v6707, %v6705
        %v6966 = vpack.c.b16 %v6708, %v6706
        %v6967 = vpack.c.b16 %v6711, %v6709
        %v6968 = vpack.c.b16 %v6712, %v6710
        %v7226 = vperm.slane %v5944, 0
        %v7227 = vperm.slane %v5944, 1
        %7230 = vmatpush.bf16.msra.mxu0 %v6727
        %7231 = vmatpush.bf16.msra.mxu0 %v6725
        %7232 = vmatpush.bf16.msra.mxu0 %v6723
        %7233 = vmatpush.bf16.msra.mxu0 %v6721
        %7234 = vmatpush.bf16.msra.mxu0 %v6719
        %7235 = vmatpush.bf16.msra.mxu0 %v6717
        %7236 = vmatpush.bf16.msra.mxu0 %v6715
        %7237 = vmatpush.bf16.msra.mxu0 %v6713
        %7238 = vmatmul.bf16.gmra.mxu0 %v5672
        %v7239 = vpop.f32.mrf.mxu0
        %v7240 = vadd.f32 %v7226, %v7239
        %v7241 = vpop.f32.mrf.mxu0
        %7242 = vdwg.mxu0
        %7243 = vmatpush.bf16.msra.mxu0 %v6743
        %7244 = vmatpush.bf16.msra.mxu0 %v6741
        %7245 = vmatpush.bf16.msra.mxu0 %v6739
        %7246 = vmatpush.bf16.msra.mxu0 %v6737
        %7247 = vmatpush.bf16.msra.mxu0 %v6735
        %7248 = vmatpush.bf16.msra.mxu0 %v6733
        %7249 = vmatpush.bf16.msra.mxu0 %v6731
        %7250 = vmatpush.bf16.msra.mxu0 %v6729
        %7251 = vmatmul.bf16.gmra.mxu0 %v5673
        %v7252 = vpop.f32.mrf.mxu0
        %v7253 = vadd.f32 %v7240, %v7252
        %v7254 = vpop.f32.mrf.mxu0
        %7255 = vdwg.mxu0
        %7256 = vmatpush.bf16.msra.mxu0 %v6759
        %7257 = vmatpush.bf16.msra.mxu0 %v6757
        %7258 = vmatpush.bf16.msra.mxu0 %v6755
        %7259 = vmatpush.bf16.msra.mxu0 %v6753
        %7260 = vmatpush.bf16.msra.mxu0 %v6751
        %7261 = vmatpush.bf16.msra.mxu0 %v6749
        %7262 = vmatpush.bf16.msra.mxu0 %v6747
        %7263 = vmatpush.bf16.msra.mxu0 %v6745
        %7264 = vmatmul.bf16.gmra.mxu0 %v5674
        %v7265 = vpop.f32.mrf.mxu0
        %v7266 = vadd.f32 %v7253, %v7265
        %v7267 = vpop.f32.mrf.mxu0
        %7268 = vdwg.mxu0
        %7269 = vmatpush.bf16.msra.mxu0 %v6775
        %7270 = vmatpush.bf16.msra.mxu0 %v6773
        %7271 = vmatpush.bf16.msra.mxu0 %v6771
        %7272 = vmatpush.bf16.msra.mxu0 %v6769
        %7273 = vmatpush.bf16.msra.mxu0 %v6767
        %7274 = vmatpush.bf16.msra.mxu0 %v6765
        %7275 = vmatpush.bf16.msra.mxu0 %v6763
        %7276 = vmatpush.bf16.msra.mxu0 %v6761
        %7277 = vmatmul.bf16.gmra.mxu0 %v5675
        %v7278 = vpop.f32.mrf.mxu0
        %v7279 = vadd.f32 %v7266, %v7278
        %v7280 = vpop.f32.mrf.mxu0
        %7281 = vdwg.mxu0
        %7282 = vmatpush.bf16.msra.mxu0 %v6791
        %7283 = vmatpush.bf16.msra.mxu0 %v6789
        %7284 = vmatpush.bf16.msra.mxu0 %v6787
        %7285 = vmatpush.bf16.msra.mxu0 %v6785
        %7286 = vmatpush.bf16.msra.mxu0 %v6783
        %7287 = vmatpush.bf16.msra.mxu0 %v6781
        %7288 = vmatpush.bf16.msra.mxu0 %v6779
        %7289 = vmatpush.bf16.msra.mxu0 %v6777
        %7290 = vmatmul.bf16.gmra.mxu0 %v5676
        %v7291 = vpop.f32.mrf.mxu0
        %v7292 = vadd.f32 %v7279, %v7291
        %v7293 = vpop.f32.mrf.mxu0
        %7294 = vdwg.mxu0
        %7295 = vmatpush.bf16.msra.mxu0 %v6807
        %7296 = vmatpush.bf16.msra.mxu0 %v6805
        %7297 = vmatpush.bf16.msra.mxu0 %v6803
        %7298 = vmatpush.bf16.msra.mxu0 %v6801
        %7299 = vmatpush.bf16.msra.mxu0 %v6799
        %7300 = vmatpush.bf16.msra.mxu0 %v6797
        %7301 = vmatpush.bf16.msra.mxu0 %v6795
        %7302 = vmatpush.bf16.msra.mxu0 %v6793
        %7303 = vmatmul.bf16.gmra.mxu0 %v5677
        %v7304 = vpop.f32.mrf.mxu0
        %v7305 = vadd.f32 %v7292, %v7304
        %v7306 = vpop.f32.mrf.mxu0
        %7307 = vdwg.mxu0
        %7308 = vmatpush.bf16.msra.mxu0 %v6823
        %7309 = vmatpush.bf16.msra.mxu0 %v6821
        %7310 = vmatpush.bf16.msra.mxu0 %v6819
        %7311 = vmatpush.bf16.msra.mxu0 %v6817
        %7312 = vmatpush.bf16.msra.mxu0 %v6815
        %7313 = vmatpush.bf16.msra.mxu0 %v6813
        %7314 = vmatpush.bf16.msra.mxu0 %v6811
        %7315 = vmatpush.bf16.msra.mxu0 %v6809
        %7316 = vmatmul.bf16.gmra.mxu0 %v5678
        %v7317 = vpop.f32.mrf.mxu0
        %v7318 = vadd.f32 %v7305, %v7317
        %v7319 = vpop.f32.mrf.mxu0
        %7320 = vdwg.mxu0
        %7321 = vmatpush.bf16.msra.mxu0 %v6839
        %7322 = vmatpush.bf16.msra.mxu0 %v6837
        %7323 = vmatpush.bf16.msra.mxu0 %v6835
        %7324 = vmatpush.bf16.msra.mxu0 %v6833
        %7325 = vmatpush.bf16.msra.mxu0 %v6831
        %7326 = vmatpush.bf16.msra.mxu0 %v6829
        %7327 = vmatpush.bf16.msra.mxu0 %v6827
        %7328 = vmatpush.bf16.msra.mxu0 %v6825
        %7329 = vmatmul.bf16.gmra.mxu0 %v5679
        %v7330 = vpop.f32.mrf.mxu0
        %v7331 = vadd.f32 %v7318, %v7330
        %v7332 = vpop.f32.mrf.mxu0
        %7333 = vdwg.mxu0
        %7334 = vmatpush.bf16.msra.mxu0 %v6855
        %7335 = vmatpush.bf16.msra.mxu0 %v6853
        %7336 = vmatpush.bf16.msra.mxu0 %v6851
        %7337 = vmatpush.bf16.msra.mxu0 %v6849
        %7338 = vmatpush.bf16.msra.mxu0 %v6847
        %7339 = vmatpush.bf16.msra.mxu0 %v6845
        %7340 = vmatpush.bf16.msra.mxu0 %v6843
        %7341 = vmatpush.bf16.msra.mxu0 %v6841
        %7342 = vmatmul.bf16.gmra.mxu0 %v5680
        %v7343 = vpop.f32.mrf.mxu0
        %v7344 = vadd.f32 %v7331, %v7343
        %v7345 = vpop.f32.mrf.mxu0
        %7346 = vdwg.mxu0
        %7347 = vmatpush.bf16.msra.mxu0 %v6871
        %7348 = vmatpush.bf16.msra.mxu0 %v6869
        %7349 = vmatpush.bf16.msra.mxu0 %v6867
        %7350 = vmatpush.bf16.msra.mxu0 %v6865
        %7351 = vmatpush.bf16.msra.mxu0 %v6863
        %7352 = vmatpush.bf16.msra.mxu0 %v6861
        %7353 = vmatpush.bf16.msra.mxu0 %v6859
        %7354 = vmatpush.bf16.msra.mxu0 %v6857
        %7355 = vmatmul.bf16.gmra.mxu0 %v5681
        %v7356 = vpop.f32.mrf.mxu0
        %v7357 = vadd.f32 %v7344, %v7356
        %v7358 = vpop.f32.mrf.mxu0
        %7359 = vdwg.mxu0
        %7360 = vmatpush.bf16.msra.mxu0 %v6887
        %7361 = vmatpush.bf16.msra.mxu0 %v6885
        %7362 = vmatpush.bf16.msra.mxu0 %v6883
        %7363 = vmatpush.bf16.msra.mxu0 %v6881
        %7364 = vmatpush.bf16.msra.mxu0 %v6879
        %7365 = vmatpush.bf16.msra.mxu0 %v6877
        %7366 = vmatpush.bf16.msra.mxu0 %v6875
        %7367 = vmatpush.bf16.msra.mxu0 %v6873
        %7368 = vmatmul.bf16.gmra.mxu0 %v5682
        %v7369 = vpop.f32.mrf.mxu0
        %v7370 = vadd.f32 %v7357, %v7369
        %v7371 = vpop.f32.mrf.mxu0
        %7372 = vdwg.mxu0
        %7373 = vmatpush.bf16.msra.mxu0 %v6903
        %7374 = vmatpush.bf16.msra.mxu0 %v6901
        %7375 = vmatpush.bf16.msra.mxu0 %v6899
        %7376 = vmatpush.bf16.msra.mxu0 %v6897
        %7377 = vmatpush.bf16.msra.mxu0 %v6895
        %7378 = vmatpush.bf16.msra.mxu0 %v6893
        %7379 = vmatpush.bf16.msra.mxu0 %v6891
        %7380 = vmatpush.bf16.msra.mxu0 %v6889
        %7381 = vmatmul.bf16.gmra.mxu0 %v5683
        %v7382 = vpop.f32.mrf.mxu0
        %v7383 = vadd.f32 %v7370, %v7382
        %v7384 = vpop.f32.mrf.mxu0
        %7385 = vdwg.mxu0
        %7386 = vmatpush.bf16.msra.mxu0 %v6919
        %7387 = vmatpush.bf16.msra.mxu0 %v6917
        %7388 = vmatpush.bf16.msra.mxu0 %v6915
        %7389 = vmatpush.bf16.msra.mxu0 %v6913
        %7390 = vmatpush.bf16.msra.mxu0 %v6911
        %7391 = vmatpush.bf16.msra.mxu0 %v6909
        %7392 = vmatpush.bf16.msra.mxu0 %v6907
        %7393 = vmatpush.bf16.msra.mxu0 %v6905
        %7394 = vmatmul.bf16.gmra.mxu0 %v5684
        %v7395 = vpop.f32.mrf.mxu0
        %v7396 = vadd.f32 %v7383, %v7395
        %v7397 = vpop.f32.mrf.mxu0
        %7398 = vdwg.mxu0
        %7399 = vmatpush.bf16.msra.mxu0 %v6935
        %7400 = vmatpush.bf16.msra.mxu0 %v6933
        %7401 = vmatpush.bf16.msra.mxu0 %v6931
        %7402 = vmatpush.bf16.msra.mxu0 %v6929
        %7403 = vmatpush.bf16.msra.mxu0 %v6927
        %7404 = vmatpush.bf16.msra.mxu0 %v6925
        %7405 = vmatpush.bf16.msra.mxu0 %v6923
        %7406 = vmatpush.bf16.msra.mxu0 %v6921
        %7407 = vmatmul.bf16.gmra.mxu0 %v5685
        %v7408 = vpop.f32.mrf.mxu0
        %v7409 = vadd.f32 %v7396, %v7408
        %v7410 = vpop.f32.mrf.mxu0
        %7411 = vdwg.mxu0
        %7412 = vmatpush.bf16.msra.mxu0 %v6951
        %7413 = vmatpush.bf16.msra.mxu0 %v6949
        %7414 = vmatpush.bf16.msra.mxu0 %v6947
        %7415 = vmatpush.bf16.msra.mxu0 %v6945
        %7416 = vmatpush.bf16.msra.mxu0 %v6943
        %7417 = vmatpush.bf16.msra.mxu0 %v6941
        %7418 = vmatpush.bf16.msra.mxu0 %v6939
        %7419 = vmatpush.bf16.msra.mxu0 %v6937
        %7420 = vmatmul.bf16.gmra.mxu0 %v5686
        %v7421 = vpop.f32.mrf.mxu0
        %v7422 = vadd.f32 %v7409, %v7421
        %v7423 = vpop.f32.mrf.mxu0
        %7424 = vdwg.mxu0
        %7425 = vmatpush.bf16.msra.mxu0 %v6967
        %7426 = vmatpush.bf16.msra.mxu0 %v6965
        %7427 = vmatpush.bf16.msra.mxu0 %v6963
        %7428 = vmatpush.bf16.msra.mxu0 %v6961
        %7429 = vmatpush.bf16.msra.mxu0 %v6959
        %7430 = vmatpush.bf16.msra.mxu0 %v6957
        %7431 = vmatpush.bf16.msra.mxu0 %v6955
        %7432 = vmatpush.bf16.msra.mxu0 %v6953
        %7433 = vmatmul.bf16.gmra.mxu0 %v5687
        %v7434 = vpop.f32.mrf.mxu0
        %v7435 = vadd.f32 %v7422, %v7434
        %v7436 = vpop.f32.mrf.mxu0
        %7437 = vdwg.mxu0
        %7438 = vmatpush.bf16.msra.mxu0 %v6728
        %7439 = vmatpush.bf16.msra.mxu0 %v6726
        %7440 = vmatpush.bf16.msra.mxu0 %v6724
        %7441 = vmatpush.bf16.msra.mxu0 %v6722
        %7442 = vmatpush.bf16.msra.mxu0 %v6720
        %7443 = vmatpush.bf16.msra.mxu0 %v6718
        %7444 = vmatpush.bf16.msra.mxu0 %v6716
        %7445 = vmatpush.bf16.msra.mxu0 %v6714
        %7446 = vmatmul.bf16.gmra.mxu0 %v5672
        %v7447 = vpop.f32.mrf.mxu0
        %v7448 = vadd.f32 %v7227, %v7447
        %v7449 = vpop.f32.mrf.mxu0
        %7450 = vdwg.mxu0
        %7451 = vmatpush.bf16.msra.mxu0 %v6744
        %7452 = vmatpush.bf16.msra.mxu0 %v6742
        %7453 = vmatpush.bf16.msra.mxu0 %v6740
        %7454 = vmatpush.bf16.msra.mxu0 %v6738
        %7455 = vmatpush.bf16.msra.mxu0 %v6736
        %7456 = vmatpush.bf16.msra.mxu0 %v6734
        %7457 = vmatpush.bf16.msra.mxu0 %v6732
        %7458 = vmatpush.bf16.msra.mxu0 %v6730
        %7459 = vmatmul.bf16.gmra.mxu0 %v5673
        %v7460 = vpop.f32.mrf.mxu0
        %v7461 = vadd.f32 %v7448, %v7460
        %v7462 = vpop.f32.mrf.mxu0
        %7463 = vdwg.mxu0
        %7464 = vmatpush.bf16.msra.mxu0 %v6760
        %7465 = vmatpush.bf16.msra.mxu0 %v6758
        %7466 = vmatpush.bf16.msra.mxu0 %v6756
        %7467 = vmatpush.bf16.msra.mxu0 %v6754
        %7468 = vmatpush.bf16.msra.mxu0 %v6752
        %7469 = vmatpush.bf16.msra.mxu0 %v6750
        %7470 = vmatpush.bf16.msra.mxu0 %v6748
        %7471 = vmatpush.bf16.msra.mxu0 %v6746
        %7472 = vmatmul.bf16.gmra.mxu0 %v5674
        %v7473 = vpop.f32.mrf.mxu0
        %v7474 = vadd.f32 %v7461, %v7473
        %v7475 = vpop.f32.mrf.mxu0
        %7476 = vdwg.mxu0
        %7477 = vmatpush.bf16.msra.mxu0 %v6776
        %7478 = vmatpush.bf16.msra.mxu0 %v6774
        %7479 = vmatpush.bf16.msra.mxu0 %v6772
        %7480 = vmatpush.bf16.msra.mxu0 %v6770
        %7481 = vmatpush.bf16.msra.mxu0 %v6768
        %7482 = vmatpush.bf16.msra.mxu0 %v6766
        %7483 = vmatpush.bf16.msra.mxu0 %v6764
        %7484 = vmatpush.bf16.msra.mxu0 %v6762
        %7485 = vmatmul.bf16.gmra.mxu0 %v5675
        %v7486 = vpop.f32.mrf.mxu0
        %v7487 = vadd.f32 %v7474, %v7486
        %v7488 = vpop.f32.mrf.mxu0
        %7489 = vdwg.mxu0
        %7490 = vmatpush.bf16.msra.mxu0 %v6792
        %7491 = vmatpush.bf16.msra.mxu0 %v6790
        %7492 = vmatpush.bf16.msra.mxu0 %v6788
        %7493 = vmatpush.bf16.msra.mxu0 %v6786
        %7494 = vmatpush.bf16.msra.mxu0 %v6784
        %7495 = vmatpush.bf16.msra.mxu0 %v6782
        %7496 = vmatpush.bf16.msra.mxu0 %v6780
        %7497 = vmatpush.bf16.msra.mxu0 %v6778
        %7498 = vmatmul.bf16.gmra.mxu0 %v5676
        %v7499 = vpop.f32.mrf.mxu0
        %v7500 = vadd.f32 %v7487, %v7499
        %v7501 = vpop.f32.mrf.mxu0
        %7502 = vdwg.mxu0
        %7503 = vmatpush.bf16.msra.mxu0 %v6808
        %7504 = vmatpush.bf16.msra.mxu0 %v6806
        %7505 = vmatpush.bf16.msra.mxu0 %v6804
        %7506 = vmatpush.bf16.msra.mxu0 %v6802
        %7507 = vmatpush.bf16.msra.mxu0 %v6800
        %7508 = vmatpush.bf16.msra.mxu0 %v6798
        %7509 = vmatpush.bf16.msra.mxu0 %v6796
        %7510 = vmatpush.bf16.msra.mxu0 %v6794
        %7511 = vmatmul.bf16.gmra.mxu0 %v5677
        %v7512 = vpop.f32.mrf.mxu0
        %v7513 = vadd.f32 %v7500, %v7512
        %v7514 = vpop.f32.mrf.mxu0
        %7515 = vdwg.mxu0
        %7516 = vmatpush.bf16.msra.mxu0 %v6824
        %7517 = vmatpush.bf16.msra.mxu0 %v6822
        %7518 = vmatpush.bf16.msra.mxu0 %v6820
        %7519 = vmatpush.bf16.msra.mxu0 %v6818
        %7520 = vmatpush.bf16.msra.mxu0 %v6816
        %7521 = vmatpush.bf16.msra.mxu0 %v6814
        %7522 = vmatpush.bf16.msra.mxu0 %v6812
        %7523 = vmatpush.bf16.msra.mxu0 %v6810
        %7524 = vmatmul.bf16.gmra.mxu0 %v5678
        %v7525 = vpop.f32.mrf.mxu0
        %v7526 = vadd.f32 %v7513, %v7525
        %v7527 = vpop.f32.mrf.mxu0
        %7528 = vdwg.mxu0
        %7529 = vmatpush.bf16.msra.mxu0 %v6840
        %7530 = vmatpush.bf16.msra.mxu0 %v6838
        %7531 = vmatpush.bf16.msra.mxu0 %v6836
        %7532 = vmatpush.bf16.msra.mxu0 %v6834
        %7533 = vmatpush.bf16.msra.mxu0 %v6832
        %7534 = vmatpush.bf16.msra.mxu0 %v6830
        %7535 = vmatpush.bf16.msra.mxu0 %v6828
        %7536 = vmatpush.bf16.msra.mxu0 %v6826
        %7537 = vmatmul.bf16.gmra.mxu0 %v5679
        %v7538 = vpop.f32.mrf.mxu0
        %v7539 = vadd.f32 %v7526, %v7538
        %v7540 = vpop.f32.mrf.mxu0
        %7541 = vdwg.mxu0
        %7542 = vmatpush.bf16.msra.mxu0 %v6856
        %7543 = vmatpush.bf16.msra.mxu0 %v6854
        %7544 = vmatpush.bf16.msra.mxu0 %v6852
        %7545 = vmatpush.bf16.msra.mxu0 %v6850
        %7546 = vmatpush.bf16.msra.mxu0 %v6848
        %7547 = vmatpush.bf16.msra.mxu0 %v6846
        %7548 = vmatpush.bf16.msra.mxu0 %v6844
        %7549 = vmatpush.bf16.msra.mxu0 %v6842
        %7550 = vmatmul.bf16.gmra.mxu0 %v5680
        %v7551 = vpop.f32.mrf.mxu0
        %v7552 = vadd.f32 %v7539, %v7551
        %v7553 = vpop.f32.mrf.mxu0
        %7554 = vdwg.mxu0
        %7555 = vmatpush.bf16.msra.mxu0 %v6872
        %7556 = vmatpush.bf16.msra.mxu0 %v6870
        %7557 = vmatpush.bf16.msra.mxu0 %v6868
        %7558 = vmatpush.bf16.msra.mxu0 %v6866
        %7559 = vmatpush.bf16.msra.mxu0 %v6864
        %7560 = vmatpush.bf16.msra.mxu0 %v6862
        %7561 = vmatpush.bf16.msra.mxu0 %v6860
        %7562 = vmatpush.bf16.msra.mxu0 %v6858
        %7563 = vmatmul.bf16.gmra.mxu0 %v5681
        %v7564 = vpop.f32.mrf.mxu0
        %v7565 = vadd.f32 %v7552, %v7564
        %v7566 = vpop.f32.mrf.mxu0
        %7567 = vdwg.mxu0
        %7568 = vmatpush.bf16.msra.mxu0 %v6888
        %7569 = vmatpush.bf16.msra.mxu0 %v6886
        %7570 = vmatpush.bf16.msra.mxu0 %v6884
        %7571 = vmatpush.bf16.msra.mxu0 %v6882
        %7572 = vmatpush.bf16.msra.mxu0 %v6880
        %7573 = vmatpush.bf16.msra.mxu0 %v6878
        %7574 = vmatpush.bf16.msra.mxu0 %v6876
        %7575 = vmatpush.bf16.msra.mxu0 %v6874
        %7576 = vmatmul.bf16.gmra.mxu0 %v5682
        %v7577 = vpop.f32.mrf.mxu0
        %v7578 = vadd.f32 %v7565, %v7577
        %v7579 = vpop.f32.mrf.mxu0
        %7580 = vdwg.mxu0
        %7581 = vmatpush.bf16.msra.mxu0 %v6904
        %7582 = vmatpush.bf16.msra.mxu0 %v6902
        %7583 = vmatpush.bf16.msra.mxu0 %v6900
        %7584 = vmatpush.bf16.msra.mxu0 %v6898
        %7585 = vmatpush.bf16.msra.mxu0 %v6896
        %7586 = vmatpush.bf16.msra.mxu0 %v6894
        %7587 = vmatpush.bf16.msra.mxu0 %v6892
        %7588 = vmatpush.bf16.msra.mxu0 %v6890
        %7589 = vmatmul.bf16.gmra.mxu0 %v5683
        %v7590 = vpop.f32.mrf.mxu0
        %v7591 = vadd.f32 %v7578, %v7590
        %v7592 = vpop.f32.mrf.mxu0
        %7593 = vdwg.mxu0
        %7594 = vmatpush.bf16.msra.mxu0 %v6920
        %7595 = vmatpush.bf16.msra.mxu0 %v6918
        %7596 = vmatpush.bf16.msra.mxu0 %v6916
        %7597 = vmatpush.bf16.msra.mxu0 %v6914
        %7598 = vmatpush.bf16.msra.mxu0 %v6912
        %7599 = vmatpush.bf16.msra.mxu0 %v6910
        %7600 = vmatpush.bf16.msra.mxu0 %v6908
        %7601 = vmatpush.bf16.msra.mxu0 %v6906
        %7602 = vmatmul.bf16.gmra.mxu0 %v5684
        %v7603 = vpop.f32.mrf.mxu0
        %v7604 = vadd.f32 %v7591, %v7603
        %v7605 = vpop.f32.mrf.mxu0
        %7606 = vdwg.mxu0
        %7607 = vmatpush.bf16.msra.mxu0 %v6936
        %7608 = vmatpush.bf16.msra.mxu0 %v6934
        %7609 = vmatpush.bf16.msra.mxu0 %v6932
        %7610 = vmatpush.bf16.msra.mxu0 %v6930
        %7611 = vmatpush.bf16.msra.mxu0 %v6928
        %7612 = vmatpush.bf16.msra.mxu0 %v6926
        %7613 = vmatpush.bf16.msra.mxu0 %v6924
        %7614 = vmatpush.bf16.msra.mxu0 %v6922
        %7615 = vmatmul.bf16.gmra.mxu0 %v5685
        %v7616 = vpop.f32.mrf.mxu0
        %v7617 = vadd.f32 %v7604, %v7616
        %v7618 = vpop.f32.mrf.mxu0
        %7619 = vdwg.mxu0
        %7620 = vmatpush.bf16.msra.mxu0 %v6952
        %7621 = vmatpush.bf16.msra.mxu0 %v6950
        %7622 = vmatpush.bf16.msra.mxu0 %v6948
        %7623 = vmatpush.bf16.msra.mxu0 %v6946
        %7624 = vmatpush.bf16.msra.mxu0 %v6944
        %7625 = vmatpush.bf16.msra.mxu0 %v6942
        %7626 = vmatpush.bf16.msra.mxu0 %v6940
        %7627 = vmatpush.bf16.msra.mxu0 %v6938
        %7628 = vmatmul.bf16.gmra.mxu0 %v5686
        %v7629 = vpop.f32.mrf.mxu0
        %v7630 = vadd.f32 %v7617, %v7629
        %v7631 = vpop.f32.mrf.mxu0
        %7632 = vdwg.mxu0
        %7633 = vmatpush.bf16.msra.mxu0 %v6968
        %7634 = vmatpush.bf16.msra.mxu0 %v6966
        %7635 = vmatpush.bf16.msra.mxu0 %v6964
        %7636 = vmatpush.bf16.msra.mxu0 %v6962
        %7637 = vmatpush.bf16.msra.mxu0 %v6960
        %7638 = vmatpush.bf16.msra.mxu0 %v6958
        %7639 = vmatpush.bf16.msra.mxu0 %v6956
        %7640 = vmatpush.bf16.msra.mxu0 %v6954
        %7641 = vmatmul.bf16.gmra.mxu0 %v5687
        %v7642 = vpop.f32.mrf.mxu0
        %v7643 = vadd.f32 %v7630, %v7642
        %v7644 = vpop.f32.mrf.mxu0
        %7645 = vdwg.mxu0
        %vm7646 = vcmp.ge.f32.partialorder %v7435, 0.0
        %vm7647 = vcmp.ge.f32.partialorder %v7643, 0.0
        %v7648 = vmul.f32 %v7435, 0.01
        %v7649 = vmul.f32 %v7643, 0.01
        %v7650 = vsel %vm7646, %v7435, %v7648
        %v7651 = vsel %vm7647, %v7643, %v7649
        %v7652 = vpack.c.bf16 %v7650, %v7650
        %v7653 = vpack.c.bf16 %v7651, %v7651
        %v7654 = vld [vmem:[%s9] sm:$0xf]
        %v7655 = vld [vmem:[%s9 + $0x4] sm:$0xf]
        %v7656 = vld [vmem:[%s9 + $0x8] sm:$0xf]
        %v7657 = vld [vmem:[%s9 + $0xc] sm:$0xf]
        %v7658 = vld [vmem:[%s9 + $0x10] sm:$0xf]
        %v7659 = vld [vmem:[%s9 + $0x14] sm:$0xf]
        %v7660 = vld [vmem:[%s9 + $0x18] sm:$0xf]
        %v7661 = vld [vmem:[%s9 + $0x1c] sm:$0xf]
        %v7662 = vld [vmem:[%s9 + $0x20] sm:$0xf]
        %v7663 = vld [vmem:[%s9 + $0x24] sm:$0xf]
        %v7664 = vld [vmem:[%s9 + $0x28] sm:$0xf]
        %v7665 = vld [vmem:[%s9 + $0x2c] sm:$0xf]
        %v7666 = vld [vmem:[%s9 + $0x30] sm:$0xf]
        %v7667 = vld [vmem:[%s9 + $0x34] sm:$0xf]
        %v7668 = vld [vmem:[%s9 + $0x38] sm:$0xf]
        %v7669 = vld [vmem:[%s9 + $0x3c] sm:$0xf]
        %v7670 = vld [vmem:[%s9 + $0x40] sm:$0xf]
        %v7671 = vld [vmem:[%s9 + $0x44] sm:$0xf]
        %v7672 = vld [vmem:[%s9 + $0x48] sm:$0xf]
        %v7673 = vld [vmem:[%s9 + $0x4c] sm:$0xf]
        %v7674 = vld [vmem:[%s9 + $0x50] sm:$0xf]
        %v7675 = vld [vmem:[%s9 + $0x54] sm:$0xf]
        %v7676 = vld [vmem:[%s9 + $0x58] sm:$0xf]
        %v7677 = vld [vmem:[%s9 + $0x5c] sm:$0xf]
        %v7678 = vld [vmem:[%s9 + $0x60] sm:$0xf]
        %v7679 = vld [vmem:[%s9 + $0x64] sm:$0xf]
        %v7680 = vld [vmem:[%s9 + $0x68] sm:$0xf]
        %v7681 = vld [vmem:[%s9 + $0x6c] sm:$0xf]
        %v7682 = vld [vmem:[%s9 + $0x70] sm:$0xf]
        %v7683 = vld [vmem:[%s9 + $0x74] sm:$0xf]
        %v7684 = vld [vmem:[%s9 + $0x78] sm:$0xf]
        %v7685 = vld [vmem:[%s9 + $0x7c] sm:$0xf]
        %v7686 = vld [vmem:[%s10] sm:$0x1]
        %v7719 = vunpack.c.l.b16 %v7654
        %v7720 = vunpack.c.l.b16 %v7655
        %v7721 = vunpack.c.l.b16 %v7656
        %v7722 = vunpack.c.l.b16 %v7657
        %v7723 = vunpack.c.l.b16 %v7658
        %v7724 = vunpack.c.l.b16 %v7659
        %v7725 = vunpack.c.l.b16 %v7660
        %v7726 = vunpack.c.l.b16 %v7661
        %v7727 = vunpack.c.l.b16 %v7662
        %v7728 = vunpack.c.l.b16 %v7663
        %v7729 = vunpack.c.l.b16 %v7664
        %v7730 = vunpack.c.l.b16 %v7665
        %v7731 = vunpack.c.l.b16 %v7666
        %v7732 = vunpack.c.l.b16 %v7667
        %v7733 = vunpack.c.l.b16 %v7668
        %v7734 = vunpack.c.l.b16 %v7669
        %v7735 = vunpack.c.l.b16 %v7670
        %v7736 = vunpack.c.l.b16 %v7671
        %v7737 = vunpack.c.l.b16 %v7672
        %v7738 = vunpack.c.l.b16 %v7673
        %v7739 = vunpack.c.l.b16 %v7674
        %v7740 = vunpack.c.l.b16 %v7675
        %v7741 = vunpack.c.l.b16 %v7676
        %v7742 = vunpack.c.l.b16 %v7677
        %v7743 = vunpack.c.l.b16 %v7678
        %v7744 = vunpack.c.l.b16 %v7679
        %v7745 = vunpack.c.l.b16 %v7680
        %v7746 = vunpack.c.l.b16 %v7681
        %v7747 = vunpack.c.l.b16 %v7682
        %v7748 = vunpack.c.l.b16 %v7683
        %v7749 = vunpack.c.l.b16 %v7684
        %v7750 = vunpack.c.l.b16 %v7685
        %v7751 = vpack.c.b16 %v7720, %v7719
        %v7752 = vpack.c.b16 %v7722, %v7721
        %v7753 = vpack.c.b16 %v7724, %v7723
        %v7754 = vpack.c.b16 %v7726, %v7725
        %v7755 = vpack.c.b16 %v7728, %v7727
        %v7756 = vpack.c.b16 %v7730, %v7729
        %v7757 = vpack.c.b16 %v7732, %v7731
        %v7758 = vpack.c.b16 %v7734, %v7733
        %v7759 = vpack.c.b16 %v7736, %v7735
        %v7760 = vpack.c.b16 %v7738, %v7737
        %v7761 = vpack.c.b16 %v7740, %v7739
        %v7762 = vpack.c.b16 %v7742, %v7741
        %v7763 = vpack.c.b16 %v7744, %v7743
        %v7764 = vpack.c.b16 %v7746, %v7745
        %v7765 = vpack.c.b16 %v7748, %v7747
        %v7766 = vpack.c.b16 %v7750, %v7749
        %7783 = vmatpush.bf16.msra.mxu0 %v7758
        %7784 = vmatpush.bf16.msra.mxu0 %v7757
        %7785 = vmatpush.bf16.msra.mxu0 %v7756
        %7786 = vmatpush.bf16.msra.mxu0 %v7755
        %7787 = vmatpush.bf16.msra.mxu0 %v7754
        %7788 = vmatpush.bf16.msra.mxu0 %v7753
        %7789 = vmatpush.bf16.msra.mxu0 %v7752
        %7790 = vmatpush.bf16.msra.mxu0 %v7751
        %7791 = vmatmul.bf16.gmra.mxu0 %v7652
        %v7792 = vpop.f32.mrf.mxu0
        %v7793 = vadd.f32 %v7686, %v7792
        %v7794 = vpop.f32.mrf.mxu0
        %7795 = vdwg.mxu0
        %7796 = vmatpush.bf16.msra.mxu0 %v7766
        %7797 = vmatpush.bf16.msra.mxu0 %v7765
        %7798 = vmatpush.bf16.msra.mxu0 %v7764
        %7799 = vmatpush.bf16.msra.mxu0 %v7763
        %7800 = vmatpush.bf16.msra.mxu0 %v7762
        %7801 = vmatpush.bf16.msra.mxu0 %v7761
        %7802 = vmatpush.bf16.msra.mxu0 %v7760
        %7803 = vmatpush.bf16.msra.mxu0 %v7759
        %7804 = vmatmul.bf16.gmra.mxu0 %v7653
        %v7805 = vpop.f32.mrf.mxu0
        %v7806 = vadd.f32 %v7793, %v7805
        %v7807 = vpop.f32.mrf.mxu0
        %7808 = vdwg.mxu0
        %7809 = vst [vmem:[%s378] sm:$0x1] %v7806
        %s7810 = sand.u32 %s269, 1
        %s7811 = scalar_lea.sflag [#allocation14], %s7810
        %s7812 = sand.u32 %s269, 1
        %s7813 = scalar_lea.vmem [#allocation13], %s7812
        // Predicated region
        $region65: #{forward.1} parent=63 // pred_check
          %p7814 = pneg %p279
        $region66: #{forward.1} parent=63 // pred_check_branch
          %7816 = sbr.rel (%p7814) target = $region68
        $region67: #{forward.1} parent=63 // pred_region
          %7818 = vsyncadd %s7811, 0
          %s7819 = scalar_lea.hbm %s11, %s25
          %s7821 = sshll.u32 %s7813, 4
          %s7822 = int_to_ptr.vmem [resolvable:$true] %s7821
          %s7823 = sshll.u32 %s7819, 4
          %s7824 = int_to_ptr.hbm [resolvable:$true] %s7823
          %7826 = dma.vmem_to_hbm [thread:$0]  %s7822, 16, %s7824, %s7811
        $region68: #{forward.1} parent=63 // pred_fallthru
          _
      $region64: #{forward.1} parent=5 // pred_fallthru
        _
      %p7827 = scmp.le.s32.totalorder 2, %s20
      // Predicated region
      $region69: #{forward.1} parent=5 // pred_check
        %p7828 = pneg %p7827
      $region70: #{forward.1} parent=5 // pred_check_branch
        %7830 = sbr.rel (%p7828) target = $region72
      $region71: #{forward.1} parent=5 // pred_region
        %s7831 = ssub.s32 %s20, 2
        // Predicated region
        $region73: #{forward.1} parent=71 // pred_check
          %p7832 = pneg %p285
        $region74: #{forward.1} parent=71 // pred_check_branch
          %7834 = sbr.rel (%p7832) target = $region76
        $region75: #{forward.1} parent=71 // pred_region
          %s7835 = sand.u32 %s270, 1
          %s7836 = scalar_lea.sflag [#allocation14], %s7835
          %s7837 = sand.u32 %s270, 1
          %s7838 = scalar_lea.vmem [#allocation13], %s7837
          %7840 = dma.done %s7836, 16
        $region76: #{forward.1} parent=71 // pred_fallthru
          _
      $region72: #{forward.1} parent=5 // pred_fallthru
        _
    $region6: #{forward.1} parent=1 // loop_footer
      %s24 = sadd.s32 1, %s20
    $region7: #{forward.1} parent=1 // loop_footer_branch
      %19 = sbr.rel target = $region3
    $region8: #{forward.1} parent=1 // loop_exit
      _
    %7841 = vsyncpa [#allocation14], 1
    %s7842 = scalar_lea.sflag [#allocation14], 1
    %7843 = vsyncpa %s7842, 1

</llo_original>
